<compile_context>
chip_gen: v7x
topology: tpu7x:2x2x1
jax: 0.10.0
libtpu: 0.0.40
codegen_flags: <defaults>
</compile_context>

<pallas_src>
import numpy as np

import jax
import jax.numpy as jnp
from jax.experimental import pallas as pl
from jax.experimental.pallas import tpu as pltpu


# ----------------------------- Pallas kernel --------------------------------

def _fused_cnn_kernel(x_ref, m1_ref, b1_ref, m2_ref, b2_ref,
                      w3_ref, b3_ref, w4_ref, b4_ref, o_ref):
    """Whole network on VMEM-resident tiles.

    x:[B,784] -> conv1(relu) -> [B,1568] -> conv2(relu, x2 folded) -> [B,784]
      -> fc1(relu) -> [B,256] -> fc2(0.5 folded, N padded to 128) -> [B,128].
    """
    h = jnp.dot(x_ref[...], m1_ref[...], preferred_element_type=jnp.float32)
    h = jnp.maximum(h + b1_ref[...], 0.0)                       # conv1 + ReLU
    h = jnp.dot(h, m2_ref[...], preferred_element_type=jnp.float32)
    h = jnp.maximum(h + b2_ref[...], 0.0)                       # conv2 + ReLU (2.0 folded)
    h = jnp.dot(h, w3_ref[...], preferred_element_type=jnp.float32)
    h = jnp.maximum(h + b3_ref[...], 0.0)                       # fc1 + ReLU
    h = jnp.dot(h, w4_ref[...], preferred_element_type=jnp.float32)
    o_ref[...] = h + b4_ref[...]                                # fc2 (0.5 folded)


# ------------------------ init-time parameter prep ---------------------------

def _conv_as_matrix(w, b, H, W, stride, pad):
    """Lower a Conv2d with fixed input HxW to a dense matrix.

    Returns M:[Cin*H*W, Cout*Ho*Wo] and b_exp:[Cout*Ho*Wo] such that
    NCHW-flat(conv(x)) == NCHW-flat(x) @ M + b_exp  (exact same linear map;
    zero padding and im2col are folded into the structured zeros of M).
    """
    w = np.asarray(w, np.float32)
    b = np.asarray(b, np.float32)
    Cout, Cin, kh, kw = w.shape
    Ho = (H + 2 * pad - kh) // stride + 1
    Wo = (W + 2 * pad - kw) // stride + 1
    M = np.zeros((Cin, H, W, Cout, Ho, Wo), np.float32)
    for i in range(kh):
        for j in range(kw):
            for ho in range(Ho):
                h = stride * ho + i - pad
                if h < 0 or h >= H:
                    continue
                for wo in range(Wo):
                    wc = stride * wo + j - pad
                    if wc < 0 or wc >= W:
                        continue
                    M[:, h, wc, :, ho, wo] = w[:, :, i, j].T
    M = M.reshape(Cin * H * W, Cout * Ho * Wo)
    b_exp = np.repeat(b, Ho * Wo)
    return jnp.asarray(M), jnp.asarray(b_exp)


def prepare_params(p):
    """PyTorch-layout params -> fused-kernel params (one-time, at init)."""
    m1, b1 = _conv_as_matrix(p["conv1_w"], p["conv1_b"], 28, 28, 2, 1)   # [784,1568]
    m2, b2 = _conv_as_matrix(p["conv2_w"], p["conv2_b"], 14, 14, 2, 1)   # [1568,784]
    # Fold "x = 2.0 * x" into conv2's linear map (exact: relu(2y) == 2*relu(y)).
    m2 = 2.0 * m2
    b2 = 2.0 * b2
    w3 = jnp.asarray(p["fc1_w"], jnp.float32).T                          # [784,256]
    b3 = jnp.asarray(p["fc1_b"], jnp.float32)
    # Fold the final 0.5 into fc2 and zero-pad N: 10 -> 128 for a lane-dense store.
    w4 = 0.5 * jnp.asarray(p["fc2_w"], jnp.float32).T                    # [256,10]
    b4 = 0.5 * jnp.asarray(p["fc2_b"], jnp.float32)
    w4 = jnp.pad(w4, ((0, 0), (0, 128 - w4.shape[1])))
    b4 = jnp.pad(b4, (0, 128 - b4.shape[0]))
    return {
        "m1": m1, "b1": b1.reshape(1, -1),
        "m2": m2, "b2": b2.reshape(1, -1),
        "w3": w3, "b3": b3.reshape(1, -1),
        "w4": w4, "b4": b4.reshape(1, -1),
    }


# -------------------------------- forward ------------------------------------

@jax.jit
def cnn_mnist_forward(x, fp):
    """x: [B, 1, 28, 28] f32 -> [B, 10] f32 (matches cnn_MNIST.forward)."""
    B = x.shape[0]
    xf = x.reshape(B, 28 * 28).astype(jnp.float32)     # same as torch .view(-1,784) order

    operands = (xf, fp["m1"], fp["b1"], fp["m2"], fp["b2"],
                fp["w3"], fp["b3"], fp["w4"], fp["b4"])
    in_specs = [pl.BlockSpec(op.shape, lambda i: (0, 0)) for op in operands]

    n_out = fp["w4"].shape[1]  # 128 (lane-dense padded)
    flops = 2 * B * sum(int(a.shape[0]) * int(a.shape[1])
                        for a in (fp["m1"], fp["m2"], fp["w3"], fp["w4"]))
    bytes_accessed = sum(int(op.size) * op.dtype.itemsize for op in operands)
    bytes_accessed += B * n_out * 4

    out = pl.pallas_call(
        _fused_cnn_kernel,
        out_shape=jax.ShapeDtypeStruct((B, n_out), jnp.float32),
        grid=(1,),
        in_specs=in_specs,
        out_specs=pl.BlockSpec((B, n_out), lambda i: (0, 0)),
        compiler_params=pltpu.CompilerParams(
            dimension_semantics=("arbitrary",),
            vmem_limit_bytes=48 * 1024 * 1024,
        ),
        cost_estimate=pl.CostEstimate(
            flops=flops, transcendentals=0, bytes_accessed=bytes_accessed),
    )(*operands)
    return out[:, :10]


# ------------------------- reference (pure JAX) ------------------------------

def cnn_mnist_reference(x, p):
    dn = ("NCHW", "OIHW", "NCHW")
    y = jax.lax.conv_general_dilated(x, p["conv1_w"], (2, 2), ((1, 1), (1, 1)),
                                     dimension_numbers=dn)
    y = jnp.maximum(y + p["conv1_b"][None, :, None, None], 0.0)
    y = jax.lax.conv_general_dilated(y, p["conv2_w"], (2, 2), ((1, 1), (1, 1)),
                                     dimension_numbers=dn)
    y = jnp.maximum(y + p["conv2_b"][None, :, None, None], 0.0)
    y = y.reshape(y.shape[0], 784) * 2.0
    y = jnp.maximum(y @ p["fc1_w"].T + p["fc1_b"], 0.0)
    y = y @ p["fc2_w"].T + p["fc2_b"]
    return 0.5 * y


# --------------------------------- main --------------------------------------

def init_params(key):
    """Parameters in PyTorch layout: conv [Cout,Cin,kh,kw], Linear W [out,in]."""
    ks = jax.random.split(key, 8)
    f32 = jnp.float32
    return {
        "conv1_w": 0.1 * jax.random.normal(ks[0], (8, 1, 4, 4), f32),
        "conv1_b": 0.1 * jax.random.normal(ks[1], (8,), f32),
        "conv2_w": 0.1 * jax.random.normal(ks[2], (16, 8, 4, 4), f32),
        "conv2_b": 0.1 * jax.random.normal(ks[3], (16,), f32),
        "fc1_w": 0.05 * jax.random.normal(ks[4], (256, 784), f32),
        "fc1_b": 0.05 * jax.random.normal(ks[5], (256,), f32),
        "fc2_w": 0.05 * jax.random.normal(ks[6], (10, 256), f32),
        "fc2_b": 0.05 * jax.random.normal(ks[7], (10,), f32),
    }


if __name__ == "__main__":
    key = jax.random.PRNGKey(0)
    k_param, k_x = jax.random.split(key)
    params = init_params(k_param)
    fused_params = prepare_params(params)      # one-time weight prep (init time)

    # MNIST-shaped input: the .view(-1, 784) in the module forces 1x28x28.
    x = jax.random.normal(k_x, (2, 1, 28, 28), jnp.float32)

    out = jax.block_until_ready(cnn_mnist_forward(x, fused_params))
    ref = jax.block_until_ready(cnn_mnist_reference(x, params))

    assert out.shape == (2, 10), out.shape
    max_err = float(jnp.max(jnp.abs(out - ref)))
    assert jnp.allclose(out, ref, atol=2e-4, rtol=2e-4), ("mismatch vs reference", max_err)
    print("KERNEL_OK")
</pallas_src>

<mosaic_0001>
module attributes {stable_mosaic.version = 11 : i64} {
  func.func @_fused_cnn_kernel(%arg0: i32, %arg1: memref<2x784xf32, #tpu.memory_space<vmem>>, %arg2: memref<784x1568xf32, #tpu.memory_space<vmem>>, %arg3: memref<1x1568xf32, #tpu.memory_space<vmem>>, %arg4: memref<1568x784xf32, #tpu.memory_space<vmem>>, %arg5: memref<1x784xf32, #tpu.memory_space<vmem>>, %arg6: memref<784x256xf32, #tpu.memory_space<vmem>>, %arg7: memref<1x256xf32, #tpu.memory_space<vmem>>, %arg8: memref<256x128xf32, #tpu.memory_space<vmem>>, %arg9: memref<1x128xf32, #tpu.memory_space<vmem>>, %arg10: memref<2x128xf32, #tpu.memory_space<vmem>>) attributes {dimension_semantics = [#tpu.dimension_semantics<arbitrary>], iteration_bounds = array<i64: 1>, scalar_prefetch = 0 : i64, scratch_operands = 0 : i64, tpu.core_type = #tpu.core_type<tc>, window_params = [{pipeline_mode = #tpu.pipeline_mode<synchronous>, transform_indices = @transform_0, window_bounds = array<i64: 2, 784>}, {pipeline_mode = #tpu.pipeline_mode<synchronous>, transform_indices = @transform_1, window_bounds = array<i64: 784, 1568>}, {pipeline_mode = #tpu.pipeline_mode<synchronous>, transform_indices = @transform_2, window_bounds = array<i64: 1, 1568>}, {pipeline_mode = #tpu.pipeline_mode<synchronous>, transform_indices = @transform_3, window_bounds = array<i64: 1568, 784>}, {pipeline_mode = #tpu.pipeline_mode<synchronous>, transform_indices = @transform_4, window_bounds = array<i64: 1, 784>}, {pipeline_mode = #tpu.pipeline_mode<synchronous>, transform_indices = @transform_5, window_bounds = array<i64: 784, 256>}, {pipeline_mode = #tpu.pipeline_mode<synchronous>, transform_indices = @transform_6, window_bounds = array<i64: 1, 256>}, {pipeline_mode = #tpu.pipeline_mode<synchronous>, transform_indices = @transform_7, window_bounds = array<i64: 256, 128>}, {pipeline_mode = #tpu.pipeline_mode<synchronous>, transform_indices = @transform_8, window_bounds = array<i64: 1, 128>}, {pipeline_mode = #tpu.pipeline_mode<synchronous>, transform_indices = @transform_9, window_bounds = array<i64: 2, 128>}]} {
    %c0 = arith.constant 0 : index
    %c0_0 = arith.constant 0 : index
    %0 = vector.load %arg1[%c0, %c0_0] : memref<2x784xf32, #tpu.memory_space<vmem>>, vector<2x784xf32>
    %c0_1 = arith.constant 0 : index
    %c0_2 = arith.constant 0 : index
    %1 = vector.load %arg2[%c0_1, %c0_2] : memref<784x1568xf32, #tpu.memory_space<vmem>>, vector<784x1568xf32>
    %cst = arith.constant dense<0.000000e+00> : vector<2x1568xf32>
    %2 = tpu.matmul %0, %1, %cst {dimension_numbers = #tpu.dot_dimension_numbers<[1], [0], [0], [1], [0, 0, 1, 1], [], []>} : vector<2x784xf32>, vector<784x1568xf32>, vector<2x1568xf32> -> vector<2x1568xf32>
    %c0_3 = arith.constant 0 : index
    %c0_4 = arith.constant 0 : index
    %3 = vector.load %arg3[%c0_3, %c0_4] : memref<1x1568xf32, #tpu.memory_space<vmem>>, vector<1x1568xf32>
    %4 = vector.broadcast %3 : vector<1x1568xf32> to vector<2x1568xf32>
    %5 = arith.addf %2, %4 : vector<2x1568xf32>
    %cst_5 = arith.constant 0.000000e+00 : f32
    %6 = vector.broadcast %cst_5 : f32 to vector<2x1568xf32>
    %7 = arith.maximumf %5, %6 : vector<2x1568xf32>
    %c0_6 = arith.constant 0 : index
    %c0_7 = arith.constant 0 : index
    %8 = vector.load %arg4[%c0_6, %c0_7] : memref<1568x784xf32, #tpu.memory_space<vmem>>, vector<1568x784xf32>
    %cst_8 = arith.constant dense<0.000000e+00> : vector<2x784xf32>
    %9 = tpu.matmul %7, %8, %cst_8 {dimension_numbers = #tpu.dot_dimension_numbers<[1], [0], [0], [1], [0, 0, 1, 1], [], []>} : vector<2x1568xf32>, vector<1568x784xf32>, vector<2x784xf32> -> vector<2x784xf32>
    %c0_9 = arith.constant 0 : index
    %c0_10 = arith.constant 0 : index
    %10 = vector.load %arg5[%c0_9, %c0_10] : memref<1x784xf32, #tpu.memory_space<vmem>>, vector<1x784xf32>
    %11 = vector.broadcast %10 : vector<1x784xf32> to vector<2x784xf32>
    %12 = arith.addf %9, %11 : vector<2x784xf32>
    %cst_11 = arith.constant 0.000000e+00 : f32
    %13 = vector.broadcast %cst_11 : f32 to vector<2x784xf32>
    %14 = arith.maximumf %12, %13 : vector<2x784xf32>
    %c0_12 = arith.constant 0 : index
    %c0_13 = arith.constant 0 : index
    %15 = vector.load %arg6[%c0_12, %c0_13] : memref<784x256xf32, #tpu.memory_space<vmem>>, vector<784x256xf32>
    %cst_14 = arith.constant dense<0.000000e+00> : vector<2x256xf32>
    %16 = tpu.matmul %14, %15, %cst_14 {dimension_numbers = #tpu.dot_dimension_numbers<[1], [0], [0], [1], [0, 0, 1, 1], [], []>} : vector<2x784xf32>, vector<784x256xf32>, vector<2x256xf32> -> vector<2x256xf32>
    %c0_15 = arith.constant 0 : index
    %c0_16 = arith.constant 0 : index
    %17 = vector.load %arg7[%c0_15, %c0_16] : memref<1x256xf32, #tpu.memory_space<vmem>>, vector<1x256xf32>
    %18 = vector.broadcast %17 : vector<1x256xf32> to vector<2x256xf32>
    %19 = arith.addf %16, %18 : vector<2x256xf32>
    %cst_17 = arith.constant 0.000000e+00 : f32
    %20 = vector.broadcast %cst_17 : f32 to vector<2x256xf32>
    %21 = arith.maximumf %19, %20 : vector<2x256xf32>
    %c0_18 = arith.constant 0 : index
    %c0_19 = arith.constant 0 : index
    %22 = vector.load %arg8[%c0_18, %c0_19] : memref<256x128xf32, #tpu.memory_space<vmem>>, vector<256x128xf32>
    %cst_20 = arith.constant dense<0.000000e+00> : vector<2x128xf32>
    %23 = tpu.matmul %21, %22, %cst_20 {dimension_numbers = #tpu.dot_dimension_numbers<[1], [0], [0], [1], [0, 0, 1, 1], [], []>} : vector<2x256xf32>, vector<256x128xf32>, vector<2x128xf32> -> vector<2x128xf32>
    %c0_21 = arith.constant 0 : index
    %c0_22 = arith.constant 0 : index
    %24 = vector.load %arg9[%c0_21, %c0_22] : memref<1x128xf32, #tpu.memory_space<vmem>>, vector<1x128xf32>
    %25 = vector.broadcast %24 : vector<1x128xf32> to vector<2x128xf32>
    %26 = arith.addf %23, %25 : vector<2x128xf32>
    %c0_23 = arith.constant 0 : index
    %c0_24 = arith.constant 0 : index
    %27 = vector.load %arg10[%c0_23, %c0_24] : memref<2x128xf32, #tpu.memory_space<vmem>>, vector<2x128xf32>
    tpu.vector_store %arg10[%c0_23, %c0_24], %26 {strides = array<i32>} : memref<2x128xf32, #tpu.memory_space<vmem>>, vector<2x128xf32>,
    return
  }
  func.func @transform_0(%arg0: i32) -> (i32, i32) {
    %c0_i32 = arith.constant 0 : i32
    %c0_i32_0 = arith.constant 0 : i32
    %c0_i32_1 = arith.constant 0 : i32
    return %c0_i32, %c0_i32_0 : i32, i32
  }
  func.func @transform_1(%arg0: i32) -> (i32, i32) {
    %c0_i32 = arith.constant 0 : i32
    %c0_i32_0 = arith.constant 0 : i32
    %c0_i32_1 = arith.constant 0 : i32
    return %c0_i32, %c0_i32_0 : i32, i32
  }
  func.func @transform_2(%arg0: i32) -> (i32, i32) {
    %c0_i32 = arith.constant 0 : i32
    %c0_i32_0 = arith.constant 0 : i32
    %c0_i32_1 = arith.constant 0 : i32
    return %c0_i32, %c0_i32_0 : i32, i32
  }
  func.func @transform_3(%arg0: i32) -> (i32, i32) {
    %c0_i32 = arith.constant 0 : i32
    %c0_i32_0 = arith.constant 0 : i32
    %c0_i32_1 = arith.constant 0 : i32
    return %c0_i32, %c0_i32_0 : i32, i32
  }
  func.func @transform_4(%arg0: i32) -> (i32, i32) {
    %c0_i32 = arith.constant 0 : i32
    %c0_i32_0 = arith.constant 0 : i32
    %c0_i32_1 = arith.constant 0 : i32
    return %c0_i32, %c0_i32_0 : i32, i32
  }
  func.func @transform_5(%arg0: i32) -> (i32, i32) {
    %c0_i32 = arith.constant 0 : i32
    %c0_i32_0 = arith.constant 0 : i32
    %c0_i32_1 = arith.constant 0 : i32
    return %c0_i32, %c0_i32_0 : i32, i32
  }
  func.func @transform_6(%arg0: i32) -> (i32, i32) {
    %c0_i32 = arith.constant 0 : i32
    %c0_i32_0 = arith.constant 0 : i32
    %c0_i32_1 = arith.constant 0 : i32
    return %c0_i32, %c0_i32_0 : i32, i32
  }
  func.func @transform_7(%arg0: i32) -> (i32, i32) {
    %c0_i32 = arith.constant 0 : i32
    %c0_i32_0 = arith.constant 0 : i32
    %c0_i32_1 = arith.constant 0 : i32
    return %c0_i32, %c0_i32_0 : i32, i32
  }
  func.func @transform_8(%arg0: i32) -> (i32, i32) {
    %c0_i32 = arith.constant 0 : i32
    %c0_i32_0 = arith.constant 0 : i32
    %c0_i32_1 = arith.constant 0 : i32
    return %c0_i32, %c0_i32_0 : i32, i32
  }
  func.func @transform_9(%arg0: i32) -> (i32, i32) {
    %c0_i32 = arith.constant 0 : i32
    %c0_i32_0 = arith.constant 0 : i32
    %c0_i32_1 = arith.constant 0 : i32
    return %c0_i32, %c0_i32_0 : i32, i32
  }
}

</mosaic_0001>

<llo_original>
// kernel: cnn_mnist_forward.1
$region0: #{cnn_mnist_forward.1}
  #allocation0 [shape = 'u32[]', space=smem, size = 0x4, offset = 0x4, fixed_abs, tag = 'smem constant byte address 0x4 - core index']
  #allocation1 [shape = 'u32[144,128]{1,0:T(1,128)}', space=vmem, size = 0x12000, scoped, tag = 'internal scratch']
  %s0 = inlined_call_operand.vmem [shape: f32[2,784], index: 0, kind: input, shape index: {}]
  %s1 = inlined_call_operand.vmem [shape: f32[784,1568], index: 1, kind: input, shape index: {}]
  %s2 = inlined_call_operand.vmem [shape: f32[1,1568], index: 2, kind: input, shape index: {}]
  %s3 = inlined_call_operand.vmem [shape: f32[1568,784], index: 3, kind: input, shape index: {}]
  %s4 = inlined_call_operand.vmem [shape: f32[1,784], index: 4, kind: input, shape index: {}]
  %s5 = inlined_call_operand.vmem [shape: f32[784,256], index: 5, kind: input, shape index: {}]
  %s6 = inlined_call_operand.vmem [shape: f32[1,256], index: 6, kind: input, shape index: {}]
  %s7 = inlined_call_operand.vmem [shape: f32[256,128], index: 7, kind: input, shape index: {}]
  %s8 = inlined_call_operand.vmem [shape: f32[1,128], index: 8, kind: input, shape index: {}]
  %s9 = inlined_call_operand.hbm [shape: f32[2,128], index: 9, kind: output, shape index: {}]
  %s10 = sld [smem:[#allocation0]]
  $region46: #{cnn_mnist_forward.1} parent=0
    _
  %s12 = ssub.s32 1, %s10
  %s13 = scalar_select 0, %s12, %s10
  $region1: #{cnn_mnist_forward.1} parent=0
    #allocation2 [shape = 'u8[1024]{0}', space=vmem, size = 0x400, scoped, tag = 'output window, operand 0, single buffered']
    #allocation3 [shape = 's32[1]{0}', space=sflag, size = 0x4, scoped, tag = 'scoped memory for cnn_mnist_forward.1']
    %14 = vsyncpa [#allocation3], 0
    // Predicated region
    $region2: #{cnn_mnist_forward.1} parent=1 // pred_check
      _
    $region3: #{cnn_mnist_forward.1} parent=1 // pred_check_branch
      %16 = sbr.rel (0) target = $region5
    $region4: #{cnn_mnist_forward.1} parent=1 // pred_region
      _
    $region5: #{cnn_mnist_forward.1} parent=1 // pred_fallthru
      _
    // Predicated region
    $region6: #{cnn_mnist_forward.1} parent=1 // pred_check
      _
    $region7: #{cnn_mnist_forward.1} parent=1 // pred_check_branch
      %18 = sbr.rel (0) target = $region9
    $region8: #{cnn_mnist_forward.1} parent=1 // pred_region
      _
    $region9: #{cnn_mnist_forward.1} parent=1 // pred_fallthru
      _
    // Predicated region
    $region10: #{cnn_mnist_forward.1} parent=1 // pred_check
      _
    $region11: #{cnn_mnist_forward.1} parent=1 // pred_check_branch
      %20 = sbr.rel (0) target = $region13
    $region12: #{cnn_mnist_forward.1} parent=1 // pred_region
      _
    $region13: #{cnn_mnist_forward.1} parent=1 // pred_fallthru
      _
    // Predicated region
    $region14: #{cnn_mnist_forward.1} parent=1 // pred_check
      _
    $region15: #{cnn_mnist_forward.1} parent=1 // pred_check_branch
      %22 = sbr.rel (0) target = $region17
    $region16: #{cnn_mnist_forward.1} parent=1 // pred_region
      _
    $region17: #{cnn_mnist_forward.1} parent=1 // pred_fallthru
      _
    // Predicated region
    $region18: #{cnn_mnist_forward.1} parent=1 // pred_check
      _
    $region19: #{cnn_mnist_forward.1} parent=1 // pred_check_branch
      %24 = sbr.rel (0) target = $region21
    $region20: #{cnn_mnist_forward.1} parent=1 // pred_region
      _
    $region21: #{cnn_mnist_forward.1} parent=1 // pred_fallthru
      _
    // Predicated region
    $region22: #{cnn_mnist_forward.1} parent=1 // pred_check
      _
    $region23: #{cnn_mnist_forward.1} parent=1 // pred_check_branch
      %26 = sbr.rel (0) target = $region25
    $region24: #{cnn_mnist_forward.1} parent=1 // pred_region
      _
    $region25: #{cnn_mnist_forward.1} parent=1 // pred_fallthru
      _
    // Predicated region
    $region26: #{cnn_mnist_forward.1} parent=1 // pred_check
      _
    $region27: #{cnn_mnist_forward.1} parent=1 // pred_check_branch
      %28 = sbr.rel (0) target = $region29
    $region28: #{cnn_mnist_forward.1} parent=1 // pred_region
      _
    $region29: #{cnn_mnist_forward.1} parent=1 // pred_fallthru
      _
    // Predicated region
    $region30: #{cnn_mnist_forward.1} parent=1 // pred_check
      _
    $region31: #{cnn_mnist_forward.1} parent=1 // pred_check_branch
      %30 = sbr.rel (0) target = $region33
    $region32: #{cnn_mnist_forward.1} parent=1 // pred_region
      _
    $region33: #{cnn_mnist_forward.1} parent=1 // pred_fallthru
      _
    // Predicated region
    $region34: #{cnn_mnist_forward.1} parent=1 // pred_check
      _
    $region35: #{cnn_mnist_forward.1} parent=1 // pred_check_branch
      %32 = sbr.rel (0) target = $region37
    $region36: #{cnn_mnist_forward.1} parent=1 // pred_region
      _
    $region37: #{cnn_mnist_forward.1} parent=1 // pred_fallthru
      _
    %v33 = vld [vmem:[%s0] sm:$0xff]
    %v34 = vld [vmem:[%s0 + $0x8] sm:$0x3f]
    %v35 = vld [vmem:[%s1] sm:$0xff]
    %v36 = vld [vmem:[%s1 + $0x8] sm:$0xff]
    %v37 = vld [vmem:[%s1 + $0x10] sm:$0xff]
    %v38 = vld [vmem:[%s1 + $0x18] sm:$0xff]
    %v39 = vld [vmem:[%s1 + $0x20] sm:$0xff]
    %v40 = vld [vmem:[%s1 + $0x28] sm:$0xff]
    %v41 = vld [vmem:[%s1 + $0x30] sm:$0xff]
    %v42 = vld [vmem:[%s1 + $0x38] sm:$0xff]
    %v43 = vld [vmem:[%s1 + $0x40] sm:$0xff]
    %v44 = vld [vmem:[%s1 + $0x48] sm:$0xff]
    %v45 = vld [vmem:[%s1 + $0x50] sm:$0xff]
    %v46 = vld [vmem:[%s1 + $0x58] sm:$0xff]
    %v47 = vld [vmem:[%s1 + $0x60] sm:$0xff]
    %v48 = vld [vmem:[%s1 + $0x68] sm:$0xff]
    %v49 = vld [vmem:[%s1 + $0x70] sm:$0xff]
    %v50 = vld [vmem:[%s1 + $0x78] sm:$0xff]
    %v51 = vld [vmem:[%s1 + $0x80] sm:$0xff]
    %v52 = vld [vmem:[%s1 + $0x88] sm:$0xff]
    %v53 = vld [vmem:[%s1 + $0x90] sm:$0xff]
    %v54 = vld [vmem:[%s1 + $0x98] sm:$0xff]
    %v55 = vld [vmem:[%s1 + $0xa0] sm:$0xff]
    %v56 = vld [vmem:[%s1 + $0xa8] sm:$0xff]
    %v57 = vld [vmem:[%s1 + $0xb0] sm:$0xff]
    %v58 = vld [vmem:[%s1 + $0xb8] sm:$0xff]
    %v59 = vld [vmem:[%s1 + $0xc0] sm:$0xff]
    %v60 = vld [vmem:[%s1 + $0xc8] sm:$0xff]
    %v61 = vld [vmem:[%s1 + $0xd0] sm:$0xff]
    %v62 = vld [vmem:[%s1 + $0xd8] sm:$0xff]
    %v63 = vld [vmem:[%s1 + $0xe0] sm:$0xff]
    %v64 = vld [vmem:[%s1 + $0xe8] sm:$0xff]
    %v65 = vld [vmem:[%s1 + $0xf0] sm:$0xff]
    %v66 = vld [vmem:[%s1 + $0xf8] sm:$0xff]
    %v67 = vld [vmem:[%s1 + $0x100] sm:$0xff]
    %v68 = vld [vmem:[%s1 + $0x108] sm:$0xff]
    %v69 = vld [vmem:[%s1 + $0x110] sm:$0xff]
    %v70 = vld [vmem:[%s1 + $0x118] sm:$0xff]
    %v71 = vld [vmem:[%s1 + $0x120] sm:$0xff]
    %v72 = vld [vmem:[%s1 + $0x128] sm:$0xff]
    %v73 = vld [vmem:[%s1 + $0x130] sm:$0xff]
    %v74 = vld [vmem:[%s1 + $0x138] sm:$0xff]
    %v75 = vld [vmem:[%s1 + $0x140] sm:$0xff]
    %v76 = vld [vmem:[%s1 + $0x148] sm:$0xff]
    %v77 = vld [vmem:[%s1 + $0x150] sm:$0xff]
    %v78 = vld [vmem:[%s1 + $0x158] sm:$0xff]
    %v79 = vld [vmem:[%s1 + $0x160] sm:$0xff]
    %v80 = vld [vmem:[%s1 + $0x168] sm:$0xff]
    %v81 = vld [vmem:[%s1 + $0x170] sm:$0xff]
    %v82 = vld [vmem:[%s1 + $0x178] sm:$0xff]
    %v83 = vld [vmem:[%s1 + $0x180] sm:$0xff]
    %v84 = vld [vmem:[%s1 + $0x188] sm:$0xff]
    %v85 = vld [vmem:[%s1 + $0x190] sm:$0xff]
    %v86 = vld [vmem:[%s1 + $0x198] sm:$0xff]
    %v87 = vld [vmem:[%s1 + $0x1a0] sm:$0xff]
    %v88 = vld [vmem:[%s1 + $0x1a8] sm:$0xff]
    %v89 = vld [vmem:[%s1 + $0x1b0] sm:$0xff]
    %v90 = vld [vmem:[%s1 + $0x1b8] sm:$0xff]
    %v91 = vld [vmem:[%s1 + $0x1c0] sm:$0xff]
    %v92 = vld [vmem:[%s1 + $0x1c8] sm:$0xff]
    %v93 = vld [vmem:[%s1 + $0x1d0] sm:$0xff]
    %v94 = vld [vmem:[%s1 + $0x1d8] sm:$0xff]
    %v95 = vld [vmem:[%s1 + $0x1e0] sm:$0xff]
    %v96 = vld [vmem:[%s1 + $0x1e8] sm:$0xff]
    %v97 = vld [vmem:[%s1 + $0x1f0] sm:$0xff]
    %v98 = vld [vmem:[%s1 + $0x1f8] sm:$0xff]
    %v99 = vld [vmem:[%s1 + $0x200] sm:$0xff]
    %v100 = vld [vmem:[%s1 + $0x208] sm:$0xff]
    %v101 = vld [vmem:[%s1 + $0x210] sm:$0xff]
    %v102 = vld [vmem:[%s1 + $0x218] sm:$0xff]
    %v103 = vld [vmem:[%s1 + $0x220] sm:$0xff]
    %v104 = vld [vmem:[%s1 + $0x228] sm:$0xff]
    %v105 = vld [vmem:[%s1 + $0x230] sm:$0xff]
    %v106 = vld [vmem:[%s1 + $0x238] sm:$0xff]
    %v107 = vld [vmem:[%s1 + $0x240] sm:$0xff]
    %v108 = vld [vmem:[%s1 + $0x248] sm:$0xff]
    %v109 = vld [vmem:[%s1 + $0x250] sm:$0xff]
    %v110 = vld [vmem:[%s1 + $0x258] sm:$0xff]
    %v111 = vld [vmem:[%s1 + $0x260] sm:$0xff]
    %v112 = vld [vmem:[%s1 + $0x268] sm:$0xff]
    %v113 = vld [vmem:[%s1 + $0x270] sm:$0xff]
    %v114 = vld [vmem:[%s1 + $0x278] sm:$0xff]
    %v115 = vld [vmem:[%s1 + $0x280] sm:$0xff]
    %v116 = vld [vmem:[%s1 + $0x288] sm:$0xff]
    %v117 = vld [vmem:[%s1 + $0x290] sm:$0xff]
    %v118 = vld [vmem:[%s1 + $0x298] sm:$0xff]
    %v119 = vld [vmem:[%s1 + $0x2a0] sm:$0xff]
    %v120 = vld [vmem:[%s1 + $0x2a8] sm:$0xff]
    %v121 = vld [vmem:[%s1 + $0x2b0] sm:$0xff]
    %v122 = vld [vmem:[%s1 + $0x2b8] sm:$0xff]
    %v123 = vld [vmem:[%s1 + $0x2c0] sm:$0xff]
    %v124 = vld [vmem:[%s1 + $0x2c8] sm:$0xff]
    %v125 = vld [vmem:[%s1 + $0x2d0] sm:$0xff]
    %v126 = vld [vmem:[%s1 + $0x2d8] sm:$0xff]
    %v127 = vld [vmem:[%s1 + $0x2e0] sm:$0xff]
    %v128 = vld [vmem:[%s1 + $0x2e8] sm:$0xff]
    %v129 = vld [vmem:[%s1 + $0x2f0] sm:$0xff]
    %v130 = vld [vmem:[%s1 + $0x2f8] sm:$0xff]
    %v131 = vld [vmem:[%s1 + $0x300] sm:$0xff]
    %v132 = vld [vmem:[%s1 + $0x308] sm:$0xff]
    %v133 = vld [vmem:[%s1 + $0x310] sm:$0xff]
    %v134 = vld [vmem:[%s1 + $0x318] sm:$0xff]
    %v135 = vld [vmem:[%s1 + $0x320] sm:$0xff]
    %v136 = vld [vmem:[%s1 + $0x328] sm:$0xff]
    %v137 = vld [vmem:[%s1 + $0x330] sm:$0xff]
    %v138 = vld [vmem:[%s1 + $0x338] sm:$0xff]
    %v139 = vld [vmem:[%s1 + $0x340] sm:$0xff]
    %v140 = vld [vmem:[%s1 + $0x348] sm:$0xff]
    %v141 = vld [vmem:[%s1 + $0x350] sm:$0xff]
    %v142 = vld [vmem:[%s1 + $0x358] sm:$0xff]
    %v143 = vld [vmem:[%s1 + $0x360] sm:$0xff]
    %v144 = vld [vmem:[%s1 + $0x368] sm:$0xff]
    %v145 = vld [vmem:[%s1 + $0x370] sm:$0xff]
    %v146 = vld [vmem:[%s1 + $0x378] sm:$0xff]
    %v147 = vld [vmem:[%s1 + $0x380] sm:$0xff]
    %v148 = vld [vmem:[%s1 + $0x388] sm:$0xff]
    %v149 = vld [vmem:[%s1 + $0x390] sm:$0xff]
    %v150 = vld [vmem:[%s1 + $0x398] sm:$0xff]
    %v151 = vld [vmem:[%s1 + $0x3a0] sm:$0xff]
    %v152 = vld [vmem:[%s1 + $0x3a8] sm:$0xff]
    %v153 = vld [vmem:[%s1 + $0x3b0] sm:$0xff]
    %v154 = vld [vmem:[%s1 + $0x3b8] sm:$0xff]
    %v155 = vld [vmem:[%s1 + $0x3c0] sm:$0xff]
    %v156 = vld [vmem:[%s1 + $0x3c8] sm:$0xff]
    %v157 = vld [vmem:[%s1 + $0x3d0] sm:$0xff]
    %v158 = vld [vmem:[%s1 + $0x3d8] sm:$0xff]
    %v159 = vld [vmem:[%s1 + $0x3e0] sm:$0xff]
    %v160 = vld [vmem:[%s1 + $0x3e8] sm:$0xff]
    %v161 = vld [vmem:[%s1 + $0x3f0] sm:$0xff]
    %v162 = vld [vmem:[%s1 + $0x3f8] sm:$0xff]
    %v163 = vld [vmem:[%s1 + $0x400] sm:$0xff]
    %v164 = vld [vmem:[%s1 + $0x408] sm:$0xff]
    %v165 = vld [vmem:[%s1 + $0x410] sm:$0xff]
    %v166 = vld [vmem:[%s1 + $0x418] sm:$0xff]
    %v167 = vld [vmem:[%s1 + $0x420] sm:$0xff]
    %v168 = vld [vmem:[%s1 + $0x428] sm:$0xff]
    %v169 = vld [vmem:[%s1 + $0x430] sm:$0xff]
    %v170 = vld [vmem:[%s1 + $0x438] sm:$0xff]
    %v171 = vld [vmem:[%s1 + $0x440] sm:$0xff]
    %v172 = vld [vmem:[%s1 + $0x448] sm:$0xff]
    %v173 = vld [vmem:[%s1 + $0x450] sm:$0xff]
    %v174 = vld [vmem:[%s1 + $0x458] sm:$0xff]
    %v175 = vld [vmem:[%s1 + $0x460] sm:$0xff]
    %v176 = vld [vmem:[%s1 + $0x468] sm:$0xff]
    %v177 = vld [vmem:[%s1 + $0x470] sm:$0xff]
    %v178 = vld [vmem:[%s1 + $0x478] sm:$0xff]
    %v179 = vld [vmem:[%s1 + $0x480] sm:$0xff]
    %v180 = vld [vmem:[%s1 + $0x488] sm:$0xff]
    %v181 = vld [vmem:[%s1 + $0x490] sm:$0xff]
    %v182 = vld [vmem:[%s1 + $0x498] sm:$0xff]
    %v183 = vld [vmem:[%s1 + $0x4a0] sm:$0xff]
    %v184 = vld [vmem:[%s1 + $0x4a8] sm:$0xff]
    %v185 = vld [vmem:[%s1 + $0x4b0] sm:$0xff]
    %v186 = vld [vmem:[%s1 + $0x4b8] sm:$0xff]
    %v187 = vld [vmem:[%s1 + $0x4c0] sm:$0xff]
    %v188 = vld [vmem:[%s1 + $0x4c8] sm:$0xff]
    %v189 = vld [vmem:[%s1 + $0x4d0] sm:$0xff]
    %v190 = vld [vmem:[%s1 + $0x4d8] sm:$0xff]
    %v191 = vld [vmem:[%s1 + $0x4e0] sm:$0xff]
    %v192 = vld [vmem:[%s1 + $0x4e8] sm:$0xff]
    %v193 = vld [vmem:[%s1 + $0x4f0] sm:$0xff]
    %v194 = vld [vmem:[%s1 + $0x4f8] sm:$0xff]
    %v195 = vld [vmem:[%s1 + $0x500] sm:$0xff]
    %v196 = vld [vmem:[%s1 + $0x508] sm:$0xff]
    %v197 = vld [vmem:[%s1 + $0x510] sm:$0xff]
    %v198 = vld [vmem:[%s1 + $0x518] sm:$0xff]
    %v199 = vld [vmem:[%s1 + $0x520] sm:$0xff]
    %v200 = vld [vmem:[%s1 + $0x528] sm:$0xff]
    %v201 = vld [vmem:[%s1 + $0x530] sm:$0xff]
    %v202 = vld [vmem:[%s1 + $0x538] sm:$0xff]
    %v203 = vld [vmem:[%s1 + $0x540] sm:$0xff]
    %v204 = vld [vmem:[%s1 + $0x548] sm:$0xff]
    %v205 = vld [vmem:[%s1 + $0x550] sm:$0xff]
    %v206 = vld [vmem:[%s1 + $0x558] sm:$0xff]
    %v207 = vld [vmem:[%s1 + $0x560] sm:$0xff]
    %v208 = vld [vmem:[%s1 + $0x568] sm:$0xff]
    %v209 = vld [vmem:[%s1 + $0x570] sm:$0xff]
    %v210 = vld [vmem:[%s1 + $0x578] sm:$0xff]
    %v211 = vld [vmem:[%s1 + $0x580] sm:$0xff]
    %v212 = vld [vmem:[%s1 + $0x588] sm:$0xff]
    %v213 = vld [vmem:[%s1 + $0x590] sm:$0xff]
    %v214 = vld [vmem:[%s1 + $0x598] sm:$0xff]
    %v215 = vld [vmem:[%s1 + $0x5a0] sm:$0xff]
    %v216 = vld [vmem:[%s1 + $0x5a8] sm:$0xff]
    %v217 = vld [vmem:[%s1 + $0x5b0] sm:$0xff]
    %v218 = vld [vmem:[%s1 + $0x5b8] sm:$0xff]
    %v219 = vld [vmem:[%s1 + $0x5c0] sm:$0xff]
    %v220 = vld [vmem:[%s1 + $0x5c8] sm:$0xff]
    %v221 = vld [vmem:[%s1 + $0x5d0] sm:$0xff]
    %v222 = vld [vmem:[%s1 + $0x5d8] sm:$0xff]
    %v223 = vld [vmem:[%s1 + $0x5e0] sm:$0xff]
    %v224 = vld [vmem:[%s1 + $0x5e8] sm:$0xff]
    %v225 = vld [vmem:[%s1 + $0x5f0] sm:$0xff]
    %v226 = vld [vmem:[%s1 + $0x5f8] sm:$0xff]
    %v227 = vld [vmem:[%s1 + $0x600] sm:$0xff]
    %v228 = vld [vmem:[%s1 + $0x608] sm:$0xff]
    %v229 = vld [vmem:[%s1 + $0x610] sm:$0xff]
    %v230 = vld [vmem:[%s1 + $0x618] sm:$0xff]
    %v231 = vld [vmem:[%s1 + $0x620] sm:$0xff]
    %v232 = vld [vmem:[%s1 + $0x628] sm:$0xff]
    %v233 = vld [vmem:[%s1 + $0x630] sm:$0xff]
    %v234 = vld [vmem:[%s1 + $0x638] sm:$0xff]
    %v235 = vld [vmem:[%s1 + $0x640] sm:$0xff]
    %v236 = vld [vmem:[%s1 + $0x648] sm:$0xff]
    %v237 = vld [vmem:[%s1 + $0x650] sm:$0xff]
    %v238 = vld [vmem:[%s1 + $0x658] sm:$0xff]
    %v239 = vld [vmem:[%s1 + $0x660] sm:$0xff]
    %v240 = vld [vmem:[%s1 + $0x668] sm:$0xff]
    %v241 = vld [vmem:[%s1 + $0x670] sm:$0xff]
    %v242 = vld [vmem:[%s1 + $0x678] sm:$0xff]
    %v243 = vld [vmem:[%s1 + $0x680] sm:$0xff]
    %v244 = vld [vmem:[%s1 + $0x688] sm:$0xff]
    %v245 = vld [vmem:[%s1 + $0x690] sm:$0xff]
    %v246 = vld [vmem:[%s1 + $0x698] sm:$0xff]
    %v247 = vld [vmem:[%s1 + $0x6a0] sm:$0xff]
    %v248 = vld [vmem:[%s1 + $0x6a8] sm:$0xff]
    %v249 = vld [vmem:[%s1 + $0x6b0] sm:$0xff]
    %v250 = vld [vmem:[%s1 + $0x6b8] sm:$0xff]
    %v251 = vld [vmem:[%s1 + $0x6c0] sm:$0xff]
    %v252 = vld [vmem:[%s1 + $0x6c8] sm:$0xff]
    %v253 = vld [vmem:[%s1 + $0x6d0] sm:$0xff]
    %v254 = vld [vmem:[%s1 + $0x6d8] sm:$0xff]
    %v255 = vld [vmem:[%s1 + $0x6e0] sm:$0xff]
    %v256 = vld [vmem:[%s1 + $0x6e8] sm:$0xff]
    %v257 = vld [vmem:[%s1 + $0x6f0] sm:$0xff]
    %v258 = vld [vmem:[%s1 + $0x6f8] sm:$0xff]
    %v259 = vld [vmem:[%s1 + $0x700] sm:$0xff]
    %v260 = vld [vmem:[%s1 + $0x708] sm:$0xff]
    %v261 = vld [vmem:[%s1 + $0x710] sm:$0xff]
    %v262 = vld [vmem:[%s1 + $0x718] sm:$0xff]
    %v263 = vld [vmem:[%s1 + $0x720] sm:$0xff]
    %v264 = vld [vmem:[%s1 + $0x728] sm:$0xff]
    %v265 = vld [vmem:[%s1 + $0x730] sm:$0xff]
    %v266 = vld [vmem:[%s1 + $0x738] sm:$0xff]
    %v267 = vld [vmem:[%s1 + $0x740] sm:$0xff]
    %v268 = vld [vmem:[%s1 + $0x748] sm:$0xff]
    %v269 = vld [vmem:[%s1 + $0x750] sm:$0xff]
    %v270 = vld [vmem:[%s1 + $0x758] sm:$0xff]
    %v271 = vld [vmem:[%s1 + $0x760] sm:$0xff]
    %v272 = vld [vmem:[%s1 + $0x768] sm:$0xff]
    %v273 = vld [vmem:[%s1 + $0x770] sm:$0xff]
    %v274 = vld [vmem:[%s1 + $0x778] sm:$0xff]
    %v275 = vld [vmem:[%s1 + $0x780] sm:$0xff]
    %v276 = vld [vmem:[%s1 + $0x788] sm:$0xff]
    %v277 = vld [vmem:[%s1 + $0x790] sm:$0xff]
    %v278 = vld [vmem:[%s1 + $0x798] sm:$0xff]
    %v279 = vld [vmem:[%s1 + $0x7a0] sm:$0xff]
    %v280 = vld [vmem:[%s1 + $0x7a8] sm:$0xff]
    %v281 = vld [vmem:[%s1 + $0x7b0] sm:$0xff]
    %v282 = vld [vmem:[%s1 + $0x7b8] sm:$0xff]
    %v283 = vld [vmem:[%s1 + $0x7c0] sm:$0xff]
    %v284 = vld [vmem:[%s1 + $0x7c8] sm:$0xff]
    %v285 = vld [vmem:[%s1 + $0x7d0] sm:$0xff]
    %v286 = vld [vmem:[%s1 + $0x7d8] sm:$0xff]
    %v287 = vld [vmem:[%s1 + $0x7e0] sm:$0xff]
    %v288 = vld [vmem:[%s1 + $0x7e8] sm:$0xff]
    %v289 = vld [vmem:[%s1 + $0x7f0] sm:$0xff]
    %v290 = vld [vmem:[%s1 + $0x7f8] sm:$0xff]
    %v291 = vld [vmem:[%s1 + $0x800] sm:$0xff]
    %v292 = vld [vmem:[%s1 + $0x808] sm:$0xff]
    %v293 = vld [vmem:[%s1 + $0x810] sm:$0xff]
    %v294 = vld [vmem:[%s1 + $0x818] sm:$0xff]
    %v295 = vld [vmem:[%s1 + $0x820] sm:$0xff]
    %v296 = vld [vmem:[%s1 + $0x828] sm:$0xff]
    %v297 = vld [vmem:[%s1 + $0x830] sm:$0xff]
    %v298 = vld [vmem:[%s1 + $0x838] sm:$0xff]
    %v299 = vld [vmem:[%s1 + $0x840] sm:$0xff]
    %v300 = vld [vmem:[%s1 + $0x848] sm:$0xff]
    %v301 = vld [vmem:[%s1 + $0x850] sm:$0xff]
    %v302 = vld [vmem:[%s1 + $0x858] sm:$0xff]
    %v303 = vld [vmem:[%s1 + $0x860] sm:$0xff]
    %v304 = vld [vmem:[%s1 + $0x868] sm:$0xff]
    %v305 = vld [vmem:[%s1 + $0x870] sm:$0xff]
    %v306 = vld [vmem:[%s1 + $0x878] sm:$0xff]
    %v307 = vld [vmem:[%s1 + $0x880] sm:$0xff]
    %v308 = vld [vmem:[%s1 + $0x888] sm:$0xff]
    %v309 = vld [vmem:[%s1 + $0x890] sm:$0xff]
    %v310 = vld [vmem:[%s1 + $0x898] sm:$0xff]
    %v311 = vld [vmem:[%s1 + $0x8a0] sm:$0xff]
    %v312 = vld [vmem:[%s1 + $0x8a8] sm:$0xff]
    %v313 = vld [vmem:[%s1 + $0x8b0] sm:$0xff]
    %v314 = vld [vmem:[%s1 + $0x8b8] sm:$0xff]
    %v315 = vld [vmem:[%s1 + $0x8c0] sm:$0xff]
    %v316 = vld [vmem:[%s1 + $0x8c8] sm:$0xff]
    %v317 = vld [vmem:[%s1 + $0x8d0] sm:$0xff]
    %v318 = vld [vmem:[%s1 + $0x8d8] sm:$0xff]
    %v319 = vld [vmem:[%s1 + $0x8e0] sm:$0xff]
    %v320 = vld [vmem:[%s1 + $0x8e8] sm:$0xff]
    %v321 = vld [vmem:[%s1 + $0x8f0] sm:$0xff]
    %v322 = vld [vmem:[%s1 + $0x8f8] sm:$0xff]
    %v323 = vld [vmem:[%s1 + $0x900] sm:$0xff]
    %v324 = vld [vmem:[%s1 + $0x908] sm:$0xff]
    %v325 = vld [vmem:[%s1 + $0x910] sm:$0xff]
    %v326 = vld [vmem:[%s1 + $0x918] sm:$0xff]
    %v327 = vld [vmem:[%s1 + $0x920] sm:$0xff]
    %v328 = vld [vmem:[%s1 + $0x928] sm:$0xff]
    %v329 = vld [vmem:[%s1 + $0x930] sm:$0xff]
    %v330 = vld [vmem:[%s1 + $0x938] sm:$0xff]
    %v331 = vld [vmem:[%s1 + $0x940] sm:$0xff]
    %v332 = vld [vmem:[%s1 + $0x948] sm:$0xff]
    %v333 = vld [vmem:[%s1 + $0x950] sm:$0xff]
    %v334 = vld [vmem:[%s1 + $0x958] sm:$0xff]
    %v335 = vld [vmem:[%s1 + $0x960] sm:$0xff]
    %v336 = vld [vmem:[%s1 + $0x968] sm:$0xff]
    %v337 = vld [vmem:[%s1 + $0x970] sm:$0xff]
    %v338 = vld [vmem:[%s1 + $0x978] sm:$0xff]
    %v339 = vld [vmem:[%s1 + $0x980] sm:$0xff]
    %v340 = vld [vmem:[%s1 + $0x988] sm:$0xff]
    %v341 = vld [vmem:[%s1 + $0x990] sm:$0xff]
    %v342 = vld [vmem:[%s1 + $0x998] sm:$0xff]
    %v343 = vld [vmem:[%s1 + $0x9a0] sm:$0xff]
    %v344 = vld [vmem:[%s1 + $0x9a8] sm:$0xff]
    %v345 = vld [vmem:[%s1 + $0x9b0] sm:$0xff]
    %v346 = vld [vmem:[%s1 + $0x9b8] sm:$0xff]
    %v347 = vld [vmem:[%s1 + $0x9c0] sm:$0xff]
    %v348 = vld [vmem:[%s1 + $0x9c8] sm:$0xff]
    %v349 = vld [vmem:[%s1 + $0x9d0] sm:$0xff]
    %v350 = vld [vmem:[%s1 + $0x9d8] sm:$0xff]
    %v351 = vld [vmem:[%s1 + $0x9e0] sm:$0xff]
    %v352 = vld [vmem:[%s1 + $0x9e8] sm:$0xff]
    %v353 = vld [vmem:[%s1 + $0x9f0] sm:$0xff]
    %v354 = vld [vmem:[%s1 + $0x9f8] sm:$0xff]
    %v355 = vld [vmem:[%s1 + $0xa00] sm:$0xff]
    %v356 = vld [vmem:[%s1 + $0xa08] sm:$0xff]
    %v357 = vld [vmem:[%s1 + $0xa10] sm:$0xff]
    %v358 = vld [vmem:[%s1 + $0xa18] sm:$0xff]
    %v359 = vld [vmem:[%s1 + $0xa20] sm:$0xff]
    %v360 = vld [vmem:[%s1 + $0xa28] sm:$0xff]
    %v361 = vld [vmem:[%s1 + $0xa30] sm:$0xff]
    %v362 = vld [vmem:[%s1 + $0xa38] sm:$0xff]
    %v363 = vld [vmem:[%s1 + $0xa40] sm:$0xff]
    %v364 = vld [vmem:[%s1 + $0xa48] sm:$0xff]
    %v365 = vld [vmem:[%s1 + $0xa50] sm:$0xff]
    %v366 = vld [vmem:[%s1 + $0xa58] sm:$0xff]
    %v367 = vld [vmem:[%s1 + $0xa60] sm:$0xff]
    %v368 = vld [vmem:[%s1 + $0xa68] sm:$0xff]
    %v369 = vld [vmem:[%s1 + $0xa70] sm:$0xff]
    %v370 = vld [vmem:[%s1 + $0xa78] sm:$0xff]
    %v371 = vld [vmem:[%s1 + $0xa80] sm:$0xff]
    %v372 = vld [vmem:[%s1 + $0xa88] sm:$0xff]
    %v373 = vld [vmem:[%s1 + $0xa90] sm:$0xff]
    %v374 = vld [vmem:[%s1 + $0xa98] sm:$0xff]
    %v375 = vld [vmem:[%s1 + $0xaa0] sm:$0xff]
    %v376 = vld [vmem:[%s1 + $0xaa8] sm:$0xff]
    %v377 = vld [vmem:[%s1 + $0xab0] sm:$0xff]
    %v378 = vld [vmem:[%s1 + $0xab8] sm:$0xff]
    %v379 = vld [vmem:[%s1 + $0xac0] sm:$0xff]
    %v380 = vld [vmem:[%s1 + $0xac8] sm:$0xff]
    %v381 = vld [vmem:[%s1 + $0xad0] sm:$0xff]
    %v382 = vld [vmem:[%s1 + $0xad8] sm:$0xff]
    %v383 = vld [vmem:[%s1 + $0xae0] sm:$0xff]
    %v384 = vld [vmem:[%s1 + $0xae8] sm:$0xff]
    %v385 = vld [vmem:[%s1 + $0xaf0] sm:$0xff]
    %v386 = vld [vmem:[%s1 + $0xaf8] sm:$0xff]
    %v387 = vld [vmem:[%s1 + $0xb00] sm:$0xff]
    %v388 = vld [vmem:[%s1 + $0xb08] sm:$0xff]
    %v389 = vld [vmem:[%s1 + $0xb10] sm:$0xff]
    %v390 = vld [vmem:[%s1 + $0xb18] sm:$0xff]
    %v391 = vld [vmem:[%s1 + $0xb20] sm:$0xff]
    %v392 = vld [vmem:[%s1 + $0xb28] sm:$0xff]
    %v393 = vld [vmem:[%s1 + $0xb30] sm:$0xff]
    %v394 = vld [vmem:[%s1 + $0xb38] sm:$0xff]
    %v395 = vld [vmem:[%s1 + $0xb40] sm:$0xff]
    %v396 = vld [vmem:[%s1 + $0xb48] sm:$0xff]
    %v397 = vld [vmem:[%s1 + $0xb50] sm:$0xff]
    %v398 = vld [vmem:[%s1 + $0xb58] sm:$0xff]
    %v399 = vld [vmem:[%s1 + $0xb60] sm:$0xff]
    %v400 = vld [vmem:[%s1 + $0xb68] sm:$0xff]
    %v401 = vld [vmem:[%s1 + $0xb70] sm:$0xff]
    %v402 = vld [vmem:[%s1 + $0xb78] sm:$0xff]
    %v403 = vld [vmem:[%s1 + $0xb80] sm:$0xff]
    %v404 = vld [vmem:[%s1 + $0xb88] sm:$0xff]
    %v405 = vld [vmem:[%s1 + $0xb90] sm:$0xff]
    %v406 = vld [vmem:[%s1 + $0xb98] sm:$0xff]
    %v407 = vld [vmem:[%s1 + $0xba0] sm:$0xff]
    %v408 = vld [vmem:[%s1 + $0xba8] sm:$0xff]
    %v409 = vld [vmem:[%s1 + $0xbb0] sm:$0xff]
    %v410 = vld [vmem:[%s1 + $0xbb8] sm:$0xff]
    %v411 = vld [vmem:[%s1 + $0xbc0] sm:$0xff]
    %v412 = vld [vmem:[%s1 + $0xbc8] sm:$0xff]
    %v413 = vld [vmem:[%s1 + $0xbd0] sm:$0xff]
    %v414 = vld [vmem:[%s1 + $0xbd8] sm:$0xff]
    %v415 = vld [vmem:[%s1 + $0xbe0] sm:$0xff]
    %v416 = vld [vmem:[%s1 + $0xbe8] sm:$0xff]
    %v417 = vld [vmem:[%s1 + $0xbf0] sm:$0xff]
    %v418 = vld [vmem:[%s1 + $0xbf8] sm:$0xff]
    %v419 = vld [vmem:[%s1 + $0xc00] sm:$0xff]
    %v420 = vld [vmem:[%s1 + $0xc08] sm:$0xff]
    %v421 = vld [vmem:[%s1 + $0xc10] sm:$0xff]
    %v422 = vld [vmem:[%s1 + $0xc18] sm:$0xff]
    %v423 = vld [vmem:[%s1 + $0xc20] sm:$0xff]
    %v424 = vld [vmem:[%s1 + $0xc28] sm:$0xff]
    %v425 = vld [vmem:[%s1 + $0xc30] sm:$0xff]
    %v426 = vld [vmem:[%s1 + $0xc38] sm:$0xff]
    %v427 = vld [vmem:[%s1 + $0xc40] sm:$0xff]
    %v428 = vld [vmem:[%s1 + $0xc48] sm:$0xff]
    %v429 = vld [vmem:[%s1 + $0xc50] sm:$0xff]
    %v430 = vld [vmem:[%s1 + $0xc58] sm:$0xff]
    %v431 = vld [vmem:[%s1 + $0xc60] sm:$0xff]
    %v432 = vld [vmem:[%s1 + $0xc68] sm:$0xff]
    %v433 = vld [vmem:[%s1 + $0xc70] sm:$0xff]
    %v434 = vld [vmem:[%s1 + $0xc78] sm:$0xff]
    %v435 = vld [vmem:[%s1 + $0xc80] sm:$0xff]
    %v436 = vld [vmem:[%s1 + $0xc88] sm:$0xff]
    %v437 = vld [vmem:[%s1 + $0xc90] sm:$0xff]
    %v438 = vld [vmem:[%s1 + $0xc98] sm:$0xff]
    %v439 = vld [vmem:[%s1 + $0xca0] sm:$0xff]
    %v440 = vld [vmem:[%s1 + $0xca8] sm:$0xff]
    %v441 = vld [vmem:[%s1 + $0xcb0] sm:$0xff]
    %v442 = vld [vmem:[%s1 + $0xcb8] sm:$0xff]
    %v443 = vld [vmem:[%s1 + $0xcc0] sm:$0xff]
    %v444 = vld [vmem:[%s1 + $0xcc8] sm:$0xff]
    %v445 = vld [vmem:[%s1 + $0xcd0] sm:$0xff]
    %v446 = vld [vmem:[%s1 + $0xcd8] sm:$0xff]
    %v447 = vld [vmem:[%s1 + $0xce0] sm:$0xff]
    %v448 = vld [vmem:[%s1 + $0xce8] sm:$0xff]
    %v449 = vld [vmem:[%s1 + $0xcf0] sm:$0xff]
    %v450 = vld [vmem:[%s1 + $0xcf8] sm:$0xff]
    %v451 = vld [vmem:[%s1 + $0xd00] sm:$0xff]
    %v452 = vld [vmem:[%s1 + $0xd08] sm:$0xff]
    %v453 = vld [vmem:[%s1 + $0xd10] sm:$0xff]
    %v454 = vld [vmem:[%s1 + $0xd18] sm:$0xff]
    %v455 = vld [vmem:[%s1 + $0xd20] sm:$0xff]
    %v456 = vld [vmem:[%s1 + $0xd28] sm:$0xff]
    %v457 = vld [vmem:[%s1 + $0xd30] sm:$0xff]
    %v458 = vld [vmem:[%s1 + $0xd38] sm:$0xff]
    %v459 = vld [vmem:[%s1 + $0xd40] sm:$0xff]
    %v460 = vld [vmem:[%s1 + $0xd48] sm:$0xff]
    %v461 = vld [vmem:[%s1 + $0xd50] sm:$0xff]
    %v462 = vld [vmem:[%s1 + $0xd58] sm:$0xff]
    %v463 = vld [vmem:[%s1 + $0xd60] sm:$0xff]
    %v464 = vld [vmem:[%s1 + $0xd68] sm:$0xff]
    %v465 = vld [vmem:[%s1 + $0xd70] sm:$0xff]
    %v466 = vld [vmem:[%s1 + $0xd78] sm:$0xff]
    %v467 = vld [vmem:[%s1 + $0xd80] sm:$0xff]
    %v468 = vld [vmem:[%s1 + $0xd88] sm:$0xff]
    %v469 = vld [vmem:[%s1 + $0xd90] sm:$0xff]
    %v470 = vld [vmem:[%s1 + $0xd98] sm:$0xff]
    %v471 = vld [vmem:[%s1 + $0xda0] sm:$0xff]
    %v472 = vld [vmem:[%s1 + $0xda8] sm:$0xff]
    %v473 = vld [vmem:[%s1 + $0xdb0] sm:$0xff]
    %v474 = vld [vmem:[%s1 + $0xdb8] sm:$0xff]
    %v475 = vld [vmem:[%s1 + $0xdc0] sm:$0xff]
    %v476 = vld [vmem:[%s1 + $0xdc8] sm:$0xff]
    %v477 = vld [vmem:[%s1 + $0xdd0] sm:$0xff]
    %v478 = vld [vmem:[%s1 + $0xdd8] sm:$0xff]
    %v479 = vld [vmem:[%s1 + $0xde0] sm:$0xff]
    %v480 = vld [vmem:[%s1 + $0xde8] sm:$0xff]
    %v481 = vld [vmem:[%s1 + $0xdf0] sm:$0xff]
    %v482 = vld [vmem:[%s1 + $0xdf8] sm:$0xff]
    %v483 = vld [vmem:[%s1 + $0xe00] sm:$0xff]
    %v484 = vld [vmem:[%s1 + $0xe08] sm:$0xff]
    %v485 = vld [vmem:[%s1 + $0xe10] sm:$0xff]
    %v486 = vld [vmem:[%s1 + $0xe18] sm:$0xff]
    %v487 = vld [vmem:[%s1 + $0xe20] sm:$0xff]
    %v488 = vld [vmem:[%s1 + $0xe28] sm:$0xff]
    %v489 = vld [vmem:[%s1 + $0xe30] sm:$0xff]
    %v490 = vld [vmem:[%s1 + $0xe38] sm:$0xff]
    %v491 = vld [vmem:[%s1 + $0xe40] sm:$0xff]
    %v492 = vld [vmem:[%s1 + $0xe48] sm:$0xff]
    %v493 = vld [vmem:[%s1 + $0xe50] sm:$0xff]
    %v494 = vld [vmem:[%s1 + $0xe58] sm:$0xff]
    %v495 = vld [vmem:[%s1 + $0xe60] sm:$0xff]
    %v496 = vld [vmem:[%s1 + $0xe68] sm:$0xff]
    %v497 = vld [vmem:[%s1 + $0xe70] sm:$0xff]
    %v498 = vld [vmem:[%s1 + $0xe78] sm:$0xff]
    %v499 = vld [vmem:[%s1 + $0xe80] sm:$0xff]
    %v500 = vld [vmem:[%s1 + $0xe88] sm:$0xff]
    %v501 = vld [vmem:[%s1 + $0xe90] sm:$0xff]
    %v502 = vld [vmem:[%s1 + $0xe98] sm:$0xff]
    %v503 = vld [vmem:[%s1 + $0xea0] sm:$0xff]
    %v504 = vld [vmem:[%s1 + $0xea8] sm:$0xff]
    %v505 = vld [vmem:[%s1 + $0xeb0] sm:$0xff]
    %v506 = vld [vmem:[%s1 + $0xeb8] sm:$0xff]
    %v507 = vld [vmem:[%s1 + $0xec0] sm:$0xff]
    %v508 = vld [vmem:[%s1 + $0xec8] sm:$0xff]
    %v509 = vld [vmem:[%s1 + $0xed0] sm:$0xff]
    %v510 = vld [vmem:[%s1 + $0xed8] sm:$0xff]
    %v511 = vld [vmem:[%s1 + $0xee0] sm:$0xff]
    %v512 = vld [vmem:[%s1 + $0xee8] sm:$0xff]
    %v513 = vld [vmem:[%s1 + $0xef0] sm:$0xff]
    %v514 = vld [vmem:[%s1 + $0xef8] sm:$0xff]
    %v515 = vld [vmem:[%s1 + $0xf00] sm:$0xff]
    %v516 = vld [vmem:[%s1 + $0xf08] sm:$0xff]
    %v517 = vld [vmem:[%s1 + $0xf10] sm:$0xff]
    %v518 = vld [vmem:[%s1 + $0xf18] sm:$0xff]
    %v519 = vld [vmem:[%s1 + $0xf20] sm:$0xff]
    %v520 = vld [vmem:[%s1 + $0xf28] sm:$0xff]
    %v521 = vld [vmem:[%s1 + $0xf30] sm:$0xff]
    %v522 = vld [vmem:[%s1 + $0xf38] sm:$0xff]
    %v523 = vld [vmem:[%s1 + $0xf40] sm:$0xff]
    %v524 = vld [vmem:[%s1 + $0xf48] sm:$0xff]
    %v525 = vld [vmem:[%s1 + $0xf50] sm:$0xff]
    %v526 = vld [vmem:[%s1 + $0xf58] sm:$0xff]
    %v527 = vld [vmem:[%s1 + $0xf60] sm:$0xff]
    %v528 = vld [vmem:[%s1 + $0xf68] sm:$0xff]
    %v529 = vld [vmem:[%s1 + $0xf70] sm:$0xff]
    %v530 = vld [vmem:[%s1 + $0xf78] sm:$0xff]
    %v531 = vld [vmem:[%s1 + $0xf80] sm:$0xff]
    %v532 = vld [vmem:[%s1 + $0xf88] sm:$0xff]
    %v533 = vld [vmem:[%s1 + $0xf90] sm:$0xff]
    %v534 = vld [vmem:[%s1 + $0xf98] sm:$0xff]
    %v535 = vld [vmem:[%s1 + $0xfa0] sm:$0xff]
    %v536 = vld [vmem:[%s1 + $0xfa8] sm:$0xff]
    %v537 = vld [vmem:[%s1 + $0xfb0] sm:$0xff]
    %v538 = vld [vmem:[%s1 + $0xfb8] sm:$0xff]
    %v539 = vld [vmem:[%s1 + $0xfc0] sm:$0xff]
    %v540 = vld [vmem:[%s1 + $0xfc8] sm:$0xff]
    %v541 = vld [vmem:[%s1 + $0xfd0] sm:$0xff]
    %v542 = vld [vmem:[%s1 + $0xfd8] sm:$0xff]
    %v543 = vld [vmem:[%s1 + $0xfe0] sm:$0xff]
    %v544 = vld [vmem:[%s1 + $0xfe8] sm:$0xff]
    %v545 = vld [vmem:[%s1 + $0xff0] sm:$0xff]
    %v546 = vld [vmem:[%s1 + $0xff8] sm:$0xff]
    %v547 = vld [vmem:[%s1 + $0x1000] sm:$0xff]
    %v548 = vld [vmem:[%s1 + $0x1008] sm:$0xff]
    %v549 = vld [vmem:[%s1 + $0x1010] sm:$0xff]
    %v550 = vld [vmem:[%s1 + $0x1018] sm:$0xff]
    %v551 = vld [vmem:[%s1 + $0x1020] sm:$0xff]
    %v552 = vld [vmem:[%s1 + $0x1028] sm:$0xff]
    %v553 = vld [vmem:[%s1 + $0x1030] sm:$0xff]
    %v554 = vld [vmem:[%s1 + $0x1038] sm:$0xff]
    %v555 = vld [vmem:[%s1 + $0x1040] sm:$0xff]
    %v556 = vld [vmem:[%s1 + $0x1048] sm:$0xff]
    %v557 = vld [vmem:[%s1 + $0x1050] sm:$0xff]
    %v558 = vld [vmem:[%s1 + $0x1058] sm:$0xff]
    %v559 = vld [vmem:[%s1 + $0x1060] sm:$0xff]
    %v560 = vld [vmem:[%s1 + $0x1068] sm:$0xff]
    %v561 = vld [vmem:[%s1 + $0x1070] sm:$0xff]
    %v562 = vld [vmem:[%s1 + $0x1078] sm:$0xff]
    %v563 = vld [vmem:[%s1 + $0x1080] sm:$0xff]
    %v564 = vld [vmem:[%s1 + $0x1088] sm:$0xff]
    %v565 = vld [vmem:[%s1 + $0x1090] sm:$0xff]
    %v566 = vld [vmem:[%s1 + $0x1098] sm:$0xff]
    %v567 = vld [vmem:[%s1 + $0x10a0] sm:$0xff]
    %v568 = vld [vmem:[%s1 + $0x10a8] sm:$0xff]
    %v569 = vld [vmem:[%s1 + $0x10b0] sm:$0xff]
    %v570 = vld [vmem:[%s1 + $0x10b8] sm:$0xff]
    %v571 = vld [vmem:[%s1 + $0x10c0] sm:$0xff]
    %v572 = vld [vmem:[%s1 + $0x10c8] sm:$0xff]
    %v573 = vld [vmem:[%s1 + $0x10d0] sm:$0xff]
    %v574 = vld [vmem:[%s1 + $0x10d8] sm:$0xff]
    %v575 = vld [vmem:[%s1 + $0x10e0] sm:$0xff]
    %v576 = vld [vmem:[%s1 + $0x10e8] sm:$0xff]
    %v577 = vld [vmem:[%s1 + $0x10f0] sm:$0xff]
    %v578 = vld [vmem:[%s1 + $0x10f8] sm:$0xff]
    %v579 = vld [vmem:[%s1 + $0x1100] sm:$0xff]
    %v580 = vld [vmem:[%s1 + $0x1108] sm:$0xff]
    %v581 = vld [vmem:[%s1 + $0x1110] sm:$0xff]
    %v582 = vld [vmem:[%s1 + $0x1118] sm:$0xff]
    %v583 = vld [vmem:[%s1 + $0x1120] sm:$0xff]
    %v584 = vld [vmem:[%s1 + $0x1128] sm:$0xff]
    %v585 = vld [vmem:[%s1 + $0x1130] sm:$0xff]
    %v586 = vld [vmem:[%s1 + $0x1138] sm:$0xff]
    %v587 = vld [vmem:[%s1 + $0x1140] sm:$0xff]
    %v588 = vld [vmem:[%s1 + $0x1148] sm:$0xff]
    %v589 = vld [vmem:[%s1 + $0x1150] sm:$0xff]
    %v590 = vld [vmem:[%s1 + $0x1158] sm:$0xff]
    %v591 = vld [vmem:[%s1 + $0x1160] sm:$0xff]
    %v592 = vld [vmem:[%s1 + $0x1168] sm:$0xff]
    %v593 = vld [vmem:[%s1 + $0x1170] sm:$0xff]
    %v594 = vld [vmem:[%s1 + $0x1178] sm:$0xff]
    %v595 = vld [vmem:[%s1 + $0x1180] sm:$0xff]
    %v596 = vld [vmem:[%s1 + $0x1188] sm:$0xff]
    %v597 = vld [vmem:[%s1 + $0x1190] sm:$0xff]
    %v598 = vld [vmem:[%s1 + $0x1198] sm:$0xff]
    %v599 = vld [vmem:[%s1 + $0x11a0] sm:$0xff]
    %v600 = vld [vmem:[%s1 + $0x11a8] sm:$0xff]
    %v601 = vld [vmem:[%s1 + $0x11b0] sm:$0xff]
    %v602 = vld [vmem:[%s1 + $0x11b8] sm:$0xff]
    %v603 = vld [vmem:[%s1 + $0x11c0] sm:$0xff]
    %v604 = vld [vmem:[%s1 + $0x11c8] sm:$0xff]
    %v605 = vld [vmem:[%s1 + $0x11d0] sm:$0xff]
    %v606 = vld [vmem:[%s1 + $0x11d8] sm:$0xff]
    %v607 = vld [vmem:[%s1 + $0x11e0] sm:$0xff]
    %v608 = vld [vmem:[%s1 + $0x11e8] sm:$0xff]
    %v609 = vld [vmem:[%s1 + $0x11f0] sm:$0xff]
    %v610 = vld [vmem:[%s1 + $0x11f8] sm:$0xff]
    %v611 = vld [vmem:[%s1 + $0x1200] sm:$0xff]
    %v612 = vld [vmem:[%s1 + $0x1208] sm:$0xff]
    %v613 = vld [vmem:[%s1 + $0x1210] sm:$0xff]
    %v614 = vld [vmem:[%s1 + $0x1218] sm:$0xff]
    %v615 = vld [vmem:[%s1 + $0x1220] sm:$0xff]
    %v616 = vld [vmem:[%s1 + $0x1228] sm:$0xff]
    %v617 = vld [vmem:[%s1 + $0x1230] sm:$0xff]
    %v618 = vld [vmem:[%s1 + $0x1238] sm:$0xff]
    %v619 = vld [vmem:[%s1 + $0x1240] sm:$0xff]
    %v620 = vld [vmem:[%s1 + $0x1248] sm:$0xff]
    %v621 = vld [vmem:[%s1 + $0x1250] sm:$0xff]
    %v622 = vld [vmem:[%s1 + $0x1258] sm:$0xff]
    %v623 = vld [vmem:[%s1 + $0x1260] sm:$0xff]
    %v624 = vld [vmem:[%s1 + $0x1268] sm:$0xff]
    %v625 = vld [vmem:[%s1 + $0x1270] sm:$0xff]
    %v626 = vld [vmem:[%s1 + $0x1278] sm:$0xff]
    %v627 = vld [vmem:[%s1 + $0x1280] sm:$0xff]
    %v628 = vld [vmem:[%s1 + $0x1288] sm:$0xff]
    %v629 = vld [vmem:[%s1 + $0x1290] sm:$0xff]
    %v630 = vld [vmem:[%s1 + $0x1298] sm:$0xff]
    %v631 = vld [vmem:[%s1 + $0x12a0] sm:$0xff]
    %v632 = vld [vmem:[%s1 + $0x12a8] sm:$0xff]
    %v633 = vld [vmem:[%s1 + $0x12b0] sm:$0xff]
    %v634 = vld [vmem:[%s1 + $0x12b8] sm:$0xff]
    %v635 = vld [vmem:[%s1 + $0x12c0] sm:$0xff]
    %v636 = vld [vmem:[%s1 + $0x12c8] sm:$0xff]
    %v637 = vld [vmem:[%s1 + $0x12d0] sm:$0xff]
    %v638 = vld [vmem:[%s1 + $0x12d8] sm:$0xff]
    %v639 = vld [vmem:[%s1 + $0x12e0] sm:$0xff]
    %v640 = vld [vmem:[%s1 + $0x12e8] sm:$0xff]
    %v641 = vld [vmem:[%s1 + $0x12f0] sm:$0xff]
    %v642 = vld [vmem:[%s1 + $0x12f8] sm:$0xff]
    %v643 = vld [vmem:[%s1 + $0x1300] sm:$0xff]
    %v644 = vld [vmem:[%s1 + $0x1308] sm:$0xff]
    %v645 = vld [vmem:[%s1 + $0x1310] sm:$0xff]
    %v646 = vld [vmem:[%s1 + $0x1318] sm:$0xff]
    %v647 = vld [vmem:[%s1 + $0x1320] sm:$0xff]
    %v648 = vld [vmem:[%s1 + $0x1328] sm:$0xff]
    %v649 = vld [vmem:[%s1 + $0x1330] sm:$0xff]
    %v650 = vld [vmem:[%s1 + $0x1338] sm:$0xff]
    %v651 = vld [vmem:[%s1 + $0x1340] sm:$0xff]
    %v652 = vld [vmem:[%s1 + $0x1348] sm:$0xff]
    %v653 = vld [vmem:[%s1 + $0x1350] sm:$0xff]
    %v654 = vld [vmem:[%s1 + $0x1358] sm:$0xff]
    %v655 = vld [vmem:[%s1 + $0x1360] sm:$0xff]
    %v656 = vld [vmem:[%s1 + $0x1368] sm:$0xff]
    %v657 = vld [vmem:[%s1 + $0x1370] sm:$0xff]
    %v658 = vld [vmem:[%s1 + $0x1378] sm:$0xff]
    %v659 = vld [vmem:[%s1 + $0x1380] sm:$0xff]
    %v660 = vld [vmem:[%s1 + $0x1388] sm:$0xff]
    %v661 = vld [vmem:[%s1 + $0x1390] sm:$0xff]
    %v662 = vld [vmem:[%s1 + $0x1398] sm:$0xff]
    %v663 = vld [vmem:[%s1 + $0x13a0] sm:$0xff]
    %v664 = vld [vmem:[%s1 + $0x13a8] sm:$0xff]
    %v665 = vld [vmem:[%s1 + $0x13b0] sm:$0xff]
    %v666 = vld [vmem:[%s1 + $0x13b8] sm:$0xff]
    %v667 = vld [vmem:[%s1 + $0x13c0] sm:$0xff]
    %v668 = vld [vmem:[%s1 + $0x13c8] sm:$0xff]
    %v669 = vld [vmem:[%s1 + $0x13d0] sm:$0xff]
    %v670 = vld [vmem:[%s1 + $0x13d8] sm:$0xff]
    %v671 = vld [vmem:[%s1 + $0x13e0] sm:$0xff]
    %v672 = vld [vmem:[%s1 + $0x13e8] sm:$0xff]
    %v673 = vld [vmem:[%s1 + $0x13f0] sm:$0xff]
    %v674 = vld [vmem:[%s1 + $0x13f8] sm:$0xff]
    %v675 = vld [vmem:[%s1 + $0x1400] sm:$0xff]
    %v676 = vld [vmem:[%s1 + $0x1408] sm:$0xff]
    %v677 = vld [vmem:[%s1 + $0x1410] sm:$0xff]
    %v678 = vld [vmem:[%s1 + $0x1418] sm:$0xff]
    %v679 = vld [vmem:[%s1 + $0x1420] sm:$0xff]
    %v680 = vld [vmem:[%s1 + $0x1428] sm:$0xff]
    %v681 = vld [vmem:[%s1 + $0x1430] sm:$0xff]
    %v682 = vld [vmem:[%s1 + $0x1438] sm:$0xff]
    %v683 = vld [vmem:[%s1 + $0x1440] sm:$0xff]
    %v684 = vld [vmem:[%s1 + $0x1448] sm:$0xff]
    %v685 = vld [vmem:[%s1 + $0x1450] sm:$0xff]
    %v686 = vld [vmem:[%s1 + $0x1458] sm:$0xff]
    %v687 = vld [vmem:[%s1 + $0x1460] sm:$0xff]
    %v688 = vld [vmem:[%s1 + $0x1468] sm:$0xff]
    %v689 = vld [vmem:[%s1 + $0x1470] sm:$0xff]
    %v690 = vld [vmem:[%s1 + $0x1478] sm:$0xff]
    %v691 = vld [vmem:[%s1 + $0x1480] sm:$0xff]
    %v692 = vld [vmem:[%s1 + $0x1488] sm:$0xff]
    %v693 = vld [vmem:[%s1 + $0x1490] sm:$0xff]
    %v694 = vld [vmem:[%s1 + $0x1498] sm:$0xff]
    %v695 = vld [vmem:[%s1 + $0x14a0] sm:$0xff]
    %v696 = vld [vmem:[%s1 + $0x14a8] sm:$0xff]
    %v697 = vld [vmem:[%s1 + $0x14b0] sm:$0xff]
    %v698 = vld [vmem:[%s1 + $0x14b8] sm:$0xff]
    %v699 = vld [vmem:[%s1 + $0x14c0] sm:$0xff]
    %v700 = vld [vmem:[%s1 + $0x14c8] sm:$0xff]
    %v701 = vld [vmem:[%s1 + $0x14d0] sm:$0xff]
    %v702 = vld [vmem:[%s1 + $0x14d8] sm:$0xff]
    %v703 = vld [vmem:[%s1 + $0x14e0] sm:$0xff]
    %v704 = vld [vmem:[%s1 + $0x14e8] sm:$0xff]
    %v705 = vld [vmem:[%s1 + $0x14f0] sm:$0xff]
    %v706 = vld [vmem:[%s1 + $0x14f8] sm:$0xff]
    %v707 = vld [vmem:[%s1 + $0x1500] sm:$0xff]
    %v708 = vld [vmem:[%s1 + $0x1508] sm:$0xff]
    %v709 = vld [vmem:[%s1 + $0x1510] sm:$0xff]
    %v710 = vld [vmem:[%s1 + $0x1518] sm:$0xff]
    %v711 = vld [vmem:[%s1 + $0x1520] sm:$0xff]
    %v712 = vld [vmem:[%s1 + $0x1528] sm:$0xff]
    %v713 = vld [vmem:[%s1 + $0x1530] sm:$0xff]
    %v714 = vld [vmem:[%s1 + $0x1538] sm:$0xff]
    %v715 = vld [vmem:[%s1 + $0x1540] sm:$0xff]
    %v716 = vld [vmem:[%s1 + $0x1548] sm:$0xff]
    %v717 = vld [vmem:[%s1 + $0x1550] sm:$0xff]
    %v718 = vld [vmem:[%s1 + $0x1558] sm:$0xff]
    %v719 = vld [vmem:[%s1 + $0x1560] sm:$0xff]
    %v720 = vld [vmem:[%s1 + $0x1568] sm:$0xff]
    %v721 = vld [vmem:[%s1 + $0x1570] sm:$0xff]
    %v722 = vld [vmem:[%s1 + $0x1578] sm:$0xff]
    %v723 = vld [vmem:[%s1 + $0x1580] sm:$0xff]
    %v724 = vld [vmem:[%s1 + $0x1588] sm:$0xff]
    %v725 = vld [vmem:[%s1 + $0x1590] sm:$0xff]
    %v726 = vld [vmem:[%s1 + $0x1598] sm:$0xff]
    %v727 = vld [vmem:[%s1 + $0x15a0] sm:$0xff]
    %v728 = vld [vmem:[%s1 + $0x15a8] sm:$0xff]
    %v729 = vld [vmem:[%s1 + $0x15b0] sm:$0xff]
    %v730 = vld [vmem:[%s1 + $0x15b8] sm:$0xff]
    %v731 = vld [vmem:[%s1 + $0x15c0] sm:$0xff]
    %v732 = vld [vmem:[%s1 + $0x15c8] sm:$0xff]
    %v733 = vld [vmem:[%s1 + $0x15d0] sm:$0xff]
    %v734 = vld [vmem:[%s1 + $0x15d8] sm:$0xff]
    %v735 = vld [vmem:[%s1 + $0x15e0] sm:$0xff]
    %v736 = vld [vmem:[%s1 + $0x15e8] sm:$0xff]
    %v737 = vld [vmem:[%s1 + $0x15f0] sm:$0xff]
    %v738 = vld [vmem:[%s1 + $0x15f8] sm:$0xff]
    %v739 = vld [vmem:[%s1 + $0x1600] sm:$0xff]
    %v740 = vld [vmem:[%s1 + $0x1608] sm:$0xff]
    %v741 = vld [vmem:[%s1 + $0x1610] sm:$0xff]
    %v742 = vld [vmem:[%s1 + $0x1618] sm:$0xff]
    %v743 = vld [vmem:[%s1 + $0x1620] sm:$0xff]
    %v744 = vld [vmem:[%s1 + $0x1628] sm:$0xff]
    %v745 = vld [vmem:[%s1 + $0x1630] sm:$0xff]
    %v746 = vld [vmem:[%s1 + $0x1638] sm:$0xff]
    %v747 = vld [vmem:[%s1 + $0x1640] sm:$0xff]
    %v748 = vld [vmem:[%s1 + $0x1648] sm:$0xff]
    %v749 = vld [vmem:[%s1 + $0x1650] sm:$0xff]
    %v750 = vld [vmem:[%s1 + $0x1658] sm:$0xff]
    %v751 = vld [vmem:[%s1 + $0x1660] sm:$0xff]
    %v752 = vld [vmem:[%s1 + $0x1668] sm:$0xff]
    %v753 = vld [vmem:[%s1 + $0x1670] sm:$0xff]
    %v754 = vld [vmem:[%s1 + $0x1678] sm:$0xff]
    %v755 = vld [vmem:[%s1 + $0x1680] sm:$0xff]
    %v756 = vld [vmem:[%s1 + $0x1688] sm:$0xff]
    %v757 = vld [vmem:[%s1 + $0x1690] sm:$0xff]
    %v758 = vld [vmem:[%s1 + $0x1698] sm:$0xff]
    %v759 = vld [vmem:[%s1 + $0x16a0] sm:$0xff]
    %v760 = vld [vmem:[%s1 + $0x16a8] sm:$0xff]
    %v761 = vld [vmem:[%s1 + $0x16b0] sm:$0xff]
    %v762 = vld [vmem:[%s1 + $0x16b8] sm:$0xff]
    %v763 = vld [vmem:[%s1 + $0x16c0] sm:$0xff]
    %v764 = vld [vmem:[%s1 + $0x16c8] sm:$0xff]
    %v765 = vld [vmem:[%s1 + $0x16d0] sm:$0xff]
    %v766 = vld [vmem:[%s1 + $0x16d8] sm:$0xff]
    %v767 = vld [vmem:[%s1 + $0x16e0] sm:$0xff]
    %v768 = vld [vmem:[%s1 + $0x16e8] sm:$0xff]
    %v769 = vld [vmem:[%s1 + $0x16f0] sm:$0xff]
    %v770 = vld [vmem:[%s1 + $0x16f8] sm:$0xff]
    %v771 = vld [vmem:[%s1 + $0x1700] sm:$0xff]
    %v772 = vld [vmem:[%s1 + $0x1708] sm:$0xff]
    %v773 = vld [vmem:[%s1 + $0x1710] sm:$0xff]
    %v774 = vld [vmem:[%s1 + $0x1718] sm:$0xff]
    %v775 = vld [vmem:[%s1 + $0x1720] sm:$0xff]
    %v776 = vld [vmem:[%s1 + $0x1728] sm:$0xff]
    %v777 = vld [vmem:[%s1 + $0x1730] sm:$0xff]
    %v778 = vld [vmem:[%s1 + $0x1738] sm:$0xff]
    %v779 = vld [vmem:[%s1 + $0x1740] sm:$0xff]
    %v780 = vld [vmem:[%s1 + $0x1748] sm:$0xff]
    %v781 = vld [vmem:[%s1 + $0x1750] sm:$0xff]
    %v782 = vld [vmem:[%s1 + $0x1758] sm:$0xff]
    %v783 = vld [vmem:[%s1 + $0x1760] sm:$0xff]
    %v784 = vld [vmem:[%s1 + $0x1768] sm:$0xff]
    %v785 = vld [vmem:[%s1 + $0x1770] sm:$0xff]
    %v786 = vld [vmem:[%s1 + $0x1778] sm:$0xff]
    %v787 = vld [vmem:[%s1 + $0x1780] sm:$0xff]
    %v788 = vld [vmem:[%s1 + $0x1788] sm:$0xff]
    %v789 = vld [vmem:[%s1 + $0x1790] sm:$0xff]
    %v790 = vld [vmem:[%s1 + $0x1798] sm:$0xff]
    %v791 = vld [vmem:[%s1 + $0x17a0] sm:$0xff]
    %v792 = vld [vmem:[%s1 + $0x17a8] sm:$0xff]
    %v793 = vld [vmem:[%s1 + $0x17b0] sm:$0xff]
    %v794 = vld [vmem:[%s1 + $0x17b8] sm:$0xff]
    %v795 = vld [vmem:[%s1 + $0x17c0] sm:$0xff]
    %v796 = vld [vmem:[%s1 + $0x17c8] sm:$0xff]
    %v797 = vld [vmem:[%s1 + $0x17d0] sm:$0xff]
    %v798 = vld [vmem:[%s1 + $0x17d8] sm:$0xff]
    %v799 = vld [vmem:[%s1 + $0x17e0] sm:$0xff]
    %v800 = vld [vmem:[%s1 + $0x17e8] sm:$0xff]
    %v801 = vld [vmem:[%s1 + $0x17f0] sm:$0xff]
    %v802 = vld [vmem:[%s1 + $0x17f8] sm:$0xff]
    %v803 = vld [vmem:[%s1 + $0x1800] sm:$0xff]
    %v804 = vld [vmem:[%s1 + $0x1808] sm:$0xff]
    %v805 = vld [vmem:[%s1 + $0x1810] sm:$0xff]
    %v806 = vld [vmem:[%s1 + $0x1818] sm:$0xff]
    %v807 = vld [vmem:[%s1 + $0x1820] sm:$0xff]
    %v808 = vld [vmem:[%s1 + $0x1828] sm:$0xff]
    %v809 = vld [vmem:[%s1 + $0x1830] sm:$0xff]
    %v810 = vld [vmem:[%s1 + $0x1838] sm:$0xff]
    %v811 = vld [vmem:[%s1 + $0x1840] sm:$0xff]
    %v812 = vld [vmem:[%s1 + $0x1848] sm:$0xff]
    %v813 = vld [vmem:[%s1 + $0x1850] sm:$0xff]
    %v814 = vld [vmem:[%s1 + $0x1858] sm:$0xff]
    %v815 = vld [vmem:[%s1 + $0x1860] sm:$0xff]
    %v816 = vld [vmem:[%s1 + $0x1868] sm:$0xff]
    %v817 = vld [vmem:[%s1 + $0x1870] sm:$0xff]
    %v818 = vld [vmem:[%s1 + $0x1878] sm:$0xff]
    %v819 = vld [vmem:[%s1 + $0x1880] sm:$0xff]
    %v820 = vld [vmem:[%s1 + $0x1888] sm:$0xff]
    %v821 = vld [vmem:[%s1 + $0x1890] sm:$0xff]
    %v822 = vld [vmem:[%s1 + $0x1898] sm:$0xff]
    %v823 = vld [vmem:[%s1 + $0x18a0] sm:$0xff]
    %v824 = vld [vmem:[%s1 + $0x18a8] sm:$0xff]
    %v825 = vld [vmem:[%s1 + $0x18b0] sm:$0xff]
    %v826 = vld [vmem:[%s1 + $0x18b8] sm:$0xff]
    %v827 = vld [vmem:[%s1 + $0x18c0] sm:$0xff]
    %v828 = vld [vmem:[%s1 + $0x18c8] sm:$0xff]
    %v829 = vld [vmem:[%s1 + $0x18d0] sm:$0xff]
    %v830 = vld [vmem:[%s1 + $0x18d8] sm:$0xff]
    %v831 = vld [vmem:[%s1 + $0x18e0] sm:$0xff]
    %v832 = vld [vmem:[%s1 + $0x18e8] sm:$0xff]
    %v833 = vld [vmem:[%s1 + $0x18f0] sm:$0xff]
    %v834 = vld [vmem:[%s1 + $0x18f8] sm:$0xff]
    %v835 = vld [vmem:[%s1 + $0x1900] sm:$0xff]
    %v836 = vld [vmem:[%s1 + $0x1908] sm:$0xff]
    %v837 = vld [vmem:[%s1 + $0x1910] sm:$0xff]
    %v838 = vld [vmem:[%s1 + $0x1918] sm:$0xff]
    %v839 = vld [vmem:[%s1 + $0x1920] sm:$0xff]
    %v840 = vld [vmem:[%s1 + $0x1928] sm:$0xff]
    %v841 = vld [vmem:[%s1 + $0x1930] sm:$0xff]
    %v842 = vld [vmem:[%s1 + $0x1938] sm:$0xff]
    %v843 = vld [vmem:[%s1 + $0x1940] sm:$0xff]
    %v844 = vld [vmem:[%s1 + $0x1948] sm:$0xff]
    %v845 = vld [vmem:[%s1 + $0x1950] sm:$0xff]
    %v846 = vld [vmem:[%s1 + $0x1958] sm:$0xff]
    %v847 = vld [vmem:[%s1 + $0x1960] sm:$0xff]
    %v848 = vld [vmem:[%s1 + $0x1968] sm:$0xff]
    %v849 = vld [vmem:[%s1 + $0x1970] sm:$0xff]
    %v850 = vld [vmem:[%s1 + $0x1978] sm:$0xff]
    %v851 = vld [vmem:[%s1 + $0x1980] sm:$0xff]
    %v852 = vld [vmem:[%s1 + $0x1988] sm:$0xff]
    %v853 = vld [vmem:[%s1 + $0x1990] sm:$0xff]
    %v854 = vld [vmem:[%s1 + $0x1998] sm:$0xff]
    %v855 = vld [vmem:[%s1 + $0x19a0] sm:$0xff]
    %v856 = vld [vmem:[%s1 + $0x19a8] sm:$0xff]
    %v857 = vld [vmem:[%s1 + $0x19b0] sm:$0xff]
    %v858 = vld [vmem:[%s1 + $0x19b8] sm:$0xff]
    %v859 = vld [vmem:[%s1 + $0x19c0] sm:$0xff]
    %v860 = vld [vmem:[%s1 + $0x19c8] sm:$0xff]
    %v861 = vld [vmem:[%s1 + $0x19d0] sm:$0xff]
    %v862 = vld [vmem:[%s1 + $0x19d8] sm:$0xff]
    %v863 = vld [vmem:[%s1 + $0x19e0] sm:$0xff]
    %v864 = vld [vmem:[%s1 + $0x19e8] sm:$0xff]
    %v865 = vld [vmem:[%s1 + $0x19f0] sm:$0xff]
    %v866 = vld [vmem:[%s1 + $0x19f8] sm:$0xff]
    %v867 = vld [vmem:[%s1 + $0x1a00] sm:$0xff]
    %v868 = vld [vmem:[%s1 + $0x1a08] sm:$0xff]
    %v869 = vld [vmem:[%s1 + $0x1a10] sm:$0xff]
    %v870 = vld [vmem:[%s1 + $0x1a18] sm:$0xff]
    %v871 = vld [vmem:[%s1 + $0x1a20] sm:$0xff]
    %v872 = vld [vmem:[%s1 + $0x1a28] sm:$0xff]
    %v873 = vld [vmem:[%s1 + $0x1a30] sm:$0xff]
    %v874 = vld [vmem:[%s1 + $0x1a38] sm:$0xff]
    %v875 = vld [vmem:[%s1 + $0x1a40] sm:$0xff]
    %v876 = vld [vmem:[%s1 + $0x1a48] sm:$0xff]
    %v877 = vld [vmem:[%s1 + $0x1a50] sm:$0xff]
    %v878 = vld [vmem:[%s1 + $0x1a58] sm:$0xff]
    %v879 = vld [vmem:[%s1 + $0x1a60] sm:$0xff]
    %v880 = vld [vmem:[%s1 + $0x1a68] sm:$0xff]
    %v881 = vld [vmem:[%s1 + $0x1a70] sm:$0xff]
    %v882 = vld [vmem:[%s1 + $0x1a78] sm:$0xff]
    %v883 = vld [vmem:[%s1 + $0x1a80] sm:$0xff]
    %v884 = vld [vmem:[%s1 + $0x1a88] sm:$0xff]
    %v885 = vld [vmem:[%s1 + $0x1a90] sm:$0xff]
    %v886 = vld [vmem:[%s1 + $0x1a98] sm:$0xff]
    %v887 = vld [vmem:[%s1 + $0x1aa0] sm:$0xff]
    %v888 = vld [vmem:[%s1 + $0x1aa8] sm:$0xff]
    %v889 = vld [vmem:[%s1 + $0x1ab0] sm:$0xff]
    %v890 = vld [vmem:[%s1 + $0x1ab8] sm:$0xff]
    %v891 = vld [vmem:[%s1 + $0x1ac0] sm:$0xff]
    %v892 = vld [vmem:[%s1 + $0x1ac8] sm:$0xff]
    %v893 = vld [vmem:[%s1 + $0x1ad0] sm:$0xff]
    %v894 = vld [vmem:[%s1 + $0x1ad8] sm:$0xff]
    %v895 = vld [vmem:[%s1 + $0x1ae0] sm:$0xff]
    %v896 = vld [vmem:[%s1 + $0x1ae8] sm:$0xff]
    %v897 = vld [vmem:[%s1 + $0x1af0] sm:$0xff]
    %v898 = vld [vmem:[%s1 + $0x1af8] sm:$0xff]
    %v899 = vld [vmem:[%s1 + $0x1b00] sm:$0xff]
    %v900 = vld [vmem:[%s1 + $0x1b08] sm:$0xff]
    %v901 = vld [vmem:[%s1 + $0x1b10] sm:$0xff]
    %v902 = vld [vmem:[%s1 + $0x1b18] sm:$0xff]
    %v903 = vld [vmem:[%s1 + $0x1b20] sm:$0xff]
    %v904 = vld [vmem:[%s1 + $0x1b28] sm:$0xff]
    %v905 = vld [vmem:[%s1 + $0x1b30] sm:$0xff]
    %v906 = vld [vmem:[%s1 + $0x1b38] sm:$0xff]
    %v907 = vld [vmem:[%s1 + $0x1b40] sm:$0xff]
    %v908 = vld [vmem:[%s1 + $0x1b48] sm:$0xff]
    %v909 = vld [vmem:[%s1 + $0x1b50] sm:$0xff]
    %v910 = vld [vmem:[%s1 + $0x1b58] sm:$0xff]
    %v911 = vld [vmem:[%s1 + $0x1b60] sm:$0xff]
    %v912 = vld [vmem:[%s1 + $0x1b68] sm:$0xff]
    %v913 = vld [vmem:[%s1 + $0x1b70] sm:$0xff]
    %v914 = vld [vmem:[%s1 + $0x1b78] sm:$0xff]
    %v915 = vld [vmem:[%s1 + $0x1b80] sm:$0xff]
    %v916 = vld [vmem:[%s1 + $0x1b88] sm:$0xff]
    %v917 = vld [vmem:[%s1 + $0x1b90] sm:$0xff]
    %v918 = vld [vmem:[%s1 + $0x1b98] sm:$0xff]
    %v919 = vld [vmem:[%s1 + $0x1ba0] sm:$0xff]
    %v920 = vld [vmem:[%s1 + $0x1ba8] sm:$0xff]
    %v921 = vld [vmem:[%s1 + $0x1bb0] sm:$0xff]
    %v922 = vld [vmem:[%s1 + $0x1bb8] sm:$0xff]
    %v923 = vld [vmem:[%s1 + $0x1bc0] sm:$0xff]
    %v924 = vld [vmem:[%s1 + $0x1bc8] sm:$0xff]
    %v925 = vld [vmem:[%s1 + $0x1bd0] sm:$0xff]
    %v926 = vld [vmem:[%s1 + $0x1bd8] sm:$0xff]
    %v927 = vld [vmem:[%s1 + $0x1be0] sm:$0xff]
    %v928 = vld [vmem:[%s1 + $0x1be8] sm:$0xff]
    %v929 = vld [vmem:[%s1 + $0x1bf0] sm:$0xff]
    %v930 = vld [vmem:[%s1 + $0x1bf8] sm:$0xff]
    %v931 = vld [vmem:[%s1 + $0x1c00] sm:$0xff]
    %v932 = vld [vmem:[%s1 + $0x1c08] sm:$0xff]
    %v933 = vld [vmem:[%s1 + $0x1c10] sm:$0xff]
    %v934 = vld [vmem:[%s1 + $0x1c18] sm:$0xff]
    %v935 = vld [vmem:[%s1 + $0x1c20] sm:$0xff]
    %v936 = vld [vmem:[%s1 + $0x1c28] sm:$0xff]
    %v937 = vld [vmem:[%s1 + $0x1c30] sm:$0xff]
    %v938 = vld [vmem:[%s1 + $0x1c38] sm:$0xff]
    %v939 = vld [vmem:[%s1 + $0x1c40] sm:$0xff]
    %v940 = vld [vmem:[%s1 + $0x1c48] sm:$0xff]
    %v941 = vld [vmem:[%s1 + $0x1c50] sm:$0xff]
    %v942 = vld [vmem:[%s1 + $0x1c58] sm:$0xff]
    %v943 = vld [vmem:[%s1 + $0x1c60] sm:$0xff]
    %v944 = vld [vmem:[%s1 + $0x1c68] sm:$0xff]
    %v945 = vld [vmem:[%s1 + $0x1c70] sm:$0xff]
    %v946 = vld [vmem:[%s1 + $0x1c78] sm:$0xff]
    %v947 = vld [vmem:[%s1 + $0x1c80] sm:$0xff]
    %v948 = vld [vmem:[%s1 + $0x1c88] sm:$0xff]
    %v949 = vld [vmem:[%s1 + $0x1c90] sm:$0xff]
    %v950 = vld [vmem:[%s1 + $0x1c98] sm:$0xff]
    %v951 = vld [vmem:[%s1 + $0x1ca0] sm:$0xff]
    %v952 = vld [vmem:[%s1 + $0x1ca8] sm:$0xff]
    %v953 = vld [vmem:[%s1 + $0x1cb0] sm:$0xff]
    %v954 = vld [vmem:[%s1 + $0x1cb8] sm:$0xff]
    %v955 = vld [vmem:[%s1 + $0x1cc0] sm:$0xff]
    %v956 = vld [vmem:[%s1 + $0x1cc8] sm:$0xff]
    %v957 = vld [vmem:[%s1 + $0x1cd0] sm:$0xff]
    %v958 = vld [vmem:[%s1 + $0x1cd8] sm:$0xff]
    %v959 = vld [vmem:[%s1 + $0x1ce0] sm:$0xff]
    %v960 = vld [vmem:[%s1 + $0x1ce8] sm:$0xff]
    %v961 = vld [vmem:[%s1 + $0x1cf0] sm:$0xff]
    %v962 = vld [vmem:[%s1 + $0x1cf8] sm:$0xff]
    %v963 = vld [vmem:[%s1 + $0x1d00] sm:$0xff]
    %v964 = vld [vmem:[%s1 + $0x1d08] sm:$0xff]
    %v965 = vld [vmem:[%s1 + $0x1d10] sm:$0xff]
    %v966 = vld [vmem:[%s1 + $0x1d18] sm:$0xff]
    %v967 = vld [vmem:[%s1 + $0x1d20] sm:$0xff]
    %v968 = vld [vmem:[%s1 + $0x1d28] sm:$0xff]
    %v969 = vld [vmem:[%s1 + $0x1d30] sm:$0xff]
    %v970 = vld [vmem:[%s1 + $0x1d38] sm:$0xff]
    %v971 = vld [vmem:[%s1 + $0x1d40] sm:$0xff]
    %v972 = vld [vmem:[%s1 + $0x1d48] sm:$0xff]
    %v973 = vld [vmem:[%s1 + $0x1d50] sm:$0xff]
    %v974 = vld [vmem:[%s1 + $0x1d58] sm:$0xff]
    %v975 = vld [vmem:[%s1 + $0x1d60] sm:$0xff]
    %v976 = vld [vmem:[%s1 + $0x1d68] sm:$0xff]
    %v977 = vld [vmem:[%s1 + $0x1d70] sm:$0xff]
    %v978 = vld [vmem:[%s1 + $0x1d78] sm:$0xff]
    %v979 = vld [vmem:[%s1 + $0x1d80] sm:$0xff]
    %v980 = vld [vmem:[%s1 + $0x1d88] sm:$0xff]
    %v981 = vld [vmem:[%s1 + $0x1d90] sm:$0xff]
    %v982 = vld [vmem:[%s1 + $0x1d98] sm:$0xff]
    %v983 = vld [vmem:[%s1 + $0x1da0] sm:$0xff]
    %v984 = vld [vmem:[%s1 + $0x1da8] sm:$0xff]
    %v985 = vld [vmem:[%s1 + $0x1db0] sm:$0xff]
    %v986 = vld [vmem:[%s1 + $0x1db8] sm:$0xff]
    %v987 = vld [vmem:[%s1 + $0x1dc0] sm:$0xff]
    %v988 = vld [vmem:[%s1 + $0x1dc8] sm:$0xff]
    %v989 = vld [vmem:[%s1 + $0x1dd0] sm:$0xff]
    %v990 = vld [vmem:[%s1 + $0x1dd8] sm:$0xff]
    %v991 = vld [vmem:[%s1 + $0x1de0] sm:$0xff]
    %v992 = vld [vmem:[%s1 + $0x1de8] sm:$0xff]
    %v993 = vld [vmem:[%s1 + $0x1df0] sm:$0xff]
    %v994 = vld [vmem:[%s1 + $0x1df8] sm:$0xff]
    %v995 = vld [vmem:[%s1 + $0x1e00] sm:$0xff]
    %v996 = vld [vmem:[%s1 + $0x1e08] sm:$0xff]
    %v997 = vld [vmem:[%s1 + $0x1e10] sm:$0xff]
    %v998 = vld [vmem:[%s1 + $0x1e18] sm:$0xff]
    %v999 = vld [vmem:[%s1 + $0x1e20] sm:$0xff]
    %v1000 = vld [vmem:[%s1 + $0x1e28] sm:$0xff]
    %v1001 = vld [vmem:[%s1 + $0x1e30] sm:$0xff]
    %v1002 = vld [vmem:[%s1 + $0x1e38] sm:$0xff]
    %v1003 = vld [vmem:[%s1 + $0x1e40] sm:$0xff]
    %v1004 = vld [vmem:[%s1 + $0x1e48] sm:$0xff]
    %v1005 = vld [vmem:[%s1 + $0x1e50] sm:$0xff]
    %v1006 = vld [vmem:[%s1 + $0x1e58] sm:$0xff]
    %v1007 = vld [vmem:[%s1 + $0x1e60] sm:$0xff]
    %v1008 = vld [vmem:[%s1 + $0x1e68] sm:$0xff]
    %v1009 = vld [vmem:[%s1 + $0x1e70] sm:$0xff]
    %v1010 = vld [vmem:[%s1 + $0x1e78] sm:$0xff]
    %v1011 = vld [vmem:[%s1 + $0x1e80] sm:$0xff]
    %v1012 = vld [vmem:[%s1 + $0x1e88] sm:$0xff]
    %v1013 = vld [vmem:[%s1 + $0x1e90] sm:$0xff]
    %v1014 = vld [vmem:[%s1 + $0x1e98] sm:$0xff]
    %v1015 = vld [vmem:[%s1 + $0x1ea0] sm:$0xff]
    %v1016 = vld [vmem:[%s1 + $0x1ea8] sm:$0xff]
    %v1017 = vld [vmem:[%s1 + $0x1eb0] sm:$0xff]
    %v1018 = vld [vmem:[%s1 + $0x1eb8] sm:$0xff]
    %v1019 = vld [vmem:[%s1 + $0x1ec0] sm:$0xff]
    %v1020 = vld [vmem:[%s1 + $0x1ec8] sm:$0xff]
    %v1021 = vld [vmem:[%s1 + $0x1ed0] sm:$0xff]
    %v1022 = vld [vmem:[%s1 + $0x1ed8] sm:$0xff]
    %v1023 = vld [vmem:[%s1 + $0x1ee0] sm:$0xff]
    %v1024 = vld [vmem:[%s1 + $0x1ee8] sm:$0xff]
    %v1025 = vld [vmem:[%s1 + $0x1ef0] sm:$0xff]
    %v1026 = vld [vmem:[%s1 + $0x1ef8] sm:$0xff]
    %v1027 = vld [vmem:[%s1 + $0x1f00] sm:$0xff]
    %v1028 = vld [vmem:[%s1 + $0x1f08] sm:$0xff]
    %v1029 = vld [vmem:[%s1 + $0x1f10] sm:$0xff]
    %v1030 = vld [vmem:[%s1 + $0x1f18] sm:$0xff]
    %v1031 = vld [vmem:[%s1 + $0x1f20] sm:$0xff]
    %v1032 = vld [vmem:[%s1 + $0x1f28] sm:$0xff]
    %v1033 = vld [vmem:[%s1 + $0x1f30] sm:$0xff]
    %v1034 = vld [vmem:[%s1 + $0x1f38] sm:$0xff]
    %v1035 = vld [vmem:[%s1 + $0x1f40] sm:$0xff]
    %v1036 = vld [vmem:[%s1 + $0x1f48] sm:$0xff]
    %v1037 = vld [vmem:[%s1 + $0x1f50] sm:$0xff]
    %v1038 = vld [vmem:[%s1 + $0x1f58] sm:$0xff]
    %v1039 = vld [vmem:[%s1 + $0x1f60] sm:$0xff]
    %v1040 = vld [vmem:[%s1 + $0x1f68] sm:$0xff]
    %v1041 = vld [vmem:[%s1 + $0x1f70] sm:$0xff]
    %v1042 = vld [vmem:[%s1 + $0x1f78] sm:$0xff]
    %v1043 = vld [vmem:[%s1 + $0x1f80] sm:$0xff]
    %v1044 = vld [vmem:[%s1 + $0x1f88] sm:$0xff]
    %v1045 = vld [vmem:[%s1 + $0x1f90] sm:$0xff]
    %v1046 = vld [vmem:[%s1 + $0x1f98] sm:$0xff]
    %v1047 = vld [vmem:[%s1 + $0x1fa0] sm:$0xff]
    %v1048 = vld [vmem:[%s1 + $0x1fa8] sm:$0xff]
    %v1049 = vld [vmem:[%s1 + $0x1fb0] sm:$0xff]
    %v1050 = vld [vmem:[%s1 + $0x1fb8] sm:$0xff]
    %v1051 = vld [vmem:[%s1 + $0x1fc0] sm:$0xff]
    %v1052 = vld [vmem:[%s1 + $0x1fc8] sm:$0xff]
    %v1053 = vld [vmem:[%s1 + $0x1fd0] sm:$0xff]
    %v1054 = vld [vmem:[%s1 + $0x1fd8] sm:$0xff]
    %v1055 = vld [vmem:[%s1 + $0x1fe0] sm:$0xff]
    %v1056 = vld [vmem:[%s1 + $0x1fe8] sm:$0xff]
    %v1057 = vld [vmem:[%s1 + $0x1ff0] sm:$0xff]
    %v1058 = vld [vmem:[%s1 + $0x1ff8] sm:$0xff]
    %v1059 = vld [vmem:[%s1 + $0x2000] sm:$0xff]
    %v1060 = vld [vmem:[%s1 + $0x2008] sm:$0xff]
    %v1061 = vld [vmem:[%s1 + $0x2010] sm:$0xff]
    %v1062 = vld [vmem:[%s1 + $0x2018] sm:$0xff]
    %v1063 = vld [vmem:[%s1 + $0x2020] sm:$0xff]
    %v1064 = vld [vmem:[%s1 + $0x2028] sm:$0xff]
    %v1065 = vld [vmem:[%s1 + $0x2030] sm:$0xff]
    %v1066 = vld [vmem:[%s1 + $0x2038] sm:$0xff]
    %v1067 = vld [vmem:[%s1 + $0x2040] sm:$0xff]
    %v1068 = vld [vmem:[%s1 + $0x2048] sm:$0xff]
    %v1069 = vld [vmem:[%s1 + $0x2050] sm:$0xff]
    %v1070 = vld [vmem:[%s1 + $0x2058] sm:$0xff]
    %v1071 = vld [vmem:[%s1 + $0x2060] sm:$0xff]
    %v1072 = vld [vmem:[%s1 + $0x2068] sm:$0xff]
    %v1073 = vld [vmem:[%s1 + $0x2070] sm:$0xff]
    %v1074 = vld [vmem:[%s1 + $0x2078] sm:$0xff]
    %v1075 = vld [vmem:[%s1 + $0x2080] sm:$0xff]
    %v1076 = vld [vmem:[%s1 + $0x2088] sm:$0xff]
    %v1077 = vld [vmem:[%s1 + $0x2090] sm:$0xff]
    %v1078 = vld [vmem:[%s1 + $0x2098] sm:$0xff]
    %v1079 = vld [vmem:[%s1 + $0x20a0] sm:$0xff]
    %v1080 = vld [vmem:[%s1 + $0x20a8] sm:$0xff]
    %v1081 = vld [vmem:[%s1 + $0x20b0] sm:$0xff]
    %v1082 = vld [vmem:[%s1 + $0x20b8] sm:$0xff]
    %v1083 = vld [vmem:[%s1 + $0x20c0] sm:$0xff]
    %v1084 = vld [vmem:[%s1 + $0x20c8] sm:$0xff]
    %v1085 = vld [vmem:[%s1 + $0x20d0] sm:$0xff]
    %v1086 = vld [vmem:[%s1 + $0x20d8] sm:$0xff]
    %v1087 = vld [vmem:[%s1 + $0x20e0] sm:$0xff]
    %v1088 = vld [vmem:[%s1 + $0x20e8] sm:$0xff]
    %v1089 = vld [vmem:[%s1 + $0x20f0] sm:$0xff]
    %v1090 = vld [vmem:[%s1 + $0x20f8] sm:$0xff]
    %v1091 = vld [vmem:[%s1 + $0x2100] sm:$0xff]
    %v1092 = vld [vmem:[%s1 + $0x2108] sm:$0xff]
    %v1093 = vld [vmem:[%s1 + $0x2110] sm:$0xff]
    %v1094 = vld [vmem:[%s1 + $0x2118] sm:$0xff]
    %v1095 = vld [vmem:[%s1 + $0x2120] sm:$0xff]
    %v1096 = vld [vmem:[%s1 + $0x2128] sm:$0xff]
    %v1097 = vld [vmem:[%s1 + $0x2130] sm:$0xff]
    %v1098 = vld [vmem:[%s1 + $0x2138] sm:$0xff]
    %v1099 = vld [vmem:[%s1 + $0x2140] sm:$0xff]
    %v1100 = vld [vmem:[%s1 + $0x2148] sm:$0xff]
    %v1101 = vld [vmem:[%s1 + $0x2150] sm:$0xff]
    %v1102 = vld [vmem:[%s1 + $0x2158] sm:$0xff]
    %v1103 = vld [vmem:[%s1 + $0x2160] sm:$0xff]
    %v1104 = vld [vmem:[%s1 + $0x2168] sm:$0xff]
    %v1105 = vld [vmem:[%s1 + $0x2170] sm:$0xff]
    %v1106 = vld [vmem:[%s1 + $0x2178] sm:$0xff]
    %v1107 = vld [vmem:[%s1 + $0x2180] sm:$0xff]
    %v1108 = vld [vmem:[%s1 + $0x2188] sm:$0xff]
    %v1109 = vld [vmem:[%s1 + $0x2190] sm:$0xff]
    %v1110 = vld [vmem:[%s1 + $0x2198] sm:$0xff]
    %v1111 = vld [vmem:[%s1 + $0x21a0] sm:$0xff]
    %v1112 = vld [vmem:[%s1 + $0x21a8] sm:$0xff]
    %v1113 = vld [vmem:[%s1 + $0x21b0] sm:$0xff]
    %v1114 = vld [vmem:[%s1 + $0x21b8] sm:$0xff]
    %v1115 = vld [vmem:[%s1 + $0x21c0] sm:$0xff]
    %v1116 = vld [vmem:[%s1 + $0x21c8] sm:$0xff]
    %v1117 = vld [vmem:[%s1 + $0x21d0] sm:$0xff]
    %v1118 = vld [vmem:[%s1 + $0x21d8] sm:$0xff]
    %v1119 = vld [vmem:[%s1 + $0x21e0] sm:$0xff]
    %v1120 = vld [vmem:[%s1 + $0x21e8] sm:$0xff]
    %v1121 = vld [vmem:[%s1 + $0x21f0] sm:$0xff]
    %v1122 = vld [vmem:[%s1 + $0x21f8] sm:$0xff]
    %v1123 = vld [vmem:[%s1 + $0x2200] sm:$0xff]
    %v1124 = vld [vmem:[%s1 + $0x2208] sm:$0xff]
    %v1125 = vld [vmem:[%s1 + $0x2210] sm:$0xff]
    %v1126 = vld [vmem:[%s1 + $0x2218] sm:$0xff]
    %v1127 = vld [vmem:[%s1 + $0x2220] sm:$0xff]
    %v1128 = vld [vmem:[%s1 + $0x2228] sm:$0xff]
    %v1129 = vld [vmem:[%s1 + $0x2230] sm:$0xff]
    %v1130 = vld [vmem:[%s1 + $0x2238] sm:$0xff]
    %v1131 = vld [vmem:[%s1 + $0x2240] sm:$0xff]
    %v1132 = vld [vmem:[%s1 + $0x2248] sm:$0xff]
    %v1133 = vld [vmem:[%s1 + $0x2250] sm:$0xff]
    %v1134 = vld [vmem:[%s1 + $0x2258] sm:$0xff]
    %v1135 = vld [vmem:[%s1 + $0x2260] sm:$0xff]
    %v1136 = vld [vmem:[%s1 + $0x2268] sm:$0xff]
    %v1137 = vld [vmem:[%s1 + $0x2270] sm:$0xff]
    %v1138 = vld [vmem:[%s1 + $0x2278] sm:$0xff]
    %v1139 = vld [vmem:[%s1 + $0x2280] sm:$0xff]
    %v1140 = vld [vmem:[%s1 + $0x2288] sm:$0xff]
    %v1141 = vld [vmem:[%s1 + $0x2290] sm:$0xff]
    %v1142 = vld [vmem:[%s1 + $0x2298] sm:$0xff]
    %v1143 = vld [vmem:[%s1 + $0x22a0] sm:$0xff]
    %v1144 = vld [vmem:[%s1 + $0x22a8] sm:$0xff]
    %v1145 = vld [vmem:[%s1 + $0x22b0] sm:$0xff]
    %v1146 = vld [vmem:[%s1 + $0x22b8] sm:$0xff]
    %v1147 = vld [vmem:[%s1 + $0x22c0] sm:$0xff]
    %v1148 = vld [vmem:[%s1 + $0x22c8] sm:$0xff]
    %v1149 = vld [vmem:[%s1 + $0x22d0] sm:$0xff]
    %v1150 = vld [vmem:[%s1 + $0x22d8] sm:$0xff]
    %v1151 = vld [vmem:[%s1 + $0x22e0] sm:$0xff]
    %v1152 = vld [vmem:[%s1 + $0x22e8] sm:$0xff]
    %v1153 = vld [vmem:[%s1 + $0x22f0] sm:$0xff]
    %v1154 = vld [vmem:[%s1 + $0x22f8] sm:$0xff]
    %v1155 = vld [vmem:[%s1 + $0x2300] sm:$0xff]
    %v1156 = vld [vmem:[%s1 + $0x2308] sm:$0xff]
    %v1157 = vld [vmem:[%s1 + $0x2310] sm:$0xff]
    %v1158 = vld [vmem:[%s1 + $0x2318] sm:$0xff]
    %v1159 = vld [vmem:[%s1 + $0x2320] sm:$0xff]
    %v1160 = vld [vmem:[%s1 + $0x2328] sm:$0xff]
    %v1161 = vld [vmem:[%s1 + $0x2330] sm:$0xff]
    %v1162 = vld [vmem:[%s1 + $0x2338] sm:$0xff]
    %v1163 = vld [vmem:[%s1 + $0x2340] sm:$0xff]
    %v1164 = vld [vmem:[%s1 + $0x2348] sm:$0xff]
    %v1165 = vld [vmem:[%s1 + $0x2350] sm:$0xff]
    %v1166 = vld [vmem:[%s1 + $0x2358] sm:$0xff]
    %v1167 = vld [vmem:[%s1 + $0x2360] sm:$0xff]
    %v1168 = vld [vmem:[%s1 + $0x2368] sm:$0xff]
    %v1169 = vld [vmem:[%s1 + $0x2370] sm:$0xff]
    %v1170 = vld [vmem:[%s1 + $0x2378] sm:$0xff]
    %v1171 = vld [vmem:[%s1 + $0x2380] sm:$0xff]
    %v1172 = vld [vmem:[%s1 + $0x2388] sm:$0xff]
    %v1173 = vld [vmem:[%s1 + $0x2390] sm:$0xff]
    %v1174 = vld [vmem:[%s1 + $0x2398] sm:$0xff]
    %v1175 = vld [vmem:[%s1 + $0x23a0] sm:$0xff]
    %v1176 = vld [vmem:[%s1 + $0x23a8] sm:$0xff]
    %v1177 = vld [vmem:[%s1 + $0x23b0] sm:$0xff]
    %v1178 = vld [vmem:[%s1 + $0x23b8] sm:$0xff]
    %v1179 = vld [vmem:[%s1 + $0x23c0] sm:$0xff]
    %v1180 = vld [vmem:[%s1 + $0x23c8] sm:$0xff]
    %v1181 = vld [vmem:[%s1 + $0x23d0] sm:$0xff]
    %v1182 = vld [vmem:[%s1 + $0x23d8] sm:$0xff]
    %v1183 = vld [vmem:[%s1 + $0x23e0] sm:$0xff]
    %v1184 = vld [vmem:[%s1 + $0x23e8] sm:$0xff]
    %v1185 = vld [vmem:[%s1 + $0x23f0] sm:$0xff]
    %v1186 = vld [vmem:[%s1 + $0x23f8] sm:$0xff]
    %v1187 = vld [vmem:[%s1 + $0x2400] sm:$0xff]
    %v1188 = vld [vmem:[%s1 + $0x2408] sm:$0xff]
    %v1189 = vld [vmem:[%s1 + $0x2410] sm:$0xff]
    %v1190 = vld [vmem:[%s1 + $0x2418] sm:$0xff]
    %v1191 = vld [vmem:[%s1 + $0x2420] sm:$0xff]
    %v1192 = vld [vmem:[%s1 + $0x2428] sm:$0xff]
    %v1193 = vld [vmem:[%s1 + $0x2430] sm:$0xff]
    %v1194 = vld [vmem:[%s1 + $0x2438] sm:$0xff]
    %v1195 = vld [vmem:[%s1 + $0x2440] sm:$0xff]
    %v1196 = vld [vmem:[%s1 + $0x2448] sm:$0xff]
    %v1197 = vld [vmem:[%s1 + $0x2450] sm:$0xff]
    %v1198 = vld [vmem:[%s1 + $0x2458] sm:$0xff]
    %v1199 = vld [vmem:[%s1 + $0x2460] sm:$0xff]
    %v1200 = vld [vmem:[%s1 + $0x2468] sm:$0xff]
    %v1201 = vld [vmem:[%s1 + $0x2470] sm:$0xff]
    %v1202 = vld [vmem:[%s1 + $0x2478] sm:$0xff]
    %v1203 = vld [vmem:[%s1 + $0x2480] sm:$0xff]
    %v1204 = vld [vmem:[%s1 + $0x2488] sm:$0xff]
    %v1205 = vld [vmem:[%s1 + $0x2490] sm:$0xff]
    %v1206 = vld [vmem:[%s1 + $0x2498] sm:$0xff]
    %v1207 = vld [vmem:[%s1 + $0x24a0] sm:$0xff]
    %v1208 = vld [vmem:[%s1 + $0x24a8] sm:$0xff]
    %v1209 = vld [vmem:[%s1 + $0x24b0] sm:$0xff]
    %v1210 = vld [vmem:[%s1 + $0x24b8] sm:$0xff]
    %v1211 = vld [vmem:[%s1 + $0x24c0] sm:$0xff]
    %v1212 = vld [vmem:[%s1 + $0x24c8] sm:$0xff]
    %v1213 = vld [vmem:[%s1 + $0x24d0] sm:$0xff]
    %v1214 = vld [vmem:[%s1 + $0x24d8] sm:$0xff]
    %v1215 = vld [vmem:[%s1 + $0x24e0] sm:$0xff]
    %v1216 = vld [vmem:[%s1 + $0x24e8] sm:$0xff]
    %v1217 = vld [vmem:[%s1 + $0x24f0] sm:$0xff]
    %v1218 = vld [vmem:[%s1 + $0x24f8] sm:$0xff]
    %v1219 = vld [vmem:[%s1 + $0x2500] sm:$0xff]
    %v1220 = vld [vmem:[%s1 + $0x2508] sm:$0xff]
    %v1221 = vld [vmem:[%s1 + $0x2510] sm:$0xff]
    %v1222 = vld [vmem:[%s1 + $0x2518] sm:$0xff]
    %v1223 = vld [vmem:[%s1 + $0x2520] sm:$0xff]
    %v1224 = vld [vmem:[%s1 + $0x2528] sm:$0xff]
    %v1225 = vld [vmem:[%s1 + $0x2530] sm:$0xff]
    %v1226 = vld [vmem:[%s1 + $0x2538] sm:$0xff]
    %v1227 = vld [vmem:[%s1 + $0x2540] sm:$0xff]
    %v1228 = vld [vmem:[%s1 + $0x2548] sm:$0xff]
    %v1229 = vld [vmem:[%s1 + $0x2550] sm:$0xff]
    %v1230 = vld [vmem:[%s1 + $0x2558] sm:$0xff]
    %v1231 = vld [vmem:[%s1 + $0x2560] sm:$0xff]
    %v1232 = vld [vmem:[%s1 + $0x2568] sm:$0xff]
    %v1233 = vld [vmem:[%s1 + $0x2570] sm:$0xff]
    %v1234 = vld [vmem:[%s1 + $0x2578] sm:$0xff]
    %v1235 = vld [vmem:[%s1 + $0x2580] sm:$0xff]
    %v1236 = vld [vmem:[%s1 + $0x2588] sm:$0xff]
    %v1237 = vld [vmem:[%s1 + $0x2590] sm:$0xff]
    %v1238 = vld [vmem:[%s1 + $0x2598] sm:$0xff]
    %v1239 = vld [vmem:[%s1 + $0x25a0] sm:$0xff]
    %v1240 = vld [vmem:[%s1 + $0x25a8] sm:$0xff]
    %v1241 = vld [vmem:[%s1 + $0x25b0] sm:$0xff]
    %v1242 = vld [vmem:[%s1 + $0x25b8] sm:$0xff]
    %v1243 = vld [vmem:[%s1 + $0x25c0] sm:$0xff]
    %v1244 = vld [vmem:[%s1 + $0x25c8] sm:$0xff]
    %v1245 = vld [vmem:[%s1 + $0x25d0] sm:$0xff]
    %v1246 = vld [vmem:[%s1 + $0x25d8] sm:$0xff]
    %v1247 = vld [vmem:[%s1 + $0x25e0] sm:$0xff]
    %v1248 = vld [vmem:[%s1 + $0x25e8] sm:$0xff]
    %v1249 = vld [vmem:[%s1 + $0x25f0] sm:$0xff]
    %v1250 = vld [vmem:[%s1 + $0x25f8] sm:$0xff]
    %v1251 = vld [vmem:[%s1 + $0x2600] sm:$0xff]
    %v1252 = vld [vmem:[%s1 + $0x2608] sm:$0xff]
    %v1253 = vld [vmem:[%s1 + $0x2610] sm:$0xff]
    %v1254 = vld [vmem:[%s1 + $0x2618] sm:$0xff]
    %v1255 = vld [vmem:[%s1 + $0x2620] sm:$0xff]
    %v1256 = vld [vmem:[%s1 + $0x2628] sm:$0xff]
    %v1257 = vld [vmem:[%s1 + $0x2630] sm:$0xff]
    %v1258 = vld [vmem:[%s1 + $0x2638] sm:$0xff]
    %v1259 = vld [vmem:[%s1 + $0x2640] sm:$0xff]
    %v1260 = vld [vmem:[%s1 + $0x2648] sm:$0xff]
    %v1261 = vld [vmem:[%s1 + $0x2650] sm:$0xff]
    %v1262 = vld [vmem:[%s1 + $0x2658] sm:$0xff]
    %v1263 = vld [vmem:[%s1 + $0x2660] sm:$0xff]
    %v1264 = vld [vmem:[%s1 + $0x2668] sm:$0xff]
    %v1265 = vld [vmem:[%s1 + $0x2670] sm:$0xff]
    %v1266 = vld [vmem:[%s1 + $0x2678] sm:$0xff]
    %v1267 = vld [vmem:[%s1 + $0x2680] sm:$0xff]
    %v1268 = vld [vmem:[%s1 + $0x2688] sm:$0xff]
    %v1269 = vld [vmem:[%s1 + $0x2690] sm:$0xff]
    %v1270 = vld [vmem:[%s1 + $0x2698] sm:$0xff]
    %v1271 = vld [vmem:[%s1 + $0x26a0] sm:$0xff]
    %v1272 = vld [vmem:[%s1 + $0x26a8] sm:$0xff]
    %v1273 = vld [vmem:[%s1 + $0x26b0] sm:$0xff]
    %v1274 = vld [vmem:[%s1 + $0x26b8] sm:$0xff]
    %v1275 = vld [vmem:[%s1 + $0x26c0] sm:$0xff]
    %v1276 = vld [vmem:[%s1 + $0x26c8] sm:$0xff]
    %v1277 = vld [vmem:[%s1 + $0x26d0] sm:$0xff]
    %v1278 = vld [vmem:[%s1 + $0x26d8] sm:$0xff]
    %v1279 = vld [vmem:[%s1 + $0x26e0] sm:$0xff]
    %v1280 = vld [vmem:[%s1 + $0x26e8] sm:$0xff]
    %v1281 = vld [vmem:[%s1 + $0x26f0] sm:$0xff]
    %v1282 = vld [vmem:[%s1 + $0x26f8] sm:$0xff]
    %v1283 = vld [vmem:[%s1 + $0x2700] sm:$0xff]
    %v1284 = vld [vmem:[%s1 + $0x2708] sm:$0xff]
    %v1285 = vld [vmem:[%s1 + $0x2710] sm:$0xff]
    %v1286 = vld [vmem:[%s1 + $0x2718] sm:$0xff]
    %v1287 = vld [vmem:[%s1 + $0x2720] sm:$0xff]
    %v1288 = vld [vmem:[%s1 + $0x2728] sm:$0xff]
    %v1289 = vld [vmem:[%s1 + $0x2730] sm:$0xff]
    %v1290 = vld [vmem:[%s1 + $0x2738] sm:$0xff]
    %v1291 = vld [vmem:[%s1 + $0x2740] sm:$0xff]
    %v1292 = vld [vmem:[%s1 + $0x2748] sm:$0xff]
    %v1293 = vld [vmem:[%s1 + $0x2750] sm:$0xff]
    %v1294 = vld [vmem:[%s1 + $0x2758] sm:$0xff]
    %v1295 = vld [vmem:[%s1 + $0x2760] sm:$0xff]
    %v1296 = vld [vmem:[%s1 + $0x2768] sm:$0xff]
    %v1297 = vld [vmem:[%s1 + $0x2770] sm:$0xff]
    %v1298 = vld [vmem:[%s1 + $0x2778] sm:$0xff]
    %v1299 = vld [vmem:[%s1 + $0x2780] sm:$0xff]
    %v1300 = vld [vmem:[%s1 + $0x2788] sm:$0xff]
    %v1301 = vld [vmem:[%s1 + $0x2790] sm:$0xff]
    %v1302 = vld [vmem:[%s1 + $0x2798] sm:$0xff]
    %v1303 = vld [vmem:[%s1 + $0x27a0] sm:$0xff]
    %v1304 = vld [vmem:[%s1 + $0x27a8] sm:$0xff]
    %v1305 = vld [vmem:[%s1 + $0x27b0] sm:$0xff]
    %v1306 = vld [vmem:[%s1 + $0x27b8] sm:$0xff]
    %v1307 = vld [vmem:[%s1 + $0x27c0] sm:$0xff]
    %v1308 = vld [vmem:[%s1 + $0x27c8] sm:$0xff]
    %v1309 = vld [vmem:[%s2] sm:$0xff]
    %v1310 = vld [vmem:[%s2 + $0x8] sm:$0x1f]
    %v1313 = vlaneseq
    %v1314 = vshrl.u32 %v1313, 7
    %v1315 = vsub.s32 0, %v1314
    %v1316 = vrot.slane %v1309, %v1315
    %v1317 = vlaneseq
    %v1318 = vshrl.u32 %v1317, 7
    %v1319 = vsub.s32 1, %v1318
    %v1320 = vrot.slane %v1309, %v1319
    %v1321 = vlaneseq
    %v1322 = vshrl.u32 %v1321, 7
    %v1323 = vsub.s32 2, %v1322
    %v1324 = vrot.slane %v1309, %v1323
    %v1325 = vlaneseq
    %v1326 = vshrl.u32 %v1325, 7
    %v1327 = vsub.s32 3, %v1326
    %v1328 = vrot.slane %v1309, %v1327
    %v1329 = vlaneseq
    %v1330 = vshrl.u32 %v1329, 7
    %v1331 = vsub.s32 4, %v1330
    %v1332 = vrot.slane %v1309, %v1331
    %v1333 = vlaneseq
    %v1334 = vshrl.u32 %v1333, 7
    %v1335 = vsub.s32 5, %v1334
    %v1336 = vrot.slane %v1309, %v1335
    %v1337 = vlaneseq
    %v1338 = vshrl.u32 %v1337, 7
    %v1339 = vsub.s32 6, %v1338
    %v1340 = vrot.slane %v1309, %v1339
    %v1341 = vlaneseq
    %v1342 = vshrl.u32 %v1341, 7
    %v1343 = vsub.s32 7, %v1342
    %v1344 = vrot.slane %v1309, %v1343
    %v1345 = vlaneseq
    %v1346 = vshrl.u32 %v1345, 7
    %v1347 = vsub.s32 0, %v1346
    %v1348 = vrot.slane %v1310, %v1347
    %v1349 = vlaneseq
    %v1350 = vshrl.u32 %v1349, 7
    %v1351 = vsub.s32 1, %v1350
    %v1352 = vrot.slane %v1310, %v1351
    %v1353 = vlaneseq
    %v1354 = vshrl.u32 %v1353, 7
    %v1355 = vsub.s32 2, %v1354
    %v1356 = vrot.slane %v1310, %v1355
    %v1357 = vlaneseq
    %v1358 = vshrl.u32 %v1357, 7
    %v1359 = vsub.s32 3, %v1358
    %v1360 = vrot.slane %v1310, %v1359
    %v1361 = vlaneseq
    %v1362 = vshrl.u32 %v1361, 7
    %v1363 = vsub.s32 4, %v1362
    %v1364 = vrot.slane %v1310, %v1363
    %v1380 = vcombine.high %v33, %v33
    %v1382 = vunpack.c.l.s4 1983009808
    %v1383 = vunpack.c.0.s8 %v1382
    %v1384 = vlaneseq
    %v1385 = vshrl.u32 %v1384, 7
    %v1386 = vsub.s32 %v1383, %v1385
    %v1387 = vrot.slane %v33, %v1386
    %v1389 = vunpack.c.l.s4 1983009808
    %v1390 = vunpack.c.0.s8 %v1389
    %v1391 = vlaneseq
    %v1392 = vshrl.u32 %v1391, 7
    %v1393 = vsub.s32 %v1390, %v1392
    %v1394 = vrot.slane %v1380, %v1393
    %v1395 = vcombine.high %v1387, %v1387
    %v1396 = vcombine.high %v1394, %v1394
    %v1397 = vcombine.high %v34, %v34
    %v1399 = vunpack.c.l.s4 1983009808
    %v1400 = vunpack.c.0.s8 %v1399
    %v1401 = vlaneseq
    %v1402 = vshrl.u32 %v1401, 7
    %v1403 = vsub.s32 %v1400, %v1402
    %v1404 = vrot.slane %v34, %v1403
    %v1406 = vunpack.c.l.s4 1983009808
    %v1407 = vunpack.c.0.s8 %v1406
    %v1408 = vlaneseq
    %v1409 = vshrl.u32 %v1408, 7
    %v1410 = vsub.s32 %v1407, %v1409
    %v1411 = vrot.slane %v1397, %v1410
    %v1412 = vcombine.high %v1404, %v1404
    %vm1419 = vcmask 130048
    %v1420 = vsel %vm1419, %v1411, 0
    %1422 = vmatprep.subr.mxu0 %v36
    %1423 = vmatpush1.msra.mxu0 %v35
    %1424 = vmatprep.subr.mxu0 %v49
    %1425 = vmatpush1.msra.mxu0 %v48
    %1426 = vmatprep.subr.mxu0 %v62
    %1427 = vmatpush1.msra.mxu0 %v61
    %1428 = vmatprep.subr.mxu0 %v75
    %1429 = vmatpush1.msra.mxu0 %v74
    %1430 = vmatprep.subr.mxu0 %v88
    %1431 = vmatpush1.msra.mxu0 %v87
    %1432 = vmatprep.subr.mxu0 %v101
    %1433 = vmatpush1.msra.mxu0 %v100
    %1434 = vmatprep.subr.mxu0 %v114
    %1435 = vmatpush1.msra.mxu0 %v113
    %1436 = vmatprep.subr.mxu0 %v127
    %1437 = vmatpush1.msra.mxu0 %v126
    %1438 = vmatprep.subr.mxu0 %v140
    %1439 = vmatpush1.msra.mxu0 %v139
    %1440 = vmatprep.subr.mxu0 %v153
    %1441 = vmatpush1.msra.mxu0 %v152
    %1442 = vmatprep.subr.mxu0 %v166
    %1443 = vmatpush1.msra.mxu0 %v165
    %1444 = vmatprep.subr.mxu0 %v179
    %1445 = vmatpush1.msra.mxu0 %v178
    %1446 = vmatprep.subr.mxu0 %v192
    %1447 = vmatpush1.msra.mxu0 %v191
    %1448 = vmatprep.subr.mxu0 %v205
    %1449 = vmatpush1.msra.mxu0 %v204
    %1450 = vmatprep.subr.mxu0 %v218
    %1451 = vmatpush1.msra.mxu0 %v217
    %1452 = vmatprep.subr.mxu0 %v231
    %1453 = vmatpush1.msra.mxu0 %v230
    %1454 = vmatprep.subr.mxu0 %v244
    %1455 = vmatpush1.msra.mxu0 %v243
    %1456 = vmatprep.subr.mxu0 %v257
    %1457 = vmatpush1.msra.mxu0 %v256
    %1458 = vmatprep.subr.mxu0 %v270
    %1459 = vmatpush1.msra.mxu0 %v269
    %1460 = vmatprep.subr.mxu0 %v283
    %1461 = vmatpush1.msra.mxu0 %v282
    %1462 = vmatprep.subr.mxu0 %v296
    %1463 = vmatpush1.msra.mxu0 %v295
    %1464 = vmatprep.subr.mxu0 %v309
    %1465 = vmatpush1.msra.mxu0 %v308
    %1466 = vmatprep.subr.mxu0 %v322
    %1467 = vmatpush1.msra.mxu0 %v321
    %1468 = vmatprep.subr.mxu0 %v335
    %1469 = vmatpush1.msra.mxu0 %v334
    %1470 = vmatprep.subr.mxu0 %v348
    %1471 = vmatpush1.msra.mxu0 %v347
    %1472 = vmatprep.subr.mxu0 %v361
    %1473 = vmatpush1.msra.mxu0 %v360
    %1474 = vmatprep.subr.mxu0 %v374
    %1475 = vmatpush1.msra.mxu0 %v373
    %1476 = vmatprep.subr.mxu0 %v387
    %1477 = vmatpush1.msra.mxu0 %v386
    %1478 = vmatprep.subr.mxu0 %v400
    %1479 = vmatpush1.msra.mxu0 %v399
    %1480 = vmatprep.subr.mxu0 %v413
    %1481 = vmatpush1.msra.mxu0 %v412
    %1482 = vmatprep.subr.mxu0 %v426
    %1483 = vmatpush1.msra.mxu0 %v425
    %1484 = vmatprep.subr.mxu0 %v439
    %1485 = vmatpush1.msra.mxu0 %v438
    %1486 = vmatprep.mubr.f32.mxu0 %v1395
    %1487 = vmatmul.mubr.f32.gmra.mrb[0].mxu0 %v1387
    %v1488 = vpop.f32.mrb[0].mxu0
    %v1489 = vadd.f32 %v1316, %v1488
    %v1490 = vpop.f32.mrb[0].mxu0
    %v1491 = vadd.f32 %v1320, %v1490
    %1492 = vdwg.mxu0
    %1493 = vmatprep.subr.mxu0 %v452
    %1494 = vmatpush1.msra.mxu0 %v451
    %1495 = vmatprep.subr.mxu0 %v465
    %1496 = vmatpush1.msra.mxu0 %v464
    %1497 = vmatprep.subr.mxu0 %v478
    %1498 = vmatpush1.msra.mxu0 %v477
    %1499 = vmatprep.subr.mxu0 %v491
    %1500 = vmatpush1.msra.mxu0 %v490
    %1501 = vmatprep.subr.mxu0 %v504
    %1502 = vmatpush1.msra.mxu0 %v503
    %1503 = vmatprep.subr.mxu0 %v517
    %1504 = vmatpush1.msra.mxu0 %v516
    %1505 = vmatprep.subr.mxu0 %v530
    %1506 = vmatpush1.msra.mxu0 %v529
    %1507 = vmatprep.subr.mxu0 %v543
    %1508 = vmatpush1.msra.mxu0 %v542
    %1509 = vmatprep.subr.mxu0 %v556
    %1510 = vmatpush1.msra.mxu0 %v555
    %1511 = vmatprep.subr.mxu0 %v569
    %1512 = vmatpush1.msra.mxu0 %v568
    %1513 = vmatprep.subr.mxu0 %v582
    %1514 = vmatpush1.msra.mxu0 %v581
    %1515 = vmatprep.subr.mxu0 %v595
    %1516 = vmatpush1.msra.mxu0 %v594
    %1517 = vmatprep.subr.mxu0 %v608
    %1518 = vmatpush1.msra.mxu0 %v607
    %1519 = vmatprep.subr.mxu0 %v621
    %1520 = vmatpush1.msra.mxu0 %v620
    %1521 = vmatprep.subr.mxu0 %v634
    %1522 = vmatpush1.msra.mxu0 %v633
    %1523 = vmatprep.subr.mxu0 %v647
    %1524 = vmatpush1.msra.mxu0 %v646
    %1525 = vmatprep.subr.mxu0 %v660
    %1526 = vmatpush1.msra.mxu0 %v659
    %1527 = vmatprep.subr.mxu0 %v673
    %1528 = vmatpush1.msra.mxu0 %v672
    %1529 = vmatprep.subr.mxu0 %v686
    %1530 = vmatpush1.msra.mxu0 %v685
    %1531 = vmatprep.subr.mxu0 %v699
    %1532 = vmatpush1.msra.mxu0 %v698
    %1533 = vmatprep.subr.mxu0 %v712
    %1534 = vmatpush1.msra.mxu0 %v711
    %1535 = vmatprep.subr.mxu0 %v725
    %1536 = vmatpush1.msra.mxu0 %v724
    %1537 = vmatprep.subr.mxu0 %v738
    %1538 = vmatpush1.msra.mxu0 %v737
    %1539 = vmatprep.subr.mxu0 %v751
    %1540 = vmatpush1.msra.mxu0 %v750
    %1541 = vmatprep.subr.mxu0 %v764
    %1542 = vmatpush1.msra.mxu0 %v763
    %1543 = vmatprep.subr.mxu0 %v777
    %1544 = vmatpush1.msra.mxu0 %v776
    %1545 = vmatprep.subr.mxu0 %v790
    %1546 = vmatpush1.msra.mxu0 %v789
    %1547 = vmatprep.subr.mxu0 %v803
    %1548 = vmatpush1.msra.mxu0 %v802
    %1549 = vmatprep.subr.mxu0 %v816
    %1550 = vmatpush1.msra.mxu0 %v815
    %1551 = vmatprep.subr.mxu0 %v829
    %1552 = vmatpush1.msra.mxu0 %v828
    %1553 = vmatprep.subr.mxu0 %v842
    %1554 = vmatpush1.msra.mxu0 %v841
    %1555 = vmatprep.subr.mxu0 %v855
    %1556 = vmatpush1.msra.mxu0 %v854
    %1557 = vmatprep.mubr.f32.mxu0 %v1396
    %1558 = vmatmul.mubr.f32.gmra.mrb[0].mxu0 %v1394
    %v1559 = vpop.f32.mrb[0].mxu0
    %v1560 = vadd.f32 %v1489, %v1559
    %v1561 = vpop.f32.mrb[0].mxu0
    %v1562 = vadd.f32 %v1491, %v1561
    %1563 = vdwg.mxu0
    %1564 = vmatprep.subr.mxu0 %v868
    %1565 = vmatpush1.msra.mxu0 %v867
    %1566 = vmatprep.subr.mxu0 %v881
    %1567 = vmatpush1.msra.mxu0 %v880
    %1568 = vmatprep.subr.mxu0 %v894
    %1569 = vmatpush1.msra.mxu0 %v893
    %1570 = vmatprep.subr.mxu0 %v907
    %1571 = vmatpush1.msra.mxu0 %v906
    %1572 = vmatprep.subr.mxu0 %v920
    %1573 = vmatpush1.msra.mxu0 %v919
    %1574 = vmatprep.subr.mxu0 %v933
    %1575 = vmatpush1.msra.mxu0 %v932
    %1576 = vmatprep.subr.mxu0 %v946
    %1577 = vmatpush1.msra.mxu0 %v945
    %1578 = vmatprep.subr.mxu0 %v959
    %1579 = vmatpush1.msra.mxu0 %v958
    %1580 = vmatprep.subr.mxu0 %v972
    %1581 = vmatpush1.msra.mxu0 %v971
    %1582 = vmatprep.subr.mxu0 %v985
    %1583 = vmatpush1.msra.mxu0 %v984
    %1584 = vmatprep.subr.mxu0 %v998
    %1585 = vmatpush1.msra.mxu0 %v997
    %1586 = vmatprep.subr.mxu0 %v1011
    %1587 = vmatpush1.msra.mxu0 %v1010
    %1588 = vmatprep.subr.mxu0 %v1024
    %1589 = vmatpush1.msra.mxu0 %v1023
    %1590 = vmatprep.subr.mxu0 %v1037
    %1591 = vmatpush1.msra.mxu0 %v1036
    %1592 = vmatprep.subr.mxu0 %v1050
    %1593 = vmatpush1.msra.mxu0 %v1049
    %1594 = vmatprep.subr.mxu0 %v1063
    %1595 = vmatpush1.msra.mxu0 %v1062
    %1596 = vmatprep.subr.mxu0 %v1076
    %1597 = vmatpush1.msra.mxu0 %v1075
    %1598 = vmatprep.subr.mxu0 %v1089
    %1599 = vmatpush1.msra.mxu0 %v1088
    %1600 = vmatprep.subr.mxu0 %v1102
    %1601 = vmatpush1.msra.mxu0 %v1101
    %1602 = vmatprep.subr.mxu0 %v1115
    %1603 = vmatpush1.msra.mxu0 %v1114
    %1604 = vmatprep.subr.mxu0 %v1128
    %1605 = vmatpush1.msra.mxu0 %v1127
    %1606 = vmatprep.subr.mxu0 %v1141
    %1607 = vmatpush1.msra.mxu0 %v1140
    %1608 = vmatprep.subr.mxu0 %v1154
    %1609 = vmatpush1.msra.mxu0 %v1153
    %1610 = vmatprep.subr.mxu0 %v1167
    %1611 = vmatpush1.msra.mxu0 %v1166
    %1612 = vmatprep.subr.mxu0 %v1180
    %1613 = vmatpush1.msra.mxu0 %v1179
    %1614 = vmatprep.subr.mxu0 %v1193
    %1615 = vmatpush1.msra.mxu0 %v1192
    %1616 = vmatprep.subr.mxu0 %v1206
    %1617 = vmatpush1.msra.mxu0 %v1205
    %1618 = vmatprep.subr.mxu0 %v1219
    %1619 = vmatpush1.msra.mxu0 %v1218
    %1620 = vmatprep.subr.mxu0 %v1232
    %1621 = vmatpush1.msra.mxu0 %v1231
    %1622 = vmatprep.subr.mxu0 %v1245
    %1623 = vmatpush1.msra.mxu0 %v1244
    %1624 = vmatprep.subr.mxu0 %v1258
    %1625 = vmatpush1.msra.mxu0 %v1257
    %1626 = vmatprep.subr.mxu0 %v1271
    %1627 = vmatpush1.msra.mxu0 %v1270
    %1628 = vmatprep.mubr.f32.mxu0 %v1412
    %1629 = vmatmul.mubr.f32.gmra.mrb[0].mxu0 %v1404
    %v1630 = vpop.f32.mrb[0].mxu0
    %v1631 = vadd.f32 %v1560, %v1630
    %v1632 = vpop.f32.mrb[0].mxu0
    %v1633 = vadd.f32 %v1562, %v1632
    %1634 = vdwg.mxu0
    %1635 = vmatprep.subr.mxu0 %v1284
    %1636 = vmatpush1.msra.mxu0 %v1283
    %1637 = vmatprep.subr.mxu0 %v1297
    %1638 = vmatpush1.msra.mxu0 %v1296
    %1639 = vmatprep.subr.mxu0 0.0
    %1640 = vmatpush1.msra.mxu0 0.0
    %1641 = vmatprep.subr.mxu0 0.0
    %1642 = vmatpush1.msra.mxu0 0.0
    %1643 = vmatprep.subr.mxu0 0.0
    %1644 = vmatpush1.msra.mxu0 0.0
    %1645 = vmatprep.subr.mxu0 0.0
    %1646 = vmatpush1.msra.mxu0 0.0
    %1647 = vmatprep.subr.mxu0 0.0
    %1648 = vmatpush1.msra.mxu0 0.0
    %1649 = vmatprep.subr.mxu0 0.0
    %1650 = vmatpush1.msra.mxu0 0.0
    %1651 = vmatprep.subr.mxu0 0.0
    %1652 = vmatpush1.msra.mxu0 0.0
    %1653 = vmatprep.subr.mxu0 0.0
    %1654 = vmatpush1.msra.mxu0 0.0
    %1655 = vmatprep.subr.mxu0 0.0
    %1656 = vmatpush1.msra.mxu0 0.0
    %1657 = vmatprep.subr.mxu0 0.0
    %1658 = vmatpush1.msra.mxu0 0.0
    %1659 = vmatprep.subr.mxu0 0.0
    %1660 = vmatpush1.msra.mxu0 0.0
    %1661 = vmatprep.subr.mxu0 0.0
    %1662 = vmatpush1.msra.mxu0 0.0
    %1663 = vmatprep.subr.mxu0 0.0
    %1664 = vmatpush1.msra.mxu0 0.0
    %1665 = vmatprep.subr.mxu0 0.0
    %1666 = vmatpush1.msra.mxu0 0.0
    %1667 = vmatprep.subr.mxu0 0.0
    %1668 = vmatpush1.msra.mxu0 0.0
    %1669 = vmatprep.subr.mxu0 0.0
    %1670 = vmatpush1.msra.mxu0 0.0
    %1671 = vmatprep.subr.mxu0 0.0
    %1672 = vmatpush1.msra.mxu0 0.0
    %1673 = vmatprep.subr.mxu0 0.0
    %1674 = vmatpush1.msra.mxu0 0.0
    %1675 = vmatprep.subr.mxu0 0.0
    %1676 = vmatpush1.msra.mxu0 0.0
    %1677 = vmatprep.subr.mxu0 0.0
    %1678 = vmatpush1.msra.mxu0 0.0
    %1679 = vmatprep.subr.mxu0 0.0
    %1680 = vmatpush1.msra.mxu0 0.0
    %1681 = vmatprep.subr.mxu0 0.0
    %1682 = vmatpush1.msra.mxu0 0.0
    %1683 = vmatprep.subr.mxu0 0.0
    %1684 = vmatpush1.msra.mxu0 0.0
    %1685 = vmatprep.subr.mxu0 0.0
    %1686 = vmatpush1.msra.mxu0 0.0
    %1687 = vmatprep.subr.mxu0 0.0
    %1688 = vmatpush1.msra.mxu0 0.0
    %1689 = vmatprep.subr.mxu0 0.0
    %1690 = vmatpush1.msra.mxu0 0.0
    %1691 = vmatprep.subr.mxu0 0.0
    %1692 = vmatpush1.msra.mxu0 0.0
    %1693 = vmatprep.subr.mxu0 0.0
    %1694 = vmatpush1.msra.mxu0 0.0
    %1695 = vmatprep.subr.mxu0 0.0
    %1696 = vmatpush1.msra.mxu0 0.0
    %1697 = vmatprep.subr.mxu0 0.0
    %1698 = vmatpush1.msra.mxu0 0.0
    %1699 = vmatprep.mubr.f32.mxu0 0.0
    %1700 = vmatmul.mubr.f32.gmra.mrb[0].mxu0 %v1420
    %v1701 = vpop.f32.mrb[0].mxu0
    %v1702 = vadd.f32 %v1631, %v1701
    %v1703 = vpop.f32.mrb[0].mxu0
    %v1704 = vadd.f32 %v1633, %v1703
    %1705 = vdwg.mxu0
    %1706 = vmatprep.subr.mxu0 %v38
    %1707 = vmatpush1.msra.mxu0 %v37
    %1708 = vmatprep.subr.mxu0 %v51
    %1709 = vmatpush1.msra.mxu0 %v50
    %1710 = vmatprep.subr.mxu0 %v64
    %1711 = vmatpush1.msra.mxu0 %v63
    %1712 = vmatprep.subr.mxu0 %v77
    %1713 = vmatpush1.msra.mxu0 %v76
    %1714 = vmatprep.subr.mxu0 %v90
    %1715 = vmatpush1.msra.mxu0 %v89
    %1716 = vmatprep.subr.mxu0 %v103
    %1717 = vmatpush1.msra.mxu0 %v102
    %1718 = vmatprep.subr.mxu0 %v116
    %1719 = vmatpush1.msra.mxu0 %v115
    %1720 = vmatprep.subr.mxu0 %v129
    %1721 = vmatpush1.msra.mxu0 %v128
    %1722 = vmatprep.subr.mxu0 %v142
    %1723 = vmatpush1.msra.mxu0 %v141
    %1724 = vmatprep.subr.mxu0 %v155
    %1725 = vmatpush1.msra.mxu0 %v154
    %1726 = vmatprep.subr.mxu0 %v168
    %1727 = vmatpush1.msra.mxu0 %v167
    %1728 = vmatprep.subr.mxu0 %v181
    %1729 = vmatpush1.msra.mxu0 %v180
    %1730 = vmatprep.subr.mxu0 %v194
    %1731 = vmatpush1.msra.mxu0 %v193
    %1732 = vmatprep.subr.mxu0 %v207
    %1733 = vmatpush1.msra.mxu0 %v206
    %1734 = vmatprep.subr.mxu0 %v220
    %1735 = vmatpush1.msra.mxu0 %v219
    %1736 = vmatprep.subr.mxu0 %v233
    %1737 = vmatpush1.msra.mxu0 %v232
    %1738 = vmatprep.subr.mxu0 %v246
    %1739 = vmatpush1.msra.mxu0 %v245
    %1740 = vmatprep.subr.mxu0 %v259
    %1741 = vmatpush1.msra.mxu0 %v258
    %1742 = vmatprep.subr.mxu0 %v272
    %1743 = vmatpush1.msra.mxu0 %v271
    %1744 = vmatprep.subr.mxu0 %v285
    %1745 = vmatpush1.msra.mxu0 %v284
    %1746 = vmatprep.subr.mxu0 %v298
    %1747 = vmatpush1.msra.mxu0 %v297
    %1748 = vmatprep.subr.mxu0 %v311
    %1749 = vmatpush1.msra.mxu0 %v310
    %1750 = vmatprep.subr.mxu0 %v324
    %1751 = vmatpush1.msra.mxu0 %v323
    %1752 = vmatprep.subr.mxu0 %v337
    %1753 = vmatpush1.msra.mxu0 %v336
    %1754 = vmatprep.subr.mxu0 %v350
    %1755 = vmatpush1.msra.mxu0 %v349
    %1756 = vmatprep.subr.mxu0 %v363
    %1757 = vmatpush1.msra.mxu0 %v362
    %1758 = vmatprep.subr.mxu0 %v376
    %1759 = vmatpush1.msra.mxu0 %v375
    %1760 = vmatprep.subr.mxu0 %v389
    %1761 = vmatpush1.msra.mxu0 %v388
    %1762 = vmatprep.subr.mxu0 %v402
    %1763 = vmatpush1.msra.mxu0 %v401
    %1764 = vmatprep.subr.mxu0 %v415
    %1765 = vmatpush1.msra.mxu0 %v414
    %1766 = vmatprep.subr.mxu0 %v428
    %1767 = vmatpush1.msra.mxu0 %v427
    %1768 = vmatprep.subr.mxu0 %v441
    %1769 = vmatpush1.msra.mxu0 %v440
    %1770 = vmatprep.mubr.f32.mxu0 %v1395
    %1771 = vmatmul.mubr.f32.gmra.mrb[0].mxu0 %v1387
    %v1772 = vpop.f32.mrb[0].mxu0
    %v1773 = vadd.f32 %v1324, %v1772
    %v1774 = vpop.f32.mrb[0].mxu0
    %v1775 = vadd.f32 %v1328, %v1774
    %1776 = vdwg.mxu0
    %1777 = vmatprep.subr.mxu0 %v454
    %1778 = vmatpush1.msra.mxu0 %v453
    %1779 = vmatprep.subr.mxu0 %v467
    %1780 = vmatpush1.msra.mxu0 %v466
    %1781 = vmatprep.subr.mxu0 %v480
    %1782 = vmatpush1.msra.mxu0 %v479
    %1783 = vmatprep.subr.mxu0 %v493
    %1784 = vmatpush1.msra.mxu0 %v492
    %1785 = vmatprep.subr.mxu0 %v506
    %1786 = vmatpush1.msra.mxu0 %v505
    %1787 = vmatprep.subr.mxu0 %v519
    %1788 = vmatpush1.msra.mxu0 %v518
    %1789 = vmatprep.subr.mxu0 %v532
    %1790 = vmatpush1.msra.mxu0 %v531
    %1791 = vmatprep.subr.mxu0 %v545
    %1792 = vmatpush1.msra.mxu0 %v544
    %1793 = vmatprep.subr.mxu0 %v558
    %1794 = vmatpush1.msra.mxu0 %v557
    %1795 = vmatprep.subr.mxu0 %v571
    %1796 = vmatpush1.msra.mxu0 %v570
    %1797 = vmatprep.subr.mxu0 %v584
    %1798 = vmatpush1.msra.mxu0 %v583
    %1799 = vmatprep.subr.mxu0 %v597
    %1800 = vmatpush1.msra.mxu0 %v596
    %1801 = vmatprep.subr.mxu0 %v610
    %1802 = vmatpush1.msra.mxu0 %v609
    %1803 = vmatprep.subr.mxu0 %v623
    %1804 = vmatpush1.msra.mxu0 %v622
    %1805 = vmatprep.subr.mxu0 %v636
    %1806 = vmatpush1.msra.mxu0 %v635
    %1807 = vmatprep.subr.mxu0 %v649
    %1808 = vmatpush1.msra.mxu0 %v648
    %1809 = vmatprep.subr.mxu0 %v662
    %1810 = vmatpush1.msra.mxu0 %v661
    %1811 = vmatprep.subr.mxu0 %v675
    %1812 = vmatpush1.msra.mxu0 %v674
    %1813 = vmatprep.subr.mxu0 %v688
    %1814 = vmatpush1.msra.mxu0 %v687
    %1815 = vmatprep.subr.mxu0 %v701
    %1816 = vmatpush1.msra.mxu0 %v700
    %1817 = vmatprep.subr.mxu0 %v714
    %1818 = vmatpush1.msra.mxu0 %v713
    %1819 = vmatprep.subr.mxu0 %v727
    %1820 = vmatpush1.msra.mxu0 %v726
    %1821 = vmatprep.subr.mxu0 %v740
    %1822 = vmatpush1.msra.mxu0 %v739
    %1823 = vmatprep.subr.mxu0 %v753
    %1824 = vmatpush1.msra.mxu0 %v752
    %1825 = vmatprep.subr.mxu0 %v766
    %1826 = vmatpush1.msra.mxu0 %v765
    %1827 = vmatprep.subr.mxu0 %v779
    %1828 = vmatpush1.msra.mxu0 %v778
    %1829 = vmatprep.subr.mxu0 %v792
    %1830 = vmatpush1.msra.mxu0 %v791
    %1831 = vmatprep.subr.mxu0 %v805
    %1832 = vmatpush1.msra.mxu0 %v804
    %1833 = vmatprep.subr.mxu0 %v818
    %1834 = vmatpush1.msra.mxu0 %v817
    %1835 = vmatprep.subr.mxu0 %v831
    %1836 = vmatpush1.msra.mxu0 %v830
    %1837 = vmatprep.subr.mxu0 %v844
    %1838 = vmatpush1.msra.mxu0 %v843
    %1839 = vmatprep.subr.mxu0 %v857
    %1840 = vmatpush1.msra.mxu0 %v856
    %1841 = vmatprep.mubr.f32.mxu0 %v1396
    %1842 = vmatmul.mubr.f32.gmra.mrb[0].mxu0 %v1394
    %v1843 = vpop.f32.mrb[0].mxu0
    %v1844 = vadd.f32 %v1773, %v1843
    %v1845 = vpop.f32.mrb[0].mxu0
    %v1846 = vadd.f32 %v1775, %v1845
    %1847 = vdwg.mxu0
    %1848 = vmatprep.subr.mxu0 %v870
    %1849 = vmatpush1.msra.mxu0 %v869
    %1850 = vmatprep.subr.mxu0 %v883
    %1851 = vmatpush1.msra.mxu0 %v882
    %1852 = vmatprep.subr.mxu0 %v896
    %1853 = vmatpush1.msra.mxu0 %v895
    %1854 = vmatprep.subr.mxu0 %v909
    %1855 = vmatpush1.msra.mxu0 %v908
    %1856 = vmatprep.subr.mxu0 %v922
    %1857 = vmatpush1.msra.mxu0 %v921
    %1858 = vmatprep.subr.mxu0 %v935
    %1859 = vmatpush1.msra.mxu0 %v934
    %1860 = vmatprep.subr.mxu0 %v948
    %1861 = vmatpush1.msra.mxu0 %v947
    %1862 = vmatprep.subr.mxu0 %v961
    %1863 = vmatpush1.msra.mxu0 %v960
    %1864 = vmatprep.subr.mxu0 %v974
    %1865 = vmatpush1.msra.mxu0 %v973
    %1866 = vmatprep.subr.mxu0 %v987
    %1867 = vmatpush1.msra.mxu0 %v986
    %1868 = vmatprep.subr.mxu0 %v1000
    %1869 = vmatpush1.msra.mxu0 %v999
    %1870 = vmatprep.subr.mxu0 %v1013
    %1871 = vmatpush1.msra.mxu0 %v1012
    %1872 = vmatprep.subr.mxu0 %v1026
    %1873 = vmatpush1.msra.mxu0 %v1025
    %1874 = vmatprep.subr.mxu0 %v1039
    %1875 = vmatpush1.msra.mxu0 %v1038
    %1876 = vmatprep.subr.mxu0 %v1052
    %1877 = vmatpush1.msra.mxu0 %v1051
    %1878 = vmatprep.subr.mxu0 %v1065
    %1879 = vmatpush1.msra.mxu0 %v1064
    %1880 = vmatprep.subr.mxu0 %v1078
    %1881 = vmatpush1.msra.mxu0 %v1077
    %1882 = vmatprep.subr.mxu0 %v1091
    %1883 = vmatpush1.msra.mxu0 %v1090
    %1884 = vmatprep.subr.mxu0 %v1104
    %1885 = vmatpush1.msra.mxu0 %v1103
    %1886 = vmatprep.subr.mxu0 %v1117
    %1887 = vmatpush1.msra.mxu0 %v1116
    %1888 = vmatprep.subr.mxu0 %v1130
    %1889 = vmatpush1.msra.mxu0 %v1129
    %1890 = vmatprep.subr.mxu0 %v1143
    %1891 = vmatpush1.msra.mxu0 %v1142
    %1892 = vmatprep.subr.mxu0 %v1156
    %1893 = vmatpush1.msra.mxu0 %v1155
    %1894 = vmatprep.subr.mxu0 %v1169
    %1895 = vmatpush1.msra.mxu0 %v1168
    %1896 = vmatprep.subr.mxu0 %v1182
    %1897 = vmatpush1.msra.mxu0 %v1181
    %1898 = vmatprep.subr.mxu0 %v1195
    %1899 = vmatpush1.msra.mxu0 %v1194
    %1900 = vmatprep.subr.mxu0 %v1208
    %1901 = vmatpush1.msra.mxu0 %v1207
    %1902 = vmatprep.subr.mxu0 %v1221
    %1903 = vmatpush1.msra.mxu0 %v1220
    %1904 = vmatprep.subr.mxu0 %v1234
    %1905 = vmatpush1.msra.mxu0 %v1233
    %1906 = vmatprep.subr.mxu0 %v1247
    %1907 = vmatpush1.msra.mxu0 %v1246
    %1908 = vmatprep.subr.mxu0 %v1260
    %1909 = vmatpush1.msra.mxu0 %v1259
    %1910 = vmatprep.subr.mxu0 %v1273
    %1911 = vmatpush1.msra.mxu0 %v1272
    %1912 = vmatprep.mubr.f32.mxu0 %v1412
    %1913 = vmatmul.mubr.f32.gmra.mrb[0].mxu0 %v1404
    %v1914 = vpop.f32.mrb[0].mxu0
    %v1915 = vadd.f32 %v1844, %v1914
    %v1916 = vpop.f32.mrb[0].mxu0
    %v1917 = vadd.f32 %v1846, %v1916
    %1918 = vdwg.mxu0
    %1919 = vmatprep.subr.mxu0 %v1286
    %1920 = vmatpush1.msra.mxu0 %v1285
    %1921 = vmatprep.subr.mxu0 %v1299
    %1922 = vmatpush1.msra.mxu0 %v1298
    %1923 = vmatprep.subr.mxu0 0.0
    %1924 = vmatpush1.msra.mxu0 0.0
    %1925 = vmatprep.subr.mxu0 0.0
    %1926 = vmatpush1.msra.mxu0 0.0
    %1927 = vmatprep.subr.mxu0 0.0
    %1928 = vmatpush1.msra.mxu0 0.0
    %1929 = vmatprep.subr.mxu0 0.0
    %1930 = vmatpush1.msra.mxu0 0.0
    %1931 = vmatprep.subr.mxu0 0.0
    %1932 = vmatpush1.msra.mxu0 0.0
    %1933 = vmatprep.subr.mxu0 0.0
    %1934 = vmatpush1.msra.mxu0 0.0
    %1935 = vmatprep.subr.mxu0 0.0
    %1936 = vmatpush1.msra.mxu0 0.0
    %1937 = vmatprep.subr.mxu0 0.0
    %1938 = vmatpush1.msra.mxu0 0.0
    %1939 = vmatprep.subr.mxu0 0.0
    %1940 = vmatpush1.msra.mxu0 0.0
    %1941 = vmatprep.subr.mxu0 0.0
    %1942 = vmatpush1.msra.mxu0 0.0
    %1943 = vmatprep.subr.mxu0 0.0
    %1944 = vmatpush1.msra.mxu0 0.0
    %1945 = vmatprep.subr.mxu0 0.0
    %1946 = vmatpush1.msra.mxu0 0.0
    %1947 = vmatprep.subr.mxu0 0.0
    %1948 = vmatpush1.msra.mxu0 0.0
    %1949 = vmatprep.subr.mxu0 0.0
    %1950 = vmatpush1.msra.mxu0 0.0
    %1951 = vmatprep.subr.mxu0 0.0
    %1952 = vmatpush1.msra.mxu0 0.0
    %1953 = vmatprep.subr.mxu0 0.0
    %1954 = vmatpush1.msra.mxu0 0.0
    %1955 = vmatprep.subr.mxu0 0.0
    %1956 = vmatpush1.msra.mxu0 0.0
    %1957 = vmatprep.subr.mxu0 0.0
    %1958 = vmatpush1.msra.mxu0 0.0
    %1959 = vmatprep.subr.mxu0 0.0
    %1960 = vmatpush1.msra.mxu0 0.0
    %1961 = vmatprep.subr.mxu0 0.0
    %1962 = vmatpush1.msra.mxu0 0.0
    %1963 = vmatprep.subr.mxu0 0.0
    %1964 = vmatpush1.msra.mxu0 0.0
    %1965 = vmatprep.subr.mxu0 0.0
    %1966 = vmatpush1.msra.mxu0 0.0
    %1967 = vmatprep.subr.mxu0 0.0
    %1968 = vmatpush1.msra.mxu0 0.0
    %1969 = vmatprep.subr.mxu0 0.0
    %1970 = vmatpush1.msra.mxu0 0.0
    %1971 = vmatprep.subr.mxu0 0.0
    %1972 = vmatpush1.msra.mxu0 0.0
    %1973 = vmatprep.subr.mxu0 0.0
    %1974 = vmatpush1.msra.mxu0 0.0
    %1975 = vmatprep.subr.mxu0 0.0
    %1976 = vmatpush1.msra.mxu0 0.0
    %1977 = vmatprep.subr.mxu0 0.0
    %1978 = vmatpush1.msra.mxu0 0.0
    %1979 = vmatprep.subr.mxu0 0.0
    %1980 = vmatpush1.msra.mxu0 0.0
    %1981 = vmatprep.subr.mxu0 0.0
    %1982 = vmatpush1.msra.mxu0 0.0
    %1983 = vmatprep.mubr.f32.mxu0 0.0
    %1984 = vmatmul.mubr.f32.gmra.mrb[0].mxu0 %v1420
    %v1985 = vpop.f32.mrb[0].mxu0
    %v1986 = vadd.f32 %v1915, %v1985
    %v1987 = vpop.f32.mrb[0].mxu0
    %v1988 = vadd.f32 %v1917, %v1987
    %1989 = vdwg.mxu0
    %1990 = vmatprep.subr.mxu0 %v40
    %1991 = vmatpush1.msra.mxu0 %v39
    %1992 = vmatprep.subr.mxu0 %v53
    %1993 = vmatpush1.msra.mxu0 %v52
    %1994 = vmatprep.subr.mxu0 %v66
    %1995 = vmatpush1.msra.mxu0 %v65
    %1996 = vmatprep.subr.mxu0 %v79
    %1997 = vmatpush1.msra.mxu0 %v78
    %1998 = vmatprep.subr.mxu0 %v92
    %1999 = vmatpush1.msra.mxu0 %v91
    %2000 = vmatprep.subr.mxu0 %v105
    %2001 = vmatpush1.msra.mxu0 %v104
    %2002 = vmatprep.subr.mxu0 %v118
    %2003 = vmatpush1.msra.mxu0 %v117
    %2004 = vmatprep.subr.mxu0 %v131
    %2005 = vmatpush1.msra.mxu0 %v130
    %2006 = vmatprep.subr.mxu0 %v144
    %2007 = vmatpush1.msra.mxu0 %v143
    %2008 = vmatprep.subr.mxu0 %v157
    %2009 = vmatpush1.msra.mxu0 %v156
    %2010 = vmatprep.subr.mxu0 %v170
    %2011 = vmatpush1.msra.mxu0 %v169
    %2012 = vmatprep.subr.mxu0 %v183
    %2013 = vmatpush1.msra.mxu0 %v182
    %2014 = vmatprep.subr.mxu0 %v196
    %2015 = vmatpush1.msra.mxu0 %v195
    %2016 = vmatprep.subr.mxu0 %v209
    %2017 = vmatpush1.msra.mxu0 %v208
    %2018 = vmatprep.subr.mxu0 %v222
    %2019 = vmatpush1.msra.mxu0 %v221
    %2020 = vmatprep.subr.mxu0 %v235
    %2021 = vmatpush1.msra.mxu0 %v234
    %2022 = vmatprep.subr.mxu0 %v248
    %2023 = vmatpush1.msra.mxu0 %v247
    %2024 = vmatprep.subr.mxu0 %v261
    %2025 = vmatpush1.msra.mxu0 %v260
    %2026 = vmatprep.subr.mxu0 %v274
    %2027 = vmatpush1.msra.mxu0 %v273
    %2028 = vmatprep.subr.mxu0 %v287
    %2029 = vmatpush1.msra.mxu0 %v286
    %2030 = vmatprep.subr.mxu0 %v300
    %2031 = vmatpush1.msra.mxu0 %v299
    %2032 = vmatprep.subr.mxu0 %v313
    %2033 = vmatpush1.msra.mxu0 %v312
    %2034 = vmatprep.subr.mxu0 %v326
    %2035 = vmatpush1.msra.mxu0 %v325
    %2036 = vmatprep.subr.mxu0 %v339
    %2037 = vmatpush1.msra.mxu0 %v338
    %2038 = vmatprep.subr.mxu0 %v352
    %2039 = vmatpush1.msra.mxu0 %v351
    %2040 = vmatprep.subr.mxu0 %v365
    %2041 = vmatpush1.msra.mxu0 %v364
    %2042 = vmatprep.subr.mxu0 %v378
    %2043 = vmatpush1.msra.mxu0 %v377
    %2044 = vmatprep.subr.mxu0 %v391
    %2045 = vmatpush1.msra.mxu0 %v390
    %2046 = vmatprep.subr.mxu0 %v404
    %2047 = vmatpush1.msra.mxu0 %v403
    %2048 = vmatprep.subr.mxu0 %v417
    %2049 = vmatpush1.msra.mxu0 %v416
    %2050 = vmatprep.subr.mxu0 %v430
    %2051 = vmatpush1.msra.mxu0 %v429
    %2052 = vmatprep.subr.mxu0 %v443
    %2053 = vmatpush1.msra.mxu0 %v442
    %2054 = vmatprep.mubr.f32.mxu0 %v1395
    %2055 = vmatmul.mubr.f32.gmra.mrb[0].mxu0 %v1387
    %v2056 = vpop.f32.mrb[0].mxu0
    %v2057 = vadd.f32 %v1332, %v2056
    %v2058 = vpop.f32.mrb[0].mxu0
    %v2059 = vadd.f32 %v1336, %v2058
    %2060 = vdwg.mxu0
    %2061 = vmatprep.subr.mxu0 %v456
    %2062 = vmatpush1.msra.mxu0 %v455
    %2063 = vmatprep.subr.mxu0 %v469
    %2064 = vmatpush1.msra.mxu0 %v468
    %2065 = vmatprep.subr.mxu0 %v482
    %2066 = vmatpush1.msra.mxu0 %v481
    %2067 = vmatprep.subr.mxu0 %v495
    %2068 = vmatpush1.msra.mxu0 %v494
    %2069 = vmatprep.subr.mxu0 %v508
    %2070 = vmatpush1.msra.mxu0 %v507
    %2071 = vmatprep.subr.mxu0 %v521
    %2072 = vmatpush1.msra.mxu0 %v520
    %2073 = vmatprep.subr.mxu0 %v534
    %2074 = vmatpush1.msra.mxu0 %v533
    %2075 = vmatprep.subr.mxu0 %v547
    %2076 = vmatpush1.msra.mxu0 %v546
    %2077 = vmatprep.subr.mxu0 %v560
    %2078 = vmatpush1.msra.mxu0 %v559
    %2079 = vmatprep.subr.mxu0 %v573
    %2080 = vmatpush1.msra.mxu0 %v572
    %2081 = vmatprep.subr.mxu0 %v586
    %2082 = vmatpush1.msra.mxu0 %v585
    %2083 = vmatprep.subr.mxu0 %v599
    %2084 = vmatpush1.msra.mxu0 %v598
    %2085 = vmatprep.subr.mxu0 %v612
    %2086 = vmatpush1.msra.mxu0 %v611
    %2087 = vmatprep.subr.mxu0 %v625
    %2088 = vmatpush1.msra.mxu0 %v624
    %2089 = vmatprep.subr.mxu0 %v638
    %2090 = vmatpush1.msra.mxu0 %v637
    %2091 = vmatprep.subr.mxu0 %v651
    %2092 = vmatpush1.msra.mxu0 %v650
    %2093 = vmatprep.subr.mxu0 %v664
    %2094 = vmatpush1.msra.mxu0 %v663
    %2095 = vmatprep.subr.mxu0 %v677
    %2096 = vmatpush1.msra.mxu0 %v676
    %2097 = vmatprep.subr.mxu0 %v690
    %2098 = vmatpush1.msra.mxu0 %v689
    %2099 = vmatprep.subr.mxu0 %v703
    %2100 = vmatpush1.msra.mxu0 %v702
    %2101 = vmatprep.subr.mxu0 %v716
    %2102 = vmatpush1.msra.mxu0 %v715
    %2103 = vmatprep.subr.mxu0 %v729
    %2104 = vmatpush1.msra.mxu0 %v728
    %2105 = vmatprep.subr.mxu0 %v742
    %2106 = vmatpush1.msra.mxu0 %v741
    %2107 = vmatprep.subr.mxu0 %v755
    %2108 = vmatpush1.msra.mxu0 %v754
    %2109 = vmatprep.subr.mxu0 %v768
    %2110 = vmatpush1.msra.mxu0 %v767
    %2111 = vmatprep.subr.mxu0 %v781
    %2112 = vmatpush1.msra.mxu0 %v780
    %2113 = vmatprep.subr.mxu0 %v794
    %2114 = vmatpush1.msra.mxu0 %v793
    %2115 = vmatprep.subr.mxu0 %v807
    %2116 = vmatpush1.msra.mxu0 %v806
    %2117 = vmatprep.subr.mxu0 %v820
    %2118 = vmatpush1.msra.mxu0 %v819
    %2119 = vmatprep.subr.mxu0 %v833
    %2120 = vmatpush1.msra.mxu0 %v832
    %2121 = vmatprep.subr.mxu0 %v846
    %2122 = vmatpush1.msra.mxu0 %v845
    %2123 = vmatprep.subr.mxu0 %v859
    %2124 = vmatpush1.msra.mxu0 %v858
    %2125 = vmatprep.mubr.f32.mxu0 %v1396
    %2126 = vmatmul.mubr.f32.gmra.mrb[0].mxu0 %v1394
    %v2127 = vpop.f32.mrb[0].mxu0
    %v2128 = vadd.f32 %v2057, %v2127
    %v2129 = vpop.f32.mrb[0].mxu0
    %v2130 = vadd.f32 %v2059, %v2129
    %2131 = vdwg.mxu0
    %2132 = vmatprep.subr.mxu0 %v872
    %2133 = vmatpush1.msra.mxu0 %v871
    %2134 = vmatprep.subr.mxu0 %v885
    %2135 = vmatpush1.msra.mxu0 %v884
    %2136 = vmatprep.subr.mxu0 %v898
    %2137 = vmatpush1.msra.mxu0 %v897
    %2138 = vmatprep.subr.mxu0 %v911
    %2139 = vmatpush1.msra.mxu0 %v910
    %2140 = vmatprep.subr.mxu0 %v924
    %2141 = vmatpush1.msra.mxu0 %v923
    %2142 = vmatprep.subr.mxu0 %v937
    %2143 = vmatpush1.msra.mxu0 %v936
    %2144 = vmatprep.subr.mxu0 %v950
    %2145 = vmatpush1.msra.mxu0 %v949
    %2146 = vmatprep.subr.mxu0 %v963
    %2147 = vmatpush1.msra.mxu0 %v962
    %2148 = vmatprep.subr.mxu0 %v976
    %2149 = vmatpush1.msra.mxu0 %v975
    %2150 = vmatprep.subr.mxu0 %v989
    %2151 = vmatpush1.msra.mxu0 %v988
    %2152 = vmatprep.subr.mxu0 %v1002
    %2153 = vmatpush1.msra.mxu0 %v1001
    %2154 = vmatprep.subr.mxu0 %v1015
    %2155 = vmatpush1.msra.mxu0 %v1014
    %2156 = vmatprep.subr.mxu0 %v1028
    %2157 = vmatpush1.msra.mxu0 %v1027
    %2158 = vmatprep.subr.mxu0 %v1041
    %2159 = vmatpush1.msra.mxu0 %v1040
    %2160 = vmatprep.subr.mxu0 %v1054
    %2161 = vmatpush1.msra.mxu0 %v1053
    %2162 = vmatprep.subr.mxu0 %v1067
    %2163 = vmatpush1.msra.mxu0 %v1066
    %2164 = vmatprep.subr.mxu0 %v1080
    %2165 = vmatpush1.msra.mxu0 %v1079
    %2166 = vmatprep.subr.mxu0 %v1093
    %2167 = vmatpush1.msra.mxu0 %v1092
    %2168 = vmatprep.subr.mxu0 %v1106
    %2169 = vmatpush1.msra.mxu0 %v1105
    %2170 = vmatprep.subr.mxu0 %v1119
    %2171 = vmatpush1.msra.mxu0 %v1118
    %2172 = vmatprep.subr.mxu0 %v1132
    %2173 = vmatpush1.msra.mxu0 %v1131
    %2174 = vmatprep.subr.mxu0 %v1145
    %2175 = vmatpush1.msra.mxu0 %v1144
    %2176 = vmatprep.subr.mxu0 %v1158
    %2177 = vmatpush1.msra.mxu0 %v1157
    %2178 = vmatprep.subr.mxu0 %v1171
    %2179 = vmatpush1.msra.mxu0 %v1170
    %2180 = vmatprep.subr.mxu0 %v1184
    %2181 = vmatpush1.msra.mxu0 %v1183
    %2182 = vmatprep.subr.mxu0 %v1197
    %2183 = vmatpush1.msra.mxu0 %v1196
    %2184 = vmatprep.subr.mxu0 %v1210
    %2185 = vmatpush1.msra.mxu0 %v1209
    %2186 = vmatprep.subr.mxu0 %v1223
    %2187 = vmatpush1.msra.mxu0 %v1222
    %2188 = vmatprep.subr.mxu0 %v1236
    %2189 = vmatpush1.msra.mxu0 %v1235
    %2190 = vmatprep.subr.mxu0 %v1249
    %2191 = vmatpush1.msra.mxu0 %v1248
    %2192 = vmatprep.subr.mxu0 %v1262
    %2193 = vmatpush1.msra.mxu0 %v1261
    %2194 = vmatprep.subr.mxu0 %v1275
    %2195 = vmatpush1.msra.mxu0 %v1274
    %2196 = vmatprep.mubr.f32.mxu0 %v1412
    %2197 = vmatmul.mubr.f32.gmra.mrb[0].mxu0 %v1404
    %v2198 = vpop.f32.mrb[0].mxu0
    %v2199 = vadd.f32 %v2128, %v2198
    %v2200 = vpop.f32.mrb[0].mxu0
    %v2201 = vadd.f32 %v2130, %v2200
    %2202 = vdwg.mxu0
    %2203 = vmatprep.subr.mxu0 %v1288
    %2204 = vmatpush1.msra.mxu0 %v1287
    %2205 = vmatprep.subr.mxu0 %v1301
    %2206 = vmatpush1.msra.mxu0 %v1300
    %2207 = vmatprep.subr.mxu0 0.0
    %2208 = vmatpush1.msra.mxu0 0.0
    %2209 = vmatprep.subr.mxu0 0.0
    %2210 = vmatpush1.msra.mxu0 0.0
    %2211 = vmatprep.subr.mxu0 0.0
    %2212 = vmatpush1.msra.mxu0 0.0
    %2213 = vmatprep.subr.mxu0 0.0
    %2214 = vmatpush1.msra.mxu0 0.0
    %2215 = vmatprep.subr.mxu0 0.0
    %2216 = vmatpush1.msra.mxu0 0.0
    %2217 = vmatprep.subr.mxu0 0.0
    %2218 = vmatpush1.msra.mxu0 0.0
    %2219 = vmatprep.subr.mxu0 0.0
    %2220 = vmatpush1.msra.mxu0 0.0
    %2221 = vmatprep.subr.mxu0 0.0
    %2222 = vmatpush1.msra.mxu0 0.0
    %2223 = vmatprep.subr.mxu0 0.0
    %2224 = vmatpush1.msra.mxu0 0.0
    %2225 = vmatprep.subr.mxu0 0.0
    %2226 = vmatpush1.msra.mxu0 0.0
    %2227 = vmatprep.subr.mxu0 0.0
    %2228 = vmatpush1.msra.mxu0 0.0
    %2229 = vmatprep.subr.mxu0 0.0
    %2230 = vmatpush1.msra.mxu0 0.0
    %2231 = vmatprep.subr.mxu0 0.0
    %2232 = vmatpush1.msra.mxu0 0.0
    %2233 = vmatprep.subr.mxu0 0.0
    %2234 = vmatpush1.msra.mxu0 0.0
    %2235 = vmatprep.subr.mxu0 0.0
    %2236 = vmatpush1.msra.mxu0 0.0
    %2237 = vmatprep.subr.mxu0 0.0
    %2238 = vmatpush1.msra.mxu0 0.0
    %2239 = vmatprep.subr.mxu0 0.0
    %2240 = vmatpush1.msra.mxu0 0.0
    %2241 = vmatprep.subr.mxu0 0.0
    %2242 = vmatpush1.msra.mxu0 0.0
    %2243 = vmatprep.subr.mxu0 0.0
    %2244 = vmatpush1.msra.mxu0 0.0
    %2245 = vmatprep.subr.mxu0 0.0
    %2246 = vmatpush1.msra.mxu0 0.0
    %2247 = vmatprep.subr.mxu0 0.0
    %2248 = vmatpush1.msra.mxu0 0.0
    %2249 = vmatprep.subr.mxu0 0.0
    %2250 = vmatpush1.msra.mxu0 0.0
    %2251 = vmatprep.subr.mxu0 0.0
    %2252 = vmatpush1.msra.mxu0 0.0
    %2253 = vmatprep.subr.mxu0 0.0
    %2254 = vmatpush1.msra.mxu0 0.0
    %2255 = vmatprep.subr.mxu0 0.0
    %2256 = vmatpush1.msra.mxu0 0.0
    %2257 = vmatprep.subr.mxu0 0.0
    %2258 = vmatpush1.msra.mxu0 0.0
    %2259 = vmatprep.subr.mxu0 0.0
    %2260 = vmatpush1.msra.mxu0 0.0
    %2261 = vmatprep.subr.mxu0 0.0
    %2262 = vmatpush1.msra.mxu0 0.0
    %2263 = vmatprep.subr.mxu0 0.0
    %2264 = vmatpush1.msra.mxu0 0.0
    %2265 = vmatprep.subr.mxu0 0.0
    %2266 = vmatpush1.msra.mxu0 0.0
    %2267 = vmatprep.mubr.f32.mxu0 0.0
    %2268 = vmatmul.mubr.f32.gmra.mrb[0].mxu0 %v1420
    %v2269 = vpop.f32.mrb[0].mxu0
    %v2270 = vadd.f32 %v2199, %v2269
    %v2271 = vpop.f32.mrb[0].mxu0
    %v2272 = vadd.f32 %v2201, %v2271
    %2273 = vdwg.mxu0
    %2274 = vmatprep.subr.mxu0 %v42
    %2275 = vmatpush1.msra.mxu0 %v41
    %2276 = vmatprep.subr.mxu0 %v55
    %2277 = vmatpush1.msra.mxu0 %v54
    %2278 = vmatprep.subr.mxu0 %v68
    %2279 = vmatpush1.msra.mxu0 %v67
    %2280 = vmatprep.subr.mxu0 %v81
    %2281 = vmatpush1.msra.mxu0 %v80
    %2282 = vmatprep.subr.mxu0 %v94
    %2283 = vmatpush1.msra.mxu0 %v93
    %2284 = vmatprep.subr.mxu0 %v107
    %2285 = vmatpush1.msra.mxu0 %v106
    %2286 = vmatprep.subr.mxu0 %v120
    %2287 = vmatpush1.msra.mxu0 %v119
    %2288 = vmatprep.subr.mxu0 %v133
    %2289 = vmatpush1.msra.mxu0 %v132
    %2290 = vmatprep.subr.mxu0 %v146
    %2291 = vmatpush1.msra.mxu0 %v145
    %2292 = vmatprep.subr.mxu0 %v159
    %2293 = vmatpush1.msra.mxu0 %v158
    %2294 = vmatprep.subr.mxu0 %v172
    %2295 = vmatpush1.msra.mxu0 %v171
    %2296 = vmatprep.subr.mxu0 %v185
    %2297 = vmatpush1.msra.mxu0 %v184
    %2298 = vmatprep.subr.mxu0 %v198
    %2299 = vmatpush1.msra.mxu0 %v197
    %2300 = vmatprep.subr.mxu0 %v211
    %2301 = vmatpush1.msra.mxu0 %v210
    %2302 = vmatprep.subr.mxu0 %v224
    %2303 = vmatpush1.msra.mxu0 %v223
    %2304 = vmatprep.subr.mxu0 %v237
    %2305 = vmatpush1.msra.mxu0 %v236
    %2306 = vmatprep.subr.mxu0 %v250
    %2307 = vmatpush1.msra.mxu0 %v249
    %2308 = vmatprep.subr.mxu0 %v263
    %2309 = vmatpush1.msra.mxu0 %v262
    %2310 = vmatprep.subr.mxu0 %v276
    %2311 = vmatpush1.msra.mxu0 %v275
    %2312 = vmatprep.subr.mxu0 %v289
    %2313 = vmatpush1.msra.mxu0 %v288
    %2314 = vmatprep.subr.mxu0 %v302
    %2315 = vmatpush1.msra.mxu0 %v301
    %2316 = vmatprep.subr.mxu0 %v315
    %2317 = vmatpush1.msra.mxu0 %v314
    %2318 = vmatprep.subr.mxu0 %v328
    %2319 = vmatpush1.msra.mxu0 %v327
    %2320 = vmatprep.subr.mxu0 %v341
    %2321 = vmatpush1.msra.mxu0 %v340
    %2322 = vmatprep.subr.mxu0 %v354
    %2323 = vmatpush1.msra.mxu0 %v353
    %2324 = vmatprep.subr.mxu0 %v367
    %2325 = vmatpush1.msra.mxu0 %v366
    %2326 = vmatprep.subr.mxu0 %v380
    %2327 = vmatpush1.msra.mxu0 %v379
    %2328 = vmatprep.subr.mxu0 %v393
    %2329 = vmatpush1.msra.mxu0 %v392
    %2330 = vmatprep.subr.mxu0 %v406
    %2331 = vmatpush1.msra.mxu0 %v405
    %2332 = vmatprep.subr.mxu0 %v419
    %2333 = vmatpush1.msra.mxu0 %v418
    %2334 = vmatprep.subr.mxu0 %v432
    %2335 = vmatpush1.msra.mxu0 %v431
    %2336 = vmatprep.subr.mxu0 %v445
    %2337 = vmatpush1.msra.mxu0 %v444
    %2338 = vmatprep.mubr.f32.mxu0 %v1395
    %2339 = vmatmul.mubr.f32.gmra.mrb[0].mxu0 %v1387
    %v2340 = vpop.f32.mrb[0].mxu0
    %v2341 = vadd.f32 %v1340, %v2340
    %v2342 = vpop.f32.mrb[0].mxu0
    %v2343 = vadd.f32 %v1344, %v2342
    %2344 = vdwg.mxu0
    %2345 = vmatprep.subr.mxu0 %v458
    %2346 = vmatpush1.msra.mxu0 %v457
    %2347 = vmatprep.subr.mxu0 %v471
    %2348 = vmatpush1.msra.mxu0 %v470
    %2349 = vmatprep.subr.mxu0 %v484
    %2350 = vmatpush1.msra.mxu0 %v483
    %2351 = vmatprep.subr.mxu0 %v497
    %2352 = vmatpush1.msra.mxu0 %v496
    %2353 = vmatprep.subr.mxu0 %v510
    %2354 = vmatpush1.msra.mxu0 %v509
    %2355 = vmatprep.subr.mxu0 %v523
    %2356 = vmatpush1.msra.mxu0 %v522
    %2357 = vmatprep.subr.mxu0 %v536
    %2358 = vmatpush1.msra.mxu0 %v535
    %2359 = vmatprep.subr.mxu0 %v549
    %2360 = vmatpush1.msra.mxu0 %v548
    %2361 = vmatprep.subr.mxu0 %v562
    %2362 = vmatpush1.msra.mxu0 %v561
    %2363 = vmatprep.subr.mxu0 %v575
    %2364 = vmatpush1.msra.mxu0 %v574
    %2365 = vmatprep.subr.mxu0 %v588
    %2366 = vmatpush1.msra.mxu0 %v587
    %2367 = vmatprep.subr.mxu0 %v601
    %2368 = vmatpush1.msra.mxu0 %v600
    %2369 = vmatprep.subr.mxu0 %v614
    %2370 = vmatpush1.msra.mxu0 %v613
    %2371 = vmatprep.subr.mxu0 %v627
    %2372 = vmatpush1.msra.mxu0 %v626
    %2373 = vmatprep.subr.mxu0 %v640
    %2374 = vmatpush1.msra.mxu0 %v639
    %2375 = vmatprep.subr.mxu0 %v653
    %2376 = vmatpush1.msra.mxu0 %v652
    %2377 = vmatprep.subr.mxu0 %v666
    %2378 = vmatpush1.msra.mxu0 %v665
    %2379 = vmatprep.subr.mxu0 %v679
    %2380 = vmatpush1.msra.mxu0 %v678
    %2381 = vmatprep.subr.mxu0 %v692
    %2382 = vmatpush1.msra.mxu0 %v691
    %2383 = vmatprep.subr.mxu0 %v705
    %2384 = vmatpush1.msra.mxu0 %v704
    %2385 = vmatprep.subr.mxu0 %v718
    %2386 = vmatpush1.msra.mxu0 %v717
    %2387 = vmatprep.subr.mxu0 %v731
    %2388 = vmatpush1.msra.mxu0 %v730
    %2389 = vmatprep.subr.mxu0 %v744
    %2390 = vmatpush1.msra.mxu0 %v743
    %2391 = vmatprep.subr.mxu0 %v757
    %2392 = vmatpush1.msra.mxu0 %v756
    %2393 = vmatprep.subr.mxu0 %v770
    %2394 = vmatpush1.msra.mxu0 %v769
    %2395 = vmatprep.subr.mxu0 %v783
    %2396 = vmatpush1.msra.mxu0 %v782
    %2397 = vmatprep.subr.mxu0 %v796
    %2398 = vmatpush1.msra.mxu0 %v795
    %2399 = vmatprep.subr.mxu0 %v809
    %2400 = vmatpush1.msra.mxu0 %v808
    %2401 = vmatprep.subr.mxu0 %v822
    %2402 = vmatpush1.msra.mxu0 %v821
    %2403 = vmatprep.subr.mxu0 %v835
    %2404 = vmatpush1.msra.mxu0 %v834
    %2405 = vmatprep.subr.mxu0 %v848
    %2406 = vmatpush1.msra.mxu0 %v847
    %2407 = vmatprep.subr.mxu0 %v861
    %2408 = vmatpush1.msra.mxu0 %v860
    %2409 = vmatprep.mubr.f32.mxu0 %v1396
    %2410 = vmatmul.mubr.f32.gmra.mrb[0].mxu0 %v1394
    %v2411 = vpop.f32.mrb[0].mxu0
    %v2412 = vadd.f32 %v2341, %v2411
    %v2413 = vpop.f32.mrb[0].mxu0
    %v2414 = vadd.f32 %v2343, %v2413
    %2415 = vdwg.mxu0
    %2416 = vmatprep.subr.mxu0 %v874
    %2417 = vmatpush1.msra.mxu0 %v873
    %2418 = vmatprep.subr.mxu0 %v887
    %2419 = vmatpush1.msra.mxu0 %v886
    %2420 = vmatprep.subr.mxu0 %v900
    %2421 = vmatpush1.msra.mxu0 %v899
    %2422 = vmatprep.subr.mxu0 %v913
    %2423 = vmatpush1.msra.mxu0 %v912
    %2424 = vmatprep.subr.mxu0 %v926
    %2425 = vmatpush1.msra.mxu0 %v925
    %2426 = vmatprep.subr.mxu0 %v939
    %2427 = vmatpush1.msra.mxu0 %v938
    %2428 = vmatprep.subr.mxu0 %v952
    %2429 = vmatpush1.msra.mxu0 %v951
    %2430 = vmatprep.subr.mxu0 %v965
    %2431 = vmatpush1.msra.mxu0 %v964
    %2432 = vmatprep.subr.mxu0 %v978
    %2433 = vmatpush1.msra.mxu0 %v977
    %2434 = vmatprep.subr.mxu0 %v991
    %2435 = vmatpush1.msra.mxu0 %v990
    %2436 = vmatprep.subr.mxu0 %v1004
    %2437 = vmatpush1.msra.mxu0 %v1003
    %2438 = vmatprep.subr.mxu0 %v1017
    %2439 = vmatpush1.msra.mxu0 %v1016
    %2440 = vmatprep.subr.mxu0 %v1030
    %2441 = vmatpush1.msra.mxu0 %v1029
    %2442 = vmatprep.subr.mxu0 %v1043
    %2443 = vmatpush1.msra.mxu0 %v1042
    %2444 = vmatprep.subr.mxu0 %v1056
    %2445 = vmatpush1.msra.mxu0 %v1055
    %2446 = vmatprep.subr.mxu0 %v1069
    %2447 = vmatpush1.msra.mxu0 %v1068
    %2448 = vmatprep.subr.mxu0 %v1082
    %2449 = vmatpush1.msra.mxu0 %v1081
    %2450 = vmatprep.subr.mxu0 %v1095
    %2451 = vmatpush1.msra.mxu0 %v1094
    %2452 = vmatprep.subr.mxu0 %v1108
    %2453 = vmatpush1.msra.mxu0 %v1107
    %2454 = vmatprep.subr.mxu0 %v1121
    %2455 = vmatpush1.msra.mxu0 %v1120
    %2456 = vmatprep.subr.mxu0 %v1134
    %2457 = vmatpush1.msra.mxu0 %v1133
    %2458 = vmatprep.subr.mxu0 %v1147
    %2459 = vmatpush1.msra.mxu0 %v1146
    %2460 = vmatprep.subr.mxu0 %v1160
    %2461 = vmatpush1.msra.mxu0 %v1159
    %2462 = vmatprep.subr.mxu0 %v1173
    %2463 = vmatpush1.msra.mxu0 %v1172
    %2464 = vmatprep.subr.mxu0 %v1186
    %2465 = vmatpush1.msra.mxu0 %v1185
    %2466 = vmatprep.subr.mxu0 %v1199
    %2467 = vmatpush1.msra.mxu0 %v1198
    %2468 = vmatprep.subr.mxu0 %v1212
    %2469 = vmatpush1.msra.mxu0 %v1211
    %2470 = vmatprep.subr.mxu0 %v1225
    %2471 = vmatpush1.msra.mxu0 %v1224
    %2472 = vmatprep.subr.mxu0 %v1238
    %2473 = vmatpush1.msra.mxu0 %v1237
    %2474 = vmatprep.subr.mxu0 %v1251
    %2475 = vmatpush1.msra.mxu0 %v1250
    %2476 = vmatprep.subr.mxu0 %v1264
    %2477 = vmatpush1.msra.mxu0 %v1263
    %2478 = vmatprep.subr.mxu0 %v1277
    %2479 = vmatpush1.msra.mxu0 %v1276
    %2480 = vmatprep.mubr.f32.mxu0 %v1412
    %2481 = vmatmul.mubr.f32.gmra.mrb[0].mxu0 %v1404
    %v2482 = vpop.f32.mrb[0].mxu0
    %v2483 = vadd.f32 %v2412, %v2482
    %v2484 = vpop.f32.mrb[0].mxu0
    %v2485 = vadd.f32 %v2414, %v2484
    %2486 = vdwg.mxu0
    %2487 = vmatprep.subr.mxu0 %v1290
    %2488 = vmatpush1.msra.mxu0 %v1289
    %2489 = vmatprep.subr.mxu0 %v1303
    %2490 = vmatpush1.msra.mxu0 %v1302
    %2491 = vmatprep.subr.mxu0 0.0
    %2492 = vmatpush1.msra.mxu0 0.0
    %2493 = vmatprep.subr.mxu0 0.0
    %2494 = vmatpush1.msra.mxu0 0.0
    %2495 = vmatprep.subr.mxu0 0.0
    %2496 = vmatpush1.msra.mxu0 0.0
    %2497 = vmatprep.subr.mxu0 0.0
    %2498 = vmatpush1.msra.mxu0 0.0
    %2499 = vmatprep.subr.mxu0 0.0
    %2500 = vmatpush1.msra.mxu0 0.0
    %2501 = vmatprep.subr.mxu0 0.0
    %2502 = vmatpush1.msra.mxu0 0.0
    %2503 = vmatprep.subr.mxu0 0.0
    %2504 = vmatpush1.msra.mxu0 0.0
    %2505 = vmatprep.subr.mxu0 0.0
    %2506 = vmatpush1.msra.mxu0 0.0
    %2507 = vmatprep.subr.mxu0 0.0
    %2508 = vmatpush1.msra.mxu0 0.0
    %2509 = vmatprep.subr.mxu0 0.0
    %2510 = vmatpush1.msra.mxu0 0.0
    %2511 = vmatprep.subr.mxu0 0.0
    %2512 = vmatpush1.msra.mxu0 0.0
    %2513 = vmatprep.subr.mxu0 0.0
    %2514 = vmatpush1.msra.mxu0 0.0
    %2515 = vmatprep.subr.mxu0 0.0
    %2516 = vmatpush1.msra.mxu0 0.0
    %2517 = vmatprep.subr.mxu0 0.0
    %2518 = vmatpush1.msra.mxu0 0.0
    %2519 = vmatprep.subr.mxu0 0.0
    %2520 = vmatpush1.msra.mxu0 0.0
    %2521 = vmatprep.subr.mxu0 0.0
    %2522 = vmatpush1.msra.mxu0 0.0
    %2523 = vmatprep.subr.mxu0 0.0
    %2524 = vmatpush1.msra.mxu0 0.0
    %2525 = vmatprep.subr.mxu0 0.0
    %2526 = vmatpush1.msra.mxu0 0.0
    %2527 = vmatprep.subr.mxu0 0.0
    %2528 = vmatpush1.msra.mxu0 0.0
    %2529 = vmatprep.subr.mxu0 0.0
    %2530 = vmatpush1.msra.mxu0 0.0
    %2531 = vmatprep.subr.mxu0 0.0
    %2532 = vmatpush1.msra.mxu0 0.0
    %2533 = vmatprep.subr.mxu0 0.0
    %2534 = vmatpush1.msra.mxu0 0.0
    %2535 = vmatprep.subr.mxu0 0.0
    %2536 = vmatpush1.msra.mxu0 0.0
    %2537 = vmatprep.subr.mxu0 0.0
    %2538 = vmatpush1.msra.mxu0 0.0
    %2539 = vmatprep.subr.mxu0 0.0
    %2540 = vmatpush1.msra.mxu0 0.0
    %2541 = vmatprep.subr.mxu0 0.0
    %2542 = vmatpush1.msra.mxu0 0.0
    %2543 = vmatprep.subr.mxu0 0.0
    %2544 = vmatpush1.msra.mxu0 0.0
    %2545 = vmatprep.subr.mxu0 0.0
    %2546 = vmatpush1.msra.mxu0 0.0
    %2547 = vmatprep.subr.mxu0 0.0
    %2548 = vmatpush1.msra.mxu0 0.0
    %2549 = vmatprep.subr.mxu0 0.0
    %2550 = vmatpush1.msra.mxu0 0.0
    %2551 = vmatprep.mubr.f32.mxu0 0.0
    %2552 = vmatmul.mubr.f32.gmra.mrb[0].mxu0 %v1420
    %v2553 = vpop.f32.mrb[0].mxu0
    %v2554 = vadd.f32 %v2483, %v2553
    %v2555 = vpop.f32.mrb[0].mxu0
    %v2556 = vadd.f32 %v2485, %v2555
    %2557 = vdwg.mxu0
    %2558 = vmatprep.subr.mxu0 %v44
    %2559 = vmatpush1.msra.mxu0 %v43
    %2560 = vmatprep.subr.mxu0 %v57
    %2561 = vmatpush1.msra.mxu0 %v56
    %2562 = vmatprep.subr.mxu0 %v70
    %2563 = vmatpush1.msra.mxu0 %v69
    %2564 = vmatprep.subr.mxu0 %v83
    %2565 = vmatpush1.msra.mxu0 %v82
    %2566 = vmatprep.subr.mxu0 %v96
    %2567 = vmatpush1.msra.mxu0 %v95
    %2568 = vmatprep.subr.mxu0 %v109
    %2569 = vmatpush1.msra.mxu0 %v108
    %2570 = vmatprep.subr.mxu0 %v122
    %2571 = vmatpush1.msra.mxu0 %v121
    %2572 = vmatprep.subr.mxu0 %v135
    %2573 = vmatpush1.msra.mxu0 %v134
    %2574 = vmatprep.subr.mxu0 %v148
    %2575 = vmatpush1.msra.mxu0 %v147
    %2576 = vmatprep.subr.mxu0 %v161
    %2577 = vmatpush1.msra.mxu0 %v160
    %2578 = vmatprep.subr.mxu0 %v174
    %2579 = vmatpush1.msra.mxu0 %v173
    %2580 = vmatprep.subr.mxu0 %v187
    %2581 = vmatpush1.msra.mxu0 %v186
    %2582 = vmatprep.subr.mxu0 %v200
    %2583 = vmatpush1.msra.mxu0 %v199
    %2584 = vmatprep.subr.mxu0 %v213
    %2585 = vmatpush1.msra.mxu0 %v212
    %2586 = vmatprep.subr.mxu0 %v226
    %2587 = vmatpush1.msra.mxu0 %v225
    %2588 = vmatprep.subr.mxu0 %v239
    %2589 = vmatpush1.msra.mxu0 %v238
    %2590 = vmatprep.subr.mxu0 %v252
    %2591 = vmatpush1.msra.mxu0 %v251
    %2592 = vmatprep.subr.mxu0 %v265
    %2593 = vmatpush1.msra.mxu0 %v264
    %2594 = vmatprep.subr.mxu0 %v278
    %2595 = vmatpush1.msra.mxu0 %v277
    %2596 = vmatprep.subr.mxu0 %v291
    %2597 = vmatpush1.msra.mxu0 %v290
    %2598 = vmatprep.subr.mxu0 %v304
    %2599 = vmatpush1.msra.mxu0 %v303
    %2600 = vmatprep.subr.mxu0 %v317
    %2601 = vmatpush1.msra.mxu0 %v316
    %2602 = vmatprep.subr.mxu0 %v330
    %2603 = vmatpush1.msra.mxu0 %v329
    %2604 = vmatprep.subr.mxu0 %v343
    %2605 = vmatpush1.msra.mxu0 %v342
    %2606 = vmatprep.subr.mxu0 %v356
    %2607 = vmatpush1.msra.mxu0 %v355
    %2608 = vmatprep.subr.mxu0 %v369
    %2609 = vmatpush1.msra.mxu0 %v368
    %2610 = vmatprep.subr.mxu0 %v382
    %2611 = vmatpush1.msra.mxu0 %v381
    %2612 = vmatprep.subr.mxu0 %v395
    %2613 = vmatpush1.msra.mxu0 %v394
    %2614 = vmatprep.subr.mxu0 %v408
    %2615 = vmatpush1.msra.mxu0 %v407
    %2616 = vmatprep.subr.mxu0 %v421
    %2617 = vmatpush1.msra.mxu0 %v420
    %2618 = vmatprep.subr.mxu0 %v434
    %2619 = vmatpush1.msra.mxu0 %v433
    %2620 = vmatprep.subr.mxu0 %v447
    %2621 = vmatpush1.msra.mxu0 %v446
    %2622 = vmatprep.mubr.f32.mxu0 %v1395
    %2623 = vmatmul.mubr.f32.gmra.mrb[0].mxu0 %v1387
    %v2624 = vpop.f32.mrb[0].mxu0
    %v2625 = vadd.f32 %v1348, %v2624
    %v2626 = vpop.f32.mrb[0].mxu0
    %v2627 = vadd.f32 %v1352, %v2626
    %2628 = vdwg.mxu0
    %2629 = vmatprep.subr.mxu0 %v460
    %2630 = vmatpush1.msra.mxu0 %v459
    %2631 = vmatprep.subr.mxu0 %v473
    %2632 = vmatpush1.msra.mxu0 %v472
    %2633 = vmatprep.subr.mxu0 %v486
    %2634 = vmatpush1.msra.mxu0 %v485
    %2635 = vmatprep.subr.mxu0 %v499
    %2636 = vmatpush1.msra.mxu0 %v498
    %2637 = vmatprep.subr.mxu0 %v512
    %2638 = vmatpush1.msra.mxu0 %v511
    %2639 = vmatprep.subr.mxu0 %v525
    %2640 = vmatpush1.msra.mxu0 %v524
    %2641 = vmatprep.subr.mxu0 %v538
    %2642 = vmatpush1.msra.mxu0 %v537
    %2643 = vmatprep.subr.mxu0 %v551
    %2644 = vmatpush1.msra.mxu0 %v550
    %2645 = vmatprep.subr.mxu0 %v564
    %2646 = vmatpush1.msra.mxu0 %v563
    %2647 = vmatprep.subr.mxu0 %v577
    %2648 = vmatpush1.msra.mxu0 %v576
    %2649 = vmatprep.subr.mxu0 %v590
    %2650 = vmatpush1.msra.mxu0 %v589
    %2651 = vmatprep.subr.mxu0 %v603
    %2652 = vmatpush1.msra.mxu0 %v602
    %2653 = vmatprep.subr.mxu0 %v616
    %2654 = vmatpush1.msra.mxu0 %v615
    %2655 = vmatprep.subr.mxu0 %v629
    %2656 = vmatpush1.msra.mxu0 %v628
    %2657 = vmatprep.subr.mxu0 %v642
    %2658 = vmatpush1.msra.mxu0 %v641
    %2659 = vmatprep.subr.mxu0 %v655
    %2660 = vmatpush1.msra.mxu0 %v654
    %2661 = vmatprep.subr.mxu0 %v668
    %2662 = vmatpush1.msra.mxu0 %v667
    %2663 = vmatprep.subr.mxu0 %v681
    %2664 = vmatpush1.msra.mxu0 %v680
    %2665 = vmatprep.subr.mxu0 %v694
    %2666 = vmatpush1.msra.mxu0 %v693
    %2667 = vmatprep.subr.mxu0 %v707
    %2668 = vmatpush1.msra.mxu0 %v706
    %2669 = vmatprep.subr.mxu0 %v720
    %2670 = vmatpush1.msra.mxu0 %v719
    %2671 = vmatprep.subr.mxu0 %v733
    %2672 = vmatpush1.msra.mxu0 %v732
    %2673 = vmatprep.subr.mxu0 %v746
    %2674 = vmatpush1.msra.mxu0 %v745
    %2675 = vmatprep.subr.mxu0 %v759
    %2676 = vmatpush1.msra.mxu0 %v758
    %2677 = vmatprep.subr.mxu0 %v772
    %2678 = vmatpush1.msra.mxu0 %v771
    %2679 = vmatprep.subr.mxu0 %v785
    %2680 = vmatpush1.msra.mxu0 %v784
    %2681 = vmatprep.subr.mxu0 %v798
    %2682 = vmatpush1.msra.mxu0 %v797
    %2683 = vmatprep.subr.mxu0 %v811
    %2684 = vmatpush1.msra.mxu0 %v810
    %2685 = vmatprep.subr.mxu0 %v824
    %2686 = vmatpush1.msra.mxu0 %v823
    %2687 = vmatprep.subr.mxu0 %v837
    %2688 = vmatpush1.msra.mxu0 %v836
    %2689 = vmatprep.subr.mxu0 %v850
    %2690 = vmatpush1.msra.mxu0 %v849
    %2691 = vmatprep.subr.mxu0 %v863
    %2692 = vmatpush1.msra.mxu0 %v862
    %2693 = vmatprep.mubr.f32.mxu0 %v1396
    %2694 = vmatmul.mubr.f32.gmra.mrb[0].mxu0 %v1394
    %v2695 = vpop.f32.mrb[0].mxu0
    %v2696 = vadd.f32 %v2625, %v2695
    %v2697 = vpop.f32.mrb[0].mxu0
    %v2698 = vadd.f32 %v2627, %v2697
    %2699 = vdwg.mxu0
    %2700 = vmatprep.subr.mxu0 %v876
    %2701 = vmatpush1.msra.mxu0 %v875
    %2702 = vmatprep.subr.mxu0 %v889
    %2703 = vmatpush1.msra.mxu0 %v888
    %2704 = vmatprep.subr.mxu0 %v902
    %2705 = vmatpush1.msra.mxu0 %v901
    %2706 = vmatprep.subr.mxu0 %v915
    %2707 = vmatpush1.msra.mxu0 %v914
    %2708 = vmatprep.subr.mxu0 %v928
    %2709 = vmatpush1.msra.mxu0 %v927
    %2710 = vmatprep.subr.mxu0 %v941
    %2711 = vmatpush1.msra.mxu0 %v940
    %2712 = vmatprep.subr.mxu0 %v954
    %2713 = vmatpush1.msra.mxu0 %v953
    %2714 = vmatprep.subr.mxu0 %v967
    %2715 = vmatpush1.msra.mxu0 %v966
    %2716 = vmatprep.subr.mxu0 %v980
    %2717 = vmatpush1.msra.mxu0 %v979
    %2718 = vmatprep.subr.mxu0 %v993
    %2719 = vmatpush1.msra.mxu0 %v992
    %2720 = vmatprep.subr.mxu0 %v1006
    %2721 = vmatpush1.msra.mxu0 %v1005
    %2722 = vmatprep.subr.mxu0 %v1019
    %2723 = vmatpush1.msra.mxu0 %v1018
    %2724 = vmatprep.subr.mxu0 %v1032
    %2725 = vmatpush1.msra.mxu0 %v1031
    %2726 = vmatprep.subr.mxu0 %v1045
    %2727 = vmatpush1.msra.mxu0 %v1044
    %2728 = vmatprep.subr.mxu0 %v1058
    %2729 = vmatpush1.msra.mxu0 %v1057
    %2730 = vmatprep.subr.mxu0 %v1071
    %2731 = vmatpush1.msra.mxu0 %v1070
    %2732 = vmatprep.subr.mxu0 %v1084
    %2733 = vmatpush1.msra.mxu0 %v1083
    %2734 = vmatprep.subr.mxu0 %v1097
    %2735 = vmatpush1.msra.mxu0 %v1096
    %2736 = vmatprep.subr.mxu0 %v1110
    %2737 = vmatpush1.msra.mxu0 %v1109
    %2738 = vmatprep.subr.mxu0 %v1123
    %2739 = vmatpush1.msra.mxu0 %v1122
    %2740 = vmatprep.subr.mxu0 %v1136
    %2741 = vmatpush1.msra.mxu0 %v1135
    %2742 = vmatprep.subr.mxu0 %v1149
    %2743 = vmatpush1.msra.mxu0 %v1148
    %2744 = vmatprep.subr.mxu0 %v1162
    %2745 = vmatpush1.msra.mxu0 %v1161
    %2746 = vmatprep.subr.mxu0 %v1175
    %2747 = vmatpush1.msra.mxu0 %v1174
    %2748 = vmatprep.subr.mxu0 %v1188
    %2749 = vmatpush1.msra.mxu0 %v1187
    %2750 = vmatprep.subr.mxu0 %v1201
    %2751 = vmatpush1.msra.mxu0 %v1200
    %2752 = vmatprep.subr.mxu0 %v1214
    %2753 = vmatpush1.msra.mxu0 %v1213
    %2754 = vmatprep.subr.mxu0 %v1227
    %2755 = vmatpush1.msra.mxu0 %v1226
    %2756 = vmatprep.subr.mxu0 %v1240
    %2757 = vmatpush1.msra.mxu0 %v1239
    %2758 = vmatprep.subr.mxu0 %v1253
    %2759 = vmatpush1.msra.mxu0 %v1252
    %2760 = vmatprep.subr.mxu0 %v1266
    %2761 = vmatpush1.msra.mxu0 %v1265
    %2762 = vmatprep.subr.mxu0 %v1279
    %2763 = vmatpush1.msra.mxu0 %v1278
    %2764 = vmatprep.mubr.f32.mxu0 %v1412
    %2765 = vmatmul.mubr.f32.gmra.mrb[0].mxu0 %v1404
    %v2766 = vpop.f32.mrb[0].mxu0
    %v2767 = vadd.f32 %v2696, %v2766
    %v2768 = vpop.f32.mrb[0].mxu0
    %v2769 = vadd.f32 %v2698, %v2768
    %2770 = vdwg.mxu0
    %2771 = vmatprep.subr.mxu0 %v1292
    %2772 = vmatpush1.msra.mxu0 %v1291
    %2773 = vmatprep.subr.mxu0 %v1305
    %2774 = vmatpush1.msra.mxu0 %v1304
    %2775 = vmatprep.subr.mxu0 0.0
    %2776 = vmatpush1.msra.mxu0 0.0
    %2777 = vmatprep.subr.mxu0 0.0
    %2778 = vmatpush1.msra.mxu0 0.0
    %2779 = vmatprep.subr.mxu0 0.0
    %2780 = vmatpush1.msra.mxu0 0.0
    %2781 = vmatprep.subr.mxu0 0.0
    %2782 = vmatpush1.msra.mxu0 0.0
    %2783 = vmatprep.subr.mxu0 0.0
    %2784 = vmatpush1.msra.mxu0 0.0
    %2785 = vmatprep.subr.mxu0 0.0
    %2786 = vmatpush1.msra.mxu0 0.0
    %2787 = vmatprep.subr.mxu0 0.0
    %2788 = vmatpush1.msra.mxu0 0.0
    %2789 = vmatprep.subr.mxu0 0.0
    %2790 = vmatpush1.msra.mxu0 0.0
    %2791 = vmatprep.subr.mxu0 0.0
    %2792 = vmatpush1.msra.mxu0 0.0
    %2793 = vmatprep.subr.mxu0 0.0
    %2794 = vmatpush1.msra.mxu0 0.0
    %2795 = vmatprep.subr.mxu0 0.0
    %2796 = vmatpush1.msra.mxu0 0.0
    %2797 = vmatprep.subr.mxu0 0.0
    %2798 = vmatpush1.msra.mxu0 0.0
    %2799 = vmatprep.subr.mxu0 0.0
    %2800 = vmatpush1.msra.mxu0 0.0
    %2801 = vmatprep.subr.mxu0 0.0
    %2802 = vmatpush1.msra.mxu0 0.0
    %2803 = vmatprep.subr.mxu0 0.0
    %2804 = vmatpush1.msra.mxu0 0.0
    %2805 = vmatprep.subr.mxu0 0.0
    %2806 = vmatpush1.msra.mxu0 0.0
    %2807 = vmatprep.subr.mxu0 0.0
    %2808 = vmatpush1.msra.mxu0 0.0
    %2809 = vmatprep.subr.mxu0 0.0
    %2810 = vmatpush1.msra.mxu0 0.0
    %2811 = vmatprep.subr.mxu0 0.0
    %2812 = vmatpush1.msra.mxu0 0.0
    %2813 = vmatprep.subr.mxu0 0.0
    %2814 = vmatpush1.msra.mxu0 0.0
    %2815 = vmatprep.subr.mxu0 0.0
    %2816 = vmatpush1.msra.mxu0 0.0
    %2817 = vmatprep.subr.mxu0 0.0
    %2818 = vmatpush1.msra.mxu0 0.0
    %2819 = vmatprep.subr.mxu0 0.0
    %2820 = vmatpush1.msra.mxu0 0.0
    %2821 = vmatprep.subr.mxu0 0.0
    %2822 = vmatpush1.msra.mxu0 0.0
    %2823 = vmatprep.subr.mxu0 0.0
    %2824 = vmatpush1.msra.mxu0 0.0
    %2825 = vmatprep.subr.mxu0 0.0
    %2826 = vmatpush1.msra.mxu0 0.0
    %2827 = vmatprep.subr.mxu0 0.0
    %2828 = vmatpush1.msra.mxu0 0.0
    %2829 = vmatprep.subr.mxu0 0.0
    %2830 = vmatpush1.msra.mxu0 0.0
    %2831 = vmatprep.subr.mxu0 0.0
    %2832 = vmatpush1.msra.mxu0 0.0
    %2833 = vmatprep.subr.mxu0 0.0
    %2834 = vmatpush1.msra.mxu0 0.0
    %2835 = vmatprep.mubr.f32.mxu0 0.0
    %2836 = vmatmul.mubr.f32.gmra.mrb[0].mxu0 %v1420
    %v2837 = vpop.f32.mrb[0].mxu0
    %v2838 = vadd.f32 %v2767, %v2837
    %v2839 = vpop.f32.mrb[0].mxu0
    %v2840 = vadd.f32 %v2769, %v2839
    %2841 = vdwg.mxu0
    %2842 = vmatprep.subr.mxu0 %v46
    %2843 = vmatpush1.msra.mxu0 %v45
    %2844 = vmatprep.subr.mxu0 %v59
    %2845 = vmatpush1.msra.mxu0 %v58
    %2846 = vmatprep.subr.mxu0 %v72
    %2847 = vmatpush1.msra.mxu0 %v71
    %2848 = vmatprep.subr.mxu0 %v85
    %2849 = vmatpush1.msra.mxu0 %v84
    %2850 = vmatprep.subr.mxu0 %v98
    %2851 = vmatpush1.msra.mxu0 %v97
    %2852 = vmatprep.subr.mxu0 %v111
    %2853 = vmatpush1.msra.mxu0 %v110
    %2854 = vmatprep.subr.mxu0 %v124
    %2855 = vmatpush1.msra.mxu0 %v123
    %2856 = vmatprep.subr.mxu0 %v137
    %2857 = vmatpush1.msra.mxu0 %v136
    %2858 = vmatprep.subr.mxu0 %v150
    %2859 = vmatpush1.msra.mxu0 %v149
    %2860 = vmatprep.subr.mxu0 %v163
    %2861 = vmatpush1.msra.mxu0 %v162
    %2862 = vmatprep.subr.mxu0 %v176
    %2863 = vmatpush1.msra.mxu0 %v175
    %2864 = vmatprep.subr.mxu0 %v189
    %2865 = vmatpush1.msra.mxu0 %v188
    %2866 = vmatprep.subr.mxu0 %v202
    %2867 = vmatpush1.msra.mxu0 %v201
    %2868 = vmatprep.subr.mxu0 %v215
    %2869 = vmatpush1.msra.mxu0 %v214
    %2870 = vmatprep.subr.mxu0 %v228
    %2871 = vmatpush1.msra.mxu0 %v227
    %2872 = vmatprep.subr.mxu0 %v241
    %2873 = vmatpush1.msra.mxu0 %v240
    %2874 = vmatprep.subr.mxu0 %v254
    %2875 = vmatpush1.msra.mxu0 %v253
    %2876 = vmatprep.subr.mxu0 %v267
    %2877 = vmatpush1.msra.mxu0 %v266
    %2878 = vmatprep.subr.mxu0 %v280
    %2879 = vmatpush1.msra.mxu0 %v279
    %2880 = vmatprep.subr.mxu0 %v293
    %2881 = vmatpush1.msra.mxu0 %v292
    %2882 = vmatprep.subr.mxu0 %v306
    %2883 = vmatpush1.msra.mxu0 %v305
    %2884 = vmatprep.subr.mxu0 %v319
    %2885 = vmatpush1.msra.mxu0 %v318
    %2886 = vmatprep.subr.mxu0 %v332
    %2887 = vmatpush1.msra.mxu0 %v331
    %2888 = vmatprep.subr.mxu0 %v345
    %2889 = vmatpush1.msra.mxu0 %v344
    %2890 = vmatprep.subr.mxu0 %v358
    %2891 = vmatpush1.msra.mxu0 %v357
    %2892 = vmatprep.subr.mxu0 %v371
    %2893 = vmatpush1.msra.mxu0 %v370
    %2894 = vmatprep.subr.mxu0 %v384
    %2895 = vmatpush1.msra.mxu0 %v383
    %2896 = vmatprep.subr.mxu0 %v397
    %2897 = vmatpush1.msra.mxu0 %v396
    %2898 = vmatprep.subr.mxu0 %v410
    %2899 = vmatpush1.msra.mxu0 %v409
    %2900 = vmatprep.subr.mxu0 %v423
    %2901 = vmatpush1.msra.mxu0 %v422
    %2902 = vmatprep.subr.mxu0 %v436
    %2903 = vmatpush1.msra.mxu0 %v435
    %2904 = vmatprep.subr.mxu0 %v449
    %2905 = vmatpush1.msra.mxu0 %v448
    %2906 = vmatprep.mubr.f32.mxu0 %v1395
    %2907 = vmatmul.mubr.f32.gmra.mrb[0].mxu0 %v1387
    %v2908 = vpop.f32.mrb[0].mxu0
    %v2909 = vadd.f32 %v1356, %v2908
    %v2910 = vpop.f32.mrb[0].mxu0
    %v2911 = vadd.f32 %v1360, %v2910
    %2912 = vdwg.mxu0
    %2913 = vmatprep.subr.mxu0 %v462
    %2914 = vmatpush1.msra.mxu0 %v461
    %2915 = vmatprep.subr.mxu0 %v475
    %2916 = vmatpush1.msra.mxu0 %v474
    %2917 = vmatprep.subr.mxu0 %v488
    %2918 = vmatpush1.msra.mxu0 %v487
    %2919 = vmatprep.subr.mxu0 %v501
    %2920 = vmatpush1.msra.mxu0 %v500
    %2921 = vmatprep.subr.mxu0 %v514
    %2922 = vmatpush1.msra.mxu0 %v513
    %2923 = vmatprep.subr.mxu0 %v527
    %2924 = vmatpush1.msra.mxu0 %v526
    %2925 = vmatprep.subr.mxu0 %v540
    %2926 = vmatpush1.msra.mxu0 %v539
    %2927 = vmatprep.subr.mxu0 %v553
    %2928 = vmatpush1.msra.mxu0 %v552
    %2929 = vmatprep.subr.mxu0 %v566
    %2930 = vmatpush1.msra.mxu0 %v565
    %2931 = vmatprep.subr.mxu0 %v579
    %2932 = vmatpush1.msra.mxu0 %v578
    %2933 = vmatprep.subr.mxu0 %v592
    %2934 = vmatpush1.msra.mxu0 %v591
    %2935 = vmatprep.subr.mxu0 %v605
    %2936 = vmatpush1.msra.mxu0 %v604
    %2937 = vmatprep.subr.mxu0 %v618
    %2938 = vmatpush1.msra.mxu0 %v617
    %2939 = vmatprep.subr.mxu0 %v631
    %2940 = vmatpush1.msra.mxu0 %v630
    %2941 = vmatprep.subr.mxu0 %v644
    %2942 = vmatpush1.msra.mxu0 %v643
    %2943 = vmatprep.subr.mxu0 %v657
    %2944 = vmatpush1.msra.mxu0 %v656
    %2945 = vmatprep.subr.mxu0 %v670
    %2946 = vmatpush1.msra.mxu0 %v669
    %2947 = vmatprep.subr.mxu0 %v683
    %2948 = vmatpush1.msra.mxu0 %v682
    %2949 = vmatprep.subr.mxu0 %v696
    %2950 = vmatpush1.msra.mxu0 %v695
    %2951 = vmatprep.subr.mxu0 %v709
    %2952 = vmatpush1.msra.mxu0 %v708
    %2953 = vmatprep.subr.mxu0 %v722
    %2954 = vmatpush1.msra.mxu0 %v721
    %2955 = vmatprep.subr.mxu0 %v735
    %2956 = vmatpush1.msra.mxu0 %v734
    %2957 = vmatprep.subr.mxu0 %v748
    %2958 = vmatpush1.msra.mxu0 %v747
    %2959 = vmatprep.subr.mxu0 %v761
    %2960 = vmatpush1.msra.mxu0 %v760
    %2961 = vmatprep.subr.mxu0 %v774
    %2962 = vmatpush1.msra.mxu0 %v773
    %2963 = vmatprep.subr.mxu0 %v787
    %2964 = vmatpush1.msra.mxu0 %v786
    %2965 = vmatprep.subr.mxu0 %v800
    %2966 = vmatpush1.msra.mxu0 %v799
    %2967 = vmatprep.subr.mxu0 %v813
    %2968 = vmatpush1.msra.mxu0 %v812
    %2969 = vmatprep.subr.mxu0 %v826
    %2970 = vmatpush1.msra.mxu0 %v825
    %2971 = vmatprep.subr.mxu0 %v839
    %2972 = vmatpush1.msra.mxu0 %v838
    %2973 = vmatprep.subr.mxu0 %v852
    %2974 = vmatpush1.msra.mxu0 %v851
    %2975 = vmatprep.subr.mxu0 %v865
    %2976 = vmatpush1.msra.mxu0 %v864
    %2977 = vmatprep.mubr.f32.mxu0 %v1396
    %2978 = vmatmul.mubr.f32.gmra.mrb[0].mxu0 %v1394
    %v2979 = vpop.f32.mrb[0].mxu0
    %v2980 = vadd.f32 %v2909, %v2979
    %v2981 = vpop.f32.mrb[0].mxu0
    %v2982 = vadd.f32 %v2911, %v2981
    %2983 = vdwg.mxu0
    %2984 = vmatprep.subr.mxu0 %v878
    %2985 = vmatpush1.msra.mxu0 %v877
    %2986 = vmatprep.subr.mxu0 %v891
    %2987 = vmatpush1.msra.mxu0 %v890
    %2988 = vmatprep.subr.mxu0 %v904
    %2989 = vmatpush1.msra.mxu0 %v903
    %2990 = vmatprep.subr.mxu0 %v917
    %2991 = vmatpush1.msra.mxu0 %v916
    %2992 = vmatprep.subr.mxu0 %v930
    %2993 = vmatpush1.msra.mxu0 %v929
    %2994 = vmatprep.subr.mxu0 %v943
    %2995 = vmatpush1.msra.mxu0 %v942
    %2996 = vmatprep.subr.mxu0 %v956
    %2997 = vmatpush1.msra.mxu0 %v955
    %2998 = vmatprep.subr.mxu0 %v969
    %2999 = vmatpush1.msra.mxu0 %v968
    %3000 = vmatprep.subr.mxu0 %v982
    %3001 = vmatpush1.msra.mxu0 %v981
    %3002 = vmatprep.subr.mxu0 %v995
    %3003 = vmatpush1.msra.mxu0 %v994
    %3004 = vmatprep.subr.mxu0 %v1008
    %3005 = vmatpush1.msra.mxu0 %v1007
    %3006 = vmatprep.subr.mxu0 %v1021
    %3007 = vmatpush1.msra.mxu0 %v1020
    %3008 = vmatprep.subr.mxu0 %v1034
    %3009 = vmatpush1.msra.mxu0 %v1033
    %3010 = vmatprep.subr.mxu0 %v1047
    %3011 = vmatpush1.msra.mxu0 %v1046
    %3012 = vmatprep.subr.mxu0 %v1060
    %3013 = vmatpush1.msra.mxu0 %v1059
    %3014 = vmatprep.subr.mxu0 %v1073
    %3015 = vmatpush1.msra.mxu0 %v1072
    %3016 = vmatprep.subr.mxu0 %v1086
    %3017 = vmatpush1.msra.mxu0 %v1085
    %3018 = vmatprep.subr.mxu0 %v1099
    %3019 = vmatpush1.msra.mxu0 %v1098
    %3020 = vmatprep.subr.mxu0 %v1112
    %3021 = vmatpush1.msra.mxu0 %v1111
    %3022 = vmatprep.subr.mxu0 %v1125
    %3023 = vmatpush1.msra.mxu0 %v1124
    %3024 = vmatprep.subr.mxu0 %v1138
    %3025 = vmatpush1.msra.mxu0 %v1137
    %3026 = vmatprep.subr.mxu0 %v1151
    %3027 = vmatpush1.msra.mxu0 %v1150
    %3028 = vmatprep.subr.mxu0 %v1164
    %3029 = vmatpush1.msra.mxu0 %v1163
    %3030 = vmatprep.subr.mxu0 %v1177
    %3031 = vmatpush1.msra.mxu0 %v1176
    %3032 = vmatprep.subr.mxu0 %v1190
    %3033 = vmatpush1.msra.mxu0 %v1189
    %3034 = vmatprep.subr.mxu0 %v1203
    %3035 = vmatpush1.msra.mxu0 %v1202
    %3036 = vmatprep.subr.mxu0 %v1216
    %3037 = vmatpush1.msra.mxu0 %v1215
    %3038 = vmatprep.subr.mxu0 %v1229
    %3039 = vmatpush1.msra.mxu0 %v1228
    %3040 = vmatprep.subr.mxu0 %v1242
    %3041 = vmatpush1.msra.mxu0 %v1241
    %3042 = vmatprep.subr.mxu0 %v1255
    %3043 = vmatpush1.msra.mxu0 %v1254
    %3044 = vmatprep.subr.mxu0 %v1268
    %3045 = vmatpush1.msra.mxu0 %v1267
    %3046 = vmatprep.subr.mxu0 %v1281
    %3047 = vmatpush1.msra.mxu0 %v1280
    %3048 = vmatprep.mubr.f32.mxu0 %v1412
    %3049 = vmatmul.mubr.f32.gmra.mrb[0].mxu0 %v1404
    %v3050 = vpop.f32.mrb[0].mxu0
    %v3051 = vadd.f32 %v2980, %v3050
    %v3052 = vpop.f32.mrb[0].mxu0
    %v3053 = vadd.f32 %v2982, %v3052
    %3054 = vdwg.mxu0
    %3055 = vmatprep.subr.mxu0 %v1294
    %3056 = vmatpush1.msra.mxu0 %v1293
    %3057 = vmatprep.subr.mxu0 %v1307
    %3058 = vmatpush1.msra.mxu0 %v1306
    %3059 = vmatprep.subr.mxu0 0.0
    %3060 = vmatpush1.msra.mxu0 0.0
    %3061 = vmatprep.subr.mxu0 0.0
    %3062 = vmatpush1.msra.mxu0 0.0
    %3063 = vmatprep.subr.mxu0 0.0
    %3064 = vmatpush1.msra.mxu0 0.0
    %3065 = vmatprep.subr.mxu0 0.0
    %3066 = vmatpush1.msra.mxu0 0.0
    %3067 = vmatprep.subr.mxu0 0.0
    %3068 = vmatpush1.msra.mxu0 0.0
    %3069 = vmatprep.subr.mxu0 0.0
    %3070 = vmatpush1.msra.mxu0 0.0
    %3071 = vmatprep.subr.mxu0 0.0
    %3072 = vmatpush1.msra.mxu0 0.0
    %3073 = vmatprep.subr.mxu0 0.0
    %3074 = vmatpush1.msra.mxu0 0.0
    %3075 = vmatprep.subr.mxu0 0.0
    %3076 = vmatpush1.msra.mxu0 0.0
    %3077 = vmatprep.subr.mxu0 0.0
    %3078 = vmatpush1.msra.mxu0 0.0
    %3079 = vmatprep.subr.mxu0 0.0
    %3080 = vmatpush1.msra.mxu0 0.0
    %3081 = vmatprep.subr.mxu0 0.0
    %3082 = vmatpush1.msra.mxu0 0.0
    %3083 = vmatprep.subr.mxu0 0.0
    %3084 = vmatpush1.msra.mxu0 0.0
    %3085 = vmatprep.subr.mxu0 0.0
    %3086 = vmatpush1.msra.mxu0 0.0
    %3087 = vmatprep.subr.mxu0 0.0
    %3088 = vmatpush1.msra.mxu0 0.0
    %3089 = vmatprep.subr.mxu0 0.0
    %3090 = vmatpush1.msra.mxu0 0.0
    %3091 = vmatprep.subr.mxu0 0.0
    %3092 = vmatpush1.msra.mxu0 0.0
    %3093 = vmatprep.subr.mxu0 0.0
    %3094 = vmatpush1.msra.mxu0 0.0
    %3095 = vmatprep.subr.mxu0 0.0
    %3096 = vmatpush1.msra.mxu0 0.0
    %3097 = vmatprep.subr.mxu0 0.0
    %3098 = vmatpush1.msra.mxu0 0.0
    %3099 = vmatprep.subr.mxu0 0.0
    %3100 = vmatpush1.msra.mxu0 0.0
    %3101 = vmatprep.subr.mxu0 0.0
    %3102 = vmatpush1.msra.mxu0 0.0
    %3103 = vmatprep.subr.mxu0 0.0
    %3104 = vmatpush1.msra.mxu0 0.0
    %3105 = vmatprep.subr.mxu0 0.0
    %3106 = vmatpush1.msra.mxu0 0.0
    %3107 = vmatprep.subr.mxu0 0.0
    %3108 = vmatpush1.msra.mxu0 0.0
    %3109 = vmatprep.subr.mxu0 0.0
    %3110 = vmatpush1.msra.mxu0 0.0
    %3111 = vmatprep.subr.mxu0 0.0
    %3112 = vmatpush1.msra.mxu0 0.0
    %3113 = vmatprep.subr.mxu0 0.0
    %3114 = vmatpush1.msra.mxu0 0.0
    %3115 = vmatprep.subr.mxu0 0.0
    %3116 = vmatpush1.msra.mxu0 0.0
    %3117 = vmatprep.subr.mxu0 0.0
    %3118 = vmatpush1.msra.mxu0 0.0
    %3119 = vmatprep.mubr.f32.mxu0 0.0
    %3120 = vmatmul.mubr.f32.gmra.mrb[0].mxu0 %v1420
    %v3121 = vpop.f32.mrb[0].mxu0
    %v3122 = vadd.f32 %v3051, %v3121
    %v3123 = vpop.f32.mrb[0].mxu0
    %v3124 = vadd.f32 %v3053, %v3123
    %3125 = vdwg.mxu0
    %3126 = vmatprep.subr.mxu0 0.0
    %3127 = vmatpush1.msra.mxu0 %v47
    %3128 = vmatprep.subr.mxu0 0.0
    %3129 = vmatpush1.msra.mxu0 %v60
    %3130 = vmatprep.subr.mxu0 0.0
    %3131 = vmatpush1.msra.mxu0 %v73
    %3132 = vmatprep.subr.mxu0 0.0
    %3133 = vmatpush1.msra.mxu0 %v86
    %3134 = vmatprep.subr.mxu0 0.0
    %3135 = vmatpush1.msra.mxu0 %v99
    %3136 = vmatprep.subr.mxu0 0.0
    %3137 = vmatpush1.msra.mxu0 %v112
    %3138 = vmatprep.subr.mxu0 0.0
    %3139 = vmatpush1.msra.mxu0 %v125
    %3140 = vmatprep.subr.mxu0 0.0
    %3141 = vmatpush1.msra.mxu0 %v138
    %3142 = vmatprep.subr.mxu0 0.0
    %3143 = vmatpush1.msra.mxu0 %v151
    %3144 = vmatprep.subr.mxu0 0.0
    %3145 = vmatpush1.msra.mxu0 %v164
    %3146 = vmatprep.subr.mxu0 0.0
    %3147 = vmatpush1.msra.mxu0 %v177
    %3148 = vmatprep.subr.mxu0 0.0
    %3149 = vmatpush1.msra.mxu0 %v190
    %3150 = vmatprep.subr.mxu0 0.0
    %3151 = vmatpush1.msra.mxu0 %v203
    %3152 = vmatprep.subr.mxu0 0.0
    %3153 = vmatpush1.msra.mxu0 %v216
    %3154 = vmatprep.subr.mxu0 0.0
    %3155 = vmatpush1.msra.mxu0 %v229
    %3156 = vmatprep.subr.mxu0 0.0
    %3157 = vmatpush1.msra.mxu0 %v242
    %3158 = vmatprep.subr.mxu0 0.0
    %3159 = vmatpush1.msra.mxu0 %v255
    %3160 = vmatprep.subr.mxu0 0.0
    %3161 = vmatpush1.msra.mxu0 %v268
    %3162 = vmatprep.subr.mxu0 0.0
    %3163 = vmatpush1.msra.mxu0 %v281
    %3164 = vmatprep.subr.mxu0 0.0
    %3165 = vmatpush1.msra.mxu0 %v294
    %3166 = vmatprep.subr.mxu0 0.0
    %3167 = vmatpush1.msra.mxu0 %v307
    %3168 = vmatprep.subr.mxu0 0.0
    %3169 = vmatpush1.msra.mxu0 %v320
    %3170 = vmatprep.subr.mxu0 0.0
    %3171 = vmatpush1.msra.mxu0 %v333
    %3172 = vmatprep.subr.mxu0 0.0
    %3173 = vmatpush1.msra.mxu0 %v346
    %3174 = vmatprep.subr.mxu0 0.0
    %3175 = vmatpush1.msra.mxu0 %v359
    %3176 = vmatprep.subr.mxu0 0.0
    %3177 = vmatpush1.msra.mxu0 %v372
    %3178 = vmatprep.subr.mxu0 0.0
    %3179 = vmatpush1.msra.mxu0 %v385
    %3180 = vmatprep.subr.mxu0 0.0
    %3181 = vmatpush1.msra.mxu0 %v398
    %3182 = vmatprep.subr.mxu0 0.0
    %3183 = vmatpush1.msra.mxu0 %v411
    %3184 = vmatprep.subr.mxu0 0.0
    %3185 = vmatpush1.msra.mxu0 %v424
    %3186 = vmatprep.subr.mxu0 0.0
    %3187 = vmatpush1.msra.mxu0 %v437
    %3188 = vmatprep.subr.mxu0 0.0
    %3189 = vmatpush1.msra.mxu0 %v450
    %3190 = vmatprep.mubr.f32.mxu0 %v1395
    %3191 = vmatmul.mubr.f32.gmra.mrb[0].mxu0 %v1387
    %v3192 = vpop.f32.mrb[0].mxu0
    %v3193 = vadd.f32 %v1364, %v3192
    %v3194 = vpop.f32.mrb[0].mxu0
    %3195 = vdwg.mxu0
    %3196 = vmatprep.subr.mxu0 0.0
    %3197 = vmatpush1.msra.mxu0 %v463
    %3198 = vmatprep.subr.mxu0 0.0
    %3199 = vmatpush1.msra.mxu0 %v476
    %3200 = vmatprep.subr.mxu0 0.0
    %3201 = vmatpush1.msra.mxu0 %v489
    %3202 = vmatprep.subr.mxu0 0.0
    %3203 = vmatpush1.msra.mxu0 %v502
    %3204 = vmatprep.subr.mxu0 0.0
    %3205 = vmatpush1.msra.mxu0 %v515
    %3206 = vmatprep.subr.mxu0 0.0
    %3207 = vmatpush1.msra.mxu0 %v528
    %3208 = vmatprep.subr.mxu0 0.0
    %3209 = vmatpush1.msra.mxu0 %v541
    %3210 = vmatprep.subr.mxu0 0.0
    %3211 = vmatpush1.msra.mxu0 %v554
    %3212 = vmatprep.subr.mxu0 0.0
    %3213 = vmatpush1.msra.mxu0 %v567
    %3214 = vmatprep.subr.mxu0 0.0
    %3215 = vmatpush1.msra.mxu0 %v580
    %3216 = vmatprep.subr.mxu0 0.0
    %3217 = vmatpush1.msra.mxu0 %v593
    %3218 = vmatprep.subr.mxu0 0.0
    %3219 = vmatpush1.msra.mxu0 %v606
    %3220 = vmatprep.subr.mxu0 0.0
    %3221 = vmatpush1.msra.mxu0 %v619
    %3222 = vmatprep.subr.mxu0 0.0
    %3223 = vmatpush1.msra.mxu0 %v632
    %3224 = vmatprep.subr.mxu0 0.0
    %3225 = vmatpush1.msra.mxu0 %v645
    %3226 = vmatprep.subr.mxu0 0.0
    %3227 = vmatpush1.msra.mxu0 %v658
    %3228 = vmatprep.subr.mxu0 0.0
    %3229 = vmatpush1.msra.mxu0 %v671
    %3230 = vmatprep.subr.mxu0 0.0
    %3231 = vmatpush1.msra.mxu0 %v684
    %3232 = vmatprep.subr.mxu0 0.0
    %3233 = vmatpush1.msra.mxu0 %v697
    %3234 = vmatprep.subr.mxu0 0.0
    %3235 = vmatpush1.msra.mxu0 %v710
    %3236 = vmatprep.subr.mxu0 0.0
    %3237 = vmatpush1.msra.mxu0 %v723
    %3238 = vmatprep.subr.mxu0 0.0
    %3239 = vmatpush1.msra.mxu0 %v736
    %3240 = vmatprep.subr.mxu0 0.0
    %3241 = vmatpush1.msra.mxu0 %v749
    %3242 = vmatprep.subr.mxu0 0.0
    %3243 = vmatpush1.msra.mxu0 %v762
    %3244 = vmatprep.subr.mxu0 0.0
    %3245 = vmatpush1.msra.mxu0 %v775
    %3246 = vmatprep.subr.mxu0 0.0
    %3247 = vmatpush1.msra.mxu0 %v788
    %3248 = vmatprep.subr.mxu0 0.0
    %3249 = vmatpush1.msra.mxu0 %v801
    %3250 = vmatprep.subr.mxu0 0.0
    %3251 = vmatpush1.msra.mxu0 %v814
    %3252 = vmatprep.subr.mxu0 0.0
    %3253 = vmatpush1.msra.mxu0 %v827
    %3254 = vmatprep.subr.mxu0 0.0
    %3255 = vmatpush1.msra.mxu0 %v840
    %3256 = vmatprep.subr.mxu0 0.0
    %3257 = vmatpush1.msra.mxu0 %v853
    %3258 = vmatprep.subr.mxu0 0.0
    %3259 = vmatpush1.msra.mxu0 %v866
    %3260 = vmatprep.mubr.f32.mxu0 %v1396
    %3261 = vmatmul.mubr.f32.gmra.mrb[0].mxu0 %v1394
    %v3262 = vpop.f32.mrb[0].mxu0
    %v3263 = vadd.f32 %v3193, %v3262
    %v3264 = vpop.f32.mrb[0].mxu0
    %3265 = vdwg.mxu0
    %3266 = vmatprep.subr.mxu0 0.0
    %3267 = vmatpush1.msra.mxu0 %v879
    %3268 = vmatprep.subr.mxu0 0.0
    %3269 = vmatpush1.msra.mxu0 %v892
    %3270 = vmatprep.subr.mxu0 0.0
    %3271 = vmatpush1.msra.mxu0 %v905
    %3272 = vmatprep.subr.mxu0 0.0
    %3273 = vmatpush1.msra.mxu0 %v918
    %3274 = vmatprep.subr.mxu0 0.0
    %3275 = vmatpush1.msra.mxu0 %v931
    %3276 = vmatprep.subr.mxu0 0.0
    %3277 = vmatpush1.msra.mxu0 %v944
    %3278 = vmatprep.subr.mxu0 0.0
    %3279 = vmatpush1.msra.mxu0 %v957
    %3280 = vmatprep.subr.mxu0 0.0
    %3281 = vmatpush1.msra.mxu0 %v970
    %3282 = vmatprep.subr.mxu0 0.0
    %3283 = vmatpush1.msra.mxu0 %v983
    %3284 = vmatprep.subr.mxu0 0.0
    %3285 = vmatpush1.msra.mxu0 %v996
    %3286 = vmatprep.subr.mxu0 0.0
    %3287 = vmatpush1.msra.mxu0 %v1009
    %3288 = vmatprep.subr.mxu0 0.0
    %3289 = vmatpush1.msra.mxu0 %v1022
    %3290 = vmatprep.subr.mxu0 0.0
    %3291 = vmatpush1.msra.mxu0 %v1035
    %3292 = vmatprep.subr.mxu0 0.0
    %3293 = vmatpush1.msra.mxu0 %v1048
    %3294 = vmatprep.subr.mxu0 0.0
    %3295 = vmatpush1.msra.mxu0 %v1061
    %3296 = vmatprep.subr.mxu0 0.0
    %3297 = vmatpush1.msra.mxu0 %v1074
    %3298 = vmatprep.subr.mxu0 0.0
    %3299 = vmatpush1.msra.mxu0 %v1087
    %3300 = vmatprep.subr.mxu0 0.0
    %3301 = vmatpush1.msra.mxu0 %v1100
    %3302 = vmatprep.subr.mxu0 0.0
    %3303 = vmatpush1.msra.mxu0 %v1113
    %3304 = vmatprep.subr.mxu0 0.0
    %3305 = vmatpush1.msra.mxu0 %v1126
    %3306 = vmatprep.subr.mxu0 0.0
    %3307 = vmatpush1.msra.mxu0 %v1139
    %3308 = vmatprep.subr.mxu0 0.0
    %3309 = vmatpush1.msra.mxu0 %v1152
    %3310 = vmatprep.subr.mxu0 0.0
    %3311 = vmatpush1.msra.mxu0 %v1165
    %3312 = vmatprep.subr.mxu0 0.0
    %3313 = vmatpush1.msra.mxu0 %v1178
    %3314 = vmatprep.subr.mxu0 0.0
    %3315 = vmatpush1.msra.mxu0 %v1191
    %3316 = vmatprep.subr.mxu0 0.0
    %3317 = vmatpush1.msra.mxu0 %v1204
    %3318 = vmatprep.subr.mxu0 0.0
    %3319 = vmatpush1.msra.mxu0 %v1217
    %3320 = vmatprep.subr.mxu0 0.0
    %3321 = vmatpush1.msra.mxu0 %v1230
    %3322 = vmatprep.subr.mxu0 0.0
    %3323 = vmatpush1.msra.mxu0 %v1243
    %3324 = vmatprep.subr.mxu0 0.0
    %3325 = vmatpush1.msra.mxu0 %v1256
    %3326 = vmatprep.subr.mxu0 0.0
    %3327 = vmatpush1.msra.mxu0 %v1269
    %3328 = vmatprep.subr.mxu0 0.0
    %3329 = vmatpush1.msra.mxu0 %v1282
    %3330 = vmatprep.mubr.f32.mxu0 %v1412
    %3331 = vmatmul.mubr.f32.gmra.mrb[0].mxu0 %v1404
    %v3332 = vpop.f32.mrb[0].mxu0
    %v3333 = vadd.f32 %v3263, %v3332
    %v3334 = vpop.f32.mrb[0].mxu0
    %3335 = vdwg.mxu0
    %3336 = vmatprep.subr.mxu0 0.0
    %3337 = vmatpush1.msra.mxu0 %v1295
    %3338 = vmatprep.subr.mxu0 0.0
    %3339 = vmatpush1.msra.mxu0 %v1308
    %3340 = vmatprep.subr.mxu0 0.0
    %3341 = vmatpush1.msra.mxu0 0.0
    %3342 = vmatprep.subr.mxu0 0.0
    %3343 = vmatpush1.msra.mxu0 0.0
    %3344 = vmatprep.subr.mxu0 0.0
    %3345 = vmatpush1.msra.mxu0 0.0
    %3346 = vmatprep.subr.mxu0 0.0
    %3347 = vmatpush1.msra.mxu0 0.0
    %3348 = vmatprep.subr.mxu0 0.0
    %3349 = vmatpush1.msra.mxu0 0.0
    %3350 = vmatprep.subr.mxu0 0.0
    %3351 = vmatpush1.msra.mxu0 0.0
    %3352 = vmatprep.subr.mxu0 0.0
    %3353 = vmatpush1.msra.mxu0 0.0
    %3354 = vmatprep.subr.mxu0 0.0
    %3355 = vmatpush1.msra.mxu0 0.0
    %3356 = vmatprep.subr.mxu0 0.0
    %3357 = vmatpush1.msra.mxu0 0.0
    %3358 = vmatprep.subr.mxu0 0.0
    %3359 = vmatpush1.msra.mxu0 0.0
    %3360 = vmatprep.subr.mxu0 0.0
    %3361 = vmatpush1.msra.mxu0 0.0
    %3362 = vmatprep.subr.mxu0 0.0
    %3363 = vmatpush1.msra.mxu0 0.0
    %3364 = vmatprep.subr.mxu0 0.0
    %3365 = vmatpush1.msra.mxu0 0.0
    %3366 = vmatprep.subr.mxu0 0.0
    %3367 = vmatpush1.msra.mxu0 0.0
    %3368 = vmatprep.subr.mxu0 0.0
    %3369 = vmatpush1.msra.mxu0 0.0
    %3370 = vmatprep.subr.mxu0 0.0
    %3371 = vmatpush1.msra.mxu0 0.0
    %3372 = vmatprep.subr.mxu0 0.0
    %3373 = vmatpush1.msra.mxu0 0.0
    %3374 = vmatprep.subr.mxu0 0.0
    %3375 = vmatpush1.msra.mxu0 0.0
    %3376 = vmatprep.subr.mxu0 0.0
    %3377 = vmatpush1.msra.mxu0 0.0
    %3378 = vmatprep.subr.mxu0 0.0
    %3379 = vmatpush1.msra.mxu0 0.0
    %3380 = vmatprep.subr.mxu0 0.0
    %3381 = vmatpush1.msra.mxu0 0.0
    %3382 = vmatprep.subr.mxu0 0.0
    %3383 = vmatpush1.msra.mxu0 0.0
    %3384 = vmatprep.subr.mxu0 0.0
    %3385 = vmatpush1.msra.mxu0 0.0
    %3386 = vmatprep.subr.mxu0 0.0
    %3387 = vmatpush1.msra.mxu0 0.0
    %3388 = vmatprep.subr.mxu0 0.0
    %3389 = vmatpush1.msra.mxu0 0.0
    %3390 = vmatprep.subr.mxu0 0.0
    %3391 = vmatpush1.msra.mxu0 0.0
    %3392 = vmatprep.subr.mxu0 0.0
    %3393 = vmatpush1.msra.mxu0 0.0
    %3394 = vmatprep.subr.mxu0 0.0
    %3395 = vmatpush1.msra.mxu0 0.0
    %3396 = vmatprep.subr.mxu0 0.0
    %3397 = vmatpush1.msra.mxu0 0.0
    %3398 = vmatprep.subr.mxu0 0.0
    %3399 = vmatpush1.msra.mxu0 0.0
    %3400 = vmatprep.mubr.f32.mxu0 0.0
    %3401 = vmatmul.mubr.f32.gmra.mrb[0].mxu0 %v1420
    %v3402 = vpop.f32.mrb[0].mxu0
    %v3403 = vadd.f32 %v3333, %v3402
    %v3404 = vpop.f32.mrb[0].mxu0
    %3405 = vdwg.mxu0
    %v3406 = vmax.f32 %v1702, 0.0
    %v3407 = vmax.f32 %v1704, 0.0
    %v3408 = vmax.f32 %v1986, 0.0
    %v3409 = vmax.f32 %v1988, 0.0
    %v3410 = vmax.f32 %v2270, 0.0
    %v3411 = vmax.f32 %v2272, 0.0
    %v3412 = vmax.f32 %v2554, 0.0
    %v3413 = vmax.f32 %v2556, 0.0
    %v3414 = vmax.f32 %v2838, 0.0
    %v3415 = vmax.f32 %v2840, 0.0
    %v3416 = vmax.f32 %v3122, 0.0
    %v3417 = vmax.f32 %v3124, 0.0
    %v3418 = vmax.f32 %v3403, 0.0
    %v3419 = vld [vmem:[%s3] sm:$0xff]
    %v3420 = vld [vmem:[%s3 + $0x8] sm:$0xff]
    %v3421 = vld [vmem:[%s3 + $0x10] sm:$0xff]
    %v3422 = vld [vmem:[%s3 + $0x18] sm:$0xff]
    %v3423 = vld [vmem:[%s3 + $0x20] sm:$0xff]
    %v3424 = vld [vmem:[%s3 + $0x28] sm:$0xff]
    %v3425 = vld [vmem:[%s3 + $0x30] sm:$0xff]
    %v3426 = vld [vmem:[%s3 + $0x38] sm:$0xff]
    %v3427 = vld [vmem:[%s3 + $0x40] sm:$0xff]
    %v3428 = vld [vmem:[%s3 + $0x48] sm:$0xff]
    %v3429 = vld [vmem:[%s3 + $0x50] sm:$0xff]
    %v3430 = vld [vmem:[%s3 + $0x58] sm:$0xff]
    %v3431 = vld [vmem:[%s3 + $0x60] sm:$0xff]
    %v3432 = vld [vmem:[%s3 + $0x68] sm:$0xff]
    %v3433 = vld [vmem:[%s3 + $0x70] sm:$0xff]
    %v3434 = vld [vmem:[%s3 + $0x78] sm:$0xff]
    %v3435 = vld [vmem:[%s3 + $0x80] sm:$0xff]
    %v3436 = vld [vmem:[%s3 + $0x88] sm:$0xff]
    %v3437 = vld [vmem:[%s3 + $0x90] sm:$0xff]
    %v3438 = vld [vmem:[%s3 + $0x98] sm:$0xff]
    %v3439 = vld [vmem:[%s3 + $0xa0] sm:$0xff]
    %v3440 = vld [vmem:[%s3 + $0xa8] sm:$0xff]
    %v3441 = vld [vmem:[%s3 + $0xb0] sm:$0xff]
    %v3442 = vld [vmem:[%s3 + $0xb8] sm:$0xff]
    %v3443 = vld [vmem:[%s3 + $0xc0] sm:$0xff]
    %v3444 = vld [vmem:[%s3 + $0xc8] sm:$0xff]
    %v3445 = vld [vmem:[%s3 + $0xd0] sm:$0xff]
    %v3446 = vld [vmem:[%s3 + $0xd8] sm:$0xff]
    %v3447 = vld [vmem:[%s3 + $0xe0] sm:$0xff]
    %v3448 = vld [vmem:[%s3 + $0xe8] sm:$0xff]
    %v3449 = vld [vmem:[%s3 + $0xf0] sm:$0xff]
    %v3450 = vld [vmem:[%s3 + $0xf8] sm:$0xff]
    %v3451 = vld [vmem:[%s3 + $0x100] sm:$0xff]
    %v3452 = vld [vmem:[%s3 + $0x108] sm:$0xff]
    %v3453 = vld [vmem:[%s3 + $0x110] sm:$0xff]
    %v3454 = vld [vmem:[%s3 + $0x118] sm:$0xff]
    %v3455 = vld [vmem:[%s3 + $0x120] sm:$0xff]
    %v3456 = vld [vmem:[%s3 + $0x128] sm:$0xff]
    %v3457 = vld [vmem:[%s3 + $0x130] sm:$0xff]
    %v3458 = vld [vmem:[%s3 + $0x138] sm:$0xff]
    %v3459 = vld [vmem:[%s3 + $0x140] sm:$0xff]
    %v3460 = vld [vmem:[%s3 + $0x148] sm:$0xff]
    %v3461 = vld [vmem:[%s3 + $0x150] sm:$0xff]
    %v3462 = vld [vmem:[%s3 + $0x158] sm:$0xff]
    %v3463 = vld [vmem:[%s3 + $0x160] sm:$0xff]
    %v3464 = vld [vmem:[%s3 + $0x168] sm:$0xff]
    %v3465 = vld [vmem:[%s3 + $0x170] sm:$0xff]
    %v3466 = vld [vmem:[%s3 + $0x178] sm:$0xff]
    %v3467 = vld [vmem:[%s3 + $0x180] sm:$0xff]
    %v3468 = vld [vmem:[%s3 + $0x188] sm:$0xff]
    %v3469 = vld [vmem:[%s3 + $0x190] sm:$0xff]
    %v3470 = vld [vmem:[%s3 + $0x198] sm:$0xff]
    %v3471 = vld [vmem:[%s3 + $0x1a0] sm:$0xff]
    %v3472 = vld [vmem:[%s3 + $0x1a8] sm:$0xff]
    %v3473 = vld [vmem:[%s3 + $0x1b0] sm:$0xff]
    %v3474 = vld [vmem:[%s3 + $0x1b8] sm:$0xff]
    %v3475 = vld [vmem:[%s3 + $0x1c0] sm:$0xff]
    %v3476 = vld [vmem:[%s3 + $0x1c8] sm:$0xff]
    %v3477 = vld [vmem:[%s3 + $0x1d0] sm:$0xff]
    %v3478 = vld [vmem:[%s3 + $0x1d8] sm:$0xff]
    %v3479 = vld [vmem:[%s3 + $0x1e0] sm:$0xff]
    %v3480 = vld [vmem:[%s3 + $0x1e8] sm:$0xff]
    %v3481 = vld [vmem:[%s3 + $0x1f0] sm:$0xff]
    %v3482 = vld [vmem:[%s3 + $0x1f8] sm:$0xff]
    %v3483 = vld [vmem:[%s3 + $0x200] sm:$0xff]
    %v3484 = vld [vmem:[%s3 + $0x208] sm:$0xff]
    %v3485 = vld [vmem:[%s3 + $0x210] sm:$0xff]
    %v3486 = vld [vmem:[%s3 + $0x218] sm:$0xff]
    %v3487 = vld [vmem:[%s3 + $0x220] sm:$0xff]
    %v3488 = vld [vmem:[%s3 + $0x228] sm:$0xff]
    %v3489 = vld [vmem:[%s3 + $0x230] sm:$0xff]
    %v3490 = vld [vmem:[%s3 + $0x238] sm:$0xff]
    %v3491 = vld [vmem:[%s3 + $0x240] sm:$0xff]
    %v3492 = vld [vmem:[%s3 + $0x248] sm:$0xff]
    %v3493 = vld [vmem:[%s3 + $0x250] sm:$0xff]
    %v3494 = vld [vmem:[%s3 + $0x258] sm:$0xff]
    %v3495 = vld [vmem:[%s3 + $0x260] sm:$0xff]
    %v3496 = vld [vmem:[%s3 + $0x268] sm:$0xff]
    %v3497 = vld [vmem:[%s3 + $0x270] sm:$0xff]
    %v3498 = vld [vmem:[%s3 + $0x278] sm:$0xff]
    %v3499 = vld [vmem:[%s3 + $0x280] sm:$0xff]
    %v3500 = vld [vmem:[%s3 + $0x288] sm:$0xff]
    %v3501 = vld [vmem:[%s3 + $0x290] sm:$0xff]
    %v3502 = vld [vmem:[%s3 + $0x298] sm:$0xff]
    %v3503 = vld [vmem:[%s3 + $0x2a0] sm:$0xff]
    %v3504 = vld [vmem:[%s3 + $0x2a8] sm:$0xff]
    %v3505 = vld [vmem:[%s3 + $0x2b0] sm:$0xff]
    %v3506 = vld [vmem:[%s3 + $0x2b8] sm:$0xff]
    %v3507 = vld [vmem:[%s3 + $0x2c0] sm:$0xff]
    %v3508 = vld [vmem:[%s3 + $0x2c8] sm:$0xff]
    %v3509 = vld [vmem:[%s3 + $0x2d0] sm:$0xff]
    %v3510 = vld [vmem:[%s3 + $0x2d8] sm:$0xff]
    %v3511 = vld [vmem:[%s3 + $0x2e0] sm:$0xff]
    %v3512 = vld [vmem:[%s3 + $0x2e8] sm:$0xff]
    %v3513 = vld [vmem:[%s3 + $0x2f0] sm:$0xff]
    %v3514 = vld [vmem:[%s3 + $0x2f8] sm:$0xff]
    %v3515 = vld [vmem:[%s3 + $0x300] sm:$0xff]
    %v3516 = vld [vmem:[%s3 + $0x308] sm:$0xff]
    %v3517 = vld [vmem:[%s3 + $0x310] sm:$0xff]
    %v3518 = vld [vmem:[%s3 + $0x318] sm:$0xff]
    %v3519 = vld [vmem:[%s3 + $0x320] sm:$0xff]
    %v3520 = vld [vmem:[%s3 + $0x328] sm:$0xff]
    %v3521 = vld [vmem:[%s3 + $0x330] sm:$0xff]
    %v3522 = vld [vmem:[%s3 + $0x338] sm:$0xff]
    %v3523 = vld [vmem:[%s3 + $0x340] sm:$0xff]
    %v3524 = vld [vmem:[%s3 + $0x348] sm:$0xff]
    %v3525 = vld [vmem:[%s3 + $0x350] sm:$0xff]
    %v3526 = vld [vmem:[%s3 + $0x358] sm:$0xff]
    %v3527 = vld [vmem:[%s3 + $0x360] sm:$0xff]
    %v3528 = vld [vmem:[%s3 + $0x368] sm:$0xff]
    %v3529 = vld [vmem:[%s3 + $0x370] sm:$0xff]
    %v3530 = vld [vmem:[%s3 + $0x378] sm:$0xff]
    %v3531 = vld [vmem:[%s3 + $0x380] sm:$0xff]
    %v3532 = vld [vmem:[%s3 + $0x388] sm:$0xff]
    %v3533 = vld [vmem:[%s3 + $0x390] sm:$0xff]
    %v3534 = vld [vmem:[%s3 + $0x398] sm:$0xff]
    %v3535 = vld [vmem:[%s3 + $0x3a0] sm:$0xff]
    %v3536 = vld [vmem:[%s3 + $0x3a8] sm:$0xff]
    %v3537 = vld [vmem:[%s3 + $0x3b0] sm:$0xff]
    %v3538 = vld [vmem:[%s3 + $0x3b8] sm:$0xff]
    %v3539 = vld [vmem:[%s3 + $0x3c0] sm:$0xff]
    %v3540 = vld [vmem:[%s3 + $0x3c8] sm:$0xff]
    %v3541 = vld [vmem:[%s3 + $0x3d0] sm:$0xff]
    %v3542 = vld [vmem:[%s3 + $0x3d8] sm:$0xff]
    %v3543 = vld [vmem:[%s3 + $0x3e0] sm:$0xff]
    %v3544 = vld [vmem:[%s3 + $0x3e8] sm:$0xff]
    %v3545 = vld [vmem:[%s3 + $0x3f0] sm:$0xff]
    %v3546 = vld [vmem:[%s3 + $0x3f8] sm:$0xff]
    %v3547 = vld [vmem:[%s3 + $0x400] sm:$0xff]
    %v3548 = vld [vmem:[%s3 + $0x408] sm:$0xff]
    %v3549 = vld [vmem:[%s3 + $0x410] sm:$0xff]
    %v3550 = vld [vmem:[%s3 + $0x418] sm:$0xff]
    %v3551 = vld [vmem:[%s3 + $0x420] sm:$0xff]
    %v3552 = vld [vmem:[%s3 + $0x428] sm:$0xff]
    %v3553 = vld [vmem:[%s3 + $0x430] sm:$0xff]
    %v3554 = vld [vmem:[%s3 + $0x438] sm:$0xff]
    %v3555 = vld [vmem:[%s3 + $0x440] sm:$0xff]
    %v3556 = vld [vmem:[%s3 + $0x448] sm:$0xff]
    %v3557 = vld [vmem:[%s3 + $0x450] sm:$0xff]
    %v3558 = vld [vmem:[%s3 + $0x458] sm:$0xff]
    %v3559 = vld [vmem:[%s3 + $0x460] sm:$0xff]
    %v3560 = vld [vmem:[%s3 + $0x468] sm:$0xff]
    %v3561 = vld [vmem:[%s3 + $0x470] sm:$0xff]
    %v3562 = vld [vmem:[%s3 + $0x478] sm:$0xff]
    %v3563 = vld [vmem:[%s3 + $0x480] sm:$0xff]
    %v3564 = vld [vmem:[%s3 + $0x488] sm:$0xff]
    %v3565 = vld [vmem:[%s3 + $0x490] sm:$0xff]
    %v3566 = vld [vmem:[%s3 + $0x498] sm:$0xff]
    %v3567 = vld [vmem:[%s3 + $0x4a0] sm:$0xff]
    %v3568 = vld [vmem:[%s3 + $0x4a8] sm:$0xff]
    %v3569 = vld [vmem:[%s3 + $0x4b0] sm:$0xff]
    %v3570 = vld [vmem:[%s3 + $0x4b8] sm:$0xff]
    %v3571 = vld [vmem:[%s3 + $0x4c0] sm:$0xff]
    %v3572 = vld [vmem:[%s3 + $0x4c8] sm:$0xff]
    %v3573 = vld [vmem:[%s3 + $0x4d0] sm:$0xff]
    %v3574 = vld [vmem:[%s3 + $0x4d8] sm:$0xff]
    %v3575 = vld [vmem:[%s3 + $0x4e0] sm:$0xff]
    %v3576 = vld [vmem:[%s3 + $0x4e8] sm:$0xff]
    %v3577 = vld [vmem:[%s3 + $0x4f0] sm:$0xff]
    %v3578 = vld [vmem:[%s3 + $0x4f8] sm:$0xff]
    %v3579 = vld [vmem:[%s3 + $0x500] sm:$0xff]
    %v3580 = vld [vmem:[%s3 + $0x508] sm:$0xff]
    %v3581 = vld [vmem:[%s3 + $0x510] sm:$0xff]
    %v3582 = vld [vmem:[%s3 + $0x518] sm:$0xff]
    %v3583 = vld [vmem:[%s3 + $0x520] sm:$0xff]
    %v3584 = vld [vmem:[%s3 + $0x528] sm:$0xff]
    %v3585 = vld [vmem:[%s3 + $0x530] sm:$0xff]
    %v3586 = vld [vmem:[%s3 + $0x538] sm:$0xff]
    %v3587 = vld [vmem:[%s3 + $0x540] sm:$0xff]
    %v3588 = vld [vmem:[%s3 + $0x548] sm:$0xff]
    %v3589 = vld [vmem:[%s3 + $0x550] sm:$0xff]
    %v3590 = vld [vmem:[%s3 + $0x558] sm:$0xff]
    %v3591 = vld [vmem:[%s3 + $0x560] sm:$0xff]
    %v3592 = vld [vmem:[%s3 + $0x568] sm:$0xff]
    %v3593 = vld [vmem:[%s3 + $0x570] sm:$0xff]
    %v3594 = vld [vmem:[%s3 + $0x578] sm:$0xff]
    %v3595 = vld [vmem:[%s3 + $0x580] sm:$0xff]
    %v3596 = vld [vmem:[%s3 + $0x588] sm:$0xff]
    %v3597 = vld [vmem:[%s3 + $0x590] sm:$0xff]
    %v3598 = vld [vmem:[%s3 + $0x598] sm:$0xff]
    %v3599 = vld [vmem:[%s3 + $0x5a0] sm:$0xff]
    %v3600 = vld [vmem:[%s3 + $0x5a8] sm:$0xff]
    %v3601 = vld [vmem:[%s3 + $0x5b0] sm:$0xff]
    %v3602 = vld [vmem:[%s3 + $0x5b8] sm:$0xff]
    %v3603 = vld [vmem:[%s3 + $0x5c0] sm:$0xff]
    %v3604 = vld [vmem:[%s3 + $0x5c8] sm:$0xff]
    %v3605 = vld [vmem:[%s3 + $0x5d0] sm:$0xff]
    %v3606 = vld [vmem:[%s3 + $0x5d8] sm:$0xff]
    %v3607 = vld [vmem:[%s3 + $0x5e0] sm:$0xff]
    %v3608 = vld [vmem:[%s3 + $0x5e8] sm:$0xff]
    %v3609 = vld [vmem:[%s3 + $0x5f0] sm:$0xff]
    %v3610 = vld [vmem:[%s3 + $0x5f8] sm:$0xff]
    %v3611 = vld [vmem:[%s3 + $0x600] sm:$0xff]
    %v3612 = vld [vmem:[%s3 + $0x608] sm:$0xff]
    %v3613 = vld [vmem:[%s3 + $0x610] sm:$0xff]
    %v3614 = vld [vmem:[%s3 + $0x618] sm:$0xff]
    %v3615 = vld [vmem:[%s3 + $0x620] sm:$0xff]
    %v3616 = vld [vmem:[%s3 + $0x628] sm:$0xff]
    %v3617 = vld [vmem:[%s3 + $0x630] sm:$0xff]
    %v3618 = vld [vmem:[%s3 + $0x638] sm:$0xff]
    %v3619 = vld [vmem:[%s3 + $0x640] sm:$0xff]
    %v3620 = vld [vmem:[%s3 + $0x648] sm:$0xff]
    %v3621 = vld [vmem:[%s3 + $0x650] sm:$0xff]
    %v3622 = vld [vmem:[%s3 + $0x658] sm:$0xff]
    %v3623 = vld [vmem:[%s3 + $0x660] sm:$0xff]
    %v3624 = vld [vmem:[%s3 + $0x668] sm:$0xff]
    %v3625 = vld [vmem:[%s3 + $0x670] sm:$0xff]
    %v3626 = vld [vmem:[%s3 + $0x678] sm:$0xff]
    %v3627 = vld [vmem:[%s3 + $0x680] sm:$0xff]
    %v3628 = vld [vmem:[%s3 + $0x688] sm:$0xff]
    %v3629 = vld [vmem:[%s3 + $0x690] sm:$0xff]
    %v3630 = vld [vmem:[%s3 + $0x698] sm:$0xff]
    %v3631 = vld [vmem:[%s3 + $0x6a0] sm:$0xff]
    %v3632 = vld [vmem:[%s3 + $0x6a8] sm:$0xff]
    %v3633 = vld [vmem:[%s3 + $0x6b0] sm:$0xff]
    %v3634 = vld [vmem:[%s3 + $0x6b8] sm:$0xff]
    %v3635 = vld [vmem:[%s3 + $0x6c0] sm:$0xff]
    %v3636 = vld [vmem:[%s3 + $0x6c8] sm:$0xff]
    %v3637 = vld [vmem:[%s3 + $0x6d0] sm:$0xff]
    %v3638 = vld [vmem:[%s3 + $0x6d8] sm:$0xff]
    %v3639 = vld [vmem:[%s3 + $0x6e0] sm:$0xff]
    %v3640 = vld [vmem:[%s3 + $0x6e8] sm:$0xff]
    %v3641 = vld [vmem:[%s3 + $0x6f0] sm:$0xff]
    %v3642 = vld [vmem:[%s3 + $0x6f8] sm:$0xff]
    %v3643 = vld [vmem:[%s3 + $0x700] sm:$0xff]
    %v3644 = vld [vmem:[%s3 + $0x708] sm:$0xff]
    %v3645 = vld [vmem:[%s3 + $0x710] sm:$0xff]
    %v3646 = vld [vmem:[%s3 + $0x718] sm:$0xff]
    %v3647 = vld [vmem:[%s3 + $0x720] sm:$0xff]
    %v3648 = vld [vmem:[%s3 + $0x728] sm:$0xff]
    %v3649 = vld [vmem:[%s3 + $0x730] sm:$0xff]
    %v3650 = vld [vmem:[%s3 + $0x738] sm:$0xff]
    %v3651 = vld [vmem:[%s3 + $0x740] sm:$0xff]
    %v3652 = vld [vmem:[%s3 + $0x748] sm:$0xff]
    %v3653 = vld [vmem:[%s3 + $0x750] sm:$0xff]
    %v3654 = vld [vmem:[%s3 + $0x758] sm:$0xff]
    %v3655 = vld [vmem:[%s3 + $0x760] sm:$0xff]
    %v3656 = vld [vmem:[%s3 + $0x768] sm:$0xff]
    %v3657 = vld [vmem:[%s3 + $0x770] sm:$0xff]
    %v3658 = vld [vmem:[%s3 + $0x778] sm:$0xff]
    %v3659 = vld [vmem:[%s3 + $0x780] sm:$0xff]
    %v3660 = vld [vmem:[%s3 + $0x788] sm:$0xff]
    %v3661 = vld [vmem:[%s3 + $0x790] sm:$0xff]
    %v3662 = vld [vmem:[%s3 + $0x798] sm:$0xff]
    %v3663 = vld [vmem:[%s3 + $0x7a0] sm:$0xff]
    %v3664 = vld [vmem:[%s3 + $0x7a8] sm:$0xff]
    %v3665 = vld [vmem:[%s3 + $0x7b0] sm:$0xff]
    %v3666 = vld [vmem:[%s3 + $0x7b8] sm:$0xff]
    %v3667 = vld [vmem:[%s3 + $0x7c0] sm:$0xff]
    %v3668 = vld [vmem:[%s3 + $0x7c8] sm:$0xff]
    %v3669 = vld [vmem:[%s3 + $0x7d0] sm:$0xff]
    %v3670 = vld [vmem:[%s3 + $0x7d8] sm:$0xff]
    %v3671 = vld [vmem:[%s3 + $0x7e0] sm:$0xff]
    %v3672 = vld [vmem:[%s3 + $0x7e8] sm:$0xff]
    %v3673 = vld [vmem:[%s3 + $0x7f0] sm:$0xff]
    %v3674 = vld [vmem:[%s3 + $0x7f8] sm:$0xff]
    %v3675 = vld [vmem:[%s3 + $0x800] sm:$0xff]
    %v3676 = vld [vmem:[%s3 + $0x808] sm:$0xff]
    %v3677 = vld [vmem:[%s3 + $0x810] sm:$0xff]
    %v3678 = vld [vmem:[%s3 + $0x818] sm:$0xff]
    %v3679 = vld [vmem:[%s3 + $0x820] sm:$0xff]
    %v3680 = vld [vmem:[%s3 + $0x828] sm:$0xff]
    %v3681 = vld [vmem:[%s3 + $0x830] sm:$0xff]
    %v3682 = vld [vmem:[%s3 + $0x838] sm:$0xff]
    %v3683 = vld [vmem:[%s3 + $0x840] sm:$0xff]
    %v3684 = vld [vmem:[%s3 + $0x848] sm:$0xff]
    %v3685 = vld [vmem:[%s3 + $0x850] sm:$0xff]
    %v3686 = vld [vmem:[%s3 + $0x858] sm:$0xff]
    %v3687 = vld [vmem:[%s3 + $0x860] sm:$0xff]
    %v3688 = vld [vmem:[%s3 + $0x868] sm:$0xff]
    %v3689 = vld [vmem:[%s3 + $0x870] sm:$0xff]
    %v3690 = vld [vmem:[%s3 + $0x878] sm:$0xff]
    %v3691 = vld [vmem:[%s3 + $0x880] sm:$0xff]
    %v3692 = vld [vmem:[%s3 + $0x888] sm:$0xff]
    %v3693 = vld [vmem:[%s3 + $0x890] sm:$0xff]
    %v3694 = vld [vmem:[%s3 + $0x898] sm:$0xff]
    %v3695 = vld [vmem:[%s3 + $0x8a0] sm:$0xff]
    %v3696 = vld [vmem:[%s3 + $0x8a8] sm:$0xff]
    %v3697 = vld [vmem:[%s3 + $0x8b0] sm:$0xff]
    %v3698 = vld [vmem:[%s3 + $0x8b8] sm:$0xff]
    %v3699 = vld [vmem:[%s3 + $0x8c0] sm:$0xff]
    %v3700 = vld [vmem:[%s3 + $0x8c8] sm:$0xff]
    %v3701 = vld [vmem:[%s3 + $0x8d0] sm:$0xff]
    %v3702 = vld [vmem:[%s3 + $0x8d8] sm:$0xff]
    %v3703 = vld [vmem:[%s3 + $0x8e0] sm:$0xff]
    %v3704 = vld [vmem:[%s3 + $0x8e8] sm:$0xff]
    %v3705 = vld [vmem:[%s3 + $0x8f0] sm:$0xff]
    %v3706 = vld [vmem:[%s3 + $0x8f8] sm:$0xff]
    %v3707 = vld [vmem:[%s3 + $0x900] sm:$0xff]
    %v3708 = vld [vmem:[%s3 + $0x908] sm:$0xff]
    %v3709 = vld [vmem:[%s3 + $0x910] sm:$0xff]
    %v3710 = vld [vmem:[%s3 + $0x918] sm:$0xff]
    %v3711 = vld [vmem:[%s3 + $0x920] sm:$0xff]
    %v3712 = vld [vmem:[%s3 + $0x928] sm:$0xff]
    %v3713 = vld [vmem:[%s3 + $0x930] sm:$0xff]
    %v3714 = vld [vmem:[%s3 + $0x938] sm:$0xff]
    %v3715 = vld [vmem:[%s3 + $0x940] sm:$0xff]
    %v3716 = vld [vmem:[%s3 + $0x948] sm:$0xff]
    %v3717 = vld [vmem:[%s3 + $0x950] sm:$0xff]
    %v3718 = vld [vmem:[%s3 + $0x958] sm:$0xff]
    %v3719 = vld [vmem:[%s3 + $0x960] sm:$0xff]
    %v3720 = vld [vmem:[%s3 + $0x968] sm:$0xff]
    %v3721 = vld [vmem:[%s3 + $0x970] sm:$0xff]
    %v3722 = vld [vmem:[%s3 + $0x978] sm:$0xff]
    %v3723 = vld [vmem:[%s3 + $0x980] sm:$0xff]
    %v3724 = vld [vmem:[%s3 + $0x988] sm:$0xff]
    %v3725 = vld [vmem:[%s3 + $0x990] sm:$0xff]
    %v3726 = vld [vmem:[%s3 + $0x998] sm:$0xff]
    %v3727 = vld [vmem:[%s3 + $0x9a0] sm:$0xff]
    %v3728 = vld [vmem:[%s3 + $0x9a8] sm:$0xff]
    %v3729 = vld [vmem:[%s3 + $0x9b0] sm:$0xff]
    %v3730 = vld [vmem:[%s3 + $0x9b8] sm:$0xff]
    %v3731 = vld [vmem:[%s3 + $0x9c0] sm:$0xff]
    %v3732 = vld [vmem:[%s3 + $0x9c8] sm:$0xff]
    %v3733 = vld [vmem:[%s3 + $0x9d0] sm:$0xff]
    %v3734 = vld [vmem:[%s3 + $0x9d8] sm:$0xff]
    %v3735 = vld [vmem:[%s3 + $0x9e0] sm:$0xff]
    %v3736 = vld [vmem:[%s3 + $0x9e8] sm:$0xff]
    %v3737 = vld [vmem:[%s3 + $0x9f0] sm:$0xff]
    %v3738 = vld [vmem:[%s3 + $0x9f8] sm:$0xff]
    %v3739 = vld [vmem:[%s3 + $0xa00] sm:$0xff]
    %v3740 = vld [vmem:[%s3 + $0xa08] sm:$0xff]
    %v3741 = vld [vmem:[%s3 + $0xa10] sm:$0xff]
    %v3742 = vld [vmem:[%s3 + $0xa18] sm:$0xff]
    %v3743 = vld [vmem:[%s3 + $0xa20] sm:$0xff]
    %v3744 = vld [vmem:[%s3 + $0xa28] sm:$0xff]
    %v3745 = vld [vmem:[%s3 + $0xa30] sm:$0xff]
    %v3746 = vld [vmem:[%s3 + $0xa38] sm:$0xff]
    %v3747 = vld [vmem:[%s3 + $0xa40] sm:$0xff]
    %v3748 = vld [vmem:[%s3 + $0xa48] sm:$0xff]
    %v3749 = vld [vmem:[%s3 + $0xa50] sm:$0xff]
    %v3750 = vld [vmem:[%s3 + $0xa58] sm:$0xff]
    %v3751 = vld [vmem:[%s3 + $0xa60] sm:$0xff]
    %v3752 = vld [vmem:[%s3 + $0xa68] sm:$0xff]
    %v3753 = vld [vmem:[%s3 + $0xa70] sm:$0xff]
    %v3754 = vld [vmem:[%s3 + $0xa78] sm:$0xff]
    %v3755 = vld [vmem:[%s3 + $0xa80] sm:$0xff]
    %v3756 = vld [vmem:[%s3 + $0xa88] sm:$0xff]
    %v3757 = vld [vmem:[%s3 + $0xa90] sm:$0xff]
    %v3758 = vld [vmem:[%s3 + $0xa98] sm:$0xff]
    %v3759 = vld [vmem:[%s3 + $0xaa0] sm:$0xff]
    %v3760 = vld [vmem:[%s3 + $0xaa8] sm:$0xff]
    %v3761 = vld [vmem:[%s3 + $0xab0] sm:$0xff]
    %v3762 = vld [vmem:[%s3 + $0xab8] sm:$0xff]
    %v3763 = vld [vmem:[%s3 + $0xac0] sm:$0xff]
    %v3764 = vld [vmem:[%s3 + $0xac8] sm:$0xff]
    %v3765 = vld [vmem:[%s3 + $0xad0] sm:$0xff]
    %v3766 = vld [vmem:[%s3 + $0xad8] sm:$0xff]
    %v3767 = vld [vmem:[%s3 + $0xae0] sm:$0xff]
    %v3768 = vld [vmem:[%s3 + $0xae8] sm:$0xff]
    %v3769 = vld [vmem:[%s3 + $0xaf0] sm:$0xff]
    %v3770 = vld [vmem:[%s3 + $0xaf8] sm:$0xff]
    %v3771 = vld [vmem:[%s3 + $0xb00] sm:$0xff]
    %v3772 = vld [vmem:[%s3 + $0xb08] sm:$0xff]
    %v3773 = vld [vmem:[%s3 + $0xb10] sm:$0xff]
    %v3774 = vld [vmem:[%s3 + $0xb18] sm:$0xff]
    %v3775 = vld [vmem:[%s3 + $0xb20] sm:$0xff]
    %v3776 = vld [vmem:[%s3 + $0xb28] sm:$0xff]
    %v3777 = vld [vmem:[%s3 + $0xb30] sm:$0xff]
    %v3778 = vld [vmem:[%s3 + $0xb38] sm:$0xff]
    %v3779 = vld [vmem:[%s3 + $0xb40] sm:$0xff]
    %v3780 = vld [vmem:[%s3 + $0xb48] sm:$0xff]
    %v3781 = vld [vmem:[%s3 + $0xb50] sm:$0xff]
    %v3782 = vld [vmem:[%s3 + $0xb58] sm:$0xff]
    %v3783 = vld [vmem:[%s3 + $0xb60] sm:$0xff]
    %v3784 = vld [vmem:[%s3 + $0xb68] sm:$0xff]
    %v3785 = vld [vmem:[%s3 + $0xb70] sm:$0xff]
    %v3786 = vld [vmem:[%s3 + $0xb78] sm:$0xff]
    %v3787 = vld [vmem:[%s3 + $0xb80] sm:$0xff]
    %v3788 = vld [vmem:[%s3 + $0xb88] sm:$0xff]
    %v3789 = vld [vmem:[%s3 + $0xb90] sm:$0xff]
    %v3790 = vld [vmem:[%s3 + $0xb98] sm:$0xff]
    %v3791 = vld [vmem:[%s3 + $0xba0] sm:$0xff]
    %v3792 = vld [vmem:[%s3 + $0xba8] sm:$0xff]
    %v3793 = vld [vmem:[%s3 + $0xbb0] sm:$0xff]
    %v3794 = vld [vmem:[%s3 + $0xbb8] sm:$0xff]
    %v3795 = vld [vmem:[%s3 + $0xbc0] sm:$0xff]
    %v3796 = vld [vmem:[%s3 + $0xbc8] sm:$0xff]
    %v3797 = vld [vmem:[%s3 + $0xbd0] sm:$0xff]
    %v3798 = vld [vmem:[%s3 + $0xbd8] sm:$0xff]
    %v3799 = vld [vmem:[%s3 + $0xbe0] sm:$0xff]
    %v3800 = vld [vmem:[%s3 + $0xbe8] sm:$0xff]
    %v3801 = vld [vmem:[%s3 + $0xbf0] sm:$0xff]
    %v3802 = vld [vmem:[%s3 + $0xbf8] sm:$0xff]
    %v3803 = vld [vmem:[%s3 + $0xc00] sm:$0xff]
    %v3804 = vld [vmem:[%s3 + $0xc08] sm:$0xff]
    %v3805 = vld [vmem:[%s3 + $0xc10] sm:$0xff]
    %v3806 = vld [vmem:[%s3 + $0xc18] sm:$0xff]
    %v3807 = vld [vmem:[%s3 + $0xc20] sm:$0xff]
    %v3808 = vld [vmem:[%s3 + $0xc28] sm:$0xff]
    %v3809 = vld [vmem:[%s3 + $0xc30] sm:$0xff]
    %v3810 = vld [vmem:[%s3 + $0xc38] sm:$0xff]
    %v3811 = vld [vmem:[%s3 + $0xc40] sm:$0xff]
    %v3812 = vld [vmem:[%s3 + $0xc48] sm:$0xff]
    %v3813 = vld [vmem:[%s3 + $0xc50] sm:$0xff]
    %v3814 = vld [vmem:[%s3 + $0xc58] sm:$0xff]
    %v3815 = vld [vmem:[%s3 + $0xc60] sm:$0xff]
    %v3816 = vld [vmem:[%s3 + $0xc68] sm:$0xff]
    %v3817 = vld [vmem:[%s3 + $0xc70] sm:$0xff]
    %v3818 = vld [vmem:[%s3 + $0xc78] sm:$0xff]
    %v3819 = vld [vmem:[%s3 + $0xc80] sm:$0xff]
    %v3820 = vld [vmem:[%s3 + $0xc88] sm:$0xff]
    %v3821 = vld [vmem:[%s3 + $0xc90] sm:$0xff]
    %v3822 = vld [vmem:[%s3 + $0xc98] sm:$0xff]
    %v3823 = vld [vmem:[%s3 + $0xca0] sm:$0xff]
    %v3824 = vld [vmem:[%s3 + $0xca8] sm:$0xff]
    %v3825 = vld [vmem:[%s3 + $0xcb0] sm:$0xff]
    %v3826 = vld [vmem:[%s3 + $0xcb8] sm:$0xff]
    %v3827 = vld [vmem:[%s3 + $0xcc0] sm:$0xff]
    %v3828 = vld [vmem:[%s3 + $0xcc8] sm:$0xff]
    %v3829 = vld [vmem:[%s3 + $0xcd0] sm:$0xff]
    %v3830 = vld [vmem:[%s3 + $0xcd8] sm:$0xff]
    %v3831 = vld [vmem:[%s3 + $0xce0] sm:$0xff]
    %v3832 = vld [vmem:[%s3 + $0xce8] sm:$0xff]
    %v3833 = vld [vmem:[%s3 + $0xcf0] sm:$0xff]
    %v3834 = vld [vmem:[%s3 + $0xcf8] sm:$0xff]
    %v3835 = vld [vmem:[%s3 + $0xd00] sm:$0xff]
    %v3836 = vld [vmem:[%s3 + $0xd08] sm:$0xff]
    %v3837 = vld [vmem:[%s3 + $0xd10] sm:$0xff]
    %v3838 = vld [vmem:[%s3 + $0xd18] sm:$0xff]
    %v3839 = vld [vmem:[%s3 + $0xd20] sm:$0xff]
    %v3840 = vld [vmem:[%s3 + $0xd28] sm:$0xff]
    %v3841 = vld [vmem:[%s3 + $0xd30] sm:$0xff]
    %v3842 = vld [vmem:[%s3 + $0xd38] sm:$0xff]
    %v3843 = vld [vmem:[%s3 + $0xd40] sm:$0xff]
    %v3844 = vld [vmem:[%s3 + $0xd48] sm:$0xff]
    %v3845 = vld [vmem:[%s3 + $0xd50] sm:$0xff]
    %v3846 = vld [vmem:[%s3 + $0xd58] sm:$0xff]
    %v3847 = vld [vmem:[%s3 + $0xd60] sm:$0xff]
    %v3848 = vld [vmem:[%s3 + $0xd68] sm:$0xff]
    %v3849 = vld [vmem:[%s3 + $0xd70] sm:$0xff]
    %v3850 = vld [vmem:[%s3 + $0xd78] sm:$0xff]
    %v3851 = vld [vmem:[%s3 + $0xd80] sm:$0xff]
    %v3852 = vld [vmem:[%s3 + $0xd88] sm:$0xff]
    %v3853 = vld [vmem:[%s3 + $0xd90] sm:$0xff]
    %v3854 = vld [vmem:[%s3 + $0xd98] sm:$0xff]
    %v3855 = vld [vmem:[%s3 + $0xda0] sm:$0xff]
    %v3856 = vld [vmem:[%s3 + $0xda8] sm:$0xff]
    %v3857 = vld [vmem:[%s3 + $0xdb0] sm:$0xff]
    %v3858 = vld [vmem:[%s3 + $0xdb8] sm:$0xff]
    %v3859 = vld [vmem:[%s3 + $0xdc0] sm:$0xff]
    %v3860 = vld [vmem:[%s3 + $0xdc8] sm:$0xff]
    %v3861 = vld [vmem:[%s3 + $0xdd0] sm:$0xff]
    %v3862 = vld [vmem:[%s3 + $0xdd8] sm:$0xff]
    %v3863 = vld [vmem:[%s3 + $0xde0] sm:$0xff]
    %v3864 = vld [vmem:[%s3 + $0xde8] sm:$0xff]
    %v3865 = vld [vmem:[%s3 + $0xdf0] sm:$0xff]
    %v3866 = vld [vmem:[%s3 + $0xdf8] sm:$0xff]
    %v3867 = vld [vmem:[%s3 + $0xe00] sm:$0xff]
    %v3868 = vld [vmem:[%s3 + $0xe08] sm:$0xff]
    %v3869 = vld [vmem:[%s3 + $0xe10] sm:$0xff]
    %v3870 = vld [vmem:[%s3 + $0xe18] sm:$0xff]
    %v3871 = vld [vmem:[%s3 + $0xe20] sm:$0xff]
    %v3872 = vld [vmem:[%s3 + $0xe28] sm:$0xff]
    %v3873 = vld [vmem:[%s3 + $0xe30] sm:$0xff]
    %v3874 = vld [vmem:[%s3 + $0xe38] sm:$0xff]
    %v3875 = vld [vmem:[%s3 + $0xe40] sm:$0xff]
    %v3876 = vld [vmem:[%s3 + $0xe48] sm:$0xff]
    %v3877 = vld [vmem:[%s3 + $0xe50] sm:$0xff]
    %v3878 = vld [vmem:[%s3 + $0xe58] sm:$0xff]
    %v3879 = vld [vmem:[%s3 + $0xe60] sm:$0xff]
    %v3880 = vld [vmem:[%s3 + $0xe68] sm:$0xff]
    %v3881 = vld [vmem:[%s3 + $0xe70] sm:$0xff]
    %v3882 = vld [vmem:[%s3 + $0xe78] sm:$0xff]
    %v3883 = vld [vmem:[%s3 + $0xe80] sm:$0xff]
    %v3884 = vld [vmem:[%s3 + $0xe88] sm:$0xff]
    %v3885 = vld [vmem:[%s3 + $0xe90] sm:$0xff]
    %v3886 = vld [vmem:[%s3 + $0xe98] sm:$0xff]
    %v3887 = vld [vmem:[%s3 + $0xea0] sm:$0xff]
    %v3888 = vld [vmem:[%s3 + $0xea8] sm:$0xff]
    %v3889 = vld [vmem:[%s3 + $0xeb0] sm:$0xff]
    %v3890 = vld [vmem:[%s3 + $0xeb8] sm:$0xff]
    %v3891 = vld [vmem:[%s3 + $0xec0] sm:$0xff]
    %v3892 = vld [vmem:[%s3 + $0xec8] sm:$0xff]
    %v3893 = vld [vmem:[%s3 + $0xed0] sm:$0xff]
    %v3894 = vld [vmem:[%s3 + $0xed8] sm:$0xff]
    %v3895 = vld [vmem:[%s3 + $0xee0] sm:$0xff]
    %v3896 = vld [vmem:[%s3 + $0xee8] sm:$0xff]
    %v3897 = vld [vmem:[%s3 + $0xef0] sm:$0xff]
    %v3898 = vld [vmem:[%s3 + $0xef8] sm:$0xff]
    %v3899 = vld [vmem:[%s3 + $0xf00] sm:$0xff]
    %v3900 = vld [vmem:[%s3 + $0xf08] sm:$0xff]
    %v3901 = vld [vmem:[%s3 + $0xf10] sm:$0xff]
    %v3902 = vld [vmem:[%s3 + $0xf18] sm:$0xff]
    %v3903 = vld [vmem:[%s3 + $0xf20] sm:$0xff]
    %v3904 = vld [vmem:[%s3 + $0xf28] sm:$0xff]
    %v3905 = vld [vmem:[%s3 + $0xf30] sm:$0xff]
    %v3906 = vld [vmem:[%s3 + $0xf38] sm:$0xff]
    %v3907 = vld [vmem:[%s3 + $0xf40] sm:$0xff]
    %v3908 = vld [vmem:[%s3 + $0xf48] sm:$0xff]
    %v3909 = vld [vmem:[%s3 + $0xf50] sm:$0xff]
    %v3910 = vld [vmem:[%s3 + $0xf58] sm:$0xff]
    %v3911 = vld [vmem:[%s3 + $0xf60] sm:$0xff]
    %v3912 = vld [vmem:[%s3 + $0xf68] sm:$0xff]
    %v3913 = vld [vmem:[%s3 + $0xf70] sm:$0xff]
    %v3914 = vld [vmem:[%s3 + $0xf78] sm:$0xff]
    %v3915 = vld [vmem:[%s3 + $0xf80] sm:$0xff]
    %v3916 = vld [vmem:[%s3 + $0xf88] sm:$0xff]
    %v3917 = vld [vmem:[%s3 + $0xf90] sm:$0xff]
    %v3918 = vld [vmem:[%s3 + $0xf98] sm:$0xff]
    %v3919 = vld [vmem:[%s3 + $0xfa0] sm:$0xff]
    %v3920 = vld [vmem:[%s3 + $0xfa8] sm:$0xff]
    %v3921 = vld [vmem:[%s3 + $0xfb0] sm:$0xff]
    %v3922 = vld [vmem:[%s3 + $0xfb8] sm:$0xff]
    %v3923 = vld [vmem:[%s3 + $0xfc0] sm:$0xff]
    %v3924 = vld [vmem:[%s3 + $0xfc8] sm:$0xff]
    %v3925 = vld [vmem:[%s3 + $0xfd0] sm:$0xff]
    %v3926 = vld [vmem:[%s3 + $0xfd8] sm:$0xff]
    %v3927 = vld [vmem:[%s3 + $0xfe0] sm:$0xff]
    %v3928 = vld [vmem:[%s3 + $0xfe8] sm:$0xff]
    %v3929 = vld [vmem:[%s3 + $0xff0] sm:$0xff]
    %v3930 = vld [vmem:[%s3 + $0xff8] sm:$0xff]
    %v3931 = vld [vmem:[%s3 + $0x1000] sm:$0xff]
    %v3932 = vld [vmem:[%s3 + $0x1008] sm:$0xff]
    %v3933 = vld [vmem:[%s3 + $0x1010] sm:$0xff]
    %v3934 = vld [vmem:[%s3 + $0x1018] sm:$0xff]
    %v3935 = vld [vmem:[%s3 + $0x1020] sm:$0xff]
    %v3936 = vld [vmem:[%s3 + $0x1028] sm:$0xff]
    %v3937 = vld [vmem:[%s3 + $0x1030] sm:$0xff]
    %v3938 = vld [vmem:[%s3 + $0x1038] sm:$0xff]
    %v3939 = vld [vmem:[%s3 + $0x1040] sm:$0xff]
    %v3940 = vld [vmem:[%s3 + $0x1048] sm:$0xff]
    %v3941 = vld [vmem:[%s3 + $0x1050] sm:$0xff]
    %v3942 = vld [vmem:[%s3 + $0x1058] sm:$0xff]
    %v3943 = vld [vmem:[%s3 + $0x1060] sm:$0xff]
    %v3944 = vld [vmem:[%s3 + $0x1068] sm:$0xff]
    %v3945 = vld [vmem:[%s3 + $0x1070] sm:$0xff]
    %v3946 = vld [vmem:[%s3 + $0x1078] sm:$0xff]
    %v3947 = vld [vmem:[%s3 + $0x1080] sm:$0xff]
    %v3948 = vld [vmem:[%s3 + $0x1088] sm:$0xff]
    %v3949 = vld [vmem:[%s3 + $0x1090] sm:$0xff]
    %v3950 = vld [vmem:[%s3 + $0x1098] sm:$0xff]
    %v3951 = vld [vmem:[%s3 + $0x10a0] sm:$0xff]
    %v3952 = vld [vmem:[%s3 + $0x10a8] sm:$0xff]
    %v3953 = vld [vmem:[%s3 + $0x10b0] sm:$0xff]
    %v3954 = vld [vmem:[%s3 + $0x10b8] sm:$0xff]
    %v3955 = vld [vmem:[%s3 + $0x10c0] sm:$0xff]
    %v3956 = vld [vmem:[%s3 + $0x10c8] sm:$0xff]
    %v3957 = vld [vmem:[%s3 + $0x10d0] sm:$0xff]
    %v3958 = vld [vmem:[%s3 + $0x10d8] sm:$0xff]
    %v3959 = vld [vmem:[%s3 + $0x10e0] sm:$0xff]
    %v3960 = vld [vmem:[%s3 + $0x10e8] sm:$0xff]
    %v3961 = vld [vmem:[%s3 + $0x10f0] sm:$0xff]
    %v3962 = vld [vmem:[%s3 + $0x10f8] sm:$0xff]
    %v3963 = vld [vmem:[%s3 + $0x1100] sm:$0xff]
    %v3964 = vld [vmem:[%s3 + $0x1108] sm:$0xff]
    %v3965 = vld [vmem:[%s3 + $0x1110] sm:$0xff]
    %v3966 = vld [vmem:[%s3 + $0x1118] sm:$0xff]
    %v3967 = vld [vmem:[%s3 + $0x1120] sm:$0xff]
    %v3968 = vld [vmem:[%s3 + $0x1128] sm:$0xff]
    %v3969 = vld [vmem:[%s3 + $0x1130] sm:$0xff]
    %v3970 = vld [vmem:[%s3 + $0x1138] sm:$0xff]
    %v3971 = vld [vmem:[%s3 + $0x1140] sm:$0xff]
    %v3972 = vld [vmem:[%s3 + $0x1148] sm:$0xff]
    %v3973 = vld [vmem:[%s3 + $0x1150] sm:$0xff]
    %v3974 = vld [vmem:[%s3 + $0x1158] sm:$0xff]
    %v3975 = vld [vmem:[%s3 + $0x1160] sm:$0xff]
    %v3976 = vld [vmem:[%s3 + $0x1168] sm:$0xff]
    %v3977 = vld [vmem:[%s3 + $0x1170] sm:$0xff]
    %v3978 = vld [vmem:[%s3 + $0x1178] sm:$0xff]
    %v3979 = vld [vmem:[%s3 + $0x1180] sm:$0xff]
    %v3980 = vld [vmem:[%s3 + $0x1188] sm:$0xff]
    %v3981 = vld [vmem:[%s3 + $0x1190] sm:$0xff]
    %v3982 = vld [vmem:[%s3 + $0x1198] sm:$0xff]
    %v3983 = vld [vmem:[%s3 + $0x11a0] sm:$0xff]
    %v3984 = vld [vmem:[%s3 + $0x11a8] sm:$0xff]
    %v3985 = vld [vmem:[%s3 + $0x11b0] sm:$0xff]
    %v3986 = vld [vmem:[%s3 + $0x11b8] sm:$0xff]
    %v3987 = vld [vmem:[%s3 + $0x11c0] sm:$0xff]
    %v3988 = vld [vmem:[%s3 + $0x11c8] sm:$0xff]
    %v3989 = vld [vmem:[%s3 + $0x11d0] sm:$0xff]
    %v3990 = vld [vmem:[%s3 + $0x11d8] sm:$0xff]
    %v3991 = vld [vmem:[%s3 + $0x11e0] sm:$0xff]
    %v3992 = vld [vmem:[%s3 + $0x11e8] sm:$0xff]
    %v3993 = vld [vmem:[%s3 + $0x11f0] sm:$0xff]
    %v3994 = vld [vmem:[%s3 + $0x11f8] sm:$0xff]
    %v3995 = vld [vmem:[%s3 + $0x1200] sm:$0xff]
    %v3996 = vld [vmem:[%s3 + $0x1208] sm:$0xff]
    %v3997 = vld [vmem:[%s3 + $0x1210] sm:$0xff]
    %v3998 = vld [vmem:[%s3 + $0x1218] sm:$0xff]
    %v3999 = vld [vmem:[%s3 + $0x1220] sm:$0xff]
    %v4000 = vld [vmem:[%s3 + $0x1228] sm:$0xff]
    %v4001 = vld [vmem:[%s3 + $0x1230] sm:$0xff]
    %v4002 = vld [vmem:[%s3 + $0x1238] sm:$0xff]
    %v4003 = vld [vmem:[%s3 + $0x1240] sm:$0xff]
    %v4004 = vld [vmem:[%s3 + $0x1248] sm:$0xff]
    %v4005 = vld [vmem:[%s3 + $0x1250] sm:$0xff]
    %v4006 = vld [vmem:[%s3 + $0x1258] sm:$0xff]
    %v4007 = vld [vmem:[%s3 + $0x1260] sm:$0xff]
    %v4008 = vld [vmem:[%s3 + $0x1268] sm:$0xff]
    %v4009 = vld [vmem:[%s3 + $0x1270] sm:$0xff]
    %v4010 = vld [vmem:[%s3 + $0x1278] sm:$0xff]
    %v4011 = vld [vmem:[%s3 + $0x1280] sm:$0xff]
    %v4012 = vld [vmem:[%s3 + $0x1288] sm:$0xff]
    %v4013 = vld [vmem:[%s3 + $0x1290] sm:$0xff]
    %v4014 = vld [vmem:[%s3 + $0x1298] sm:$0xff]
    %v4015 = vld [vmem:[%s3 + $0x12a0] sm:$0xff]
    %v4016 = vld [vmem:[%s3 + $0x12a8] sm:$0xff]
    %v4017 = vld [vmem:[%s3 + $0x12b0] sm:$0xff]
    %v4018 = vld [vmem:[%s3 + $0x12b8] sm:$0xff]
    %v4019 = vld [vmem:[%s3 + $0x12c0] sm:$0xff]
    %v4020 = vld [vmem:[%s3 + $0x12c8] sm:$0xff]
    %v4021 = vld [vmem:[%s3 + $0x12d0] sm:$0xff]
    %v4022 = vld [vmem:[%s3 + $0x12d8] sm:$0xff]
    %v4023 = vld [vmem:[%s3 + $0x12e0] sm:$0xff]
    %v4024 = vld [vmem:[%s3 + $0x12e8] sm:$0xff]
    %v4025 = vld [vmem:[%s3 + $0x12f0] sm:$0xff]
    %v4026 = vld [vmem:[%s3 + $0x12f8] sm:$0xff]
    %v4027 = vld [vmem:[%s3 + $0x1300] sm:$0xff]
    %v4028 = vld [vmem:[%s3 + $0x1308] sm:$0xff]
    %v4029 = vld [vmem:[%s3 + $0x1310] sm:$0xff]
    %v4030 = vld [vmem:[%s3 + $0x1318] sm:$0xff]
    %v4031 = vld [vmem:[%s3 + $0x1320] sm:$0xff]
    %v4032 = vld [vmem:[%s3 + $0x1328] sm:$0xff]
    %v4033 = vld [vmem:[%s3 + $0x1330] sm:$0xff]
    %v4034 = vld [vmem:[%s3 + $0x1338] sm:$0xff]
    %v4035 = vld [vmem:[%s3 + $0x1340] sm:$0xff]
    %v4036 = vld [vmem:[%s3 + $0x1348] sm:$0xff]
    %v4037 = vld [vmem:[%s3 + $0x1350] sm:$0xff]
    %v4038 = vld [vmem:[%s3 + $0x1358] sm:$0xff]
    %v4039 = vld [vmem:[%s3 + $0x1360] sm:$0xff]
    %v4040 = vld [vmem:[%s3 + $0x1368] sm:$0xff]
    %v4041 = vld [vmem:[%s3 + $0x1370] sm:$0xff]
    %v4042 = vld [vmem:[%s3 + $0x1378] sm:$0xff]
    %v4043 = vld [vmem:[%s3 + $0x1380] sm:$0xff]
    %v4044 = vld [vmem:[%s3 + $0x1388] sm:$0xff]
    %v4045 = vld [vmem:[%s3 + $0x1390] sm:$0xff]
    %v4046 = vld [vmem:[%s3 + $0x1398] sm:$0xff]
    %v4047 = vld [vmem:[%s3 + $0x13a0] sm:$0xff]
    %v4048 = vld [vmem:[%s3 + $0x13a8] sm:$0xff]
    %v4049 = vld [vmem:[%s3 + $0x13b0] sm:$0xff]
    %v4050 = vld [vmem:[%s3 + $0x13b8] sm:$0xff]
    %v4051 = vld [vmem:[%s3 + $0x13c0] sm:$0xff]
    %v4052 = vld [vmem:[%s3 + $0x13c8] sm:$0xff]
    %v4053 = vld [vmem:[%s3 + $0x13d0] sm:$0xff]
    %v4054 = vld [vmem:[%s3 + $0x13d8] sm:$0xff]
    %v4055 = vld [vmem:[%s3 + $0x13e0] sm:$0xff]
    %v4056 = vld [vmem:[%s3 + $0x13e8] sm:$0xff]
    %v4057 = vld [vmem:[%s3 + $0x13f0] sm:$0xff]
    %v4058 = vld [vmem:[%s3 + $0x13f8] sm:$0xff]
    %v4059 = vld [vmem:[%s3 + $0x1400] sm:$0xff]
    %v4060 = vld [vmem:[%s3 + $0x1408] sm:$0xff]
    %v4061 = vld [vmem:[%s3 + $0x1410] sm:$0xff]
    %v4062 = vld [vmem:[%s3 + $0x1418] sm:$0xff]
    %v4063 = vld [vmem:[%s3 + $0x1420] sm:$0xff]
    %v4064 = vld [vmem:[%s3 + $0x1428] sm:$0xff]
    %v4065 = vld [vmem:[%s3 + $0x1430] sm:$0xff]
    %v4066 = vld [vmem:[%s3 + $0x1438] sm:$0xff]
    %v4067 = vld [vmem:[%s3 + $0x1440] sm:$0xff]
    %v4068 = vld [vmem:[%s3 + $0x1448] sm:$0xff]
    %v4069 = vld [vmem:[%s3 + $0x1450] sm:$0xff]
    %v4070 = vld [vmem:[%s3 + $0x1458] sm:$0xff]
    %v4071 = vld [vmem:[%s3 + $0x1460] sm:$0xff]
    %v4072 = vld [vmem:[%s3 + $0x1468] sm:$0xff]
    %v4073 = vld [vmem:[%s3 + $0x1470] sm:$0xff]
    %v4074 = vld [vmem:[%s3 + $0x1478] sm:$0xff]
    %v4075 = vld [vmem:[%s3 + $0x1480] sm:$0xff]
    %v4076 = vld [vmem:[%s3 + $0x1488] sm:$0xff]
    %v4077 = vld [vmem:[%s3 + $0x1490] sm:$0xff]
    %v4078 = vld [vmem:[%s3 + $0x1498] sm:$0xff]
    %v4079 = vld [vmem:[%s3 + $0x14a0] sm:$0xff]
    %v4080 = vld [vmem:[%s3 + $0x14a8] sm:$0xff]
    %v4081 = vld [vmem:[%s3 + $0x14b0] sm:$0xff]
    %v4082 = vld [vmem:[%s3 + $0x14b8] sm:$0xff]
    %v4083 = vld [vmem:[%s3 + $0x14c0] sm:$0xff]
    %v4084 = vld [vmem:[%s3 + $0x14c8] sm:$0xff]
    %v4085 = vld [vmem:[%s3 + $0x14d0] sm:$0xff]
    %v4086 = vld [vmem:[%s3 + $0x14d8] sm:$0xff]
    %v4087 = vld [vmem:[%s3 + $0x14e0] sm:$0xff]
    %v4088 = vld [vmem:[%s3 + $0x14e8] sm:$0xff]
    %v4089 = vld [vmem:[%s3 + $0x14f0] sm:$0xff]
    %v4090 = vld [vmem:[%s3 + $0x14f8] sm:$0xff]
    %v4091 = vld [vmem:[%s3 + $0x1500] sm:$0xff]
    %v4092 = vld [vmem:[%s3 + $0x1508] sm:$0xff]
    %v4093 = vld [vmem:[%s3 + $0x1510] sm:$0xff]
    %v4094 = vld [vmem:[%s3 + $0x1518] sm:$0xff]
    %v4095 = vld [vmem:[%s3 + $0x1520] sm:$0xff]
    %v4096 = vld [vmem:[%s3 + $0x1528] sm:$0xff]
    %v4097 = vld [vmem:[%s3 + $0x1530] sm:$0xff]
    %v4098 = vld [vmem:[%s3 + $0x1538] sm:$0xff]
    %v4099 = vld [vmem:[%s3 + $0x1540] sm:$0xff]
    %v4100 = vld [vmem:[%s3 + $0x1548] sm:$0xff]
    %v4101 = vld [vmem:[%s3 + $0x1550] sm:$0xff]
    %v4102 = vld [vmem:[%s3 + $0x1558] sm:$0xff]
    %v4103 = vld [vmem:[%s3 + $0x1560] sm:$0xff]
    %v4104 = vld [vmem:[%s3 + $0x1568] sm:$0xff]
    %v4105 = vld [vmem:[%s3 + $0x1570] sm:$0xff]
    %v4106 = vld [vmem:[%s3 + $0x1578] sm:$0xff]
    %v4107 = vld [vmem:[%s3 + $0x1580] sm:$0xff]
    %v4108 = vld [vmem:[%s3 + $0x1588] sm:$0xff]
    %v4109 = vld [vmem:[%s3 + $0x1590] sm:$0xff]
    %v4110 = vld [vmem:[%s3 + $0x1598] sm:$0xff]
    %v4111 = vld [vmem:[%s3 + $0x15a0] sm:$0xff]
    %v4112 = vld [vmem:[%s3 + $0x15a8] sm:$0xff]
    %v4113 = vld [vmem:[%s3 + $0x15b0] sm:$0xff]
    %v4114 = vld [vmem:[%s3 + $0x15b8] sm:$0xff]
    %v4115 = vld [vmem:[%s3 + $0x15c0] sm:$0xff]
    %v4116 = vld [vmem:[%s3 + $0x15c8] sm:$0xff]
    %v4117 = vld [vmem:[%s3 + $0x15d0] sm:$0xff]
    %v4118 = vld [vmem:[%s3 + $0x15d8] sm:$0xff]
    %v4119 = vld [vmem:[%s3 + $0x15e0] sm:$0xff]
    %v4120 = vld [vmem:[%s3 + $0x15e8] sm:$0xff]
    %v4121 = vld [vmem:[%s3 + $0x15f0] sm:$0xff]
    %v4122 = vld [vmem:[%s3 + $0x15f8] sm:$0xff]
    %v4123 = vld [vmem:[%s3 + $0x1600] sm:$0xff]
    %v4124 = vld [vmem:[%s3 + $0x1608] sm:$0xff]
    %v4125 = vld [vmem:[%s3 + $0x1610] sm:$0xff]
    %v4126 = vld [vmem:[%s3 + $0x1618] sm:$0xff]
    %v4127 = vld [vmem:[%s3 + $0x1620] sm:$0xff]
    %v4128 = vld [vmem:[%s3 + $0x1628] sm:$0xff]
    %v4129 = vld [vmem:[%s3 + $0x1630] sm:$0xff]
    %v4130 = vld [vmem:[%s3 + $0x1638] sm:$0xff]
    %v4131 = vld [vmem:[%s3 + $0x1640] sm:$0xff]
    %v4132 = vld [vmem:[%s3 + $0x1648] sm:$0xff]
    %v4133 = vld [vmem:[%s3 + $0x1650] sm:$0xff]
    %v4134 = vld [vmem:[%s3 + $0x1658] sm:$0xff]
    %v4135 = vld [vmem:[%s3 + $0x1660] sm:$0xff]
    %v4136 = vld [vmem:[%s3 + $0x1668] sm:$0xff]
    %v4137 = vld [vmem:[%s3 + $0x1670] sm:$0xff]
    %v4138 = vld [vmem:[%s3 + $0x1678] sm:$0xff]
    %v4139 = vld [vmem:[%s3 + $0x1680] sm:$0xff]
    %v4140 = vld [vmem:[%s3 + $0x1688] sm:$0xff]
    %v4141 = vld [vmem:[%s3 + $0x1690] sm:$0xff]
    %v4142 = vld [vmem:[%s3 + $0x1698] sm:$0xff]
    %v4143 = vld [vmem:[%s3 + $0x16a0] sm:$0xff]
    %v4144 = vld [vmem:[%s3 + $0x16a8] sm:$0xff]
    %v4145 = vld [vmem:[%s3 + $0x16b0] sm:$0xff]
    %v4146 = vld [vmem:[%s3 + $0x16b8] sm:$0xff]
    %v4147 = vld [vmem:[%s3 + $0x16c0] sm:$0xff]
    %v4148 = vld [vmem:[%s3 + $0x16c8] sm:$0xff]
    %v4149 = vld [vmem:[%s3 + $0x16d0] sm:$0xff]
    %v4150 = vld [vmem:[%s3 + $0x16d8] sm:$0xff]
    %v4151 = vld [vmem:[%s3 + $0x16e0] sm:$0xff]
    %v4152 = vld [vmem:[%s3 + $0x16e8] sm:$0xff]
    %v4153 = vld [vmem:[%s3 + $0x16f0] sm:$0xff]
    %v4154 = vld [vmem:[%s3 + $0x16f8] sm:$0xff]
    %v4155 = vld [vmem:[%s3 + $0x1700] sm:$0xff]
    %v4156 = vld [vmem:[%s3 + $0x1708] sm:$0xff]
    %v4157 = vld [vmem:[%s3 + $0x1710] sm:$0xff]
    %v4158 = vld [vmem:[%s3 + $0x1718] sm:$0xff]
    %v4159 = vld [vmem:[%s3 + $0x1720] sm:$0xff]
    %v4160 = vld [vmem:[%s3 + $0x1728] sm:$0xff]
    %v4161 = vld [vmem:[%s3 + $0x1730] sm:$0xff]
    %v4162 = vld [vmem:[%s3 + $0x1738] sm:$0xff]
    %v4163 = vld [vmem:[%s3 + $0x1740] sm:$0xff]
    %v4164 = vld [vmem:[%s3 + $0x1748] sm:$0xff]
    %v4165 = vld [vmem:[%s3 + $0x1750] sm:$0xff]
    %v4166 = vld [vmem:[%s3 + $0x1758] sm:$0xff]
    %v4167 = vld [vmem:[%s3 + $0x1760] sm:$0xff]
    %v4168 = vld [vmem:[%s3 + $0x1768] sm:$0xff]
    %v4169 = vld [vmem:[%s3 + $0x1770] sm:$0xff]
    %v4170 = vld [vmem:[%s3 + $0x1778] sm:$0xff]
    %v4171 = vld [vmem:[%s3 + $0x1780] sm:$0xff]
    %v4172 = vld [vmem:[%s3 + $0x1788] sm:$0xff]
    %v4173 = vld [vmem:[%s3 + $0x1790] sm:$0xff]
    %v4174 = vld [vmem:[%s3 + $0x1798] sm:$0xff]
    %v4175 = vld [vmem:[%s3 + $0x17a0] sm:$0xff]
    %v4176 = vld [vmem:[%s3 + $0x17a8] sm:$0xff]
    %v4177 = vld [vmem:[%s3 + $0x17b0] sm:$0xff]
    %v4178 = vld [vmem:[%s3 + $0x17b8] sm:$0xff]
    %v4179 = vld [vmem:[%s3 + $0x17c0] sm:$0xff]
    %v4180 = vld [vmem:[%s3 + $0x17c8] sm:$0xff]
    %v4181 = vld [vmem:[%s3 + $0x17d0] sm:$0xff]
    %v4182 = vld [vmem:[%s3 + $0x17d8] sm:$0xff]
    %v4183 = vld [vmem:[%s3 + $0x17e0] sm:$0xff]
    %v4184 = vld [vmem:[%s3 + $0x17e8] sm:$0xff]
    %v4185 = vld [vmem:[%s3 + $0x17f0] sm:$0xff]
    %v4186 = vld [vmem:[%s3 + $0x17f8] sm:$0xff]
    %v4187 = vld [vmem:[%s3 + $0x1800] sm:$0xff]
    %v4188 = vld [vmem:[%s3 + $0x1808] sm:$0xff]
    %v4189 = vld [vmem:[%s3 + $0x1810] sm:$0xff]
    %v4190 = vld [vmem:[%s3 + $0x1818] sm:$0xff]
    %v4191 = vld [vmem:[%s3 + $0x1820] sm:$0xff]
    %v4192 = vld [vmem:[%s3 + $0x1828] sm:$0xff]
    %v4193 = vld [vmem:[%s3 + $0x1830] sm:$0xff]
    %v4194 = vld [vmem:[%s3 + $0x1838] sm:$0xff]
    %v4195 = vld [vmem:[%s3 + $0x1840] sm:$0xff]
    %v4196 = vld [vmem:[%s3 + $0x1848] sm:$0xff]
    %v4197 = vld [vmem:[%s3 + $0x1850] sm:$0xff]
    %v4198 = vld [vmem:[%s3 + $0x1858] sm:$0xff]
    %v4199 = vld [vmem:[%s3 + $0x1860] sm:$0xff]
    %v4200 = vld [vmem:[%s3 + $0x1868] sm:$0xff]
    %v4201 = vld [vmem:[%s3 + $0x1870] sm:$0xff]
    %v4202 = vld [vmem:[%s3 + $0x1878] sm:$0xff]
    %v4203 = vld [vmem:[%s3 + $0x1880] sm:$0xff]
    %v4204 = vld [vmem:[%s3 + $0x1888] sm:$0xff]
    %v4205 = vld [vmem:[%s3 + $0x1890] sm:$0xff]
    %v4206 = vld [vmem:[%s3 + $0x1898] sm:$0xff]
    %v4207 = vld [vmem:[%s3 + $0x18a0] sm:$0xff]
    %v4208 = vld [vmem:[%s3 + $0x18a8] sm:$0xff]
    %v4209 = vld [vmem:[%s3 + $0x18b0] sm:$0xff]
    %v4210 = vld [vmem:[%s3 + $0x18b8] sm:$0xff]
    %v4211 = vld [vmem:[%s3 + $0x18c0] sm:$0xff]
    %v4212 = vld [vmem:[%s3 + $0x18c8] sm:$0xff]
    %v4213 = vld [vmem:[%s3 + $0x18d0] sm:$0xff]
    %v4214 = vld [vmem:[%s3 + $0x18d8] sm:$0xff]
    %v4215 = vld [vmem:[%s3 + $0x18e0] sm:$0xff]
    %v4216 = vld [vmem:[%s3 + $0x18e8] sm:$0xff]
    %v4217 = vld [vmem:[%s3 + $0x18f0] sm:$0xff]
    %v4218 = vld [vmem:[%s3 + $0x18f8] sm:$0xff]
    %v4219 = vld [vmem:[%s3 + $0x1900] sm:$0xff]
    %v4220 = vld [vmem:[%s3 + $0x1908] sm:$0xff]
    %v4221 = vld [vmem:[%s3 + $0x1910] sm:$0xff]
    %v4222 = vld [vmem:[%s3 + $0x1918] sm:$0xff]
    %v4223 = vld [vmem:[%s3 + $0x1920] sm:$0xff]
    %v4224 = vld [vmem:[%s3 + $0x1928] sm:$0xff]
    %v4225 = vld [vmem:[%s3 + $0x1930] sm:$0xff]
    %v4226 = vld [vmem:[%s3 + $0x1938] sm:$0xff]
    %v4227 = vld [vmem:[%s3 + $0x1940] sm:$0xff]
    %v4228 = vld [vmem:[%s3 + $0x1948] sm:$0xff]
    %v4229 = vld [vmem:[%s3 + $0x1950] sm:$0xff]
    %v4230 = vld [vmem:[%s3 + $0x1958] sm:$0xff]
    %v4231 = vld [vmem:[%s3 + $0x1960] sm:$0xff]
    %v4232 = vld [vmem:[%s3 + $0x1968] sm:$0xff]
    %v4233 = vld [vmem:[%s3 + $0x1970] sm:$0xff]
    %v4234 = vld [vmem:[%s3 + $0x1978] sm:$0xff]
    %v4235 = vld [vmem:[%s3 + $0x1980] sm:$0xff]
    %v4236 = vld [vmem:[%s3 + $0x1988] sm:$0xff]
    %v4237 = vld [vmem:[%s3 + $0x1990] sm:$0xff]
    %v4238 = vld [vmem:[%s3 + $0x1998] sm:$0xff]
    %v4239 = vld [vmem:[%s3 + $0x19a0] sm:$0xff]
    %v4240 = vld [vmem:[%s3 + $0x19a8] sm:$0xff]
    %v4241 = vld [vmem:[%s3 + $0x19b0] sm:$0xff]
    %v4242 = vld [vmem:[%s3 + $0x19b8] sm:$0xff]
    %v4243 = vld [vmem:[%s3 + $0x19c0] sm:$0xff]
    %v4244 = vld [vmem:[%s3 + $0x19c8] sm:$0xff]
    %v4245 = vld [vmem:[%s3 + $0x19d0] sm:$0xff]
    %v4246 = vld [vmem:[%s3 + $0x19d8] sm:$0xff]
    %v4247 = vld [vmem:[%s3 + $0x19e0] sm:$0xff]
    %v4248 = vld [vmem:[%s3 + $0x19e8] sm:$0xff]
    %v4249 = vld [vmem:[%s3 + $0x19f0] sm:$0xff]
    %v4250 = vld [vmem:[%s3 + $0x19f8] sm:$0xff]
    %v4251 = vld [vmem:[%s3 + $0x1a00] sm:$0xff]
    %v4252 = vld [vmem:[%s3 + $0x1a08] sm:$0xff]
    %v4253 = vld [vmem:[%s3 + $0x1a10] sm:$0xff]
    %v4254 = vld [vmem:[%s3 + $0x1a18] sm:$0xff]
    %v4255 = vld [vmem:[%s3 + $0x1a20] sm:$0xff]
    %v4256 = vld [vmem:[%s3 + $0x1a28] sm:$0xff]
    %v4257 = vld [vmem:[%s3 + $0x1a30] sm:$0xff]
    %v4258 = vld [vmem:[%s3 + $0x1a38] sm:$0xff]
    %v4259 = vld [vmem:[%s3 + $0x1a40] sm:$0xff]
    %v4260 = vld [vmem:[%s3 + $0x1a48] sm:$0xff]
    %v4261 = vld [vmem:[%s3 + $0x1a50] sm:$0xff]
    %v4262 = vld [vmem:[%s3 + $0x1a58] sm:$0xff]
    %v4263 = vld [vmem:[%s3 + $0x1a60] sm:$0xff]
    %v4264 = vld [vmem:[%s3 + $0x1a68] sm:$0xff]
    %v4265 = vld [vmem:[%s3 + $0x1a70] sm:$0xff]
    %v4266 = vld [vmem:[%s3 + $0x1a78] sm:$0xff]
    %v4267 = vld [vmem:[%s3 + $0x1a80] sm:$0xff]
    %v4268 = vld [vmem:[%s3 + $0x1a88] sm:$0xff]
    %v4269 = vld [vmem:[%s3 + $0x1a90] sm:$0xff]
    %v4270 = vld [vmem:[%s3 + $0x1a98] sm:$0xff]
    %v4271 = vld [vmem:[%s3 + $0x1aa0] sm:$0xff]
    %v4272 = vld [vmem:[%s3 + $0x1aa8] sm:$0xff]
    %v4273 = vld [vmem:[%s3 + $0x1ab0] sm:$0xff]
    %v4274 = vld [vmem:[%s3 + $0x1ab8] sm:$0xff]
    %v4275 = vld [vmem:[%s3 + $0x1ac0] sm:$0xff]
    %v4276 = vld [vmem:[%s3 + $0x1ac8] sm:$0xff]
    %v4277 = vld [vmem:[%s3 + $0x1ad0] sm:$0xff]
    %v4278 = vld [vmem:[%s3 + $0x1ad8] sm:$0xff]
    %v4279 = vld [vmem:[%s3 + $0x1ae0] sm:$0xff]
    %v4280 = vld [vmem:[%s3 + $0x1ae8] sm:$0xff]
    %v4281 = vld [vmem:[%s3 + $0x1af0] sm:$0xff]
    %v4282 = vld [vmem:[%s3 + $0x1af8] sm:$0xff]
    %v4283 = vld [vmem:[%s3 + $0x1b00] sm:$0xff]
    %v4284 = vld [vmem:[%s3 + $0x1b08] sm:$0xff]
    %v4285 = vld [vmem:[%s3 + $0x1b10] sm:$0xff]
    %v4286 = vld [vmem:[%s3 + $0x1b18] sm:$0xff]
    %v4287 = vld [vmem:[%s3 + $0x1b20] sm:$0xff]
    %v4288 = vld [vmem:[%s3 + $0x1b28] sm:$0xff]
    %v4289 = vld [vmem:[%s3 + $0x1b30] sm:$0xff]
    %v4290 = vld [vmem:[%s3 + $0x1b38] sm:$0xff]
    %v4291 = vld [vmem:[%s3 + $0x1b40] sm:$0xff]
    %v4292 = vld [vmem:[%s3 + $0x1b48] sm:$0xff]
    %v4293 = vld [vmem:[%s3 + $0x1b50] sm:$0xff]
    %v4294 = vld [vmem:[%s3 + $0x1b58] sm:$0xff]
    %v4295 = vld [vmem:[%s3 + $0x1b60] sm:$0xff]
    %v4296 = vld [vmem:[%s3 + $0x1b68] sm:$0xff]
    %v4297 = vld [vmem:[%s3 + $0x1b70] sm:$0xff]
    %v4298 = vld [vmem:[%s3 + $0x1b78] sm:$0xff]
    %v4299 = vld [vmem:[%s3 + $0x1b80] sm:$0xff]
    %v4300 = vld [vmem:[%s3 + $0x1b88] sm:$0xff]
    %v4301 = vld [vmem:[%s3 + $0x1b90] sm:$0xff]
    %v4302 = vld [vmem:[%s3 + $0x1b98] sm:$0xff]
    %v4303 = vld [vmem:[%s3 + $0x1ba0] sm:$0xff]
    %v4304 = vld [vmem:[%s3 + $0x1ba8] sm:$0xff]
    %v4305 = vld [vmem:[%s3 + $0x1bb0] sm:$0xff]
    %v4306 = vld [vmem:[%s3 + $0x1bb8] sm:$0xff]
    %v4307 = vld [vmem:[%s3 + $0x1bc0] sm:$0xff]
    %v4308 = vld [vmem:[%s3 + $0x1bc8] sm:$0xff]
    %v4309 = vld [vmem:[%s3 + $0x1bd0] sm:$0xff]
    %v4310 = vld [vmem:[%s3 + $0x1bd8] sm:$0xff]
    %v4311 = vld [vmem:[%s3 + $0x1be0] sm:$0xff]
    %v4312 = vld [vmem:[%s3 + $0x1be8] sm:$0xff]
    %v4313 = vld [vmem:[%s3 + $0x1bf0] sm:$0xff]
    %v4314 = vld [vmem:[%s3 + $0x1bf8] sm:$0xff]
    %v4315 = vld [vmem:[%s3 + $0x1c00] sm:$0xff]
    %v4316 = vld [vmem:[%s3 + $0x1c08] sm:$0xff]
    %v4317 = vld [vmem:[%s3 + $0x1c10] sm:$0xff]
    %v4318 = vld [vmem:[%s3 + $0x1c18] sm:$0xff]
    %v4319 = vld [vmem:[%s3 + $0x1c20] sm:$0xff]
    %v4320 = vld [vmem:[%s3 + $0x1c28] sm:$0xff]
    %v4321 = vld [vmem:[%s3 + $0x1c30] sm:$0xff]
    %v4322 = vld [vmem:[%s3 + $0x1c38] sm:$0xff]
    %v4323 = vld [vmem:[%s3 + $0x1c40] sm:$0xff]
    %v4324 = vld [vmem:[%s3 + $0x1c48] sm:$0xff]
    %v4325 = vld [vmem:[%s3 + $0x1c50] sm:$0xff]
    %v4326 = vld [vmem:[%s3 + $0x1c58] sm:$0xff]
    %v4327 = vld [vmem:[%s3 + $0x1c60] sm:$0xff]
    %v4328 = vld [vmem:[%s3 + $0x1c68] sm:$0xff]
    %v4329 = vld [vmem:[%s3 + $0x1c70] sm:$0xff]
    %v4330 = vld [vmem:[%s3 + $0x1c78] sm:$0xff]
    %v4331 = vld [vmem:[%s3 + $0x1c80] sm:$0xff]
    %v4332 = vld [vmem:[%s3 + $0x1c88] sm:$0xff]
    %v4333 = vld [vmem:[%s3 + $0x1c90] sm:$0xff]
    %v4334 = vld [vmem:[%s3 + $0x1c98] sm:$0xff]
    %v4335 = vld [vmem:[%s3 + $0x1ca0] sm:$0xff]
    %v4336 = vld [vmem:[%s3 + $0x1ca8] sm:$0xff]
    %v4337 = vld [vmem:[%s3 + $0x1cb0] sm:$0xff]
    %v4338 = vld [vmem:[%s3 + $0x1cb8] sm:$0xff]
    %v4339 = vld [vmem:[%s3 + $0x1cc0] sm:$0xff]
    %v4340 = vld [vmem:[%s3 + $0x1cc8] sm:$0xff]
    %v4341 = vld [vmem:[%s3 + $0x1cd0] sm:$0xff]
    %v4342 = vld [vmem:[%s3 + $0x1cd8] sm:$0xff]
    %v4343 = vld [vmem:[%s3 + $0x1ce0] sm:$0xff]
    %v4344 = vld [vmem:[%s3 + $0x1ce8] sm:$0xff]
    %v4345 = vld [vmem:[%s3 + $0x1cf0] sm:$0xff]
    %v4346 = vld [vmem:[%s3 + $0x1cf8] sm:$0xff]
    %v4347 = vld [vmem:[%s3 + $0x1d00] sm:$0xff]
    %v4348 = vld [vmem:[%s3 + $0x1d08] sm:$0xff]
    %v4349 = vld [vmem:[%s3 + $0x1d10] sm:$0xff]
    %v4350 = vld [vmem:[%s3 + $0x1d18] sm:$0xff]
    %v4351 = vld [vmem:[%s3 + $0x1d20] sm:$0xff]
    %v4352 = vld [vmem:[%s3 + $0x1d28] sm:$0xff]
    %v4353 = vld [vmem:[%s3 + $0x1d30] sm:$0xff]
    %v4354 = vld [vmem:[%s3 + $0x1d38] sm:$0xff]
    %v4355 = vld [vmem:[%s3 + $0x1d40] sm:$0xff]
    %v4356 = vld [vmem:[%s3 + $0x1d48] sm:$0xff]
    %v4357 = vld [vmem:[%s3 + $0x1d50] sm:$0xff]
    %v4358 = vld [vmem:[%s3 + $0x1d58] sm:$0xff]
    %v4359 = vld [vmem:[%s3 + $0x1d60] sm:$0xff]
    %v4360 = vld [vmem:[%s3 + $0x1d68] sm:$0xff]
    %v4361 = vld [vmem:[%s3 + $0x1d70] sm:$0xff]
    %v4362 = vld [vmem:[%s3 + $0x1d78] sm:$0xff]
    %v4363 = vld [vmem:[%s3 + $0x1d80] sm:$0xff]
    %v4364 = vld [vmem:[%s3 + $0x1d88] sm:$0xff]
    %v4365 = vld [vmem:[%s3 + $0x1d90] sm:$0xff]
    %v4366 = vld [vmem:[%s3 + $0x1d98] sm:$0xff]
    %v4367 = vld [vmem:[%s3 + $0x1da0] sm:$0xff]
    %v4368 = vld [vmem:[%s3 + $0x1da8] sm:$0xff]
    %v4369 = vld [vmem:[%s3 + $0x1db0] sm:$0xff]
    %v4370 = vld [vmem:[%s3 + $0x1db8] sm:$0xff]
    %v4371 = vld [vmem:[%s3 + $0x1dc0] sm:$0xff]
    %v4372 = vld [vmem:[%s3 + $0x1dc8] sm:$0xff]
    %v4373 = vld [vmem:[%s3 + $0x1dd0] sm:$0xff]
    %v4374 = vld [vmem:[%s3 + $0x1dd8] sm:$0xff]
    %v4375 = vld [vmem:[%s3 + $0x1de0] sm:$0xff]
    %v4376 = vld [vmem:[%s3 + $0x1de8] sm:$0xff]
    %v4377 = vld [vmem:[%s3 + $0x1df0] sm:$0xff]
    %v4378 = vld [vmem:[%s3 + $0x1df8] sm:$0xff]
    %v4379 = vld [vmem:[%s3 + $0x1e00] sm:$0xff]
    %v4380 = vld [vmem:[%s3 + $0x1e08] sm:$0xff]
    %v4381 = vld [vmem:[%s3 + $0x1e10] sm:$0xff]
    %v4382 = vld [vmem:[%s3 + $0x1e18] sm:$0xff]
    %v4383 = vld [vmem:[%s3 + $0x1e20] sm:$0xff]
    %v4384 = vld [vmem:[%s3 + $0x1e28] sm:$0xff]
    %v4385 = vld [vmem:[%s3 + $0x1e30] sm:$0xff]
    %v4386 = vld [vmem:[%s3 + $0x1e38] sm:$0xff]
    %v4387 = vld [vmem:[%s3 + $0x1e40] sm:$0xff]
    %v4388 = vld [vmem:[%s3 + $0x1e48] sm:$0xff]
    %v4389 = vld [vmem:[%s3 + $0x1e50] sm:$0xff]
    %v4390 = vld [vmem:[%s3 + $0x1e58] sm:$0xff]
    %v4391 = vld [vmem:[%s3 + $0x1e60] sm:$0xff]
    %v4392 = vld [vmem:[%s3 + $0x1e68] sm:$0xff]
    %v4393 = vld [vmem:[%s3 + $0x1e70] sm:$0xff]
    %v4394 = vld [vmem:[%s3 + $0x1e78] sm:$0xff]
    %v4395 = vld [vmem:[%s3 + $0x1e80] sm:$0xff]
    %v4396 = vld [vmem:[%s3 + $0x1e88] sm:$0xff]
    %v4397 = vld [vmem:[%s3 + $0x1e90] sm:$0xff]
    %v4398 = vld [vmem:[%s3 + $0x1e98] sm:$0xff]
    %v4399 = vld [vmem:[%s3 + $0x1ea0] sm:$0xff]
    %v4400 = vld [vmem:[%s3 + $0x1ea8] sm:$0xff]
    %v4401 = vld [vmem:[%s3 + $0x1eb0] sm:$0xff]
    %v4402 = vld [vmem:[%s3 + $0x1eb8] sm:$0xff]
    %v4403 = vld [vmem:[%s3 + $0x1ec0] sm:$0xff]
    %v4404 = vld [vmem:[%s3 + $0x1ec8] sm:$0xff]
    %v4405 = vld [vmem:[%s3 + $0x1ed0] sm:$0xff]
    %v4406 = vld [vmem:[%s3 + $0x1ed8] sm:$0xff]
    %v4407 = vld [vmem:[%s3 + $0x1ee0] sm:$0xff]
    %v4408 = vld [vmem:[%s3 + $0x1ee8] sm:$0xff]
    %v4409 = vld [vmem:[%s3 + $0x1ef0] sm:$0xff]
    %v4410 = vld [vmem:[%s3 + $0x1ef8] sm:$0xff]
    %v4411 = vld [vmem:[%s3 + $0x1f00] sm:$0xff]
    %v4412 = vld [vmem:[%s3 + $0x1f08] sm:$0xff]
    %v4413 = vld [vmem:[%s3 + $0x1f10] sm:$0xff]
    %v4414 = vld [vmem:[%s3 + $0x1f18] sm:$0xff]
    %v4415 = vld [vmem:[%s3 + $0x1f20] sm:$0xff]
    %v4416 = vld [vmem:[%s3 + $0x1f28] sm:$0xff]
    %v4417 = vld [vmem:[%s3 + $0x1f30] sm:$0xff]
    %v4418 = vld [vmem:[%s3 + $0x1f38] sm:$0xff]
    %v4419 = vld [vmem:[%s3 + $0x1f40] sm:$0xff]
    %v4420 = vld [vmem:[%s3 + $0x1f48] sm:$0xff]
    %v4421 = vld [vmem:[%s3 + $0x1f50] sm:$0xff]
    %v4422 = vld [vmem:[%s3 + $0x1f58] sm:$0xff]
    %v4423 = vld [vmem:[%s3 + $0x1f60] sm:$0xff]
    %v4424 = vld [vmem:[%s3 + $0x1f68] sm:$0xff]
    %v4425 = vld [vmem:[%s3 + $0x1f70] sm:$0xff]
    %v4426 = vld [vmem:[%s3 + $0x1f78] sm:$0xff]
    %v4427 = vld [vmem:[%s3 + $0x1f80] sm:$0xff]
    %v4428 = vld [vmem:[%s3 + $0x1f88] sm:$0xff]
    %v4429 = vld [vmem:[%s3 + $0x1f90] sm:$0xff]
    %v4430 = vld [vmem:[%s3 + $0x1f98] sm:$0xff]
    %v4431 = vld [vmem:[%s3 + $0x1fa0] sm:$0xff]
    %v4432 = vld [vmem:[%s3 + $0x1fa8] sm:$0xff]
    %v4433 = vld [vmem:[%s3 + $0x1fb0] sm:$0xff]
    %v4434 = vld [vmem:[%s3 + $0x1fb8] sm:$0xff]
    %v4435 = vld [vmem:[%s3 + $0x1fc0] sm:$0xff]
    %v4436 = vld [vmem:[%s3 + $0x1fc8] sm:$0xff]
    %v4437 = vld [vmem:[%s3 + $0x1fd0] sm:$0xff]
    %v4438 = vld [vmem:[%s3 + $0x1fd8] sm:$0xff]
    %v4439 = vld [vmem:[%s3 + $0x1fe0] sm:$0xff]
    %v4440 = vld [vmem:[%s3 + $0x1fe8] sm:$0xff]
    %v4441 = vld [vmem:[%s3 + $0x1ff0] sm:$0xff]
    %v4442 = vld [vmem:[%s3 + $0x1ff8] sm:$0xff]
    %v4443 = vld [vmem:[%s3 + $0x2000] sm:$0xff]
    %v4444 = vld [vmem:[%s3 + $0x2008] sm:$0xff]
    %v4445 = vld [vmem:[%s3 + $0x2010] sm:$0xff]
    %v4446 = vld [vmem:[%s3 + $0x2018] sm:$0xff]
    %v4447 = vld [vmem:[%s3 + $0x2020] sm:$0xff]
    %v4448 = vld [vmem:[%s3 + $0x2028] sm:$0xff]
    %v4449 = vld [vmem:[%s3 + $0x2030] sm:$0xff]
    %v4450 = vld [vmem:[%s3 + $0x2038] sm:$0xff]
    %v4451 = vld [vmem:[%s3 + $0x2040] sm:$0xff]
    %v4452 = vld [vmem:[%s3 + $0x2048] sm:$0xff]
    %v4453 = vld [vmem:[%s3 + $0x2050] sm:$0xff]
    %v4454 = vld [vmem:[%s3 + $0x2058] sm:$0xff]
    %v4455 = vld [vmem:[%s3 + $0x2060] sm:$0xff]
    %v4456 = vld [vmem:[%s3 + $0x2068] sm:$0xff]
    %v4457 = vld [vmem:[%s3 + $0x2070] sm:$0xff]
    %v4458 = vld [vmem:[%s3 + $0x2078] sm:$0xff]
    %v4459 = vld [vmem:[%s3 + $0x2080] sm:$0xff]
    %v4460 = vld [vmem:[%s3 + $0x2088] sm:$0xff]
    %v4461 = vld [vmem:[%s3 + $0x2090] sm:$0xff]
    %v4462 = vld [vmem:[%s3 + $0x2098] sm:$0xff]
    %v4463 = vld [vmem:[%s3 + $0x20a0] sm:$0xff]
    %v4464 = vld [vmem:[%s3 + $0x20a8] sm:$0xff]
    %v4465 = vld [vmem:[%s3 + $0x20b0] sm:$0xff]
    %v4466 = vld [vmem:[%s3 + $0x20b8] sm:$0xff]
    %v4467 = vld [vmem:[%s3 + $0x20c0] sm:$0xff]
    %v4468 = vld [vmem:[%s3 + $0x20c8] sm:$0xff]
    %v4469 = vld [vmem:[%s3 + $0x20d0] sm:$0xff]
    %v4470 = vld [vmem:[%s3 + $0x20d8] sm:$0xff]
    %v4471 = vld [vmem:[%s3 + $0x20e0] sm:$0xff]
    %v4472 = vld [vmem:[%s3 + $0x20e8] sm:$0xff]
    %v4473 = vld [vmem:[%s3 + $0x20f0] sm:$0xff]
    %v4474 = vld [vmem:[%s3 + $0x20f8] sm:$0xff]
    %v4475 = vld [vmem:[%s3 + $0x2100] sm:$0xff]
    %v4476 = vld [vmem:[%s3 + $0x2108] sm:$0xff]
    %v4477 = vld [vmem:[%s3 + $0x2110] sm:$0xff]
    %v4478 = vld [vmem:[%s3 + $0x2118] sm:$0xff]
    %v4479 = vld [vmem:[%s3 + $0x2120] sm:$0xff]
    %v4480 = vld [vmem:[%s3 + $0x2128] sm:$0xff]
    %v4481 = vld [vmem:[%s3 + $0x2130] sm:$0xff]
    %v4482 = vld [vmem:[%s3 + $0x2138] sm:$0xff]
    %v4483 = vld [vmem:[%s3 + $0x2140] sm:$0xff]
    %v4484 = vld [vmem:[%s3 + $0x2148] sm:$0xff]
    %v4485 = vld [vmem:[%s3 + $0x2150] sm:$0xff]
    %v4486 = vld [vmem:[%s3 + $0x2158] sm:$0xff]
    %v4487 = vld [vmem:[%s3 + $0x2160] sm:$0xff]
    %v4488 = vld [vmem:[%s3 + $0x2168] sm:$0xff]
    %v4489 = vld [vmem:[%s3 + $0x2170] sm:$0xff]
    %v4490 = vld [vmem:[%s3 + $0x2178] sm:$0xff]
    %v4491 = vld [vmem:[%s3 + $0x2180] sm:$0xff]
    %v4492 = vld [vmem:[%s3 + $0x2188] sm:$0xff]
    %v4493 = vld [vmem:[%s3 + $0x2190] sm:$0xff]
    %v4494 = vld [vmem:[%s3 + $0x2198] sm:$0xff]
    %v4495 = vld [vmem:[%s3 + $0x21a0] sm:$0xff]
    %v4496 = vld [vmem:[%s3 + $0x21a8] sm:$0xff]
    %v4497 = vld [vmem:[%s3 + $0x21b0] sm:$0xff]
    %v4498 = vld [vmem:[%s3 + $0x21b8] sm:$0xff]
    %v4499 = vld [vmem:[%s3 + $0x21c0] sm:$0xff]
    %v4500 = vld [vmem:[%s3 + $0x21c8] sm:$0xff]
    %v4501 = vld [vmem:[%s3 + $0x21d0] sm:$0xff]
    %v4502 = vld [vmem:[%s3 + $0x21d8] sm:$0xff]
    %v4503 = vld [vmem:[%s3 + $0x21e0] sm:$0xff]
    %v4504 = vld [vmem:[%s3 + $0x21e8] sm:$0xff]
    %v4505 = vld [vmem:[%s3 + $0x21f0] sm:$0xff]
    %v4506 = vld [vmem:[%s3 + $0x21f8] sm:$0xff]
    %v4507 = vld [vmem:[%s3 + $0x2200] sm:$0xff]
    %v4508 = vld [vmem:[%s3 + $0x2208] sm:$0xff]
    %v4509 = vld [vmem:[%s3 + $0x2210] sm:$0xff]
    %v4510 = vld [vmem:[%s3 + $0x2218] sm:$0xff]
    %v4511 = vld [vmem:[%s3 + $0x2220] sm:$0xff]
    %v4512 = vld [vmem:[%s3 + $0x2228] sm:$0xff]
    %v4513 = vld [vmem:[%s3 + $0x2230] sm:$0xff]
    %v4514 = vld [vmem:[%s3 + $0x2238] sm:$0xff]
    %v4515 = vld [vmem:[%s3 + $0x2240] sm:$0xff]
    %v4516 = vld [vmem:[%s3 + $0x2248] sm:$0xff]
    %v4517 = vld [vmem:[%s3 + $0x2250] sm:$0xff]
    %v4518 = vld [vmem:[%s3 + $0x2258] sm:$0xff]
    %v4519 = vld [vmem:[%s3 + $0x2260] sm:$0xff]
    %v4520 = vld [vmem:[%s3 + $0x2268] sm:$0xff]
    %v4521 = vld [vmem:[%s3 + $0x2270] sm:$0xff]
    %v4522 = vld [vmem:[%s3 + $0x2278] sm:$0xff]
    %v4523 = vld [vmem:[%s3 + $0x2280] sm:$0xff]
    %v4524 = vld [vmem:[%s3 + $0x2288] sm:$0xff]
    %v4525 = vld [vmem:[%s3 + $0x2290] sm:$0xff]
    %v4526 = vld [vmem:[%s3 + $0x2298] sm:$0xff]
    %v4527 = vld [vmem:[%s3 + $0x22a0] sm:$0xff]
    %v4528 = vld [vmem:[%s3 + $0x22a8] sm:$0xff]
    %v4529 = vld [vmem:[%s3 + $0x22b0] sm:$0xff]
    %v4530 = vld [vmem:[%s3 + $0x22b8] sm:$0xff]
    %v4531 = vld [vmem:[%s3 + $0x22c0] sm:$0xff]
    %v4532 = vld [vmem:[%s3 + $0x22c8] sm:$0xff]
    %v4533 = vld [vmem:[%s3 + $0x22d0] sm:$0xff]
    %v4534 = vld [vmem:[%s3 + $0x22d8] sm:$0xff]
    %v4535 = vld [vmem:[%s3 + $0x22e0] sm:$0xff]
    %v4536 = vld [vmem:[%s3 + $0x22e8] sm:$0xff]
    %v4537 = vld [vmem:[%s3 + $0x22f0] sm:$0xff]
    %v4538 = vld [vmem:[%s3 + $0x22f8] sm:$0xff]
    %v4539 = vld [vmem:[%s3 + $0x2300] sm:$0xff]
    %v4540 = vld [vmem:[%s3 + $0x2308] sm:$0xff]
    %v4541 = vld [vmem:[%s3 + $0x2310] sm:$0xff]
    %v4542 = vld [vmem:[%s3 + $0x2318] sm:$0xff]
    %v4543 = vld [vmem:[%s3 + $0x2320] sm:$0xff]
    %v4544 = vld [vmem:[%s3 + $0x2328] sm:$0xff]
    %v4545 = vld [vmem:[%s3 + $0x2330] sm:$0xff]
    %v4546 = vld [vmem:[%s3 + $0x2338] sm:$0xff]
    %v4547 = vld [vmem:[%s3 + $0x2340] sm:$0xff]
    %v4548 = vld [vmem:[%s3 + $0x2348] sm:$0xff]
    %v4549 = vld [vmem:[%s3 + $0x2350] sm:$0xff]
    %v4550 = vld [vmem:[%s3 + $0x2358] sm:$0xff]
    %v4551 = vld [vmem:[%s3 + $0x2360] sm:$0xff]
    %v4552 = vld [vmem:[%s3 + $0x2368] sm:$0xff]
    %v4553 = vld [vmem:[%s3 + $0x2370] sm:$0xff]
    %v4554 = vld [vmem:[%s3 + $0x2378] sm:$0xff]
    %v4555 = vld [vmem:[%s3 + $0x2380] sm:$0xff]
    %v4556 = vld [vmem:[%s3 + $0x2388] sm:$0xff]
    %v4557 = vld [vmem:[%s3 + $0x2390] sm:$0xff]
    %v4558 = vld [vmem:[%s3 + $0x2398] sm:$0xff]
    %v4559 = vld [vmem:[%s3 + $0x23a0] sm:$0xff]
    %v4560 = vld [vmem:[%s3 + $0x23a8] sm:$0xff]
    %v4561 = vld [vmem:[%s3 + $0x23b0] sm:$0xff]
    %v4562 = vld [vmem:[%s3 + $0x23b8] sm:$0xff]
    %v4563 = vld [vmem:[%s3 + $0x23c0] sm:$0xff]
    %v4564 = vld [vmem:[%s3 + $0x23c8] sm:$0xff]
    %v4565 = vld [vmem:[%s3 + $0x23d0] sm:$0xff]
    %v4566 = vld [vmem:[%s3 + $0x23d8] sm:$0xff]
    %v4567 = vld [vmem:[%s3 + $0x23e0] sm:$0xff]
    %v4568 = vld [vmem:[%s3 + $0x23e8] sm:$0xff]
    %v4569 = vld [vmem:[%s3 + $0x23f0] sm:$0xff]
    %v4570 = vld [vmem:[%s3 + $0x23f8] sm:$0xff]
    %v4571 = vld [vmem:[%s3 + $0x2400] sm:$0xff]
    %v4572 = vld [vmem:[%s3 + $0x2408] sm:$0xff]
    %v4573 = vld [vmem:[%s3 + $0x2410] sm:$0xff]
    %v4574 = vld [vmem:[%s3 + $0x2418] sm:$0xff]
    %v4575 = vld [vmem:[%s3 + $0x2420] sm:$0xff]
    %v4576 = vld [vmem:[%s3 + $0x2428] sm:$0xff]
    %v4577 = vld [vmem:[%s3 + $0x2430] sm:$0xff]
    %v4578 = vld [vmem:[%s3 + $0x2438] sm:$0xff]
    %v4579 = vld [vmem:[%s3 + $0x2440] sm:$0xff]
    %v4580 = vld [vmem:[%s3 + $0x2448] sm:$0xff]
    %v4581 = vld [vmem:[%s3 + $0x2450] sm:$0xff]
    %v4582 = vld [vmem:[%s3 + $0x2458] sm:$0xff]
    %v4583 = vld [vmem:[%s3 + $0x2460] sm:$0xff]
    %v4584 = vld [vmem:[%s3 + $0x2468] sm:$0xff]
    %v4585 = vld [vmem:[%s3 + $0x2470] sm:$0xff]
    %v4586 = vld [vmem:[%s3 + $0x2478] sm:$0xff]
    %v4587 = vld [vmem:[%s3 + $0x2480] sm:$0xff]
    %v4588 = vld [vmem:[%s3 + $0x2488] sm:$0xff]
    %v4589 = vld [vmem:[%s3 + $0x2490] sm:$0xff]
    %v4590 = vld [vmem:[%s3 + $0x2498] sm:$0xff]
    %v4591 = vld [vmem:[%s3 + $0x24a0] sm:$0xff]
    %v4592 = vld [vmem:[%s3 + $0x24a8] sm:$0xff]
    %v4593 = vld [vmem:[%s3 + $0x24b0] sm:$0xff]
    %v4594 = vld [vmem:[%s3 + $0x24b8] sm:$0xff]
    %v4595 = vld [vmem:[%s3 + $0x24c0] sm:$0xff]
    %v4596 = vld [vmem:[%s3 + $0x24c8] sm:$0xff]
    %v4597 = vld [vmem:[%s3 + $0x24d0] sm:$0xff]
    %v4598 = vld [vmem:[%s3 + $0x24d8] sm:$0xff]
    %v4599 = vld [vmem:[%s3 + $0x24e0] sm:$0xff]
    %v4600 = vld [vmem:[%s3 + $0x24e8] sm:$0xff]
    %v4601 = vld [vmem:[%s3 + $0x24f0] sm:$0xff]
    %v4602 = vld [vmem:[%s3 + $0x24f8] sm:$0xff]
    %v4603 = vld [vmem:[%s3 + $0x2500] sm:$0xff]
    %v4604 = vld [vmem:[%s3 + $0x2508] sm:$0xff]
    %v4605 = vld [vmem:[%s3 + $0x2510] sm:$0xff]
    %v4606 = vld [vmem:[%s3 + $0x2518] sm:$0xff]
    %v4607 = vld [vmem:[%s3 + $0x2520] sm:$0xff]
    %v4608 = vld [vmem:[%s3 + $0x2528] sm:$0xff]
    %v4609 = vld [vmem:[%s3 + $0x2530] sm:$0xff]
    %v4610 = vld [vmem:[%s3 + $0x2538] sm:$0xff]
    %v4611 = vld [vmem:[%s3 + $0x2540] sm:$0xff]
    %v4612 = vld [vmem:[%s3 + $0x2548] sm:$0xff]
    %v4613 = vld [vmem:[%s3 + $0x2550] sm:$0xff]
    %v4614 = vld [vmem:[%s3 + $0x2558] sm:$0xff]
    %v4615 = vld [vmem:[%s3 + $0x2560] sm:$0xff]
    %v4616 = vld [vmem:[%s3 + $0x2568] sm:$0xff]
    %v4617 = vld [vmem:[%s3 + $0x2570] sm:$0xff]
    %v4618 = vld [vmem:[%s3 + $0x2578] sm:$0xff]
    %v4619 = vld [vmem:[%s3 + $0x2580] sm:$0xff]
    %v4620 = vld [vmem:[%s3 + $0x2588] sm:$0xff]
    %v4621 = vld [vmem:[%s3 + $0x2590] sm:$0xff]
    %v4622 = vld [vmem:[%s3 + $0x2598] sm:$0xff]
    %v4623 = vld [vmem:[%s3 + $0x25a0] sm:$0xff]
    %v4624 = vld [vmem:[%s3 + $0x25a8] sm:$0xff]
    %v4625 = vld [vmem:[%s3 + $0x25b0] sm:$0xff]
    %v4626 = vld [vmem:[%s3 + $0x25b8] sm:$0xff]
    %v4627 = vld [vmem:[%s3 + $0x25c0] sm:$0xff]
    %v4628 = vld [vmem:[%s3 + $0x25c8] sm:$0xff]
    %v4629 = vld [vmem:[%s3 + $0x25d0] sm:$0xff]
    %v4630 = vld [vmem:[%s3 + $0x25d8] sm:$0xff]
    %v4631 = vld [vmem:[%s3 + $0x25e0] sm:$0xff]
    %v4632 = vld [vmem:[%s3 + $0x25e8] sm:$0xff]
    %v4633 = vld [vmem:[%s3 + $0x25f0] sm:$0xff]
    %v4634 = vld [vmem:[%s3 + $0x25f8] sm:$0xff]
    %v4635 = vld [vmem:[%s3 + $0x2600] sm:$0xff]
    %v4636 = vld [vmem:[%s3 + $0x2608] sm:$0xff]
    %v4637 = vld [vmem:[%s3 + $0x2610] sm:$0xff]
    %v4638 = vld [vmem:[%s3 + $0x2618] sm:$0xff]
    %v4639 = vld [vmem:[%s3 + $0x2620] sm:$0xff]
    %v4640 = vld [vmem:[%s3 + $0x2628] sm:$0xff]
    %v4641 = vld [vmem:[%s3 + $0x2630] sm:$0xff]
    %v4642 = vld [vmem:[%s3 + $0x2638] sm:$0xff]
    %v4643 = vld [vmem:[%s3 + $0x2640] sm:$0xff]
    %v4644 = vld [vmem:[%s3 + $0x2648] sm:$0xff]
    %v4645 = vld [vmem:[%s3 + $0x2650] sm:$0xff]
    %v4646 = vld [vmem:[%s3 + $0x2658] sm:$0xff]
    %v4647 = vld [vmem:[%s3 + $0x2660] sm:$0xff]
    %v4648 = vld [vmem:[%s3 + $0x2668] sm:$0xff]
    %v4649 = vld [vmem:[%s3 + $0x2670] sm:$0xff]
    %v4650 = vld [vmem:[%s3 + $0x2678] sm:$0xff]
    %v4651 = vld [vmem:[%s3 + $0x2680] sm:$0xff]
    %v4652 = vld [vmem:[%s3 + $0x2688] sm:$0xff]
    %v4653 = vld [vmem:[%s3 + $0x2690] sm:$0xff]
    %v4654 = vld [vmem:[%s3 + $0x2698] sm:$0xff]
    %v4655 = vld [vmem:[%s3 + $0x26a0] sm:$0xff]
    %v4656 = vld [vmem:[%s3 + $0x26a8] sm:$0xff]
    %v4657 = vld [vmem:[%s3 + $0x26b0] sm:$0xff]
    %v4658 = vld [vmem:[%s3 + $0x26b8] sm:$0xff]
    %v4659 = vld [vmem:[%s3 + $0x26c0] sm:$0xff]
    %v4660 = vld [vmem:[%s3 + $0x26c8] sm:$0xff]
    %v4661 = vld [vmem:[%s3 + $0x26d0] sm:$0xff]
    %v4662 = vld [vmem:[%s3 + $0x26d8] sm:$0xff]
    %v4663 = vld [vmem:[%s3 + $0x26e0] sm:$0xff]
    %v4664 = vld [vmem:[%s3 + $0x26e8] sm:$0xff]
    %v4665 = vld [vmem:[%s3 + $0x26f0] sm:$0xff]
    %v4666 = vld [vmem:[%s3 + $0x26f8] sm:$0xff]
    %v4667 = vld [vmem:[%s3 + $0x2700] sm:$0xff]
    %v4668 = vld [vmem:[%s3 + $0x2708] sm:$0xff]
    %v4669 = vld [vmem:[%s3 + $0x2710] sm:$0xff]
    %v4670 = vld [vmem:[%s3 + $0x2718] sm:$0xff]
    %v4671 = vld [vmem:[%s3 + $0x2720] sm:$0xff]
    %v4672 = vld [vmem:[%s3 + $0x2728] sm:$0xff]
    %v4673 = vld [vmem:[%s3 + $0x2730] sm:$0xff]
    %v4674 = vld [vmem:[%s3 + $0x2738] sm:$0xff]
    %v4675 = vld [vmem:[%s3 + $0x2740] sm:$0xff]
    %v4676 = vld [vmem:[%s3 + $0x2748] sm:$0xff]
    %v4677 = vld [vmem:[%s3 + $0x2750] sm:$0xff]
    %v4678 = vld [vmem:[%s3 + $0x2758] sm:$0xff]
    %v4679 = vld [vmem:[%s3 + $0x2760] sm:$0xff]
    %v4680 = vld [vmem:[%s3 + $0x2768] sm:$0xff]
    %v4681 = vld [vmem:[%s3 + $0x2770] sm:$0xff]
    %v4682 = vld [vmem:[%s3 + $0x2778] sm:$0xff]
    %v4683 = vld [vmem:[%s3 + $0x2780] sm:$0xff]
    %v4684 = vld [vmem:[%s3 + $0x2788] sm:$0xff]
    %v4685 = vld [vmem:[%s3 + $0x2790] sm:$0xff]
    %v4686 = vld [vmem:[%s3 + $0x2798] sm:$0xff]
    %v4687 = vld [vmem:[%s3 + $0x27a0] sm:$0xff]
    %v4688 = vld [vmem:[%s3 + $0x27a8] sm:$0xff]
    %v4689 = vld [vmem:[%s3 + $0x27b0] sm:$0xff]
    %v4690 = vld [vmem:[%s3 + $0x27b8] sm:$0xff]
    %v4691 = vld [vmem:[%s3 + $0x27c0] sm:$0xff]
    %v4692 = vld [vmem:[%s3 + $0x27c8] sm:$0xff]
    %v4693 = vld [vmem:[%s3 + $0x27d0] sm:$0xff]
    %v4694 = vld [vmem:[%s3 + $0x27d8] sm:$0xff]
    %v4695 = vld [vmem:[%s3 + $0x27e0] sm:$0xff]
    %v4696 = vld [vmem:[%s3 + $0x27e8] sm:$0xff]
    %v4697 = vld [vmem:[%s3 + $0x27f0] sm:$0xff]
    %v4698 = vld [vmem:[%s3 + $0x27f8] sm:$0xff]
    %v4699 = vld [vmem:[%s3 + $0x2800] sm:$0xff]
    %v4700 = vld [vmem:[%s3 + $0x2808] sm:$0xff]
    %v4701 = vld [vmem:[%s3 + $0x2810] sm:$0xff]
    %v4702 = vld [vmem:[%s3 + $0x2818] sm:$0xff]
    %v4703 = vld [vmem:[%s3 + $0x2820] sm:$0xff]
    %v4704 = vld [vmem:[%s3 + $0x2828] sm:$0xff]
    %v4705 = vld [vmem:[%s3 + $0x2830] sm:$0xff]
    %v4706 = vld [vmem:[%s3 + $0x2838] sm:$0xff]
    %v4707 = vld [vmem:[%s3 + $0x2840] sm:$0xff]
    %v4708 = vld [vmem:[%s3 + $0x2848] sm:$0xff]
    %v4709 = vld [vmem:[%s3 + $0x2850] sm:$0xff]
    %v4710 = vld [vmem:[%s3 + $0x2858] sm:$0xff]
    %v4711 = vld [vmem:[%s3 + $0x2860] sm:$0xff]
    %v4712 = vld [vmem:[%s3 + $0x2868] sm:$0xff]
    %v4713 = vld [vmem:[%s3 + $0x2870] sm:$0xff]
    %v4714 = vld [vmem:[%s3 + $0x2878] sm:$0xff]
    %v4715 = vld [vmem:[%s3 + $0x2880] sm:$0xff]
    %v4716 = vld [vmem:[%s3 + $0x2888] sm:$0xff]
    %v4717 = vld [vmem:[%s3 + $0x2890] sm:$0xff]
    %v4718 = vld [vmem:[%s3 + $0x2898] sm:$0xff]
    %v4719 = vld [vmem:[%s3 + $0x28a0] sm:$0xff]
    %v4720 = vld [vmem:[%s3 + $0x28a8] sm:$0xff]
    %v4721 = vld [vmem:[%s3 + $0x28b0] sm:$0xff]
    %v4722 = vld [vmem:[%s3 + $0x28b8] sm:$0xff]
    %v4723 = vld [vmem:[%s3 + $0x28c0] sm:$0xff]
    %v4724 = vld [vmem:[%s3 + $0x28c8] sm:$0xff]
    %v4725 = vld [vmem:[%s3 + $0x28d0] sm:$0xff]
    %v4726 = vld [vmem:[%s3 + $0x28d8] sm:$0xff]
    %v4727 = vld [vmem:[%s3 + $0x28e0] sm:$0xff]
    %v4728 = vld [vmem:[%s3 + $0x28e8] sm:$0xff]
    %v4729 = vld [vmem:[%s3 + $0x28f0] sm:$0xff]
    %v4730 = vld [vmem:[%s3 + $0x28f8] sm:$0xff]
    %v4731 = vld [vmem:[%s3 + $0x2900] sm:$0xff]
    %v4732 = vld [vmem:[%s3 + $0x2908] sm:$0xff]
    %v4733 = vld [vmem:[%s3 + $0x2910] sm:$0xff]
    %v4734 = vld [vmem:[%s3 + $0x2918] sm:$0xff]
    %v4735 = vld [vmem:[%s3 + $0x2920] sm:$0xff]
    %v4736 = vld [vmem:[%s3 + $0x2928] sm:$0xff]
    %v4737 = vld [vmem:[%s3 + $0x2930] sm:$0xff]
    %v4738 = vld [vmem:[%s3 + $0x2938] sm:$0xff]
    %v4739 = vld [vmem:[%s3 + $0x2940] sm:$0xff]
    %v4740 = vld [vmem:[%s3 + $0x2948] sm:$0xff]
    %v4741 = vld [vmem:[%s3 + $0x2950] sm:$0xff]
    %v4742 = vld [vmem:[%s3 + $0x2958] sm:$0xff]
    %v4743 = vld [vmem:[%s3 + $0x2960] sm:$0xff]
    %v4744 = vld [vmem:[%s3 + $0x2968] sm:$0xff]
    %v4745 = vld [vmem:[%s3 + $0x2970] sm:$0xff]
    %v4746 = vld [vmem:[%s3 + $0x2978] sm:$0xff]
    %v4747 = vld [vmem:[%s3 + $0x2980] sm:$0xff]
    %v4748 = vld [vmem:[%s3 + $0x2988] sm:$0xff]
    %v4749 = vld [vmem:[%s3 + $0x2990] sm:$0xff]
    %v4750 = vld [vmem:[%s3 + $0x2998] sm:$0xff]
    %v4751 = vld [vmem:[%s3 + $0x29a0] sm:$0xff]
    %v4752 = vld [vmem:[%s3 + $0x29a8] sm:$0xff]
    %v4753 = vld [vmem:[%s3 + $0x29b0] sm:$0xff]
    %v4754 = vld [vmem:[%s3 + $0x29b8] sm:$0xff]
    %v4755 = vld [vmem:[%s3 + $0x29c0] sm:$0xff]
    %v4756 = vld [vmem:[%s3 + $0x29c8] sm:$0xff]
    %v4757 = vld [vmem:[%s3 + $0x29d0] sm:$0xff]
    %v4758 = vld [vmem:[%s3 + $0x29d8] sm:$0xff]
    %v4759 = vld [vmem:[%s3 + $0x29e0] sm:$0xff]
    %v4760 = vld [vmem:[%s3 + $0x29e8] sm:$0xff]
    %v4761 = vld [vmem:[%s3 + $0x29f0] sm:$0xff]
    %v4762 = vld [vmem:[%s3 + $0x29f8] sm:$0xff]
    %v4763 = vld [vmem:[%s3 + $0x2a00] sm:$0xff]
    %v4764 = vld [vmem:[%s3 + $0x2a08] sm:$0xff]
    %v4765 = vld [vmem:[%s3 + $0x2a10] sm:$0xff]
    %v4766 = vld [vmem:[%s3 + $0x2a18] sm:$0xff]
    %v4767 = vld [vmem:[%s3 + $0x2a20] sm:$0xff]
    %v4768 = vld [vmem:[%s3 + $0x2a28] sm:$0xff]
    %v4769 = vld [vmem:[%s3 + $0x2a30] sm:$0xff]
    %v4770 = vld [vmem:[%s3 + $0x2a38] sm:$0xff]
    %v4771 = vld [vmem:[%s3 + $0x2a40] sm:$0xff]
    %v4772 = vld [vmem:[%s3 + $0x2a48] sm:$0xff]
    %v4773 = vld [vmem:[%s3 + $0x2a50] sm:$0xff]
    %v4774 = vld [vmem:[%s3 + $0x2a58] sm:$0xff]
    %v4775 = vld [vmem:[%s3 + $0x2a60] sm:$0xff]
    %v4776 = vld [vmem:[%s3 + $0x2a68] sm:$0xff]
    %v4777 = vld [vmem:[%s3 + $0x2a70] sm:$0xff]
    %v4778 = vld [vmem:[%s3 + $0x2a78] sm:$0xff]
    %v4779 = vld [vmem:[%s3 + $0x2a80] sm:$0xff]
    %v4780 = vld [vmem:[%s3 + $0x2a88] sm:$0xff]
    %v4781 = vld [vmem:[%s3 + $0x2a90] sm:$0xff]
    %v4782 = vld [vmem:[%s3 + $0x2a98] sm:$0xff]
    %v4783 = vld [vmem:[%s3 + $0x2aa0] sm:$0xff]
    %v4784 = vld [vmem:[%s3 + $0x2aa8] sm:$0xff]
    %v4785 = vld [vmem:[%s3 + $0x2ab0] sm:$0xff]
    %v4786 = vld [vmem:[%s3 + $0x2ab8] sm:$0xff]
    %v4787 = vld [vmem:[%s3 + $0x2ac0] sm:$0xff]
    %v4788 = vld [vmem:[%s3 + $0x2ac8] sm:$0xff]
    %v4789 = vld [vmem:[%s3 + $0x2ad0] sm:$0xff]
    %v4790 = vld [vmem:[%s3 + $0x2ad8] sm:$0xff]
    %v4791 = vld [vmem:[%s4] sm:$0x7f]
    %v4793 = vlaneseq
    %v4794 = vshrl.u32 %v4793, 7
    %v4795 = vsub.s32 0, %v4794
    %v4796 = vrot.slane %v4791, %v4795
    %v4797 = vlaneseq
    %v4798 = vshrl.u32 %v4797, 7
    %v4799 = vsub.s32 1, %v4798
    %v4800 = vrot.slane %v4791, %v4799
    %v4801 = vlaneseq
    %v4802 = vshrl.u32 %v4801, 7
    %v4803 = vsub.s32 2, %v4802
    %v4804 = vrot.slane %v4791, %v4803
    %v4805 = vlaneseq
    %v4806 = vshrl.u32 %v4805, 7
    %v4807 = vsub.s32 3, %v4806
    %v4808 = vrot.slane %v4791, %v4807
    %v4809 = vlaneseq
    %v4810 = vshrl.u32 %v4809, 7
    %v4811 = vsub.s32 4, %v4810
    %v4812 = vrot.slane %v4791, %v4811
    %v4813 = vlaneseq
    %v4814 = vshrl.u32 %v4813, 7
    %v4815 = vsub.s32 5, %v4814
    %v4816 = vrot.slane %v4791, %v4815
    %v4817 = vlaneseq
    %v4818 = vshrl.u32 %v4817, 7
    %v4819 = vsub.s32 6, %v4818
    %v4820 = vrot.slane %v4791, %v4819
    %vm4828 = vcmask 261120
    %v4830 = vsel %vm4828, %v3418, 0
    %4832 = vmatprep.subr.mxu0 %v3420
    %4833 = vmatpush1.msra.mxu0 %v3419
    %4834 = vmatprep.subr.mxu0 %v3427
    %4835 = vmatpush1.msra.mxu0 %v3426
    %4836 = vmatprep.subr.mxu0 %v3434
    %4837 = vmatpush1.msra.mxu0 %v3433
    %4838 = vmatprep.subr.mxu0 %v3441
    %4839 = vmatpush1.msra.mxu0 %v3440
    %4840 = vmatprep.subr.mxu0 %v3448
    %4841 = vmatpush1.msra.mxu0 %v3447
    %4842 = vmatprep.subr.mxu0 %v3455
    %4843 = vmatpush1.msra.mxu0 %v3454
    %4844 = vmatprep.subr.mxu0 %v3462
    %4845 = vmatpush1.msra.mxu0 %v3461
    %4846 = vmatprep.subr.mxu0 %v3469
    %4847 = vmatpush1.msra.mxu0 %v3468
    %4848 = vmatprep.subr.mxu0 %v3476
    %4849 = vmatpush1.msra.mxu0 %v3475
    %4850 = vmatprep.subr.mxu0 %v3483
    %4851 = vmatpush1.msra.mxu0 %v3482
    %4852 = vmatprep.subr.mxu0 %v3490
    %4853 = vmatpush1.msra.mxu0 %v3489
    %4854 = vmatprep.subr.mxu0 %v3497
    %4855 = vmatpush1.msra.mxu0 %v3496
    %4856 = vmatprep.subr.mxu0 %v3504
    %4857 = vmatpush1.msra.mxu0 %v3503
    %4858 = vmatprep.subr.mxu0 %v3511
    %4859 = vmatpush1.msra.mxu0 %v3510
    %4860 = vmatprep.subr.mxu0 %v3518
    %4861 = vmatpush1.msra.mxu0 %v3517
    %4862 = vmatprep.subr.mxu0 %v3525
    %4863 = vmatpush1.msra.mxu0 %v3524
    %4864 = vmatprep.subr.mxu0 %v3532
    %4865 = vmatpush1.msra.mxu0 %v3531
    %4866 = vmatprep.subr.mxu0 %v3539
    %4867 = vmatpush1.msra.mxu0 %v3538
    %4868 = vmatprep.subr.mxu0 %v3546
    %4869 = vmatpush1.msra.mxu0 %v3545
    %4870 = vmatprep.subr.mxu0 %v3553
    %4871 = vmatpush1.msra.mxu0 %v3552
    %4872 = vmatprep.subr.mxu0 %v3560
    %4873 = vmatpush1.msra.mxu0 %v3559
    %4874 = vmatprep.subr.mxu0 %v3567
    %4875 = vmatpush1.msra.mxu0 %v3566
    %4876 = vmatprep.subr.mxu0 %v3574
    %4877 = vmatpush1.msra.mxu0 %v3573
    %4878 = vmatprep.subr.mxu0 %v3581
    %4879 = vmatpush1.msra.mxu0 %v3580
    %4880 = vmatprep.subr.mxu0 %v3588
    %4881 = vmatpush1.msra.mxu0 %v3587
    %4882 = vmatprep.subr.mxu0 %v3595
    %4883 = vmatpush1.msra.mxu0 %v3594
    %4884 = vmatprep.subr.mxu0 %v3602
    %4885 = vmatpush1.msra.mxu0 %v3601
    %4886 = vmatprep.subr.mxu0 %v3609
    %4887 = vmatpush1.msra.mxu0 %v3608
    %4888 = vmatprep.subr.mxu0 %v3616
    %4889 = vmatpush1.msra.mxu0 %v3615
    %4890 = vmatprep.subr.mxu0 %v3623
    %4891 = vmatpush1.msra.mxu0 %v3622
    %4892 = vmatprep.subr.mxu0 %v3630
    %4893 = vmatpush1.msra.mxu0 %v3629
    %4894 = vmatprep.subr.mxu0 %v3637
    %4895 = vmatpush1.msra.mxu0 %v3636
    %4896 = vmatprep.mubr.f32.mxu0 %v3407
    %4897 = vmatmul.mubr.f32.gmra.mrb[0].mxu0 %v3406
    %v4898 = vpop.f32.mrb[0].mxu0
    %v4899 = vadd.f32 %v4796, %v4898
    %v4900 = vpop.f32.mrb[0].mxu0
    %v4901 = vadd.f32 %v4800, %v4900
    %4902 = vdwg.mxu0
    %4903 = vmatprep.subr.mxu0 %v3644
    %4904 = vmatpush1.msra.mxu0 %v3643
    %4905 = vmatprep.subr.mxu0 %v3651
    %4906 = vmatpush1.msra.mxu0 %v3650
    %4907 = vmatprep.subr.mxu0 %v3658
    %4908 = vmatpush1.msra.mxu0 %v3657
    %4909 = vmatprep.subr.mxu0 %v3665
    %4910 = vmatpush1.msra.mxu0 %v3664
    %4911 = vmatprep.subr.mxu0 %v3672
    %4912 = vmatpush1.msra.mxu0 %v3671
    %4913 = vmatprep.subr.mxu0 %v3679
    %4914 = vmatpush1.msra.mxu0 %v3678
    %4915 = vmatprep.subr.mxu0 %v3686
    %4916 = vmatpush1.msra.mxu0 %v3685
    %4917 = vmatprep.subr.mxu0 %v3693
    %4918 = vmatpush1.msra.mxu0 %v3692
    %4919 = vmatprep.subr.mxu0 %v3700
    %4920 = vmatpush1.msra.mxu0 %v3699
    %4921 = vmatprep.subr.mxu0 %v3707
    %4922 = vmatpush1.msra.mxu0 %v3706
    %4923 = vmatprep.subr.mxu0 %v3714
    %4924 = vmatpush1.msra.mxu0 %v3713
    %4925 = vmatprep.subr.mxu0 %v3721
    %4926 = vmatpush1.msra.mxu0 %v3720
    %4927 = vmatprep.subr.mxu0 %v3728
    %4928 = vmatpush1.msra.mxu0 %v3727
    %4929 = vmatprep.subr.mxu0 %v3735
    %4930 = vmatpush1.msra.mxu0 %v3734
    %4931 = vmatprep.subr.mxu0 %v3742
    %4932 = vmatpush1.msra.mxu0 %v3741
    %4933 = vmatprep.subr.mxu0 %v3749
    %4934 = vmatpush1.msra.mxu0 %v3748
    %4935 = vmatprep.subr.mxu0 %v3756
    %4936 = vmatpush1.msra.mxu0 %v3755
    %4937 = vmatprep.subr.mxu0 %v3763
    %4938 = vmatpush1.msra.mxu0 %v3762
    %4939 = vmatprep.subr.mxu0 %v3770
    %4940 = vmatpush1.msra.mxu0 %v3769
    %4941 = vmatprep.subr.mxu0 %v3777
    %4942 = vmatpush1.msra.mxu0 %v3776
    %4943 = vmatprep.subr.mxu0 %v3784
    %4944 = vmatpush1.msra.mxu0 %v3783
    %4945 = vmatprep.subr.mxu0 %v3791
    %4946 = vmatpush1.msra.mxu0 %v3790
    %4947 = vmatprep.subr.mxu0 %v3798
    %4948 = vmatpush1.msra.mxu0 %v3797
    %4949 = vmatprep.subr.mxu0 %v3805
    %4950 = vmatpush1.msra.mxu0 %v3804
    %4951 = vmatprep.subr.mxu0 %v3812
    %4952 = vmatpush1.msra.mxu0 %v3811
    %4953 = vmatprep.subr.mxu0 %v3819
    %4954 = vmatpush1.msra.mxu0 %v3818
    %4955 = vmatprep.subr.mxu0 %v3826
    %4956 = vmatpush1.msra.mxu0 %v3825
    %4957 = vmatprep.subr.mxu0 %v3833
    %4958 = vmatpush1.msra.mxu0 %v3832
    %4959 = vmatprep.subr.mxu0 %v3840
    %4960 = vmatpush1.msra.mxu0 %v3839
    %4961 = vmatprep.subr.mxu0 %v3847
    %4962 = vmatpush1.msra.mxu0 %v3846
    %4963 = vmatprep.subr.mxu0 %v3854
    %4964 = vmatpush1.msra.mxu0 %v3853
    %4965 = vmatprep.subr.mxu0 %v3861
    %4966 = vmatpush1.msra.mxu0 %v3860
    %4967 = vmatprep.mubr.f32.mxu0 %v3409
    %4968 = vmatmul.mubr.f32.gmra.mrb[0].mxu0 %v3408
    %v4969 = vpop.f32.mrb[0].mxu0
    %v4970 = vadd.f32 %v4899, %v4969
    %v4971 = vpop.f32.mrb[0].mxu0
    %v4972 = vadd.f32 %v4901, %v4971
    %4973 = vdwg.mxu0
    %4974 = vmatprep.subr.mxu0 %v3868
    %4975 = vmatpush1.msra.mxu0 %v3867
    %4976 = vmatprep.subr.mxu0 %v3875
    %4977 = vmatpush1.msra.mxu0 %v3874
    %4978 = vmatprep.subr.mxu0 %v3882
    %4979 = vmatpush1.msra.mxu0 %v3881
    %4980 = vmatprep.subr.mxu0 %v3889
    %4981 = vmatpush1.msra.mxu0 %v3888
    %4982 = vmatprep.subr.mxu0 %v3896
    %4983 = vmatpush1.msra.mxu0 %v3895
    %4984 = vmatprep.subr.mxu0 %v3903
    %4985 = vmatpush1.msra.mxu0 %v3902
    %4986 = vmatprep.subr.mxu0 %v3910
    %4987 = vmatpush1.msra.mxu0 %v3909
    %4988 = vmatprep.subr.mxu0 %v3917
    %4989 = vmatpush1.msra.mxu0 %v3916
    %4990 = vmatprep.subr.mxu0 %v3924
    %4991 = vmatpush1.msra.mxu0 %v3923
    %4992 = vmatprep.subr.mxu0 %v3931
    %4993 = vmatpush1.msra.mxu0 %v3930
    %4994 = vmatprep.subr.mxu0 %v3938
    %4995 = vmatpush1.msra.mxu0 %v3937
    %4996 = vmatprep.subr.mxu0 %v3945
    %4997 = vmatpush1.msra.mxu0 %v3944
    %4998 = vmatprep.subr.mxu0 %v3952
    %4999 = vmatpush1.msra.mxu0 %v3951
    %5000 = vmatprep.subr.mxu0 %v3959
    %5001 = vmatpush1.msra.mxu0 %v3958
    %5002 = vmatprep.subr.mxu0 %v3966
    %5003 = vmatpush1.msra.mxu0 %v3965
    %5004 = vmatprep.subr.mxu0 %v3973
    %5005 = vmatpush1.msra.mxu0 %v3972
    %5006 = vmatprep.subr.mxu0 %v3980
    %5007 = vmatpush1.msra.mxu0 %v3979
    %5008 = vmatprep.subr.mxu0 %v3987
    %5009 = vmatpush1.msra.mxu0 %v3986
    %5010 = vmatprep.subr.mxu0 %v3994
    %5011 = vmatpush1.msra.mxu0 %v3993
    %5012 = vmatprep.subr.mxu0 %v4001
    %5013 = vmatpush1.msra.mxu0 %v4000
    %5014 = vmatprep.subr.mxu0 %v4008
    %5015 = vmatpush1.msra.mxu0 %v4007
    %5016 = vmatprep.subr.mxu0 %v4015
    %5017 = vmatpush1.msra.mxu0 %v4014
    %5018 = vmatprep.subr.mxu0 %v4022
    %5019 = vmatpush1.msra.mxu0 %v4021
    %5020 = vmatprep.subr.mxu0 %v4029
    %5021 = vmatpush1.msra.mxu0 %v4028
    %5022 = vmatprep.subr.mxu0 %v4036
    %5023 = vmatpush1.msra.mxu0 %v4035
    %5024 = vmatprep.subr.mxu0 %v4043
    %5025 = vmatpush1.msra.mxu0 %v4042
    %5026 = vmatprep.subr.mxu0 %v4050
    %5027 = vmatpush1.msra.mxu0 %v4049
    %5028 = vmatprep.subr.mxu0 %v4057
    %5029 = vmatpush1.msra.mxu0 %v4056
    %5030 = vmatprep.subr.mxu0 %v4064
    %5031 = vmatpush1.msra.mxu0 %v4063
    %5032 = vmatprep.subr.mxu0 %v4071
    %5033 = vmatpush1.msra.mxu0 %v4070
    %5034 = vmatprep.subr.mxu0 %v4078
    %5035 = vmatpush1.msra.mxu0 %v4077
    %5036 = vmatprep.subr.mxu0 %v4085
    %5037 = vmatpush1.msra.mxu0 %v4084
    %5038 = vmatprep.mubr.f32.mxu0 %v3411
    %5039 = vmatmul.mubr.f32.gmra.mrb[0].mxu0 %v3410
    %v5040 = vpop.f32.mrb[0].mxu0
    %v5041 = vadd.f32 %v4970, %v5040
    %v5042 = vpop.f32.mrb[0].mxu0
    %v5043 = vadd.f32 %v4972, %v5042
    %5044 = vdwg.mxu0
    %5045 = vmatprep.subr.mxu0 %v4092
    %5046 = vmatpush1.msra.mxu0 %v4091
    %5047 = vmatprep.subr.mxu0 %v4099
    %5048 = vmatpush1.msra.mxu0 %v4098
    %5049 = vmatprep.subr.mxu0 %v4106
    %5050 = vmatpush1.msra.mxu0 %v4105
    %5051 = vmatprep.subr.mxu0 %v4113
    %5052 = vmatpush1.msra.mxu0 %v4112
    %5053 = vmatprep.subr.mxu0 %v4120
    %5054 = vmatpush1.msra.mxu0 %v4119
    %5055 = vmatprep.subr.mxu0 %v4127
    %5056 = vmatpush1.msra.mxu0 %v4126
    %5057 = vmatprep.subr.mxu0 %v4134
    %5058 = vmatpush1.msra.mxu0 %v4133
    %5059 = vmatprep.subr.mxu0 %v4141
    %5060 = vmatpush1.msra.mxu0 %v4140
    %5061 = vmatprep.subr.mxu0 %v4148
    %5062 = vmatpush1.msra.mxu0 %v4147
    %5063 = vmatprep.subr.mxu0 %v4155
    %5064 = vmatpush1.msra.mxu0 %v4154
    %5065 = vmatprep.subr.mxu0 %v4162
    %5066 = vmatpush1.msra.mxu0 %v4161
    %5067 = vmatprep.subr.mxu0 %v4169
    %5068 = vmatpush1.msra.mxu0 %v4168
    %5069 = vmatprep.subr.mxu0 %v4176
    %5070 = vmatpush1.msra.mxu0 %v4175
    %5071 = vmatprep.subr.mxu0 %v4183
    %5072 = vmatpush1.msra.mxu0 %v4182
    %5073 = vmatprep.subr.mxu0 %v4190
    %5074 = vmatpush1.msra.mxu0 %v4189
    %5075 = vmatprep.subr.mxu0 %v4197
    %5076 = vmatpush1.msra.mxu0 %v4196
    %5077 = vmatprep.subr.mxu0 %v4204
    %5078 = vmatpush1.msra.mxu0 %v4203
    %5079 = vmatprep.subr.mxu0 %v4211
    %5080 = vmatpush1.msra.mxu0 %v4210
    %5081 = vmatprep.subr.mxu0 %v4218
    %5082 = vmatpush1.msra.mxu0 %v4217
    %5083 = vmatprep.subr.mxu0 %v4225
    %5084 = vmatpush1.msra.mxu0 %v4224
    %5085 = vmatprep.subr.mxu0 %v4232
    %5086 = vmatpush1.msra.mxu0 %v4231
    %5087 = vmatprep.subr.mxu0 %v4239
    %5088 = vmatpush1.msra.mxu0 %v4238
    %5089 = vmatprep.subr.mxu0 %v4246
    %5090 = vmatpush1.msra.mxu0 %v4245
    %5091 = vmatprep.subr.mxu0 %v4253
    %5092 = vmatpush1.msra.mxu0 %v4252
    %5093 = vmatprep.subr.mxu0 %v4260
    %5094 = vmatpush1.msra.mxu0 %v4259
    %5095 = vmatprep.subr.mxu0 %v4267
    %5096 = vmatpush1.msra.mxu0 %v4266
    %5097 = vmatprep.subr.mxu0 %v4274
    %5098 = vmatpush1.msra.mxu0 %v4273
    %5099 = vmatprep.subr.mxu0 %v4281
    %5100 = vmatpush1.msra.mxu0 %v4280
    %5101 = vmatprep.subr.mxu0 %v4288
    %5102 = vmatpush1.msra.mxu0 %v4287
    %5103 = vmatprep.subr.mxu0 %v4295
    %5104 = vmatpush1.msra.mxu0 %v4294
    %5105 = vmatprep.subr.mxu0 %v4302
    %5106 = vmatpush1.msra.mxu0 %v4301
    %5107 = vmatprep.subr.mxu0 %v4309
    %5108 = vmatpush1.msra.mxu0 %v4308
    %5109 = vmatprep.mubr.f32.mxu0 %v3413
    %5110 = vmatmul.mubr.f32.gmra.mrb[0].mxu0 %v3412
    %v5111 = vpop.f32.mrb[0].mxu0
    %v5112 = vadd.f32 %v5041, %v5111
    %v5113 = vpop.f32.mrb[0].mxu0
    %v5114 = vadd.f32 %v5043, %v5113
    %5115 = vdwg.mxu0
    %5116 = vmatprep.subr.mxu0 %v4316
    %5117 = vmatpush1.msra.mxu0 %v4315
    %5118 = vmatprep.subr.mxu0 %v4323
    %5119 = vmatpush1.msra.mxu0 %v4322
    %5120 = vmatprep.subr.mxu0 %v4330
    %5121 = vmatpush1.msra.mxu0 %v4329
    %5122 = vmatprep.subr.mxu0 %v4337
    %5123 = vmatpush1.msra.mxu0 %v4336
    %5124 = vmatprep.subr.mxu0 %v4344
    %5125 = vmatpush1.msra.mxu0 %v4343
    %5126 = vmatprep.subr.mxu0 %v4351
    %5127 = vmatpush1.msra.mxu0 %v4350
    %5128 = vmatprep.subr.mxu0 %v4358
    %5129 = vmatpush1.msra.mxu0 %v4357
    %5130 = vmatprep.subr.mxu0 %v4365
    %5131 = vmatpush1.msra.mxu0 %v4364
    %5132 = vmatprep.subr.mxu0 %v4372
    %5133 = vmatpush1.msra.mxu0 %v4371
    %5134 = vmatprep.subr.mxu0 %v4379
    %5135 = vmatpush1.msra.mxu0 %v4378
    %5136 = vmatprep.subr.mxu0 %v4386
    %5137 = vmatpush1.msra.mxu0 %v4385
    %5138 = vmatprep.subr.mxu0 %v4393
    %5139 = vmatpush1.msra.mxu0 %v4392
    %5140 = vmatprep.subr.mxu0 %v4400
    %5141 = vmatpush1.msra.mxu0 %v4399
    %5142 = vmatprep.subr.mxu0 %v4407
    %5143 = vmatpush1.msra.mxu0 %v4406
    %5144 = vmatprep.subr.mxu0 %v4414
    %5145 = vmatpush1.msra.mxu0 %v4413
    %5146 = vmatprep.subr.mxu0 %v4421
    %5147 = vmatpush1.msra.mxu0 %v4420
    %5148 = vmatprep.subr.mxu0 %v4428
    %5149 = vmatpush1.msra.mxu0 %v4427
    %5150 = vmatprep.subr.mxu0 %v4435
    %5151 = vmatpush1.msra.mxu0 %v4434
    %5152 = vmatprep.subr.mxu0 %v4442
    %5153 = vmatpush1.msra.mxu0 %v4441
    %5154 = vmatprep.subr.mxu0 %v4449
    %5155 = vmatpush1.msra.mxu0 %v4448
    %5156 = vmatprep.subr.mxu0 %v4456
    %5157 = vmatpush1.msra.mxu0 %v4455
    %5158 = vmatprep.subr.mxu0 %v4463
    %5159 = vmatpush1.msra.mxu0 %v4462
    %5160 = vmatprep.subr.mxu0 %v4470
    %5161 = vmatpush1.msra.mxu0 %v4469
    %5162 = vmatprep.subr.mxu0 %v4477
    %5163 = vmatpush1.msra.mxu0 %v4476
    %5164 = vmatprep.subr.mxu0 %v4484
    %5165 = vmatpush1.msra.mxu0 %v4483
    %5166 = vmatprep.subr.mxu0 %v4491
    %5167 = vmatpush1.msra.mxu0 %v4490
    %5168 = vmatprep.subr.mxu0 %v4498
    %5169 = vmatpush1.msra.mxu0 %v4497
    %5170 = vmatprep.subr.mxu0 %v4505
    %5171 = vmatpush1.msra.mxu0 %v4504
    %5172 = vmatprep.subr.mxu0 %v4512
    %5173 = vmatpush1.msra.mxu0 %v4511
    %5174 = vmatprep.subr.mxu0 %v4519
    %5175 = vmatpush1.msra.mxu0 %v4518
    %5176 = vmatprep.subr.mxu0 %v4526
    %5177 = vmatpush1.msra.mxu0 %v4525
    %5178 = vmatprep.subr.mxu0 %v4533
    %5179 = vmatpush1.msra.mxu0 %v4532
    %5180 = vmatprep.mubr.f32.mxu0 %v3415
    %5181 = vmatmul.mubr.f32.gmra.mrb[0].mxu0 %v3414
    %v5182 = vpop.f32.mrb[0].mxu0
    %v5183 = vadd.f32 %v5112, %v5182
    %v5184 = vpop.f32.mrb[0].mxu0
    %v5185 = vadd.f32 %v5114, %v5184
    %5186 = vdwg.mxu0
    %5187 = vmatprep.subr.mxu0 %v4540
    %5188 = vmatpush1.msra.mxu0 %v4539
    %5189 = vmatprep.subr.mxu0 %v4547
    %5190 = vmatpush1.msra.mxu0 %v4546
    %5191 = vmatprep.subr.mxu0 %v4554
    %5192 = vmatpush1.msra.mxu0 %v4553
    %5193 = vmatprep.subr.mxu0 %v4561
    %5194 = vmatpush1.msra.mxu0 %v4560
    %5195 = vmatprep.subr.mxu0 %v4568
    %5196 = vmatpush1.msra.mxu0 %v4567
    %5197 = vmatprep.subr.mxu0 %v4575
    %5198 = vmatpush1.msra.mxu0 %v4574
    %5199 = vmatprep.subr.mxu0 %v4582
    %5200 = vmatpush1.msra.mxu0 %v4581
    %5201 = vmatprep.subr.mxu0 %v4589
    %5202 = vmatpush1.msra.mxu0 %v4588
    %5203 = vmatprep.subr.mxu0 %v4596
    %5204 = vmatpush1.msra.mxu0 %v4595
    %5205 = vmatprep.subr.mxu0 %v4603
    %5206 = vmatpush1.msra.mxu0 %v4602
    %5207 = vmatprep.subr.mxu0 %v4610
    %5208 = vmatpush1.msra.mxu0 %v4609
    %5209 = vmatprep.subr.mxu0 %v4617
    %5210 = vmatpush1.msra.mxu0 %v4616
    %5211 = vmatprep.subr.mxu0 %v4624
    %5212 = vmatpush1.msra.mxu0 %v4623
    %5213 = vmatprep.subr.mxu0 %v4631
    %5214 = vmatpush1.msra.mxu0 %v4630
    %5215 = vmatprep.subr.mxu0 %v4638
    %5216 = vmatpush1.msra.mxu0 %v4637
    %5217 = vmatprep.subr.mxu0 %v4645
    %5218 = vmatpush1.msra.mxu0 %v4644
    %5219 = vmatprep.subr.mxu0 %v4652
    %5220 = vmatpush1.msra.mxu0 %v4651
    %5221 = vmatprep.subr.mxu0 %v4659
    %5222 = vmatpush1.msra.mxu0 %v4658
    %5223 = vmatprep.subr.mxu0 %v4666
    %5224 = vmatpush1.msra.mxu0 %v4665
    %5225 = vmatprep.subr.mxu0 %v4673
    %5226 = vmatpush1.msra.mxu0 %v4672
    %5227 = vmatprep.subr.mxu0 %v4680
    %5228 = vmatpush1.msra.mxu0 %v4679
    %5229 = vmatprep.subr.mxu0 %v4687
    %5230 = vmatpush1.msra.mxu0 %v4686
    %5231 = vmatprep.subr.mxu0 %v4694
    %5232 = vmatpush1.msra.mxu0 %v4693
    %5233 = vmatprep.subr.mxu0 %v4701
    %5234 = vmatpush1.msra.mxu0 %v4700
    %5235 = vmatprep.subr.mxu0 %v4708
    %5236 = vmatpush1.msra.mxu0 %v4707
    %5237 = vmatprep.subr.mxu0 %v4715
    %5238 = vmatpush1.msra.mxu0 %v4714
    %5239 = vmatprep.subr.mxu0 %v4722
    %5240 = vmatpush1.msra.mxu0 %v4721
    %5241 = vmatprep.subr.mxu0 %v4729
    %5242 = vmatpush1.msra.mxu0 %v4728
    %5243 = vmatprep.subr.mxu0 %v4736
    %5244 = vmatpush1.msra.mxu0 %v4735
    %5245 = vmatprep.subr.mxu0 %v4743
    %5246 = vmatpush1.msra.mxu0 %v4742
    %5247 = vmatprep.subr.mxu0 %v4750
    %5248 = vmatpush1.msra.mxu0 %v4749
    %5249 = vmatprep.subr.mxu0 %v4757
    %5250 = vmatpush1.msra.mxu0 %v4756
    %5251 = vmatprep.mubr.f32.mxu0 %v3417
    %5252 = vmatmul.mubr.f32.gmra.mrb[0].mxu0 %v3416
    %v5253 = vpop.f32.mrb[0].mxu0
    %v5254 = vadd.f32 %v5183, %v5253
    %v5255 = vpop.f32.mrb[0].mxu0
    %v5256 = vadd.f32 %v5185, %v5255
    %5257 = vdwg.mxu0
    %5258 = vmatprep.subr.mxu0 %v4764
    %5259 = vmatpush1.msra.mxu0 %v4763
    %5260 = vmatprep.subr.mxu0 %v4771
    %5261 = vmatpush1.msra.mxu0 %v4770
    %5262 = vmatprep.subr.mxu0 %v4778
    %5263 = vmatpush1.msra.mxu0 %v4777
    %5264 = vmatprep.subr.mxu0 %v4785
    %5265 = vmatpush1.msra.mxu0 %v4784
    %5266 = vmatprep.subr.mxu0 0.0
    %5267 = vmatpush1.msra.mxu0 0.0
    %5268 = vmatprep.subr.mxu0 0.0
    %5269 = vmatpush1.msra.mxu0 0.0
    %5270 = vmatprep.subr.mxu0 0.0
    %5271 = vmatpush1.msra.mxu0 0.0
    %5272 = vmatprep.subr.mxu0 0.0
    %5273 = vmatpush1.msra.mxu0 0.0
    %5274 = vmatprep.subr.mxu0 0.0
    %5275 = vmatpush1.msra.mxu0 0.0
    %5276 = vmatprep.subr.mxu0 0.0
    %5277 = vmatpush1.msra.mxu0 0.0
    %5278 = vmatprep.subr.mxu0 0.0
    %5279 = vmatpush1.msra.mxu0 0.0
    %5280 = vmatprep.subr.mxu0 0.0
    %5281 = vmatpush1.msra.mxu0 0.0
    %5282 = vmatprep.subr.mxu0 0.0
    %5283 = vmatpush1.msra.mxu0 0.0
    %5284 = vmatprep.subr.mxu0 0.0
    %5285 = vmatpush1.msra.mxu0 0.0
    %5286 = vmatprep.subr.mxu0 0.0
    %5287 = vmatpush1.msra.mxu0 0.0
    %5288 = vmatprep.subr.mxu0 0.0
    %5289 = vmatpush1.msra.mxu0 0.0
    %5290 = vmatprep.subr.mxu0 0.0
    %5291 = vmatpush1.msra.mxu0 0.0
    %5292 = vmatprep.subr.mxu0 0.0
    %5293 = vmatpush1.msra.mxu0 0.0
    %5294 = vmatprep.subr.mxu0 0.0
    %5295 = vmatpush1.msra.mxu0 0.0
    %5296 = vmatprep.subr.mxu0 0.0
    %5297 = vmatpush1.msra.mxu0 0.0
    %5298 = vmatprep.subr.mxu0 0.0
    %5299 = vmatpush1.msra.mxu0 0.0
    %5300 = vmatprep.subr.mxu0 0.0
    %5301 = vmatpush1.msra.mxu0 0.0
    %5302 = vmatprep.subr.mxu0 0.0
    %5303 = vmatpush1.msra.mxu0 0.0
    %5304 = vmatprep.subr.mxu0 0.0
    %5305 = vmatpush1.msra.mxu0 0.0
    %5306 = vmatprep.subr.mxu0 0.0
    %5307 = vmatpush1.msra.mxu0 0.0
    %5308 = vmatprep.subr.mxu0 0.0
    %5309 = vmatpush1.msra.mxu0 0.0
    %5310 = vmatprep.subr.mxu0 0.0
    %5311 = vmatpush1.msra.mxu0 0.0
    %5312 = vmatprep.subr.mxu0 0.0
    %5313 = vmatpush1.msra.mxu0 0.0
    %5314 = vmatprep.subr.mxu0 0.0
    %5315 = vmatpush1.msra.mxu0 0.0
    %5316 = vmatprep.subr.mxu0 0.0
    %5317 = vmatpush1.msra.mxu0 0.0
    %5318 = vmatprep.subr.mxu0 0.0
    %5319 = vmatpush1.msra.mxu0 0.0
    %5320 = vmatprep.subr.mxu0 0.0
    %5321 = vmatpush1.msra.mxu0 0.0
    %5322 = vmatprep.mubr.f32.mxu0 0.0
    %5323 = vmatmul.mubr.f32.gmra.mrb[0].mxu0 %v4830
    %v5324 = vpop.f32.mrb[0].mxu0
    %v5325 = vadd.f32 %v5254, %v5324
    %v5326 = vpop.f32.mrb[0].mxu0
    %v5327 = vadd.f32 %v5256, %v5326
    %5328 = vdwg.mxu0
    %5329 = vmatprep.subr.mxu0 %v3422
    %5330 = vmatpush1.msra.mxu0 %v3421
    %5331 = vmatprep.subr.mxu0 %v3429
    %5332 = vmatpush1.msra.mxu0 %v3428
    %5333 = vmatprep.subr.mxu0 %v3436
    %5334 = vmatpush1.msra.mxu0 %v3435
    %5335 = vmatprep.subr.mxu0 %v3443
    %5336 = vmatpush1.msra.mxu0 %v3442
    %5337 = vmatprep.subr.mxu0 %v3450
    %5338 = vmatpush1.msra.mxu0 %v3449
    %5339 = vmatprep.subr.mxu0 %v3457
    %5340 = vmatpush1.msra.mxu0 %v3456
    %5341 = vmatprep.subr.mxu0 %v3464
    %5342 = vmatpush1.msra.mxu0 %v3463
    %5343 = vmatprep.subr.mxu0 %v3471
    %5344 = vmatpush1.msra.mxu0 %v3470
    %5345 = vmatprep.subr.mxu0 %v3478
    %5346 = vmatpush1.msra.mxu0 %v3477
    %5347 = vmatprep.subr.mxu0 %v3485
    %5348 = vmatpush1.msra.mxu0 %v3484
    %5349 = vmatprep.subr.mxu0 %v3492
    %5350 = vmatpush1.msra.mxu0 %v3491
    %5351 = vmatprep.subr.mxu0 %v3499
    %5352 = vmatpush1.msra.mxu0 %v3498
    %5353 = vmatprep.subr.mxu0 %v3506
    %5354 = vmatpush1.msra.mxu0 %v3505
    %5355 = vmatprep.subr.mxu0 %v3513
    %5356 = vmatpush1.msra.mxu0 %v3512
    %5357 = vmatprep.subr.mxu0 %v3520
    %5358 = vmatpush1.msra.mxu0 %v3519
    %5359 = vmatprep.subr.mxu0 %v3527
    %5360 = vmatpush1.msra.mxu0 %v3526
    %5361 = vmatprep.subr.mxu0 %v3534
    %5362 = vmatpush1.msra.mxu0 %v3533
    %5363 = vmatprep.subr.mxu0 %v3541
    %5364 = vmatpush1.msra.mxu0 %v3540
    %5365 = vmatprep.subr.mxu0 %v3548
    %5366 = vmatpush1.msra.mxu0 %v3547
    %5367 = vmatprep.subr.mxu0 %v3555
    %5368 = vmatpush1.msra.mxu0 %v3554
    %5369 = vmatprep.subr.mxu0 %v3562
    %5370 = vmatpush1.msra.mxu0 %v3561
    %5371 = vmatprep.subr.mxu0 %v3569
    %5372 = vmatpush1.msra.mxu0 %v3568
    %5373 = vmatprep.subr.mxu0 %v3576
    %5374 = vmatpush1.msra.mxu0 %v3575
    %5375 = vmatprep.subr.mxu0 %v3583
    %5376 = vmatpush1.msra.mxu0 %v3582
    %5377 = vmatprep.subr.mxu0 %v3590
    %5378 = vmatpush1.msra.mxu0 %v3589
    %5379 = vmatprep.subr.mxu0 %v3597
    %5380 = vmatpush1.msra.mxu0 %v3596
    %5381 = vmatprep.subr.mxu0 %v3604
    %5382 = vmatpush1.msra.mxu0 %v3603
    %5383 = vmatprep.subr.mxu0 %v3611
    %5384 = vmatpush1.msra.mxu0 %v3610
    %5385 = vmatprep.subr.mxu0 %v3618
    %5386 = vmatpush1.msra.mxu0 %v3617
    %5387 = vmatprep.subr.mxu0 %v3625
    %5388 = vmatpush1.msra.mxu0 %v3624
    %5389 = vmatprep.subr.mxu0 %v3632
    %5390 = vmatpush1.msra.mxu0 %v3631
    %5391 = vmatprep.subr.mxu0 %v3639
    %5392 = vmatpush1.msra.mxu0 %v3638
    %5393 = vmatprep.mubr.f32.mxu0 %v3407
    %5394 = vmatmul.mubr.f32.gmra.mrb[0].mxu0 %v3406
    %v5395 = vpop.f32.mrb[0].mxu0
    %v5396 = vadd.f32 %v4804, %v5395
    %v5397 = vpop.f32.mrb[0].mxu0
    %v5398 = vadd.f32 %v4808, %v5397
    %5399 = vdwg.mxu0
    %5400 = vmatprep.subr.mxu0 %v3646
    %5401 = vmatpush1.msra.mxu0 %v3645
    %5402 = vmatprep.subr.mxu0 %v3653
    %5403 = vmatpush1.msra.mxu0 %v3652
    %5404 = vmatprep.subr.mxu0 %v3660
    %5405 = vmatpush1.msra.mxu0 %v3659
    %5406 = vmatprep.subr.mxu0 %v3667
    %5407 = vmatpush1.msra.mxu0 %v3666
    %5408 = vmatprep.subr.mxu0 %v3674
    %5409 = vmatpush1.msra.mxu0 %v3673
    %5410 = vmatprep.subr.mxu0 %v3681
    %5411 = vmatpush1.msra.mxu0 %v3680
    %5412 = vmatprep.subr.mxu0 %v3688
    %5413 = vmatpush1.msra.mxu0 %v3687
    %5414 = vmatprep.subr.mxu0 %v3695
    %5415 = vmatpush1.msra.mxu0 %v3694
    %5416 = vmatprep.subr.mxu0 %v3702
    %5417 = vmatpush1.msra.mxu0 %v3701
    %5418 = vmatprep.subr.mxu0 %v3709
    %5419 = vmatpush1.msra.mxu0 %v3708
    %5420 = vmatprep.subr.mxu0 %v3716
    %5421 = vmatpush1.msra.mxu0 %v3715
    %5422 = vmatprep.subr.mxu0 %v3723
    %5423 = vmatpush1.msra.mxu0 %v3722
    %5424 = vmatprep.subr.mxu0 %v3730
    %5425 = vmatpush1.msra.mxu0 %v3729
    %5426 = vmatprep.subr.mxu0 %v3737
    %5427 = vmatpush1.msra.mxu0 %v3736
    %5428 = vmatprep.subr.mxu0 %v3744
    %5429 = vmatpush1.msra.mxu0 %v3743
    %5430 = vmatprep.subr.mxu0 %v3751
    %5431 = vmatpush1.msra.mxu0 %v3750
    %5432 = vmatprep.subr.mxu0 %v3758
    %5433 = vmatpush1.msra.mxu0 %v3757
    %5434 = vmatprep.subr.mxu0 %v3765
    %5435 = vmatpush1.msra.mxu0 %v3764
    %5436 = vmatprep.subr.mxu0 %v3772
    %5437 = vmatpush1.msra.mxu0 %v3771
    %5438 = vmatprep.subr.mxu0 %v3779
    %5439 = vmatpush1.msra.mxu0 %v3778
    %5440 = vmatprep.subr.mxu0 %v3786
    %5441 = vmatpush1.msra.mxu0 %v3785
    %5442 = vmatprep.subr.mxu0 %v3793
    %5443 = vmatpush1.msra.mxu0 %v3792
    %5444 = vmatprep.subr.mxu0 %v3800
    %5445 = vmatpush1.msra.mxu0 %v3799
    %5446 = vmatprep.subr.mxu0 %v3807
    %5447 = vmatpush1.msra.mxu0 %v3806
    %5448 = vmatprep.subr.mxu0 %v3814
    %5449 = vmatpush1.msra.mxu0 %v3813
    %5450 = vmatprep.subr.mxu0 %v3821
    %5451 = vmatpush1.msra.mxu0 %v3820
    %5452 = vmatprep.subr.mxu0 %v3828
    %5453 = vmatpush1.msra.mxu0 %v3827
    %5454 = vmatprep.subr.mxu0 %v3835
    %5455 = vmatpush1.msra.mxu0 %v3834
    %5456 = vmatprep.subr.mxu0 %v3842
    %5457 = vmatpush1.msra.mxu0 %v3841
    %5458 = vmatprep.subr.mxu0 %v3849
    %5459 = vmatpush1.msra.mxu0 %v3848
    %5460 = vmatprep.subr.mxu0 %v3856
    %5461 = vmatpush1.msra.mxu0 %v3855
    %5462 = vmatprep.subr.mxu0 %v3863
    %5463 = vmatpush1.msra.mxu0 %v3862
    %5464 = vmatprep.mubr.f32.mxu0 %v3409
    %5465 = vmatmul.mubr.f32.gmra.mrb[0].mxu0 %v3408
    %v5466 = vpop.f32.mrb[0].mxu0
    %v5467 = vadd.f32 %v5396, %v5466
    %v5468 = vpop.f32.mrb[0].mxu0
    %v5469 = vadd.f32 %v5398, %v5468
    %5470 = vdwg.mxu0
    %5471 = vmatprep.subr.mxu0 %v3870
    %5472 = vmatpush1.msra.mxu0 %v3869
    %5473 = vmatprep.subr.mxu0 %v3877
    %5474 = vmatpush1.msra.mxu0 %v3876
    %5475 = vmatprep.subr.mxu0 %v3884
    %5476 = vmatpush1.msra.mxu0 %v3883
    %5477 = vmatprep.subr.mxu0 %v3891
    %5478 = vmatpush1.msra.mxu0 %v3890
    %5479 = vmatprep.subr.mxu0 %v3898
    %5480 = vmatpush1.msra.mxu0 %v3897
    %5481 = vmatprep.subr.mxu0 %v3905
    %5482 = vmatpush1.msra.mxu0 %v3904
    %5483 = vmatprep.subr.mxu0 %v3912
    %5484 = vmatpush1.msra.mxu0 %v3911
    %5485 = vmatprep.subr.mxu0 %v3919
    %5486 = vmatpush1.msra.mxu0 %v3918
    %5487 = vmatprep.subr.mxu0 %v3926
    %5488 = vmatpush1.msra.mxu0 %v3925
    %5489 = vmatprep.subr.mxu0 %v3933
    %5490 = vmatpush1.msra.mxu0 %v3932
    %5491 = vmatprep.subr.mxu0 %v3940
    %5492 = vmatpush1.msra.mxu0 %v3939
    %5493 = vmatprep.subr.mxu0 %v3947
    %5494 = vmatpush1.msra.mxu0 %v3946
    %5495 = vmatprep.subr.mxu0 %v3954
    %5496 = vmatpush1.msra.mxu0 %v3953
    %5497 = vmatprep.subr.mxu0 %v3961
    %5498 = vmatpush1.msra.mxu0 %v3960
    %5499 = vmatprep.subr.mxu0 %v3968
    %5500 = vmatpush1.msra.mxu0 %v3967
    %5501 = vmatprep.subr.mxu0 %v3975
    %5502 = vmatpush1.msra.mxu0 %v3974
    %5503 = vmatprep.subr.mxu0 %v3982
    %5504 = vmatpush1.msra.mxu0 %v3981
    %5505 = vmatprep.subr.mxu0 %v3989
    %5506 = vmatpush1.msra.mxu0 %v3988
    %5507 = vmatprep.subr.mxu0 %v3996
    %5508 = vmatpush1.msra.mxu0 %v3995
    %5509 = vmatprep.subr.mxu0 %v4003
    %5510 = vmatpush1.msra.mxu0 %v4002
    %5511 = vmatprep.subr.mxu0 %v4010
    %5512 = vmatpush1.msra.mxu0 %v4009
    %5513 = vmatprep.subr.mxu0 %v4017
    %5514 = vmatpush1.msra.mxu0 %v4016
    %5515 = vmatprep.subr.mxu0 %v4024
    %5516 = vmatpush1.msra.mxu0 %v4023
    %5517 = vmatprep.subr.mxu0 %v4031
    %5518 = vmatpush1.msra.mxu0 %v4030
    %5519 = vmatprep.subr.mxu0 %v4038
    %5520 = vmatpush1.msra.mxu0 %v4037
    %5521 = vmatprep.subr.mxu0 %v4045
    %5522 = vmatpush1.msra.mxu0 %v4044
    %5523 = vmatprep.subr.mxu0 %v4052
    %5524 = vmatpush1.msra.mxu0 %v4051
    %5525 = vmatprep.subr.mxu0 %v4059
    %5526 = vmatpush1.msra.mxu0 %v4058
    %5527 = vmatprep.subr.mxu0 %v4066
    %5528 = vmatpush1.msra.mxu0 %v4065
    %5529 = vmatprep.subr.mxu0 %v4073
    %5530 = vmatpush1.msra.mxu0 %v4072
    %5531 = vmatprep.subr.mxu0 %v4080
    %5532 = vmatpush1.msra.mxu0 %v4079
    %5533 = vmatprep.subr.mxu0 %v4087
    %5534 = vmatpush1.msra.mxu0 %v4086
    %5535 = vmatprep.mubr.f32.mxu0 %v3411
    %5536 = vmatmul.mubr.f32.gmra.mrb[0].mxu0 %v3410
    %v5537 = vpop.f32.mrb[0].mxu0
    %v5538 = vadd.f32 %v5467, %v5537
    %v5539 = vpop.f32.mrb[0].mxu0
    %v5540 = vadd.f32 %v5469, %v5539
    %5541 = vdwg.mxu0
    %5542 = vmatprep.subr.mxu0 %v4094
    %5543 = vmatpush1.msra.mxu0 %v4093
    %5544 = vmatprep.subr.mxu0 %v4101
    %5545 = vmatpush1.msra.mxu0 %v4100
    %5546 = vmatprep.subr.mxu0 %v4108
    %5547 = vmatpush1.msra.mxu0 %v4107
    %5548 = vmatprep.subr.mxu0 %v4115
    %5549 = vmatpush1.msra.mxu0 %v4114
    %5550 = vmatprep.subr.mxu0 %v4122
    %5551 = vmatpush1.msra.mxu0 %v4121
    %5552 = vmatprep.subr.mxu0 %v4129
    %5553 = vmatpush1.msra.mxu0 %v4128
    %5554 = vmatprep.subr.mxu0 %v4136
    %5555 = vmatpush1.msra.mxu0 %v4135
    %5556 = vmatprep.subr.mxu0 %v4143
    %5557 = vmatpush1.msra.mxu0 %v4142
    %5558 = vmatprep.subr.mxu0 %v4150
    %5559 = vmatpush1.msra.mxu0 %v4149
    %5560 = vmatprep.subr.mxu0 %v4157
    %5561 = vmatpush1.msra.mxu0 %v4156
    %5562 = vmatprep.subr.mxu0 %v4164
    %5563 = vmatpush1.msra.mxu0 %v4163
    %5564 = vmatprep.subr.mxu0 %v4171
    %5565 = vmatpush1.msra.mxu0 %v4170
    %5566 = vmatprep.subr.mxu0 %v4178
    %5567 = vmatpush1.msra.mxu0 %v4177
    %5568 = vmatprep.subr.mxu0 %v4185
    %5569 = vmatpush1.msra.mxu0 %v4184
    %5570 = vmatprep.subr.mxu0 %v4192
    %5571 = vmatpush1.msra.mxu0 %v4191
    %5572 = vmatprep.subr.mxu0 %v4199
    %5573 = vmatpush1.msra.mxu0 %v4198
    %5574 = vmatprep.subr.mxu0 %v4206
    %5575 = vmatpush1.msra.mxu0 %v4205
    %5576 = vmatprep.subr.mxu0 %v4213
    %5577 = vmatpush1.msra.mxu0 %v4212
    %5578 = vmatprep.subr.mxu0 %v4220
    %5579 = vmatpush1.msra.mxu0 %v4219
    %5580 = vmatprep.subr.mxu0 %v4227
    %5581 = vmatpush1.msra.mxu0 %v4226
    %5582 = vmatprep.subr.mxu0 %v4234
    %5583 = vmatpush1.msra.mxu0 %v4233
    %5584 = vmatprep.subr.mxu0 %v4241
    %5585 = vmatpush1.msra.mxu0 %v4240
    %5586 = vmatprep.subr.mxu0 %v4248
    %5587 = vmatpush1.msra.mxu0 %v4247
    %5588 = vmatprep.subr.mxu0 %v4255
    %5589 = vmatpush1.msra.mxu0 %v4254
    %5590 = vmatprep.subr.mxu0 %v4262
    %5591 = vmatpush1.msra.mxu0 %v4261
    %5592 = vmatprep.subr.mxu0 %v4269
    %5593 = vmatpush1.msra.mxu0 %v4268
    %5594 = vmatprep.subr.mxu0 %v4276
    %5595 = vmatpush1.msra.mxu0 %v4275
    %5596 = vmatprep.subr.mxu0 %v4283
    %5597 = vmatpush1.msra.mxu0 %v4282
    %5598 = vmatprep.subr.mxu0 %v4290
    %5599 = vmatpush1.msra.mxu0 %v4289
    %5600 = vmatprep.subr.mxu0 %v4297
    %5601 = vmatpush1.msra.mxu0 %v4296
    %5602 = vmatprep.subr.mxu0 %v4304
    %5603 = vmatpush1.msra.mxu0 %v4303
    %5604 = vmatprep.subr.mxu0 %v4311
    %5605 = vmatpush1.msra.mxu0 %v4310
    %5606 = vmatprep.mubr.f32.mxu0 %v3413
    %5607 = vmatmul.mubr.f32.gmra.mrb[0].mxu0 %v3412
    %v5608 = vpop.f32.mrb[0].mxu0
    %v5609 = vadd.f32 %v5538, %v5608
    %v5610 = vpop.f32.mrb[0].mxu0
    %v5611 = vadd.f32 %v5540, %v5610
    %5612 = vdwg.mxu0
    %5613 = vmatprep.subr.mxu0 %v4318
    %5614 = vmatpush1.msra.mxu0 %v4317
    %5615 = vmatprep.subr.mxu0 %v4325
    %5616 = vmatpush1.msra.mxu0 %v4324
    %5617 = vmatprep.subr.mxu0 %v4332
    %5618 = vmatpush1.msra.mxu0 %v4331
    %5619 = vmatprep.subr.mxu0 %v4339
    %5620 = vmatpush1.msra.mxu0 %v4338
    %5621 = vmatprep.subr.mxu0 %v4346
    %5622 = vmatpush1.msra.mxu0 %v4345
    %5623 = vmatprep.subr.mxu0 %v4353
    %5624 = vmatpush1.msra.mxu0 %v4352
    %5625 = vmatprep.subr.mxu0 %v4360
    %5626 = vmatpush1.msra.mxu0 %v4359
    %5627 = vmatprep.subr.mxu0 %v4367
    %5628 = vmatpush1.msra.mxu0 %v4366
    %5629 = vmatprep.subr.mxu0 %v4374
    %5630 = vmatpush1.msra.mxu0 %v4373
    %5631 = vmatprep.subr.mxu0 %v4381
    %5632 = vmatpush1.msra.mxu0 %v4380
    %5633 = vmatprep.subr.mxu0 %v4388
    %5634 = vmatpush1.msra.mxu0 %v4387
    %5635 = vmatprep.subr.mxu0 %v4395
    %5636 = vmatpush1.msra.mxu0 %v4394
    %5637 = vmatprep.subr.mxu0 %v4402
    %5638 = vmatpush1.msra.mxu0 %v4401
    %5639 = vmatprep.subr.mxu0 %v4409
    %5640 = vmatpush1.msra.mxu0 %v4408
    %5641 = vmatprep.subr.mxu0 %v4416
    %5642 = vmatpush1.msra.mxu0 %v4415
    %5643 = vmatprep.subr.mxu0 %v4423
    %5644 = vmatpush1.msra.mxu0 %v4422
    %5645 = vmatprep.subr.mxu0 %v4430
    %5646 = vmatpush1.msra.mxu0 %v4429
    %5647 = vmatprep.subr.mxu0 %v4437
    %5648 = vmatpush1.msra.mxu0 %v4436
    %5649 = vmatprep.subr.mxu0 %v4444
    %5650 = vmatpush1.msra.mxu0 %v4443
    %5651 = vmatprep.subr.mxu0 %v4451
    %5652 = vmatpush1.msra.mxu0 %v4450
    %5653 = vmatprep.subr.mxu0 %v4458
    %5654 = vmatpush1.msra.mxu0 %v4457
    %5655 = vmatprep.subr.mxu0 %v4465
    %5656 = vmatpush1.msra.mxu0 %v4464
    %5657 = vmatprep.subr.mxu0 %v4472
    %5658 = vmatpush1.msra.mxu0 %v4471
    %5659 = vmatprep.subr.mxu0 %v4479
    %5660 = vmatpush1.msra.mxu0 %v4478
    %5661 = vmatprep.subr.mxu0 %v4486
    %5662 = vmatpush1.msra.mxu0 %v4485
    %5663 = vmatprep.subr.mxu0 %v4493
    %5664 = vmatpush1.msra.mxu0 %v4492
    %5665 = vmatprep.subr.mxu0 %v4500
    %5666 = vmatpush1.msra.mxu0 %v4499
    %5667 = vmatprep.subr.mxu0 %v4507
    %5668 = vmatpush1.msra.mxu0 %v4506
    %5669 = vmatprep.subr.mxu0 %v4514
    %5670 = vmatpush1.msra.mxu0 %v4513
    %5671 = vmatprep.subr.mxu0 %v4521
    %5672 = vmatpush1.msra.mxu0 %v4520
    %5673 = vmatprep.subr.mxu0 %v4528
    %5674 = vmatpush1.msra.mxu0 %v4527
    %5675 = vmatprep.subr.mxu0 %v4535
    %5676 = vmatpush1.msra.mxu0 %v4534
    %5677 = vmatprep.mubr.f32.mxu0 %v3415
    %5678 = vmatmul.mubr.f32.gmra.mrb[0].mxu0 %v3414
    %v5679 = vpop.f32.mrb[0].mxu0
    %v5680 = vadd.f32 %v5609, %v5679
    %v5681 = vpop.f32.mrb[0].mxu0
    %v5682 = vadd.f32 %v5611, %v5681
    %5683 = vdwg.mxu0
    %5684 = vmatprep.subr.mxu0 %v4542
    %5685 = vmatpush1.msra.mxu0 %v4541
    %5686 = vmatprep.subr.mxu0 %v4549
    %5687 = vmatpush1.msra.mxu0 %v4548
    %5688 = vmatprep.subr.mxu0 %v4556
    %5689 = vmatpush1.msra.mxu0 %v4555
    %5690 = vmatprep.subr.mxu0 %v4563
    %5691 = vmatpush1.msra.mxu0 %v4562
    %5692 = vmatprep.subr.mxu0 %v4570
    %5693 = vmatpush1.msra.mxu0 %v4569
    %5694 = vmatprep.subr.mxu0 %v4577
    %5695 = vmatpush1.msra.mxu0 %v4576
    %5696 = vmatprep.subr.mxu0 %v4584
    %5697 = vmatpush1.msra.mxu0 %v4583
    %5698 = vmatprep.subr.mxu0 %v4591
    %5699 = vmatpush1.msra.mxu0 %v4590
    %5700 = vmatprep.subr.mxu0 %v4598
    %5701 = vmatpush1.msra.mxu0 %v4597
    %5702 = vmatprep.subr.mxu0 %v4605
    %5703 = vmatpush1.msra.mxu0 %v4604
    %5704 = vmatprep.subr.mxu0 %v4612
    %5705 = vmatpush1.msra.mxu0 %v4611
    %5706 = vmatprep.subr.mxu0 %v4619
    %5707 = vmatpush1.msra.mxu0 %v4618
    %5708 = vmatprep.subr.mxu0 %v4626
    %5709 = vmatpush1.msra.mxu0 %v4625
    %5710 = vmatprep.subr.mxu0 %v4633
    %5711 = vmatpush1.msra.mxu0 %v4632
    %5712 = vmatprep.subr.mxu0 %v4640
    %5713 = vmatpush1.msra.mxu0 %v4639
    %5714 = vmatprep.subr.mxu0 %v4647
    %5715 = vmatpush1.msra.mxu0 %v4646
    %5716 = vmatprep.subr.mxu0 %v4654
    %5717 = vmatpush1.msra.mxu0 %v4653
    %5718 = vmatprep.subr.mxu0 %v4661
    %5719 = vmatpush1.msra.mxu0 %v4660
    %5720 = vmatprep.subr.mxu0 %v4668
    %5721 = vmatpush1.msra.mxu0 %v4667
    %5722 = vmatprep.subr.mxu0 %v4675
    %5723 = vmatpush1.msra.mxu0 %v4674
    %5724 = vmatprep.subr.mxu0 %v4682
    %5725 = vmatpush1.msra.mxu0 %v4681
    %5726 = vmatprep.subr.mxu0 %v4689
    %5727 = vmatpush1.msra.mxu0 %v4688
    %5728 = vmatprep.subr.mxu0 %v4696
    %5729 = vmatpush1.msra.mxu0 %v4695
    %5730 = vmatprep.subr.mxu0 %v4703
    %5731 = vmatpush1.msra.mxu0 %v4702
    %5732 = vmatprep.subr.mxu0 %v4710
    %5733 = vmatpush1.msra.mxu0 %v4709
    %5734 = vmatprep.subr.mxu0 %v4717
    %5735 = vmatpush1.msra.mxu0 %v4716
    %5736 = vmatprep.subr.mxu0 %v4724
    %5737 = vmatpush1.msra.mxu0 %v4723
    %5738 = vmatprep.subr.mxu0 %v4731
    %5739 = vmatpush1.msra.mxu0 %v4730
    %5740 = vmatprep.subr.mxu0 %v4738
    %5741 = vmatpush1.msra.mxu0 %v4737
    %5742 = vmatprep.subr.mxu0 %v4745
    %5743 = vmatpush1.msra.mxu0 %v4744
    %5744 = vmatprep.subr.mxu0 %v4752
    %5745 = vmatpush1.msra.mxu0 %v4751
    %5746 = vmatprep.subr.mxu0 %v4759
    %5747 = vmatpush1.msra.mxu0 %v4758
    %5748 = vmatprep.mubr.f32.mxu0 %v3417
    %5749 = vmatmul.mubr.f32.gmra.mrb[0].mxu0 %v3416
    %v5750 = vpop.f32.mrb[0].mxu0
    %v5751 = vadd.f32 %v5680, %v5750
    %v5752 = vpop.f32.mrb[0].mxu0
    %v5753 = vadd.f32 %v5682, %v5752
    %5754 = vdwg.mxu0
    %5755 = vmatprep.subr.mxu0 %v4766
    %5756 = vmatpush1.msra.mxu0 %v4765
    %5757 = vmatprep.subr.mxu0 %v4773
    %5758 = vmatpush1.msra.mxu0 %v4772
    %5759 = vmatprep.subr.mxu0 %v4780
    %5760 = vmatpush1.msra.mxu0 %v4779
    %5761 = vmatprep.subr.mxu0 %v4787
    %5762 = vmatpush1.msra.mxu0 %v4786
    %5763 = vmatprep.subr.mxu0 0.0
    %5764 = vmatpush1.msra.mxu0 0.0
    %5765 = vmatprep.subr.mxu0 0.0
    %5766 = vmatpush1.msra.mxu0 0.0
    %5767 = vmatprep.subr.mxu0 0.0
    %5768 = vmatpush1.msra.mxu0 0.0
    %5769 = vmatprep.subr.mxu0 0.0
    %5770 = vmatpush1.msra.mxu0 0.0
    %5771 = vmatprep.subr.mxu0 0.0
    %5772 = vmatpush1.msra.mxu0 0.0
    %5773 = vmatprep.subr.mxu0 0.0
    %5774 = vmatpush1.msra.mxu0 0.0
    %5775 = vmatprep.subr.mxu0 0.0
    %5776 = vmatpush1.msra.mxu0 0.0
    %5777 = vmatprep.subr.mxu0 0.0
    %5778 = vmatpush1.msra.mxu0 0.0
    %5779 = vmatprep.subr.mxu0 0.0
    %5780 = vmatpush1.msra.mxu0 0.0
    %5781 = vmatprep.subr.mxu0 0.0
    %5782 = vmatpush1.msra.mxu0 0.0
    %5783 = vmatprep.subr.mxu0 0.0
    %5784 = vmatpush1.msra.mxu0 0.0
    %5785 = vmatprep.subr.mxu0 0.0
    %5786 = vmatpush1.msra.mxu0 0.0
    %5787 = vmatprep.subr.mxu0 0.0
    %5788 = vmatpush1.msra.mxu0 0.0
    %5789 = vmatprep.subr.mxu0 0.0
    %5790 = vmatpush1.msra.mxu0 0.0
    %5791 = vmatprep.subr.mxu0 0.0
    %5792 = vmatpush1.msra.mxu0 0.0
    %5793 = vmatprep.subr.mxu0 0.0
    %5794 = vmatpush1.msra.mxu0 0.0
    %5795 = vmatprep.subr.mxu0 0.0
    %5796 = vmatpush1.msra.mxu0 0.0
    %5797 = vmatprep.subr.mxu0 0.0
    %5798 = vmatpush1.msra.mxu0 0.0
    %5799 = vmatprep.subr.mxu0 0.0
    %5800 = vmatpush1.msra.mxu0 0.0
    %5801 = vmatprep.subr.mxu0 0.0
    %5802 = vmatpush1.msra.mxu0 0.0
    %5803 = vmatprep.subr.mxu0 0.0
    %5804 = vmatpush1.msra.mxu0 0.0
    %5805 = vmatprep.subr.mxu0 0.0
    %5806 = vmatpush1.msra.mxu0 0.0
    %5807 = vmatprep.subr.mxu0 0.0
    %5808 = vmatpush1.msra.mxu0 0.0
    %5809 = vmatprep.subr.mxu0 0.0
    %5810 = vmatpush1.msra.mxu0 0.0
    %5811 = vmatprep.subr.mxu0 0.0
    %5812 = vmatpush1.msra.mxu0 0.0
    %5813 = vmatprep.subr.mxu0 0.0
    %5814 = vmatpush1.msra.mxu0 0.0
    %5815 = vmatprep.subr.mxu0 0.0
    %5816 = vmatpush1.msra.mxu0 0.0
    %5817 = vmatprep.subr.mxu0 0.0
    %5818 = vmatpush1.msra.mxu0 0.0
    %5819 = vmatprep.mubr.f32.mxu0 0.0
    %5820 = vmatmul.mubr.f32.gmra.mrb[0].mxu0 %v4830
    %v5821 = vpop.f32.mrb[0].mxu0
    %v5822 = vadd.f32 %v5751, %v5821
    %v5823 = vpop.f32.mrb[0].mxu0
    %v5824 = vadd.f32 %v5753, %v5823
    %5825 = vdwg.mxu0
    %5826 = vmatprep.subr.mxu0 %v3424
    %5827 = vmatpush1.msra.mxu0 %v3423
    %5828 = vmatprep.subr.mxu0 %v3431
    %5829 = vmatpush1.msra.mxu0 %v3430
    %5830 = vmatprep.subr.mxu0 %v3438
    %5831 = vmatpush1.msra.mxu0 %v3437
    %5832 = vmatprep.subr.mxu0 %v3445
    %5833 = vmatpush1.msra.mxu0 %v3444
    %5834 = vmatprep.subr.mxu0 %v3452
    %5835 = vmatpush1.msra.mxu0 %v3451
    %5836 = vmatprep.subr.mxu0 %v3459
    %5837 = vmatpush1.msra.mxu0 %v3458
    %5838 = vmatprep.subr.mxu0 %v3466
    %5839 = vmatpush1.msra.mxu0 %v3465
    %5840 = vmatprep.subr.mxu0 %v3473
    %5841 = vmatpush1.msra.mxu0 %v3472
    %5842 = vmatprep.subr.mxu0 %v3480
    %5843 = vmatpush1.msra.mxu0 %v3479
    %5844 = vmatprep.subr.mxu0 %v3487
    %5845 = vmatpush1.msra.mxu0 %v3486
    %5846 = vmatprep.subr.mxu0 %v3494
    %5847 = vmatpush1.msra.mxu0 %v3493
    %5848 = vmatprep.subr.mxu0 %v3501
    %5849 = vmatpush1.msra.mxu0 %v3500
    %5850 = vmatprep.subr.mxu0 %v3508
    %5851 = vmatpush1.msra.mxu0 %v3507
    %5852 = vmatprep.subr.mxu0 %v3515
    %5853 = vmatpush1.msra.mxu0 %v3514
    %5854 = vmatprep.subr.mxu0 %v3522
    %5855 = vmatpush1.msra.mxu0 %v3521
    %5856 = vmatprep.subr.mxu0 %v3529
    %5857 = vmatpush1.msra.mxu0 %v3528
    %5858 = vmatprep.subr.mxu0 %v3536
    %5859 = vmatpush1.msra.mxu0 %v3535
    %5860 = vmatprep.subr.mxu0 %v3543
    %5861 = vmatpush1.msra.mxu0 %v3542
    %5862 = vmatprep.subr.mxu0 %v3550
    %5863 = vmatpush1.msra.mxu0 %v3549
    %5864 = vmatprep.subr.mxu0 %v3557
    %5865 = vmatpush1.msra.mxu0 %v3556
    %5866 = vmatprep.subr.mxu0 %v3564
    %5867 = vmatpush1.msra.mxu0 %v3563
    %5868 = vmatprep.subr.mxu0 %v3571
    %5869 = vmatpush1.msra.mxu0 %v3570
    %5870 = vmatprep.subr.mxu0 %v3578
    %5871 = vmatpush1.msra.mxu0 %v3577
    %5872 = vmatprep.subr.mxu0 %v3585
    %5873 = vmatpush1.msra.mxu0 %v3584
    %5874 = vmatprep.subr.mxu0 %v3592
    %5875 = vmatpush1.msra.mxu0 %v3591
    %5876 = vmatprep.subr.mxu0 %v3599
    %5877 = vmatpush1.msra.mxu0 %v3598
    %5878 = vmatprep.subr.mxu0 %v3606
    %5879 = vmatpush1.msra.mxu0 %v3605
    %5880 = vmatprep.subr.mxu0 %v3613
    %5881 = vmatpush1.msra.mxu0 %v3612
    %5882 = vmatprep.subr.mxu0 %v3620
    %5883 = vmatpush1.msra.mxu0 %v3619
    %5884 = vmatprep.subr.mxu0 %v3627
    %5885 = vmatpush1.msra.mxu0 %v3626
    %5886 = vmatprep.subr.mxu0 %v3634
    %5887 = vmatpush1.msra.mxu0 %v3633
    %5888 = vmatprep.subr.mxu0 %v3641
    %5889 = vmatpush1.msra.mxu0 %v3640
    %5890 = vmatprep.mubr.f32.mxu0 %v3407
    %5891 = vmatmul.mubr.f32.gmra.mrb[0].mxu0 %v3406
    %v5892 = vpop.f32.mrb[0].mxu0
    %v5893 = vadd.f32 %v4812, %v5892
    %v5894 = vpop.f32.mrb[0].mxu0
    %v5895 = vadd.f32 %v4816, %v5894
    %5896 = vdwg.mxu0
    %5897 = vmatprep.subr.mxu0 %v3648
    %5898 = vmatpush1.msra.mxu0 %v3647
    %5899 = vmatprep.subr.mxu0 %v3655
    %5900 = vmatpush1.msra.mxu0 %v3654
    %5901 = vmatprep.subr.mxu0 %v3662
    %5902 = vmatpush1.msra.mxu0 %v3661
    %5903 = vmatprep.subr.mxu0 %v3669
    %5904 = vmatpush1.msra.mxu0 %v3668
    %5905 = vmatprep.subr.mxu0 %v3676
    %5906 = vmatpush1.msra.mxu0 %v3675
    %5907 = vmatprep.subr.mxu0 %v3683
    %5908 = vmatpush1.msra.mxu0 %v3682
    %5909 = vmatprep.subr.mxu0 %v3690
    %5910 = vmatpush1.msra.mxu0 %v3689
    %5911 = vmatprep.subr.mxu0 %v3697
    %5912 = vmatpush1.msra.mxu0 %v3696
    %5913 = vmatprep.subr.mxu0 %v3704
    %5914 = vmatpush1.msra.mxu0 %v3703
    %5915 = vmatprep.subr.mxu0 %v3711
    %5916 = vmatpush1.msra.mxu0 %v3710
    %5917 = vmatprep.subr.mxu0 %v3718
    %5918 = vmatpush1.msra.mxu0 %v3717
    %5919 = vmatprep.subr.mxu0 %v3725
    %5920 = vmatpush1.msra.mxu0 %v3724
    %5921 = vmatprep.subr.mxu0 %v3732
    %5922 = vmatpush1.msra.mxu0 %v3731
    %5923 = vmatprep.subr.mxu0 %v3739
    %5924 = vmatpush1.msra.mxu0 %v3738
    %5925 = vmatprep.subr.mxu0 %v3746
    %5926 = vmatpush1.msra.mxu0 %v3745
    %5927 = vmatprep.subr.mxu0 %v3753
    %5928 = vmatpush1.msra.mxu0 %v3752
    %5929 = vmatprep.subr.mxu0 %v3760
    %5930 = vmatpush1.msra.mxu0 %v3759
    %5931 = vmatprep.subr.mxu0 %v3767
    %5932 = vmatpush1.msra.mxu0 %v3766
    %5933 = vmatprep.subr.mxu0 %v3774
    %5934 = vmatpush1.msra.mxu0 %v3773
    %5935 = vmatprep.subr.mxu0 %v3781
    %5936 = vmatpush1.msra.mxu0 %v3780
    %5937 = vmatprep.subr.mxu0 %v3788
    %5938 = vmatpush1.msra.mxu0 %v3787
    %5939 = vmatprep.subr.mxu0 %v3795
    %5940 = vmatpush1.msra.mxu0 %v3794
    %5941 = vmatprep.subr.mxu0 %v3802
    %5942 = vmatpush1.msra.mxu0 %v3801
    %5943 = vmatprep.subr.mxu0 %v3809
    %5944 = vmatpush1.msra.mxu0 %v3808
    %5945 = vmatprep.subr.mxu0 %v3816
    %5946 = vmatpush1.msra.mxu0 %v3815
    %5947 = vmatprep.subr.mxu0 %v3823
    %5948 = vmatpush1.msra.mxu0 %v3822
    %5949 = vmatprep.subr.mxu0 %v3830
    %5950 = vmatpush1.msra.mxu0 %v3829
    %5951 = vmatprep.subr.mxu0 %v3837
    %5952 = vmatpush1.msra.mxu0 %v3836
    %5953 = vmatprep.subr.mxu0 %v3844
    %5954 = vmatpush1.msra.mxu0 %v3843
    %5955 = vmatprep.subr.mxu0 %v3851
    %5956 = vmatpush1.msra.mxu0 %v3850
    %5957 = vmatprep.subr.mxu0 %v3858
    %5958 = vmatpush1.msra.mxu0 %v3857
    %5959 = vmatprep.subr.mxu0 %v3865
    %5960 = vmatpush1.msra.mxu0 %v3864
    %5961 = vmatprep.mubr.f32.mxu0 %v3409
    %5962 = vmatmul.mubr.f32.gmra.mrb[0].mxu0 %v3408
    %v5963 = vpop.f32.mrb[0].mxu0
    %v5964 = vadd.f32 %v5893, %v5963
    %v5965 = vpop.f32.mrb[0].mxu0
    %v5966 = vadd.f32 %v5895, %v5965
    %5967 = vdwg.mxu0
    %5968 = vmatprep.subr.mxu0 %v3872
    %5969 = vmatpush1.msra.mxu0 %v3871
    %5970 = vmatprep.subr.mxu0 %v3879
    %5971 = vmatpush1.msra.mxu0 %v3878
    %5972 = vmatprep.subr.mxu0 %v3886
    %5973 = vmatpush1.msra.mxu0 %v3885
    %5974 = vmatprep.subr.mxu0 %v3893
    %5975 = vmatpush1.msra.mxu0 %v3892
    %5976 = vmatprep.subr.mxu0 %v3900
    %5977 = vmatpush1.msra.mxu0 %v3899
    %5978 = vmatprep.subr.mxu0 %v3907
    %5979 = vmatpush1.msra.mxu0 %v3906
    %5980 = vmatprep.subr.mxu0 %v3914
    %5981 = vmatpush1.msra.mxu0 %v3913
    %5982 = vmatprep.subr.mxu0 %v3921
    %5983 = vmatpush1.msra.mxu0 %v3920
    %5984 = vmatprep.subr.mxu0 %v3928
    %5985 = vmatpush1.msra.mxu0 %v3927
    %5986 = vmatprep.subr.mxu0 %v3935
    %5987 = vmatpush1.msra.mxu0 %v3934
    %5988 = vmatprep.subr.mxu0 %v3942
    %5989 = vmatpush1.msra.mxu0 %v3941
    %5990 = vmatprep.subr.mxu0 %v3949
    %5991 = vmatpush1.msra.mxu0 %v3948
    %5992 = vmatprep.subr.mxu0 %v3956
    %5993 = vmatpush1.msra.mxu0 %v3955
    %5994 = vmatprep.subr.mxu0 %v3963
    %5995 = vmatpush1.msra.mxu0 %v3962
    %5996 = vmatprep.subr.mxu0 %v3970
    %5997 = vmatpush1.msra.mxu0 %v3969
    %5998 = vmatprep.subr.mxu0 %v3977
    %5999 = vmatpush1.msra.mxu0 %v3976
    %6000 = vmatprep.subr.mxu0 %v3984
    %6001 = vmatpush1.msra.mxu0 %v3983
    %6002 = vmatprep.subr.mxu0 %v3991
    %6003 = vmatpush1.msra.mxu0 %v3990
    %6004 = vmatprep.subr.mxu0 %v3998
    %6005 = vmatpush1.msra.mxu0 %v3997
    %6006 = vmatprep.subr.mxu0 %v4005
    %6007 = vmatpush1.msra.mxu0 %v4004
    %6008 = vmatprep.subr.mxu0 %v4012
    %6009 = vmatpush1.msra.mxu0 %v4011
    %6010 = vmatprep.subr.mxu0 %v4019
    %6011 = vmatpush1.msra.mxu0 %v4018
    %6012 = vmatprep.subr.mxu0 %v4026
    %6013 = vmatpush1.msra.mxu0 %v4025
    %6014 = vmatprep.subr.mxu0 %v4033
    %6015 = vmatpush1.msra.mxu0 %v4032
    %6016 = vmatprep.subr.mxu0 %v4040
    %6017 = vmatpush1.msra.mxu0 %v4039
    %6018 = vmatprep.subr.mxu0 %v4047
    %6019 = vmatpush1.msra.mxu0 %v4046
    %6020 = vmatprep.subr.mxu0 %v4054
    %6021 = vmatpush1.msra.mxu0 %v4053
    %6022 = vmatprep.subr.mxu0 %v4061
    %6023 = vmatpush1.msra.mxu0 %v4060
    %6024 = vmatprep.subr.mxu0 %v4068
    %6025 = vmatpush1.msra.mxu0 %v4067
    %6026 = vmatprep.subr.mxu0 %v4075
    %6027 = vmatpush1.msra.mxu0 %v4074
    %6028 = vmatprep.subr.mxu0 %v4082
    %6029 = vmatpush1.msra.mxu0 %v4081
    %6030 = vmatprep.subr.mxu0 %v4089
    %6031 = vmatpush1.msra.mxu0 %v4088
    %6032 = vmatprep.mubr.f32.mxu0 %v3411
    %6033 = vmatmul.mubr.f32.gmra.mrb[0].mxu0 %v3410
    %v6034 = vpop.f32.mrb[0].mxu0
    %v6035 = vadd.f32 %v5964, %v6034
    %v6036 = vpop.f32.mrb[0].mxu0
    %v6037 = vadd.f32 %v5966, %v6036
    %6038 = vdwg.mxu0
    %6039 = vmatprep.subr.mxu0 %v4096
    %6040 = vmatpush1.msra.mxu0 %v4095
    %6041 = vmatprep.subr.mxu0 %v4103
    %6042 = vmatpush1.msra.mxu0 %v4102
    %6043 = vmatprep.subr.mxu0 %v4110
    %6044 = vmatpush1.msra.mxu0 %v4109
    %6045 = vmatprep.subr.mxu0 %v4117
    %6046 = vmatpush1.msra.mxu0 %v4116
    %6047 = vmatprep.subr.mxu0 %v4124
    %6048 = vmatpush1.msra.mxu0 %v4123
    %6049 = vmatprep.subr.mxu0 %v4131
    %6050 = vmatpush1.msra.mxu0 %v4130
    %6051 = vmatprep.subr.mxu0 %v4138
    %6052 = vmatpush1.msra.mxu0 %v4137
    %6053 = vmatprep.subr.mxu0 %v4145
    %6054 = vmatpush1.msra.mxu0 %v4144
    %6055 = vmatprep.subr.mxu0 %v4152
    %6056 = vmatpush1.msra.mxu0 %v4151
    %6057 = vmatprep.subr.mxu0 %v4159
    %6058 = vmatpush1.msra.mxu0 %v4158
    %6059 = vmatprep.subr.mxu0 %v4166
    %6060 = vmatpush1.msra.mxu0 %v4165
    %6061 = vmatprep.subr.mxu0 %v4173
    %6062 = vmatpush1.msra.mxu0 %v4172
    %6063 = vmatprep.subr.mxu0 %v4180
    %6064 = vmatpush1.msra.mxu0 %v4179
    %6065 = vmatprep.subr.mxu0 %v4187
    %6066 = vmatpush1.msra.mxu0 %v4186
    %6067 = vmatprep.subr.mxu0 %v4194
    %6068 = vmatpush1.msra.mxu0 %v4193
    %6069 = vmatprep.subr.mxu0 %v4201
    %6070 = vmatpush1.msra.mxu0 %v4200
    %6071 = vmatprep.subr.mxu0 %v4208
    %6072 = vmatpush1.msra.mxu0 %v4207
    %6073 = vmatprep.subr.mxu0 %v4215
    %6074 = vmatpush1.msra.mxu0 %v4214
    %6075 = vmatprep.subr.mxu0 %v4222
    %6076 = vmatpush1.msra.mxu0 %v4221
    %6077 = vmatprep.subr.mxu0 %v4229
    %6078 = vmatpush1.msra.mxu0 %v4228
    %6079 = vmatprep.subr.mxu0 %v4236
    %6080 = vmatpush1.msra.mxu0 %v4235
    %6081 = vmatprep.subr.mxu0 %v4243
    %6082 = vmatpush1.msra.mxu0 %v4242
    %6083 = vmatprep.subr.mxu0 %v4250
    %6084 = vmatpush1.msra.mxu0 %v4249
    %6085 = vmatprep.subr.mxu0 %v4257
    %6086 = vmatpush1.msra.mxu0 %v4256
    %6087 = vmatprep.subr.mxu0 %v4264
    %6088 = vmatpush1.msra.mxu0 %v4263
    %6089 = vmatprep.subr.mxu0 %v4271
    %6090 = vmatpush1.msra.mxu0 %v4270
    %6091 = vmatprep.subr.mxu0 %v4278
    %6092 = vmatpush1.msra.mxu0 %v4277
    %6093 = vmatprep.subr.mxu0 %v4285
    %6094 = vmatpush1.msra.mxu0 %v4284
    %6095 = vmatprep.subr.mxu0 %v4292
    %6096 = vmatpush1.msra.mxu0 %v4291
    %6097 = vmatprep.subr.mxu0 %v4299
    %6098 = vmatpush1.msra.mxu0 %v4298
    %6099 = vmatprep.subr.mxu0 %v4306
    %6100 = vmatpush1.msra.mxu0 %v4305
    %6101 = vmatprep.subr.mxu0 %v4313
    %6102 = vmatpush1.msra.mxu0 %v4312
    %6103 = vmatprep.mubr.f32.mxu0 %v3413
    %6104 = vmatmul.mubr.f32.gmra.mrb[0].mxu0 %v3412
    %v6105 = vpop.f32.mrb[0].mxu0
    %v6106 = vadd.f32 %v6035, %v6105
    %v6107 = vpop.f32.mrb[0].mxu0
    %v6108 = vadd.f32 %v6037, %v6107
    %6109 = vdwg.mxu0
    %6110 = vmatprep.subr.mxu0 %v4320
    %6111 = vmatpush1.msra.mxu0 %v4319
    %6112 = vmatprep.subr.mxu0 %v4327
    %6113 = vmatpush1.msra.mxu0 %v4326
    %6114 = vmatprep.subr.mxu0 %v4334
    %6115 = vmatpush1.msra.mxu0 %v4333
    %6116 = vmatprep.subr.mxu0 %v4341
    %6117 = vmatpush1.msra.mxu0 %v4340
    %6118 = vmatprep.subr.mxu0 %v4348
    %6119 = vmatpush1.msra.mxu0 %v4347
    %6120 = vmatprep.subr.mxu0 %v4355
    %6121 = vmatpush1.msra.mxu0 %v4354
    %6122 = vmatprep.subr.mxu0 %v4362
    %6123 = vmatpush1.msra.mxu0 %v4361
    %6124 = vmatprep.subr.mxu0 %v4369
    %6125 = vmatpush1.msra.mxu0 %v4368
    %6126 = vmatprep.subr.mxu0 %v4376
    %6127 = vmatpush1.msra.mxu0 %v4375
    %6128 = vmatprep.subr.mxu0 %v4383
    %6129 = vmatpush1.msra.mxu0 %v4382
    %6130 = vmatprep.subr.mxu0 %v4390
    %6131 = vmatpush1.msra.mxu0 %v4389
    %6132 = vmatprep.subr.mxu0 %v4397
    %6133 = vmatpush1.msra.mxu0 %v4396
    %6134 = vmatprep.subr.mxu0 %v4404
    %6135 = vmatpush1.msra.mxu0 %v4403
    %6136 = vmatprep.subr.mxu0 %v4411
    %6137 = vmatpush1.msra.mxu0 %v4410
    %6138 = vmatprep.subr.mxu0 %v4418
    %6139 = vmatpush1.msra.mxu0 %v4417
    %6140 = vmatprep.subr.mxu0 %v4425
    %6141 = vmatpush1.msra.mxu0 %v4424
    %6142 = vmatprep.subr.mxu0 %v4432
    %6143 = vmatpush1.msra.mxu0 %v4431
    %6144 = vmatprep.subr.mxu0 %v4439
    %6145 = vmatpush1.msra.mxu0 %v4438
    %6146 = vmatprep.subr.mxu0 %v4446
    %6147 = vmatpush1.msra.mxu0 %v4445
    %6148 = vmatprep.subr.mxu0 %v4453
    %6149 = vmatpush1.msra.mxu0 %v4452
    %6150 = vmatprep.subr.mxu0 %v4460
    %6151 = vmatpush1.msra.mxu0 %v4459
    %6152 = vmatprep.subr.mxu0 %v4467
    %6153 = vmatpush1.msra.mxu0 %v4466
    %6154 = vmatprep.subr.mxu0 %v4474
    %6155 = vmatpush1.msra.mxu0 %v4473
    %6156 = vmatprep.subr.mxu0 %v4481
    %6157 = vmatpush1.msra.mxu0 %v4480
    %6158 = vmatprep.subr.mxu0 %v4488
    %6159 = vmatpush1.msra.mxu0 %v4487
    %6160 = vmatprep.subr.mxu0 %v4495
    %6161 = vmatpush1.msra.mxu0 %v4494
    %6162 = vmatprep.subr.mxu0 %v4502
    %6163 = vmatpush1.msra.mxu0 %v4501
    %6164 = vmatprep.subr.mxu0 %v4509
    %6165 = vmatpush1.msra.mxu0 %v4508
    %6166 = vmatprep.subr.mxu0 %v4516
    %6167 = vmatpush1.msra.mxu0 %v4515
    %6168 = vmatprep.subr.mxu0 %v4523
    %6169 = vmatpush1.msra.mxu0 %v4522
    %6170 = vmatprep.subr.mxu0 %v4530
    %6171 = vmatpush1.msra.mxu0 %v4529
    %6172 = vmatprep.subr.mxu0 %v4537
    %6173 = vmatpush1.msra.mxu0 %v4536
    %6174 = vmatprep.mubr.f32.mxu0 %v3415
    %6175 = vmatmul.mubr.f32.gmra.mrb[0].mxu0 %v3414
    %v6176 = vpop.f32.mrb[0].mxu0
    %v6177 = vadd.f32 %v6106, %v6176
    %v6178 = vpop.f32.mrb[0].mxu0
    %v6179 = vadd.f32 %v6108, %v6178
    %6180 = vdwg.mxu0
    %6181 = vmatprep.subr.mxu0 %v4544
    %6182 = vmatpush1.msra.mxu0 %v4543
    %6183 = vmatprep.subr.mxu0 %v4551
    %6184 = vmatpush1.msra.mxu0 %v4550
    %6185 = vmatprep.subr.mxu0 %v4558
    %6186 = vmatpush1.msra.mxu0 %v4557
    %6187 = vmatprep.subr.mxu0 %v4565
    %6188 = vmatpush1.msra.mxu0 %v4564
    %6189 = vmatprep.subr.mxu0 %v4572
    %6190 = vmatpush1.msra.mxu0 %v4571
    %6191 = vmatprep.subr.mxu0 %v4579
    %6192 = vmatpush1.msra.mxu0 %v4578
    %6193 = vmatprep.subr.mxu0 %v4586
    %6194 = vmatpush1.msra.mxu0 %v4585
    %6195 = vmatprep.subr.mxu0 %v4593
    %6196 = vmatpush1.msra.mxu0 %v4592
    %6197 = vmatprep.subr.mxu0 %v4600
    %6198 = vmatpush1.msra.mxu0 %v4599
    %6199 = vmatprep.subr.mxu0 %v4607
    %6200 = vmatpush1.msra.mxu0 %v4606
    %6201 = vmatprep.subr.mxu0 %v4614
    %6202 = vmatpush1.msra.mxu0 %v4613
    %6203 = vmatprep.subr.mxu0 %v4621
    %6204 = vmatpush1.msra.mxu0 %v4620
    %6205 = vmatprep.subr.mxu0 %v4628
    %6206 = vmatpush1.msra.mxu0 %v4627
    %6207 = vmatprep.subr.mxu0 %v4635
    %6208 = vmatpush1.msra.mxu0 %v4634
    %6209 = vmatprep.subr.mxu0 %v4642
    %6210 = vmatpush1.msra.mxu0 %v4641
    %6211 = vmatprep.subr.mxu0 %v4649
    %6212 = vmatpush1.msra.mxu0 %v4648
    %6213 = vmatprep.subr.mxu0 %v4656
    %6214 = vmatpush1.msra.mxu0 %v4655
    %6215 = vmatprep.subr.mxu0 %v4663
    %6216 = vmatpush1.msra.mxu0 %v4662
    %6217 = vmatprep.subr.mxu0 %v4670
    %6218 = vmatpush1.msra.mxu0 %v4669
    %6219 = vmatprep.subr.mxu0 %v4677
    %6220 = vmatpush1.msra.mxu0 %v4676
    %6221 = vmatprep.subr.mxu0 %v4684
    %6222 = vmatpush1.msra.mxu0 %v4683
    %6223 = vmatprep.subr.mxu0 %v4691
    %6224 = vmatpush1.msra.mxu0 %v4690
    %6225 = vmatprep.subr.mxu0 %v4698
    %6226 = vmatpush1.msra.mxu0 %v4697
    %6227 = vmatprep.subr.mxu0 %v4705
    %6228 = vmatpush1.msra.mxu0 %v4704
    %6229 = vmatprep.subr.mxu0 %v4712
    %6230 = vmatpush1.msra.mxu0 %v4711
    %6231 = vmatprep.subr.mxu0 %v4719
    %6232 = vmatpush1.msra.mxu0 %v4718
    %6233 = vmatprep.subr.mxu0 %v4726
    %6234 = vmatpush1.msra.mxu0 %v4725
    %6235 = vmatprep.subr.mxu0 %v4733
    %6236 = vmatpush1.msra.mxu0 %v4732
    %6237 = vmatprep.subr.mxu0 %v4740
    %6238 = vmatpush1.msra.mxu0 %v4739
    %6239 = vmatprep.subr.mxu0 %v4747
    %6240 = vmatpush1.msra.mxu0 %v4746
    %6241 = vmatprep.subr.mxu0 %v4754
    %6242 = vmatpush1.msra.mxu0 %v4753
    %6243 = vmatprep.subr.mxu0 %v4761
    %6244 = vmatpush1.msra.mxu0 %v4760
    %6245 = vmatprep.mubr.f32.mxu0 %v3417
    %6246 = vmatmul.mubr.f32.gmra.mrb[0].mxu0 %v3416
    %v6247 = vpop.f32.mrb[0].mxu0
    %v6248 = vadd.f32 %v6177, %v6247
    %v6249 = vpop.f32.mrb[0].mxu0
    %v6250 = vadd.f32 %v6179, %v6249
    %6251 = vdwg.mxu0
    %6252 = vmatprep.subr.mxu0 %v4768
    %6253 = vmatpush1.msra.mxu0 %v4767
    %6254 = vmatprep.subr.mxu0 %v4775
    %6255 = vmatpush1.msra.mxu0 %v4774
    %6256 = vmatprep.subr.mxu0 %v4782
    %6257 = vmatpush1.msra.mxu0 %v4781
    %6258 = vmatprep.subr.mxu0 %v4789
    %6259 = vmatpush1.msra.mxu0 %v4788
    %6260 = vmatprep.subr.mxu0 0.0
    %6261 = vmatpush1.msra.mxu0 0.0
    %6262 = vmatprep.subr.mxu0 0.0
    %6263 = vmatpush1.msra.mxu0 0.0
    %6264 = vmatprep.subr.mxu0 0.0
    %6265 = vmatpush1.msra.mxu0 0.0
    %6266 = vmatprep.subr.mxu0 0.0
    %6267 = vmatpush1.msra.mxu0 0.0
    %6268 = vmatprep.subr.mxu0 0.0
    %6269 = vmatpush1.msra.mxu0 0.0
    %6270 = vmatprep.subr.mxu0 0.0
    %6271 = vmatpush1.msra.mxu0 0.0
    %6272 = vmatprep.subr.mxu0 0.0
    %6273 = vmatpush1.msra.mxu0 0.0
    %6274 = vmatprep.subr.mxu0 0.0
    %6275 = vmatpush1.msra.mxu0 0.0
    %6276 = vmatprep.subr.mxu0 0.0
    %6277 = vmatpush1.msra.mxu0 0.0
    %6278 = vmatprep.subr.mxu0 0.0
    %6279 = vmatpush1.msra.mxu0 0.0
    %6280 = vmatprep.subr.mxu0 0.0
    %6281 = vmatpush1.msra.mxu0 0.0
    %6282 = vmatprep.subr.mxu0 0.0
    %6283 = vmatpush1.msra.mxu0 0.0
    %6284 = vmatprep.subr.mxu0 0.0
    %6285 = vmatpush1.msra.mxu0 0.0
    %6286 = vmatprep.subr.mxu0 0.0
    %6287 = vmatpush1.msra.mxu0 0.0
    %6288 = vmatprep.subr.mxu0 0.0
    %6289 = vmatpush1.msra.mxu0 0.0
    %6290 = vmatprep.subr.mxu0 0.0
    %6291 = vmatpush1.msra.mxu0 0.0
    %6292 = vmatprep.subr.mxu0 0.0
    %6293 = vmatpush1.msra.mxu0 0.0
    %6294 = vmatprep.subr.mxu0 0.0
    %6295 = vmatpush1.msra.mxu0 0.0
    %6296 = vmatprep.subr.mxu0 0.0
    %6297 = vmatpush1.msra.mxu0 0.0
    %6298 = vmatprep.subr.mxu0 0.0
    %6299 = vmatpush1.msra.mxu0 0.0
    %6300 = vmatprep.subr.mxu0 0.0
    %6301 = vmatpush1.msra.mxu0 0.0
    %6302 = vmatprep.subr.mxu0 0.0
    %6303 = vmatpush1.msra.mxu0 0.0
    %6304 = vmatprep.subr.mxu0 0.0
    %6305 = vmatpush1.msra.mxu0 0.0
    %6306 = vmatprep.subr.mxu0 0.0
    %6307 = vmatpush1.msra.mxu0 0.0
    %6308 = vmatprep.subr.mxu0 0.0
    %6309 = vmatpush1.msra.mxu0 0.0
    %6310 = vmatprep.subr.mxu0 0.0
    %6311 = vmatpush1.msra.mxu0 0.0
    %6312 = vmatprep.subr.mxu0 0.0
    %6313 = vmatpush1.msra.mxu0 0.0
    %6314 = vmatprep.subr.mxu0 0.0
    %6315 = vmatpush1.msra.mxu0 0.0
    %6316 = vmatprep.mubr.f32.mxu0 0.0
    %6317 = vmatmul.mubr.f32.gmra.mrb[0].mxu0 %v4830
    %v6318 = vpop.f32.mrb[0].mxu0
    %v6319 = vadd.f32 %v6248, %v6318
    %v6320 = vpop.f32.mrb[0].mxu0
    %v6321 = vadd.f32 %v6250, %v6320
    %6322 = vdwg.mxu0
    %6323 = vmatprep.subr.mxu0 0.0
    %6324 = vmatpush1.msra.mxu0 %v3425
    %6325 = vmatprep.subr.mxu0 0.0
    %6326 = vmatpush1.msra.mxu0 %v3432
    %6327 = vmatprep.subr.mxu0 0.0
    %6328 = vmatpush1.msra.mxu0 %v3439
    %6329 = vmatprep.subr.mxu0 0.0
    %6330 = vmatpush1.msra.mxu0 %v3446
    %6331 = vmatprep.subr.mxu0 0.0
    %6332 = vmatpush1.msra.mxu0 %v3453
    %6333 = vmatprep.subr.mxu0 0.0
    %6334 = vmatpush1.msra.mxu0 %v3460
    %6335 = vmatprep.subr.mxu0 0.0
    %6336 = vmatpush1.msra.mxu0 %v3467
    %6337 = vmatprep.subr.mxu0 0.0
    %6338 = vmatpush1.msra.mxu0 %v3474
    %6339 = vmatprep.subr.mxu0 0.0
    %6340 = vmatpush1.msra.mxu0 %v3481
    %6341 = vmatprep.subr.mxu0 0.0
    %6342 = vmatpush1.msra.mxu0 %v3488
    %6343 = vmatprep.subr.mxu0 0.0
    %6344 = vmatpush1.msra.mxu0 %v3495
    %6345 = vmatprep.subr.mxu0 0.0
    %6346 = vmatpush1.msra.mxu0 %v3502
    %6347 = vmatprep.subr.mxu0 0.0
    %6348 = vmatpush1.msra.mxu0 %v3509
    %6349 = vmatprep.subr.mxu0 0.0
    %6350 = vmatpush1.msra.mxu0 %v3516
    %6351 = vmatprep.subr.mxu0 0.0
    %6352 = vmatpush1.msra.mxu0 %v3523
    %6353 = vmatprep.subr.mxu0 0.0
    %6354 = vmatpush1.msra.mxu0 %v3530
    %6355 = vmatprep.subr.mxu0 0.0
    %6356 = vmatpush1.msra.mxu0 %v3537
    %6357 = vmatprep.subr.mxu0 0.0
    %6358 = vmatpush1.msra.mxu0 %v3544
    %6359 = vmatprep.subr.mxu0 0.0
    %6360 = vmatpush1.msra.mxu0 %v3551
    %6361 = vmatprep.subr.mxu0 0.0
    %6362 = vmatpush1.msra.mxu0 %v3558
    %6363 = vmatprep.subr.mxu0 0.0
    %6364 = vmatpush1.msra.mxu0 %v3565
    %6365 = vmatprep.subr.mxu0 0.0
    %6366 = vmatpush1.msra.mxu0 %v3572
    %6367 = vmatprep.subr.mxu0 0.0
    %6368 = vmatpush1.msra.mxu0 %v3579
    %6369 = vmatprep.subr.mxu0 0.0
    %6370 = vmatpush1.msra.mxu0 %v3586
    %6371 = vmatprep.subr.mxu0 0.0
    %6372 = vmatpush1.msra.mxu0 %v3593
    %6373 = vmatprep.subr.mxu0 0.0
    %6374 = vmatpush1.msra.mxu0 %v3600
    %6375 = vmatprep.subr.mxu0 0.0
    %6376 = vmatpush1.msra.mxu0 %v3607
    %6377 = vmatprep.subr.mxu0 0.0
    %6378 = vmatpush1.msra.mxu0 %v3614
    %6379 = vmatprep.subr.mxu0 0.0
    %6380 = vmatpush1.msra.mxu0 %v3621
    %6381 = vmatprep.subr.mxu0 0.0
    %6382 = vmatpush1.msra.mxu0 %v3628
    %6383 = vmatprep.subr.mxu0 0.0
    %6384 = vmatpush1.msra.mxu0 %v3635
    %6385 = vmatprep.subr.mxu0 0.0
    %6386 = vmatpush1.msra.mxu0 %v3642
    %6387 = vmatprep.mubr.f32.mxu0 %v3407
    %6388 = vmatmul.mubr.f32.gmra.mrb[0].mxu0 %v3406
    %v6389 = vpop.f32.mrb[0].mxu0
    %v6390 = vadd.f32 %v4820, %v6389
    %v6391 = vpop.f32.mrb[0].mxu0
    %6392 = vdwg.mxu0
    %6393 = vmatprep.subr.mxu0 0.0
    %6394 = vmatpush1.msra.mxu0 %v3649
    %6395 = vmatprep.subr.mxu0 0.0
    %6396 = vmatpush1.msra.mxu0 %v3656
    %6397 = vmatprep.subr.mxu0 0.0
    %6398 = vmatpush1.msra.mxu0 %v3663
    %6399 = vmatprep.subr.mxu0 0.0
    %6400 = vmatpush1.msra.mxu0 %v3670
    %6401 = vmatprep.subr.mxu0 0.0
    %6402 = vmatpush1.msra.mxu0 %v3677
    %6403 = vmatprep.subr.mxu0 0.0
    %6404 = vmatpush1.msra.mxu0 %v3684
    %6405 = vmatprep.subr.mxu0 0.0
    %6406 = vmatpush1.msra.mxu0 %v3691
    %6407 = vmatprep.subr.mxu0 0.0
    %6408 = vmatpush1.msra.mxu0 %v3698
    %6409 = vmatprep.subr.mxu0 0.0
    %6410 = vmatpush1.msra.mxu0 %v3705
    %6411 = vmatprep.subr.mxu0 0.0
    %6412 = vmatpush1.msra.mxu0 %v3712
    %6413 = vmatprep.subr.mxu0 0.0
    %6414 = vmatpush1.msra.mxu0 %v3719
    %6415 = vmatprep.subr.mxu0 0.0
    %6416 = vmatpush1.msra.mxu0 %v3726
    %6417 = vmatprep.subr.mxu0 0.0
    %6418 = vmatpush1.msra.mxu0 %v3733
    %6419 = vmatprep.subr.mxu0 0.0
    %6420 = vmatpush1.msra.mxu0 %v3740
    %6421 = vmatprep.subr.mxu0 0.0
    %6422 = vmatpush1.msra.mxu0 %v3747
    %6423 = vmatprep.subr.mxu0 0.0
    %6424 = vmatpush1.msra.mxu0 %v3754
    %6425 = vmatprep.subr.mxu0 0.0
    %6426 = vmatpush1.msra.mxu0 %v3761
    %6427 = vmatprep.subr.mxu0 0.0
    %6428 = vmatpush1.msra.mxu0 %v3768
    %6429 = vmatprep.subr.mxu0 0.0
    %6430 = vmatpush1.msra.mxu0 %v3775
    %6431 = vmatprep.subr.mxu0 0.0
    %6432 = vmatpush1.msra.mxu0 %v3782
    %6433 = vmatprep.subr.mxu0 0.0
    %6434 = vmatpush1.msra.mxu0 %v3789
    %6435 = vmatprep.subr.mxu0 0.0
    %6436 = vmatpush1.msra.mxu0 %v3796
    %6437 = vmatprep.subr.mxu0 0.0
    %6438 = vmatpush1.msra.mxu0 %v3803
    %6439 = vmatprep.subr.mxu0 0.0
    %6440 = vmatpush1.msra.mxu0 %v3810
    %6441 = vmatprep.subr.mxu0 0.0
    %6442 = vmatpush1.msra.mxu0 %v3817
    %6443 = vmatprep.subr.mxu0 0.0
    %6444 = vmatpush1.msra.mxu0 %v3824
    %6445 = vmatprep.subr.mxu0 0.0
    %6446 = vmatpush1.msra.mxu0 %v3831
    %6447 = vmatprep.subr.mxu0 0.0
    %6448 = vmatpush1.msra.mxu0 %v3838
    %6449 = vmatprep.subr.mxu0 0.0
    %6450 = vmatpush1.msra.mxu0 %v3845
    %6451 = vmatprep.subr.mxu0 0.0
    %6452 = vmatpush1.msra.mxu0 %v3852
    %6453 = vmatprep.subr.mxu0 0.0
    %6454 = vmatpush1.msra.mxu0 %v3859
    %6455 = vmatprep.subr.mxu0 0.0
    %6456 = vmatpush1.msra.mxu0 %v3866
    %6457 = vmatprep.mubr.f32.mxu0 %v3409
    %6458 = vmatmul.mubr.f32.gmra.mrb[0].mxu0 %v3408
    %v6459 = vpop.f32.mrb[0].mxu0
    %v6460 = vadd.f32 %v6390, %v6459
    %v6461 = vpop.f32.mrb[0].mxu0
    %6462 = vdwg.mxu0
    %6463 = vmatprep.subr.mxu0 0.0
    %6464 = vmatpush1.msra.mxu0 %v3873
    %6465 = vmatprep.subr.mxu0 0.0
    %6466 = vmatpush1.msra.mxu0 %v3880
    %6467 = vmatprep.subr.mxu0 0.0
    %6468 = vmatpush1.msra.mxu0 %v3887
    %6469 = vmatprep.subr.mxu0 0.0
    %6470 = vmatpush1.msra.mxu0 %v3894
    %6471 = vmatprep.subr.mxu0 0.0
    %6472 = vmatpush1.msra.mxu0 %v3901
    %6473 = vmatprep.subr.mxu0 0.0
    %6474 = vmatpush1.msra.mxu0 %v3908
    %6475 = vmatprep.subr.mxu0 0.0
    %6476 = vmatpush1.msra.mxu0 %v3915
    %6477 = vmatprep.subr.mxu0 0.0
    %6478 = vmatpush1.msra.mxu0 %v3922
    %6479 = vmatprep.subr.mxu0 0.0
    %6480 = vmatpush1.msra.mxu0 %v3929
    %6481 = vmatprep.subr.mxu0 0.0
    %6482 = vmatpush1.msra.mxu0 %v3936
    %6483 = vmatprep.subr.mxu0 0.0
    %6484 = vmatpush1.msra.mxu0 %v3943
    %6485 = vmatprep.subr.mxu0 0.0
    %6486 = vmatpush1.msra.mxu0 %v3950
    %6487 = vmatprep.subr.mxu0 0.0
    %6488 = vmatpush1.msra.mxu0 %v3957
    %6489 = vmatprep.subr.mxu0 0.0
    %6490 = vmatpush1.msra.mxu0 %v3964
    %6491 = vmatprep.subr.mxu0 0.0
    %6492 = vmatpush1.msra.mxu0 %v3971
    %6493 = vmatprep.subr.mxu0 0.0
    %6494 = vmatpush1.msra.mxu0 %v3978
    %6495 = vmatprep.subr.mxu0 0.0
    %6496 = vmatpush1.msra.mxu0 %v3985
    %6497 = vmatprep.subr.mxu0 0.0
    %6498 = vmatpush1.msra.mxu0 %v3992
    %6499 = vmatprep.subr.mxu0 0.0
    %6500 = vmatpush1.msra.mxu0 %v3999
    %6501 = vmatprep.subr.mxu0 0.0
    %6502 = vmatpush1.msra.mxu0 %v4006
    %6503 = vmatprep.subr.mxu0 0.0
    %6504 = vmatpush1.msra.mxu0 %v4013
    %6505 = vmatprep.subr.mxu0 0.0
    %6506 = vmatpush1.msra.mxu0 %v4020
    %6507 = vmatprep.subr.mxu0 0.0
    %6508 = vmatpush1.msra.mxu0 %v4027
    %6509 = vmatprep.subr.mxu0 0.0
    %6510 = vmatpush1.msra.mxu0 %v4034
    %6511 = vmatprep.subr.mxu0 0.0
    %6512 = vmatpush1.msra.mxu0 %v4041
    %6513 = vmatprep.subr.mxu0 0.0
    %6514 = vmatpush1.msra.mxu0 %v4048
    %6515 = vmatprep.subr.mxu0 0.0
    %6516 = vmatpush1.msra.mxu0 %v4055
    %6517 = vmatprep.subr.mxu0 0.0
    %6518 = vmatpush1.msra.mxu0 %v4062
    %6519 = vmatprep.subr.mxu0 0.0
    %6520 = vmatpush1.msra.mxu0 %v4069
    %6521 = vmatprep.subr.mxu0 0.0
    %6522 = vmatpush1.msra.mxu0 %v4076
    %6523 = vmatprep.subr.mxu0 0.0
    %6524 = vmatpush1.msra.mxu0 %v4083
    %6525 = vmatprep.subr.mxu0 0.0
    %6526 = vmatpush1.msra.mxu0 %v4090
    %6527 = vmatprep.mubr.f32.mxu0 %v3411
    %6528 = vmatmul.mubr.f32.gmra.mrb[0].mxu0 %v3410
    %v6529 = vpop.f32.mrb[0].mxu0
    %v6530 = vadd.f32 %v6460, %v6529
    %v6531 = vpop.f32.mrb[0].mxu0
    %6532 = vdwg.mxu0
    %6533 = vmatprep.subr.mxu0 0.0
    %6534 = vmatpush1.msra.mxu0 %v4097
    %6535 = vmatprep.subr.mxu0 0.0
    %6536 = vmatpush1.msra.mxu0 %v4104
    %6537 = vmatprep.subr.mxu0 0.0
    %6538 = vmatpush1.msra.mxu0 %v4111
    %6539 = vmatprep.subr.mxu0 0.0
    %6540 = vmatpush1.msra.mxu0 %v4118
    %6541 = vmatprep.subr.mxu0 0.0
    %6542 = vmatpush1.msra.mxu0 %v4125
    %6543 = vmatprep.subr.mxu0 0.0
    %6544 = vmatpush1.msra.mxu0 %v4132
    %6545 = vmatprep.subr.mxu0 0.0
    %6546 = vmatpush1.msra.mxu0 %v4139
    %6547 = vmatprep.subr.mxu0 0.0
    %6548 = vmatpush1.msra.mxu0 %v4146
    %6549 = vmatprep.subr.mxu0 0.0
    %6550 = vmatpush1.msra.mxu0 %v4153
    %6551 = vmatprep.subr.mxu0 0.0
    %6552 = vmatpush1.msra.mxu0 %v4160
    %6553 = vmatprep.subr.mxu0 0.0
    %6554 = vmatpush1.msra.mxu0 %v4167
    %6555 = vmatprep.subr.mxu0 0.0
    %6556 = vmatpush1.msra.mxu0 %v4174
    %6557 = vmatprep.subr.mxu0 0.0
    %6558 = vmatpush1.msra.mxu0 %v4181
    %6559 = vmatprep.subr.mxu0 0.0
    %6560 = vmatpush1.msra.mxu0 %v4188
    %6561 = vmatprep.subr.mxu0 0.0
    %6562 = vmatpush1.msra.mxu0 %v4195
    %6563 = vmatprep.subr.mxu0 0.0
    %6564 = vmatpush1.msra.mxu0 %v4202
    %6565 = vmatprep.subr.mxu0 0.0
    %6566 = vmatpush1.msra.mxu0 %v4209
    %6567 = vmatprep.subr.mxu0 0.0
    %6568 = vmatpush1.msra.mxu0 %v4216
    %6569 = vmatprep.subr.mxu0 0.0
    %6570 = vmatpush1.msra.mxu0 %v4223
    %6571 = vmatprep.subr.mxu0 0.0
    %6572 = vmatpush1.msra.mxu0 %v4230
    %6573 = vmatprep.subr.mxu0 0.0
    %6574 = vmatpush1.msra.mxu0 %v4237
    %6575 = vmatprep.subr.mxu0 0.0
    %6576 = vmatpush1.msra.mxu0 %v4244
    %6577 = vmatprep.subr.mxu0 0.0
    %6578 = vmatpush1.msra.mxu0 %v4251
    %6579 = vmatprep.subr.mxu0 0.0
    %6580 = vmatpush1.msra.mxu0 %v4258
    %6581 = vmatprep.subr.mxu0 0.0
    %6582 = vmatpush1.msra.mxu0 %v4265
    %6583 = vmatprep.subr.mxu0 0.0
    %6584 = vmatpush1.msra.mxu0 %v4272
    %6585 = vmatprep.subr.mxu0 0.0
    %6586 = vmatpush1.msra.mxu0 %v4279
    %6587 = vmatprep.subr.mxu0 0.0
    %6588 = vmatpush1.msra.mxu0 %v4286
    %6589 = vmatprep.subr.mxu0 0.0
    %6590 = vmatpush1.msra.mxu0 %v4293
    %6591 = vmatprep.subr.mxu0 0.0
    %6592 = vmatpush1.msra.mxu0 %v4300
    %6593 = vmatprep.subr.mxu0 0.0
    %6594 = vmatpush1.msra.mxu0 %v4307
    %6595 = vmatprep.subr.mxu0 0.0
    %6596 = vmatpush1.msra.mxu0 %v4314
    %6597 = vmatprep.mubr.f32.mxu0 %v3413
    %6598 = vmatmul.mubr.f32.gmra.mrb[0].mxu0 %v3412
    %v6599 = vpop.f32.mrb[0].mxu0
    %v6600 = vadd.f32 %v6530, %v6599
    %v6601 = vpop.f32.mrb[0].mxu0
    %6602 = vdwg.mxu0
    %6603 = vmatprep.subr.mxu0 0.0
    %6604 = vmatpush1.msra.mxu0 %v4321
    %6605 = vmatprep.subr.mxu0 0.0
    %6606 = vmatpush1.msra.mxu0 %v4328
    %6607 = vmatprep.subr.mxu0 0.0
    %6608 = vmatpush1.msra.mxu0 %v4335
    %6609 = vmatprep.subr.mxu0 0.0
    %6610 = vmatpush1.msra.mxu0 %v4342
    %6611 = vmatprep.subr.mxu0 0.0
    %6612 = vmatpush1.msra.mxu0 %v4349
    %6613 = vmatprep.subr.mxu0 0.0
    %6614 = vmatpush1.msra.mxu0 %v4356
    %6615 = vmatprep.subr.mxu0 0.0
    %6616 = vmatpush1.msra.mxu0 %v4363
    %6617 = vmatprep.subr.mxu0 0.0
    %6618 = vmatpush1.msra.mxu0 %v4370
    %6619 = vmatprep.subr.mxu0 0.0
    %6620 = vmatpush1.msra.mxu0 %v4377
    %6621 = vmatprep.subr.mxu0 0.0
    %6622 = vmatpush1.msra.mxu0 %v4384
    %6623 = vmatprep.subr.mxu0 0.0
    %6624 = vmatpush1.msra.mxu0 %v4391
    %6625 = vmatprep.subr.mxu0 0.0
    %6626 = vmatpush1.msra.mxu0 %v4398
    %6627 = vmatprep.subr.mxu0 0.0
    %6628 = vmatpush1.msra.mxu0 %v4405
    %6629 = vmatprep.subr.mxu0 0.0
    %6630 = vmatpush1.msra.mxu0 %v4412
    %6631 = vmatprep.subr.mxu0 0.0
    %6632 = vmatpush1.msra.mxu0 %v4419
    %6633 = vmatprep.subr.mxu0 0.0
    %6634 = vmatpush1.msra.mxu0 %v4426
    %6635 = vmatprep.subr.mxu0 0.0
    %6636 = vmatpush1.msra.mxu0 %v4433
    %6637 = vmatprep.subr.mxu0 0.0
    %6638 = vmatpush1.msra.mxu0 %v4440
    %6639 = vmatprep.subr.mxu0 0.0
    %6640 = vmatpush1.msra.mxu0 %v4447
    %6641 = vmatprep.subr.mxu0 0.0
    %6642 = vmatpush1.msra.mxu0 %v4454
    %6643 = vmatprep.subr.mxu0 0.0
    %6644 = vmatpush1.msra.mxu0 %v4461
    %6645 = vmatprep.subr.mxu0 0.0
    %6646 = vmatpush1.msra.mxu0 %v4468
    %6647 = vmatprep.subr.mxu0 0.0
    %6648 = vmatpush1.msra.mxu0 %v4475
    %6649 = vmatprep.subr.mxu0 0.0
    %6650 = vmatpush1.msra.mxu0 %v4482
    %6651 = vmatprep.subr.mxu0 0.0
    %6652 = vmatpush1.msra.mxu0 %v4489
    %6653 = vmatprep.subr.mxu0 0.0
    %6654 = vmatpush1.msra.mxu0 %v4496
    %6655 = vmatprep.subr.mxu0 0.0
    %6656 = vmatpush1.msra.mxu0 %v4503
    %6657 = vmatprep.subr.mxu0 0.0
    %6658 = vmatpush1.msra.mxu0 %v4510
    %6659 = vmatprep.subr.mxu0 0.0
    %6660 = vmatpush1.msra.mxu0 %v4517
    %6661 = vmatprep.subr.mxu0 0.0
    %6662 = vmatpush1.msra.mxu0 %v4524
    %6663 = vmatprep.subr.mxu0 0.0
    %6664 = vmatpush1.msra.mxu0 %v4531
    %6665 = vmatprep.subr.mxu0 0.0
    %6666 = vmatpush1.msra.mxu0 %v4538
    %6667 = vmatprep.mubr.f32.mxu0 %v3415
    %6668 = vmatmul.mubr.f32.gmra.mrb[0].mxu0 %v3414
    %v6669 = vpop.f32.mrb[0].mxu0
    %v6670 = vadd.f32 %v6600, %v6669
    %v6671 = vpop.f32.mrb[0].mxu0
    %6672 = vdwg.mxu0
    %6673 = vmatprep.subr.mxu0 0.0
    %6674 = vmatpush1.msra.mxu0 %v4545
    %6675 = vmatprep.subr.mxu0 0.0
    %6676 = vmatpush1.msra.mxu0 %v4552
    %6677 = vmatprep.subr.mxu0 0.0
    %6678 = vmatpush1.msra.mxu0 %v4559
    %6679 = vmatprep.subr.mxu0 0.0
    %6680 = vmatpush1.msra.mxu0 %v4566
    %6681 = vmatprep.subr.mxu0 0.0
    %6682 = vmatpush1.msra.mxu0 %v4573
    %6683 = vmatprep.subr.mxu0 0.0
    %6684 = vmatpush1.msra.mxu0 %v4580
    %6685 = vmatprep.subr.mxu0 0.0
    %6686 = vmatpush1.msra.mxu0 %v4587
    %6687 = vmatprep.subr.mxu0 0.0
    %6688 = vmatpush1.msra.mxu0 %v4594
    %6689 = vmatprep.subr.mxu0 0.0
    %6690 = vmatpush1.msra.mxu0 %v4601
    %6691 = vmatprep.subr.mxu0 0.0
    %6692 = vmatpush1.msra.mxu0 %v4608
    %6693 = vmatprep.subr.mxu0 0.0
    %6694 = vmatpush1.msra.mxu0 %v4615
    %6695 = vmatprep.subr.mxu0 0.0
    %6696 = vmatpush1.msra.mxu0 %v4622
    %6697 = vmatprep.subr.mxu0 0.0
    %6698 = vmatpush1.msra.mxu0 %v4629
    %6699 = vmatprep.subr.mxu0 0.0
    %6700 = vmatpush1.msra.mxu0 %v4636
    %6701 = vmatprep.subr.mxu0 0.0
    %6702 = vmatpush1.msra.mxu0 %v4643
    %6703 = vmatprep.subr.mxu0 0.0
    %6704 = vmatpush1.msra.mxu0 %v4650
    %6705 = vmatprep.subr.mxu0 0.0
    %6706 = vmatpush1.msra.mxu0 %v4657
    %6707 = vmatprep.subr.mxu0 0.0
    %6708 = vmatpush1.msra.mxu0 %v4664
    %6709 = vmatprep.subr.mxu0 0.0
    %6710 = vmatpush1.msra.mxu0 %v4671
    %6711 = vmatprep.subr.mxu0 0.0
    %6712 = vmatpush1.msra.mxu0 %v4678
    %6713 = vmatprep.subr.mxu0 0.0
    %6714 = vmatpush1.msra.mxu0 %v4685
    %6715 = vmatprep.subr.mxu0 0.0
    %6716 = vmatpush1.msra.mxu0 %v4692
    %6717 = vmatprep.subr.mxu0 0.0
    %6718 = vmatpush1.msra.mxu0 %v4699
    %6719 = vmatprep.subr.mxu0 0.0
    %6720 = vmatpush1.msra.mxu0 %v4706
    %6721 = vmatprep.subr.mxu0 0.0
    %6722 = vmatpush1.msra.mxu0 %v4713
    %6723 = vmatprep.subr.mxu0 0.0
    %6724 = vmatpush1.msra.mxu0 %v4720
    %6725 = vmatprep.subr.mxu0 0.0
    %6726 = vmatpush1.msra.mxu0 %v4727
    %6727 = vmatprep.subr.mxu0 0.0
    %6728 = vmatpush1.msra.mxu0 %v4734
    %6729 = vmatprep.subr.mxu0 0.0
    %6730 = vmatpush1.msra.mxu0 %v4741
    %6731 = vmatprep.subr.mxu0 0.0
    %6732 = vmatpush1.msra.mxu0 %v4748
    %6733 = vmatprep.subr.mxu0 0.0
    %6734 = vmatpush1.msra.mxu0 %v4755
    %6735 = vmatprep.subr.mxu0 0.0
    %6736 = vmatpush1.msra.mxu0 %v4762
    %6737 = vmatprep.mubr.f32.mxu0 %v3417
    %6738 = vmatmul.mubr.f32.gmra.mrb[0].mxu0 %v3416
    %v6739 = vpop.f32.mrb[0].mxu0
    %v6740 = vadd.f32 %v6670, %v6739
    %v6741 = vpop.f32.mrb[0].mxu0
    %6742 = vdwg.mxu0
    %6743 = vmatprep.subr.mxu0 0.0
    %6744 = vmatpush1.msra.mxu0 %v4769
    %6745 = vmatprep.subr.mxu0 0.0
    %6746 = vmatpush1.msra.mxu0 %v4776
    %6747 = vmatprep.subr.mxu0 0.0
    %6748 = vmatpush1.msra.mxu0 %v4783
    %6749 = vmatprep.subr.mxu0 0.0
    %6750 = vmatpush1.msra.mxu0 %v4790
    %6751 = vmatprep.subr.mxu0 0.0
    %6752 = vmatpush1.msra.mxu0 0.0
    %6753 = vmatprep.subr.mxu0 0.0
    %6754 = vmatpush1.msra.mxu0 0.0
    %6755 = vmatprep.subr.mxu0 0.0
    %6756 = vmatpush1.msra.mxu0 0.0
    %6757 = vmatprep.subr.mxu0 0.0
    %6758 = vmatpush1.msra.mxu0 0.0
    %6759 = vmatprep.subr.mxu0 0.0
    %6760 = vmatpush1.msra.mxu0 0.0
    %6761 = vmatprep.subr.mxu0 0.0
    %6762 = vmatpush1.msra.mxu0 0.0
    %6763 = vmatprep.subr.mxu0 0.0
    %6764 = vmatpush1.msra.mxu0 0.0
    %6765 = vmatprep.subr.mxu0 0.0
    %6766 = vmatpush1.msra.mxu0 0.0
    %6767 = vmatprep.subr.mxu0 0.0
    %6768 = vmatpush1.msra.mxu0 0.0
    %6769 = vmatprep.subr.mxu0 0.0
    %6770 = vmatpush1.msra.mxu0 0.0
    %6771 = vmatprep.subr.mxu0 0.0
    %6772 = vmatpush1.msra.mxu0 0.0
    %6773 = vmatprep.subr.mxu0 0.0
    %6774 = vmatpush1.msra.mxu0 0.0
    %6775 = vmatprep.subr.mxu0 0.0
    %6776 = vmatpush1.msra.mxu0 0.0
    %6777 = vmatprep.subr.mxu0 0.0
    %6778 = vmatpush1.msra.mxu0 0.0
    %6779 = vmatprep.subr.mxu0 0.0
    %6780 = vmatpush1.msra.mxu0 0.0
    %6781 = vmatprep.subr.mxu0 0.0
    %6782 = vmatpush1.msra.mxu0 0.0
    %6783 = vmatprep.subr.mxu0 0.0
    %6784 = vmatpush1.msra.mxu0 0.0
    %6785 = vmatprep.subr.mxu0 0.0
    %6786 = vmatpush1.msra.mxu0 0.0
    %6787 = vmatprep.subr.mxu0 0.0
    %6788 = vmatpush1.msra.mxu0 0.0
    %6789 = vmatprep.subr.mxu0 0.0
    %6790 = vmatpush1.msra.mxu0 0.0
    %6791 = vmatprep.subr.mxu0 0.0
    %6792 = vmatpush1.msra.mxu0 0.0
    %6793 = vmatprep.subr.mxu0 0.0
    %6794 = vmatpush1.msra.mxu0 0.0
    %6795 = vmatprep.subr.mxu0 0.0
    %6796 = vmatpush1.msra.mxu0 0.0
    %6797 = vmatprep.subr.mxu0 0.0
    %6798 = vmatpush1.msra.mxu0 0.0
    %6799 = vmatprep.subr.mxu0 0.0
    %6800 = vmatpush1.msra.mxu0 0.0
    %6801 = vmatprep.subr.mxu0 0.0
    %6802 = vmatpush1.msra.mxu0 0.0
    %6803 = vmatprep.subr.mxu0 0.0
    %6804 = vmatpush1.msra.mxu0 0.0
    %6805 = vmatprep.subr.mxu0 0.0
    %6806 = vmatpush1.msra.mxu0 0.0
    %6807 = vmatprep.mubr.f32.mxu0 0.0
    %6808 = vmatmul.mubr.f32.gmra.mrb[0].mxu0 %v4830
    %v6809 = vpop.f32.mrb[0].mxu0
    %v6810 = vadd.f32 %v6740, %v6809
    %v6811 = vpop.f32.mrb[0].mxu0
    %6812 = vdwg.mxu0
    %v6813 = vmax.f32 %v5325, 0.0
    %v6814 = vmax.f32 %v5327, 0.0
    %v6815 = vmax.f32 %v5822, 0.0
    %v6816 = vmax.f32 %v5824, 0.0
    %v6817 = vmax.f32 %v6319, 0.0
    %v6818 = vmax.f32 %v6321, 0.0
    %v6819 = vmax.f32 %v6810, 0.0
    %v6820 = vld [vmem:[%s5] sm:$0xff]
    %v6821 = vld [vmem:[%s5 + $0x8] sm:$0xff]
    %v6822 = vld [vmem:[%s5 + $0x10] sm:$0xff]
    %v6823 = vld [vmem:[%s5 + $0x18] sm:$0xff]
    %v6824 = vld [vmem:[%s5 + $0x20] sm:$0xff]
    %v6825 = vld [vmem:[%s5 + $0x28] sm:$0xff]
    %v6826 = vld [vmem:[%s5 + $0x30] sm:$0xff]
    %v6827 = vld [vmem:[%s5 + $0x38] sm:$0xff]
    %v6828 = vld [vmem:[%s5 + $0x40] sm:$0xff]
    %v6829 = vld [vmem:[%s5 + $0x48] sm:$0xff]
    %v6830 = vld [vmem:[%s5 + $0x50] sm:$0xff]
    %v6831 = vld [vmem:[%s5 + $0x58] sm:$0xff]
    %v6832 = vld [vmem:[%s5 + $0x60] sm:$0xff]
    %v6833 = vld [vmem:[%s5 + $0x68] sm:$0xff]
    %v6834 = vld [vmem:[%s5 + $0x70] sm:$0xff]
    %v6835 = vld [vmem:[%s5 + $0x78] sm:$0xff]
    %v6836 = vld [vmem:[%s5 + $0x80] sm:$0xff]
    %v6837 = vld [vmem:[%s5 + $0x88] sm:$0xff]
    %v6838 = vld [vmem:[%s5 + $0x90] sm:$0xff]
    %v6839 = vld [vmem:[%s5 + $0x98] sm:$0xff]
    %v6840 = vld [vmem:[%s5 + $0xa0] sm:$0xff]
    %v6841 = vld [vmem:[%s5 + $0xa8] sm:$0xff]
    %v6842 = vld [vmem:[%s5 + $0xb0] sm:$0xff]
    %v6843 = vld [vmem:[%s5 + $0xb8] sm:$0xff]
    %v6844 = vld [vmem:[%s5 + $0xc0] sm:$0xff]
    %v6845 = vld [vmem:[%s5 + $0xc8] sm:$0xff]
    %v6846 = vld [vmem:[%s5 + $0xd0] sm:$0xff]
    %v6847 = vld [vmem:[%s5 + $0xd8] sm:$0xff]
    %v6848 = vld [vmem:[%s5 + $0xe0] sm:$0xff]
    %v6849 = vld [vmem:[%s5 + $0xe8] sm:$0xff]
    %v6850 = vld [vmem:[%s5 + $0xf0] sm:$0xff]
    %v6851 = vld [vmem:[%s5 + $0xf8] sm:$0xff]
    %v6852 = vld [vmem:[%s5 + $0x100] sm:$0xff]
    %v6853 = vld [vmem:[%s5 + $0x108] sm:$0xff]
    %v6854 = vld [vmem:[%s5 + $0x110] sm:$0xff]
    %v6855 = vld [vmem:[%s5 + $0x118] sm:$0xff]
    %v6856 = vld [vmem:[%s5 + $0x120] sm:$0xff]
    %v6857 = vld [vmem:[%s5 + $0x128] sm:$0xff]
    %v6858 = vld [vmem:[%s5 + $0x130] sm:$0xff]
    %v6859 = vld [vmem:[%s5 + $0x138] sm:$0xff]
    %v6860 = vld [vmem:[%s5 + $0x140] sm:$0xff]
    %v6861 = vld [vmem:[%s5 + $0x148] sm:$0xff]
    %v6862 = vld [vmem:[%s5 + $0x150] sm:$0xff]
    %v6863 = vld [vmem:[%s5 + $0x158] sm:$0xff]
    %v6864 = vld [vmem:[%s5 + $0x160] sm:$0xff]
    %v6865 = vld [vmem:[%s5 + $0x168] sm:$0xff]
    %v6866 = vld [vmem:[%s5 + $0x170] sm:$0xff]
    %v6867 = vld [vmem:[%s5 + $0x178] sm:$0xff]
    %v6868 = vld [vmem:[%s5 + $0x180] sm:$0xff]
    %v6869 = vld [vmem:[%s5 + $0x188] sm:$0xff]
    %v6870 = vld [vmem:[%s5 + $0x190] sm:$0xff]
    %v6871 = vld [vmem:[%s5 + $0x198] sm:$0xff]
    %v6872 = vld [vmem:[%s5 + $0x1a0] sm:$0xff]
    %v6873 = vld [vmem:[%s5 + $0x1a8] sm:$0xff]
    %v6874 = vld [vmem:[%s5 + $0x1b0] sm:$0xff]
    %v6875 = vld [vmem:[%s5 + $0x1b8] sm:$0xff]
    %v6876 = vld [vmem:[%s5 + $0x1c0] sm:$0xff]
    %v6877 = vld [vmem:[%s5 + $0x1c8] sm:$0xff]
    %v6878 = vld [vmem:[%s5 + $0x1d0] sm:$0xff]
    %v6879 = vld [vmem:[%s5 + $0x1d8] sm:$0xff]
    %v6880 = vld [vmem:[%s5 + $0x1e0] sm:$0xff]
    %v6881 = vld [vmem:[%s5 + $0x1e8] sm:$0xff]
    %v6882 = vld [vmem:[%s5 + $0x1f0] sm:$0xff]
    %v6883 = vld [vmem:[%s5 + $0x1f8] sm:$0xff]
    %v6884 = vld [vmem:[%s5 + $0x200] sm:$0xff]
    %v6885 = vld [vmem:[%s5 + $0x208] sm:$0xff]
    %v6886 = vld [vmem:[%s5 + $0x210] sm:$0xff]
    %v6887 = vld [vmem:[%s5 + $0x218] sm:$0xff]
    %v6888 = vld [vmem:[%s5 + $0x220] sm:$0xff]
    %v6889 = vld [vmem:[%s5 + $0x228] sm:$0xff]
    %v6890 = vld [vmem:[%s5 + $0x230] sm:$0xff]
    %v6891 = vld [vmem:[%s5 + $0x238] sm:$0xff]
    %v6892 = vld [vmem:[%s5 + $0x240] sm:$0xff]
    %v6893 = vld [vmem:[%s5 + $0x248] sm:$0xff]
    %v6894 = vld [vmem:[%s5 + $0x250] sm:$0xff]
    %v6895 = vld [vmem:[%s5 + $0x258] sm:$0xff]
    %v6896 = vld [vmem:[%s5 + $0x260] sm:$0xff]
    %v6897 = vld [vmem:[%s5 + $0x268] sm:$0xff]
    %v6898 = vld [vmem:[%s5 + $0x270] sm:$0xff]
    %v6899 = vld [vmem:[%s5 + $0x278] sm:$0xff]
    %v6900 = vld [vmem:[%s5 + $0x280] sm:$0xff]
    %v6901 = vld [vmem:[%s5 + $0x288] sm:$0xff]
    %v6902 = vld [vmem:[%s5 + $0x290] sm:$0xff]
    %v6903 = vld [vmem:[%s5 + $0x298] sm:$0xff]
    %v6904 = vld [vmem:[%s5 + $0x2a0] sm:$0xff]
    %v6905 = vld [vmem:[%s5 + $0x2a8] sm:$0xff]
    %v6906 = vld [vmem:[%s5 + $0x2b0] sm:$0xff]
    %v6907 = vld [vmem:[%s5 + $0x2b8] sm:$0xff]
    %v6908 = vld [vmem:[%s5 + $0x2c0] sm:$0xff]
    %v6909 = vld [vmem:[%s5 + $0x2c8] sm:$0xff]
    %v6910 = vld [vmem:[%s5 + $0x2d0] sm:$0xff]
    %v6911 = vld [vmem:[%s5 + $0x2d8] sm:$0xff]
    %v6912 = vld [vmem:[%s5 + $0x2e0] sm:$0xff]
    %v6913 = vld [vmem:[%s5 + $0x2e8] sm:$0xff]
    %v6914 = vld [vmem:[%s5 + $0x2f0] sm:$0xff]
    %v6915 = vld [vmem:[%s5 + $0x2f8] sm:$0xff]
    %v6916 = vld [vmem:[%s5 + $0x300] sm:$0xff]
    %v6917 = vld [vmem:[%s5 + $0x308] sm:$0xff]
    %v6918 = vld [vmem:[%s5 + $0x310] sm:$0xff]
    %v6919 = vld [vmem:[%s5 + $0x318] sm:$0xff]
    %v6920 = vld [vmem:[%s5 + $0x320] sm:$0xff]
    %v6921 = vld [vmem:[%s5 + $0x328] sm:$0xff]
    %v6922 = vld [vmem:[%s5 + $0x330] sm:$0xff]
    %v6923 = vld [vmem:[%s5 + $0x338] sm:$0xff]
    %v6924 = vld [vmem:[%s5 + $0x340] sm:$0xff]
    %v6925 = vld [vmem:[%s5 + $0x348] sm:$0xff]
    %v6926 = vld [vmem:[%s5 + $0x350] sm:$0xff]
    %v6927 = vld [vmem:[%s5 + $0x358] sm:$0xff]
    %v6928 = vld [vmem:[%s5 + $0x360] sm:$0xff]
    %v6929 = vld [vmem:[%s5 + $0x368] sm:$0xff]
    %v6930 = vld [vmem:[%s5 + $0x370] sm:$0xff]
    %v6931 = vld [vmem:[%s5 + $0x378] sm:$0xff]
    %v6932 = vld [vmem:[%s5 + $0x380] sm:$0xff]
    %v6933 = vld [vmem:[%s5 + $0x388] sm:$0xff]
    %v6934 = vld [vmem:[%s5 + $0x390] sm:$0xff]
    %v6935 = vld [vmem:[%s5 + $0x398] sm:$0xff]
    %v6936 = vld [vmem:[%s5 + $0x3a0] sm:$0xff]
    %v6937 = vld [vmem:[%s5 + $0x3a8] sm:$0xff]
    %v6938 = vld [vmem:[%s5 + $0x3b0] sm:$0xff]
    %v6939 = vld [vmem:[%s5 + $0x3b8] sm:$0xff]
    %v6940 = vld [vmem:[%s5 + $0x3c0] sm:$0xff]
    %v6941 = vld [vmem:[%s5 + $0x3c8] sm:$0xff]
    %v6942 = vld [vmem:[%s5 + $0x3d0] sm:$0xff]
    %v6943 = vld [vmem:[%s5 + $0x3d8] sm:$0xff]
    %v6944 = vld [vmem:[%s5 + $0x3e0] sm:$0xff]
    %v6945 = vld [vmem:[%s5 + $0x3e8] sm:$0xff]
    %v6946 = vld [vmem:[%s5 + $0x3f0] sm:$0xff]
    %v6947 = vld [vmem:[%s5 + $0x3f8] sm:$0xff]
    %v6948 = vld [vmem:[%s5 + $0x400] sm:$0xff]
    %v6949 = vld [vmem:[%s5 + $0x408] sm:$0xff]
    %v6950 = vld [vmem:[%s5 + $0x410] sm:$0xff]
    %v6951 = vld [vmem:[%s5 + $0x418] sm:$0xff]
    %v6952 = vld [vmem:[%s5 + $0x420] sm:$0xff]
    %v6953 = vld [vmem:[%s5 + $0x428] sm:$0xff]
    %v6954 = vld [vmem:[%s5 + $0x430] sm:$0xff]
    %v6955 = vld [vmem:[%s5 + $0x438] sm:$0xff]
    %v6956 = vld [vmem:[%s5 + $0x440] sm:$0xff]
    %v6957 = vld [vmem:[%s5 + $0x448] sm:$0xff]
    %v6958 = vld [vmem:[%s5 + $0x450] sm:$0xff]
    %v6959 = vld [vmem:[%s5 + $0x458] sm:$0xff]
    %v6960 = vld [vmem:[%s5 + $0x460] sm:$0xff]
    %v6961 = vld [vmem:[%s5 + $0x468] sm:$0xff]
    %v6962 = vld [vmem:[%s5 + $0x470] sm:$0xff]
    %v6963 = vld [vmem:[%s5 + $0x478] sm:$0xff]
    %v6964 = vld [vmem:[%s5 + $0x480] sm:$0xff]
    %v6965 = vld [vmem:[%s5 + $0x488] sm:$0xff]
    %v6966 = vld [vmem:[%s5 + $0x490] sm:$0xff]
    %v6967 = vld [vmem:[%s5 + $0x498] sm:$0xff]
    %v6968 = vld [vmem:[%s5 + $0x4a0] sm:$0xff]
    %v6969 = vld [vmem:[%s5 + $0x4a8] sm:$0xff]
    %v6970 = vld [vmem:[%s5 + $0x4b0] sm:$0xff]
    %v6971 = vld [vmem:[%s5 + $0x4b8] sm:$0xff]
    %v6972 = vld [vmem:[%s5 + $0x4c0] sm:$0xff]
    %v6973 = vld [vmem:[%s5 + $0x4c8] sm:$0xff]
    %v6974 = vld [vmem:[%s5 + $0x4d0] sm:$0xff]
    %v6975 = vld [vmem:[%s5 + $0x4d8] sm:$0xff]
    %v6976 = vld [vmem:[%s5 + $0x4e0] sm:$0xff]
    %v6977 = vld [vmem:[%s5 + $0x4e8] sm:$0xff]
    %v6978 = vld [vmem:[%s5 + $0x4f0] sm:$0xff]
    %v6979 = vld [vmem:[%s5 + $0x4f8] sm:$0xff]
    %v6980 = vld [vmem:[%s5 + $0x500] sm:$0xff]
    %v6981 = vld [vmem:[%s5 + $0x508] sm:$0xff]
    %v6982 = vld [vmem:[%s5 + $0x510] sm:$0xff]
    %v6983 = vld [vmem:[%s5 + $0x518] sm:$0xff]
    %v6984 = vld [vmem:[%s5 + $0x520] sm:$0xff]
    %v6985 = vld [vmem:[%s5 + $0x528] sm:$0xff]
    %v6986 = vld [vmem:[%s5 + $0x530] sm:$0xff]
    %v6987 = vld [vmem:[%s5 + $0x538] sm:$0xff]
    %v6988 = vld [vmem:[%s5 + $0x540] sm:$0xff]
    %v6989 = vld [vmem:[%s5 + $0x548] sm:$0xff]
    %v6990 = vld [vmem:[%s5 + $0x550] sm:$0xff]
    %v6991 = vld [vmem:[%s5 + $0x558] sm:$0xff]
    %v6992 = vld [vmem:[%s5 + $0x560] sm:$0xff]
    %v6993 = vld [vmem:[%s5 + $0x568] sm:$0xff]
    %v6994 = vld [vmem:[%s5 + $0x570] sm:$0xff]
    %v6995 = vld [vmem:[%s5 + $0x578] sm:$0xff]
    %v6996 = vld [vmem:[%s5 + $0x580] sm:$0xff]
    %v6997 = vld [vmem:[%s5 + $0x588] sm:$0xff]
    %v6998 = vld [vmem:[%s5 + $0x590] sm:$0xff]
    %v6999 = vld [vmem:[%s5 + $0x598] sm:$0xff]
    %v7000 = vld [vmem:[%s5 + $0x5a0] sm:$0xff]
    %v7001 = vld [vmem:[%s5 + $0x5a8] sm:$0xff]
    %v7002 = vld [vmem:[%s5 + $0x5b0] sm:$0xff]
    %v7003 = vld [vmem:[%s5 + $0x5b8] sm:$0xff]
    %v7004 = vld [vmem:[%s5 + $0x5c0] sm:$0xff]
    %v7005 = vld [vmem:[%s5 + $0x5c8] sm:$0xff]
    %v7006 = vld [vmem:[%s5 + $0x5d0] sm:$0xff]
    %v7007 = vld [vmem:[%s5 + $0x5d8] sm:$0xff]
    %v7008 = vld [vmem:[%s5 + $0x5e0] sm:$0xff]
    %v7009 = vld [vmem:[%s5 + $0x5e8] sm:$0xff]
    %v7010 = vld [vmem:[%s5 + $0x5f0] sm:$0xff]
    %v7011 = vld [vmem:[%s5 + $0x5f8] sm:$0xff]
    %v7012 = vld [vmem:[%s5 + $0x600] sm:$0xff]
    %v7013 = vld [vmem:[%s5 + $0x608] sm:$0xff]
    %v7014 = vld [vmem:[%s5 + $0x610] sm:$0xff]
    %v7015 = vld [vmem:[%s5 + $0x618] sm:$0xff]
    %v7016 = vld [vmem:[%s6] sm:$0x3]
    %v7018 = vlaneseq
    %v7019 = vshrl.u32 %v7018, 7
    %v7020 = vsub.s32 0, %v7019
    %v7021 = vrot.slane %v7016, %v7020
    %v7022 = vlaneseq
    %v7023 = vshrl.u32 %v7022, 7
    %v7024 = vsub.s32 1, %v7023
    %v7025 = vrot.slane %v7016, %v7024
    %v7029 = vsel %vm1419, %v6819, 0
    %7031 = vmatprep.subr.mxu0 %v6821
    %7032 = vmatpush1.msra.mxu0 %v6820
    %7033 = vmatprep.subr.mxu0 %v6823
    %7034 = vmatpush1.msra.mxu0 %v6822
    %7035 = vmatprep.subr.mxu0 %v6825
    %7036 = vmatpush1.msra.mxu0 %v6824
    %7037 = vmatprep.subr.mxu0 %v6827
    %7038 = vmatpush1.msra.mxu0 %v6826
    %7039 = vmatprep.subr.mxu0 %v6829
    %7040 = vmatpush1.msra.mxu0 %v6828
    %7041 = vmatprep.subr.mxu0 %v6831
    %7042 = vmatpush1.msra.mxu0 %v6830
    %7043 = vmatprep.subr.mxu0 %v6833
    %7044 = vmatpush1.msra.mxu0 %v6832
    %7045 = vmatprep.subr.mxu0 %v6835
    %7046 = vmatpush1.msra.mxu0 %v6834
    %7047 = vmatprep.subr.mxu0 %v6837
    %7048 = vmatpush1.msra.mxu0 %v6836
    %7049 = vmatprep.subr.mxu0 %v6839
    %7050 = vmatpush1.msra.mxu0 %v6838
    %7051 = vmatprep.subr.mxu0 %v6841
    %7052 = vmatpush1.msra.mxu0 %v6840
    %7053 = vmatprep.subr.mxu0 %v6843
    %7054 = vmatpush1.msra.mxu0 %v6842
    %7055 = vmatprep.subr.mxu0 %v6845
    %7056 = vmatpush1.msra.mxu0 %v6844
    %7057 = vmatprep.subr.mxu0 %v6847
    %7058 = vmatpush1.msra.mxu0 %v6846
    %7059 = vmatprep.subr.mxu0 %v6849
    %7060 = vmatpush1.msra.mxu0 %v6848
    %7061 = vmatprep.subr.mxu0 %v6851
    %7062 = vmatpush1.msra.mxu0 %v6850
    %7063 = vmatprep.subr.mxu0 %v6853
    %7064 = vmatpush1.msra.mxu0 %v6852
    %7065 = vmatprep.subr.mxu0 %v6855
    %7066 = vmatpush1.msra.mxu0 %v6854
    %7067 = vmatprep.subr.mxu0 %v6857
    %7068 = vmatpush1.msra.mxu0 %v6856
    %7069 = vmatprep.subr.mxu0 %v6859
    %7070 = vmatpush1.msra.mxu0 %v6858
    %7071 = vmatprep.subr.mxu0 %v6861
    %7072 = vmatpush1.msra.mxu0 %v6860
    %7073 = vmatprep.subr.mxu0 %v6863
    %7074 = vmatpush1.msra.mxu0 %v6862
    %7075 = vmatprep.subr.mxu0 %v6865
    %7076 = vmatpush1.msra.mxu0 %v6864
    %7077 = vmatprep.subr.mxu0 %v6867
    %7078 = vmatpush1.msra.mxu0 %v6866
    %7079 = vmatprep.subr.mxu0 %v6869
    %7080 = vmatpush1.msra.mxu0 %v6868
    %7081 = vmatprep.subr.mxu0 %v6871
    %7082 = vmatpush1.msra.mxu0 %v6870
    %7083 = vmatprep.subr.mxu0 %v6873
    %7084 = vmatpush1.msra.mxu0 %v6872
    %7085 = vmatprep.subr.mxu0 %v6875
    %7086 = vmatpush1.msra.mxu0 %v6874
    %7087 = vmatprep.subr.mxu0 %v6877
    %7088 = vmatpush1.msra.mxu0 %v6876
    %7089 = vmatprep.subr.mxu0 %v6879
    %7090 = vmatpush1.msra.mxu0 %v6878
    %7091 = vmatprep.subr.mxu0 %v6881
    %7092 = vmatpush1.msra.mxu0 %v6880
    %7093 = vmatprep.subr.mxu0 %v6883
    %7094 = vmatpush1.msra.mxu0 %v6882
    %7095 = vmatprep.mubr.f32.mxu0 %v6814
    %7096 = vmatmul.mubr.f32.gmra.mrb[0].mxu0 %v6813
    %v7097 = vpop.f32.mrb[0].mxu0
    %v7098 = vadd.f32 %v7021, %v7097
    %v7099 = vpop.f32.mrb[0].mxu0
    %v7100 = vadd.f32 %v7025, %v7099
    %7101 = vdwg.mxu0
    %7102 = vmatprep.subr.mxu0 %v6885
    %7103 = vmatpush1.msra.mxu0 %v6884
    %7104 = vmatprep.subr.mxu0 %v6887
    %7105 = vmatpush1.msra.mxu0 %v6886
    %7106 = vmatprep.subr.mxu0 %v6889
    %7107 = vmatpush1.msra.mxu0 %v6888
    %7108 = vmatprep.subr.mxu0 %v6891
    %7109 = vmatpush1.msra.mxu0 %v6890
    %7110 = vmatprep.subr.mxu0 %v6893
    %7111 = vmatpush1.msra.mxu0 %v6892
    %7112 = vmatprep.subr.mxu0 %v6895
    %7113 = vmatpush1.msra.mxu0 %v6894
    %7114 = vmatprep.subr.mxu0 %v6897
    %7115 = vmatpush1.msra.mxu0 %v6896
    %7116 = vmatprep.subr.mxu0 %v6899
    %7117 = vmatpush1.msra.mxu0 %v6898
    %7118 = vmatprep.subr.mxu0 %v6901
    %7119 = vmatpush1.msra.mxu0 %v6900
    %7120 = vmatprep.subr.mxu0 %v6903
    %7121 = vmatpush1.msra.mxu0 %v6902
    %7122 = vmatprep.subr.mxu0 %v6905
    %7123 = vmatpush1.msra.mxu0 %v6904
    %7124 = vmatprep.subr.mxu0 %v6907
    %7125 = vmatpush1.msra.mxu0 %v6906
    %7126 = vmatprep.subr.mxu0 %v6909
    %7127 = vmatpush1.msra.mxu0 %v6908
    %7128 = vmatprep.subr.mxu0 %v6911
    %7129 = vmatpush1.msra.mxu0 %v6910
    %7130 = vmatprep.subr.mxu0 %v6913
    %7131 = vmatpush1.msra.mxu0 %v6912
    %7132 = vmatprep.subr.mxu0 %v6915
    %7133 = vmatpush1.msra.mxu0 %v6914
    %7134 = vmatprep.subr.mxu0 %v6917
    %7135 = vmatpush1.msra.mxu0 %v6916
    %7136 = vmatprep.subr.mxu0 %v6919
    %7137 = vmatpush1.msra.mxu0 %v6918
    %7138 = vmatprep.subr.mxu0 %v6921
    %7139 = vmatpush1.msra.mxu0 %v6920
    %7140 = vmatprep.subr.mxu0 %v6923
    %7141 = vmatpush1.msra.mxu0 %v6922
    %7142 = vmatprep.subr.mxu0 %v6925
    %7143 = vmatpush1.msra.mxu0 %v6924
    %7144 = vmatprep.subr.mxu0 %v6927
    %7145 = vmatpush1.msra.mxu0 %v6926
    %7146 = vmatprep.subr.mxu0 %v6929
    %7147 = vmatpush1.msra.mxu0 %v6928
    %7148 = vmatprep.subr.mxu0 %v6931
    %7149 = vmatpush1.msra.mxu0 %v6930
    %7150 = vmatprep.subr.mxu0 %v6933
    %7151 = vmatpush1.msra.mxu0 %v6932
    %7152 = vmatprep.subr.mxu0 %v6935
    %7153 = vmatpush1.msra.mxu0 %v6934
    %7154 = vmatprep.subr.mxu0 %v6937
    %7155 = vmatpush1.msra.mxu0 %v6936
    %7156 = vmatprep.subr.mxu0 %v6939
    %7157 = vmatpush1.msra.mxu0 %v6938
    %7158 = vmatprep.subr.mxu0 %v6941
    %7159 = vmatpush1.msra.mxu0 %v6940
    %7160 = vmatprep.subr.mxu0 %v6943
    %7161 = vmatpush1.msra.mxu0 %v6942
    %7162 = vmatprep.subr.mxu0 %v6945
    %7163 = vmatpush1.msra.mxu0 %v6944
    %7164 = vmatprep.subr.mxu0 %v6947
    %7165 = vmatpush1.msra.mxu0 %v6946
    %7166 = vmatprep.mubr.f32.mxu0 %v6816
    %7167 = vmatmul.mubr.f32.gmra.mrb[0].mxu0 %v6815
    %v7168 = vpop.f32.mrb[0].mxu0
    %v7169 = vadd.f32 %v7098, %v7168
    %v7170 = vpop.f32.mrb[0].mxu0
    %v7171 = vadd.f32 %v7100, %v7170
    %7172 = vdwg.mxu0
    %7173 = vmatprep.subr.mxu0 %v6949
    %7174 = vmatpush1.msra.mxu0 %v6948
    %7175 = vmatprep.subr.mxu0 %v6951
    %7176 = vmatpush1.msra.mxu0 %v6950
    %7177 = vmatprep.subr.mxu0 %v6953
    %7178 = vmatpush1.msra.mxu0 %v6952
    %7179 = vmatprep.subr.mxu0 %v6955
    %7180 = vmatpush1.msra.mxu0 %v6954
    %7181 = vmatprep.subr.mxu0 %v6957
    %7182 = vmatpush1.msra.mxu0 %v6956
    %7183 = vmatprep.subr.mxu0 %v6959
    %7184 = vmatpush1.msra.mxu0 %v6958
    %7185 = vmatprep.subr.mxu0 %v6961
    %7186 = vmatpush1.msra.mxu0 %v6960
    %7187 = vmatprep.subr.mxu0 %v6963
    %7188 = vmatpush1.msra.mxu0 %v6962
    %7189 = vmatprep.subr.mxu0 %v6965
    %7190 = vmatpush1.msra.mxu0 %v6964
    %7191 = vmatprep.subr.mxu0 %v6967
    %7192 = vmatpush1.msra.mxu0 %v6966
    %7193 = vmatprep.subr.mxu0 %v6969
    %7194 = vmatpush1.msra.mxu0 %v6968
    %7195 = vmatprep.subr.mxu0 %v6971
    %7196 = vmatpush1.msra.mxu0 %v6970
    %7197 = vmatprep.subr.mxu0 %v6973
    %7198 = vmatpush1.msra.mxu0 %v6972
    %7199 = vmatprep.subr.mxu0 %v6975
    %7200 = vmatpush1.msra.mxu0 %v6974
    %7201 = vmatprep.subr.mxu0 %v6977
    %7202 = vmatpush1.msra.mxu0 %v6976
    %7203 = vmatprep.subr.mxu0 %v6979
    %7204 = vmatpush1.msra.mxu0 %v6978
    %7205 = vmatprep.subr.mxu0 %v6981
    %7206 = vmatpush1.msra.mxu0 %v6980
    %7207 = vmatprep.subr.mxu0 %v6983
    %7208 = vmatpush1.msra.mxu0 %v6982
    %7209 = vmatprep.subr.mxu0 %v6985
    %7210 = vmatpush1.msra.mxu0 %v6984
    %7211 = vmatprep.subr.mxu0 %v6987
    %7212 = vmatpush1.msra.mxu0 %v6986
    %7213 = vmatprep.subr.mxu0 %v6989
    %7214 = vmatpush1.msra.mxu0 %v6988
    %7215 = vmatprep.subr.mxu0 %v6991
    %7216 = vmatpush1.msra.mxu0 %v6990
    %7217 = vmatprep.subr.mxu0 %v6993
    %7218 = vmatpush1.msra.mxu0 %v6992
    %7219 = vmatprep.subr.mxu0 %v6995
    %7220 = vmatpush1.msra.mxu0 %v6994
    %7221 = vmatprep.subr.mxu0 %v6997
    %7222 = vmatpush1.msra.mxu0 %v6996
    %7223 = vmatprep.subr.mxu0 %v6999
    %7224 = vmatpush1.msra.mxu0 %v6998
    %7225 = vmatprep.subr.mxu0 %v7001
    %7226 = vmatpush1.msra.mxu0 %v7000
    %7227 = vmatprep.subr.mxu0 %v7003
    %7228 = vmatpush1.msra.mxu0 %v7002
    %7229 = vmatprep.subr.mxu0 %v7005
    %7230 = vmatpush1.msra.mxu0 %v7004
    %7231 = vmatprep.subr.mxu0 %v7007
    %7232 = vmatpush1.msra.mxu0 %v7006
    %7233 = vmatprep.subr.mxu0 %v7009
    %7234 = vmatpush1.msra.mxu0 %v7008
    %7235 = vmatprep.subr.mxu0 %v7011
    %7236 = vmatpush1.msra.mxu0 %v7010
    %7237 = vmatprep.mubr.f32.mxu0 %v6818
    %7238 = vmatmul.mubr.f32.gmra.mrb[0].mxu0 %v6817
    %v7239 = vpop.f32.mrb[0].mxu0
    %v7240 = vadd.f32 %v7169, %v7239
    %v7241 = vpop.f32.mrb[0].mxu0
    %v7242 = vadd.f32 %v7171, %v7241
    %7243 = vdwg.mxu0
    %7244 = vmatprep.subr.mxu0 %v7013
    %7245 = vmatpush1.msra.mxu0 %v7012
    %7246 = vmatprep.subr.mxu0 %v7015
    %7247 = vmatpush1.msra.mxu0 %v7014
    %7248 = vmatprep.subr.mxu0 0.0
    %7249 = vmatpush1.msra.mxu0 0.0
    %7250 = vmatprep.subr.mxu0 0.0
    %7251 = vmatpush1.msra.mxu0 0.0
    %7252 = vmatprep.subr.mxu0 0.0
    %7253 = vmatpush1.msra.mxu0 0.0
    %7254 = vmatprep.subr.mxu0 0.0
    %7255 = vmatpush1.msra.mxu0 0.0
    %7256 = vmatprep.subr.mxu0 0.0
    %7257 = vmatpush1.msra.mxu0 0.0
    %7258 = vmatprep.subr.mxu0 0.0
    %7259 = vmatpush1.msra.mxu0 0.0
    %7260 = vmatprep.subr.mxu0 0.0
    %7261 = vmatpush1.msra.mxu0 0.0
    %7262 = vmatprep.subr.mxu0 0.0
    %7263 = vmatpush1.msra.mxu0 0.0
    %7264 = vmatprep.subr.mxu0 0.0
    %7265 = vmatpush1.msra.mxu0 0.0
    %7266 = vmatprep.subr.mxu0 0.0
    %7267 = vmatpush1.msra.mxu0 0.0
    %7268 = vmatprep.subr.mxu0 0.0
    %7269 = vmatpush1.msra.mxu0 0.0
    %7270 = vmatprep.subr.mxu0 0.0
    %7271 = vmatpush1.msra.mxu0 0.0
    %7272 = vmatprep.subr.mxu0 0.0
    %7273 = vmatpush1.msra.mxu0 0.0
    %7274 = vmatprep.subr.mxu0 0.0
    %7275 = vmatpush1.msra.mxu0 0.0
    %7276 = vmatprep.subr.mxu0 0.0
    %7277 = vmatpush1.msra.mxu0 0.0
    %7278 = vmatprep.subr.mxu0 0.0
    %7279 = vmatpush1.msra.mxu0 0.0
    %7280 = vmatprep.subr.mxu0 0.0
    %7281 = vmatpush1.msra.mxu0 0.0
    %7282 = vmatprep.subr.mxu0 0.0
    %7283 = vmatpush1.msra.mxu0 0.0
    %7284 = vmatprep.subr.mxu0 0.0
    %7285 = vmatpush1.msra.mxu0 0.0
    %7286 = vmatprep.subr.mxu0 0.0
    %7287 = vmatpush1.msra.mxu0 0.0
    %7288 = vmatprep.subr.mxu0 0.0
    %7289 = vmatpush1.msra.mxu0 0.0
    %7290 = vmatprep.subr.mxu0 0.0
    %7291 = vmatpush1.msra.mxu0 0.0
    %7292 = vmatprep.subr.mxu0 0.0
    %7293 = vmatpush1.msra.mxu0 0.0
    %7294 = vmatprep.subr.mxu0 0.0
    %7295 = vmatpush1.msra.mxu0 0.0
    %7296 = vmatprep.subr.mxu0 0.0
    %7297 = vmatpush1.msra.mxu0 0.0
    %7298 = vmatprep.subr.mxu0 0.0
    %7299 = vmatpush1.msra.mxu0 0.0
    %7300 = vmatprep.subr.mxu0 0.0
    %7301 = vmatpush1.msra.mxu0 0.0
    %7302 = vmatprep.subr.mxu0 0.0
    %7303 = vmatpush1.msra.mxu0 0.0
    %7304 = vmatprep.subr.mxu0 0.0
    %7305 = vmatpush1.msra.mxu0 0.0
    %7306 = vmatprep.subr.mxu0 0.0
    %7307 = vmatpush1.msra.mxu0 0.0
    %7308 = vmatprep.mubr.f32.mxu0 0.0
    %7309 = vmatmul.mubr.f32.gmra.mrb[0].mxu0 %v7029
    %v7310 = vpop.f32.mrb[0].mxu0
    %v7311 = vadd.f32 %v7240, %v7310
    %v7312 = vpop.f32.mrb[0].mxu0
    %v7313 = vadd.f32 %v7242, %v7312
    %7314 = vdwg.mxu0
    %v7315 = vmax.f32 %v7311, 0.0
    %v7316 = vmax.f32 %v7313, 0.0
    %v7317 = vld [vmem:[%s7] sm:$0xff]
    %v7318 = vld [vmem:[%s7 + $0x8] sm:$0xff]
    %v7319 = vld [vmem:[%s7 + $0x10] sm:$0xff]
    %v7320 = vld [vmem:[%s7 + $0x18] sm:$0xff]
    %v7321 = vld [vmem:[%s7 + $0x20] sm:$0xff]
    %v7322 = vld [vmem:[%s7 + $0x28] sm:$0xff]
    %v7323 = vld [vmem:[%s7 + $0x30] sm:$0xff]
    %v7324 = vld [vmem:[%s7 + $0x38] sm:$0xff]
    %v7325 = vld [vmem:[%s7 + $0x40] sm:$0xff]
    %v7326 = vld [vmem:[%s7 + $0x48] sm:$0xff]
    %v7327 = vld [vmem:[%s7 + $0x50] sm:$0xff]
    %v7328 = vld [vmem:[%s7 + $0x58] sm:$0xff]
    %v7329 = vld [vmem:[%s7 + $0x60] sm:$0xff]
    %v7330 = vld [vmem:[%s7 + $0x68] sm:$0xff]
    %v7331 = vld [vmem:[%s7 + $0x70] sm:$0xff]
    %v7332 = vld [vmem:[%s7 + $0x78] sm:$0xff]
    %v7333 = vld [vmem:[%s7 + $0x80] sm:$0xff]
    %v7334 = vld [vmem:[%s7 + $0x88] sm:$0xff]
    %v7335 = vld [vmem:[%s7 + $0x90] sm:$0xff]
    %v7336 = vld [vmem:[%s7 + $0x98] sm:$0xff]
    %v7337 = vld [vmem:[%s7 + $0xa0] sm:$0xff]
    %v7338 = vld [vmem:[%s7 + $0xa8] sm:$0xff]
    %v7339 = vld [vmem:[%s7 + $0xb0] sm:$0xff]
    %v7340 = vld [vmem:[%s7 + $0xb8] sm:$0xff]
    %v7341 = vld [vmem:[%s7 + $0xc0] sm:$0xff]
    %v7342 = vld [vmem:[%s7 + $0xc8] sm:$0xff]
    %v7343 = vld [vmem:[%s7 + $0xd0] sm:$0xff]
    %v7344 = vld [vmem:[%s7 + $0xd8] sm:$0xff]
    %v7345 = vld [vmem:[%s7 + $0xe0] sm:$0xff]
    %v7346 = vld [vmem:[%s7 + $0xe8] sm:$0xff]
    %v7347 = vld [vmem:[%s7 + $0xf0] sm:$0xff]
    %v7348 = vld [vmem:[%s7 + $0xf8] sm:$0xff]
    %v7349 = vld [vmem:[%s8] sm:$0x1]
    %v7351 = vlaneseq
    %v7352 = vshrl.u32 %v7351, 7
    %v7353 = vsub.s32 0, %v7352
    %v7354 = vrot.slane %v7349, %v7353
    %7356 = vmatprep.subr.mxu0 0.0
    %7357 = vmatpush1.msra.mxu0 %v7317
    %7358 = vmatprep.subr.mxu0 0.0
    %7359 = vmatpush1.msra.mxu0 %v7318
    %7360 = vmatprep.subr.mxu0 0.0
    %7361 = vmatpush1.msra.mxu0 %v7319
    %7362 = vmatprep.subr.mxu0 0.0
    %7363 = vmatpush1.msra.mxu0 %v7320
    %7364 = vmatprep.subr.mxu0 0.0
    %7365 = vmatpush1.msra.mxu0 %v7321
    %7366 = vmatprep.subr.mxu0 0.0
    %7367 = vmatpush1.msra.mxu0 %v7322
    %7368 = vmatprep.subr.mxu0 0.0
    %7369 = vmatpush1.msra.mxu0 %v7323
    %7370 = vmatprep.subr.mxu0 0.0
    %7371 = vmatpush1.msra.mxu0 %v7324
    %7372 = vmatprep.subr.mxu0 0.0
    %7373 = vmatpush1.msra.mxu0 %v7325
    %7374 = vmatprep.subr.mxu0 0.0
    %7375 = vmatpush1.msra.mxu0 %v7326
    %7376 = vmatprep.subr.mxu0 0.0
    %7377 = vmatpush1.msra.mxu0 %v7327
    %7378 = vmatprep.subr.mxu0 0.0
    %7379 = vmatpush1.msra.mxu0 %v7328
    %7380 = vmatprep.subr.mxu0 0.0
    %7381 = vmatpush1.msra.mxu0 %v7329
    %7382 = vmatprep.subr.mxu0 0.0
    %7383 = vmatpush1.msra.mxu0 %v7330
    %7384 = vmatprep.subr.mxu0 0.0
    %7385 = vmatpush1.msra.mxu0 %v7331
    %7386 = vmatprep.subr.mxu0 0.0
    %7387 = vmatpush1.msra.mxu0 %v7332
    %7388 = vmatprep.subr.mxu0 0.0
    %7389 = vmatpush1.msra.mxu0 %v7333
    %7390 = vmatprep.subr.mxu0 0.0
    %7391 = vmatpush1.msra.mxu0 %v7334
    %7392 = vmatprep.subr.mxu0 0.0
    %7393 = vmatpush1.msra.mxu0 %v7335
    %7394 = vmatprep.subr.mxu0 0.0
    %7395 = vmatpush1.msra.mxu0 %v7336
    %7396 = vmatprep.subr.mxu0 0.0
    %7397 = vmatpush1.msra.mxu0 %v7337
    %7398 = vmatprep.subr.mxu0 0.0
    %7399 = vmatpush1.msra.mxu0 %v7338
    %7400 = vmatprep.subr.mxu0 0.0
    %7401 = vmatpush1.msra.mxu0 %v7339
    %7402 = vmatprep.subr.mxu0 0.0
    %7403 = vmatpush1.msra.mxu0 %v7340
    %7404 = vmatprep.subr.mxu0 0.0
    %7405 = vmatpush1.msra.mxu0 %v7341
    %7406 = vmatprep.subr.mxu0 0.0
    %7407 = vmatpush1.msra.mxu0 %v7342
    %7408 = vmatprep.subr.mxu0 0.0
    %7409 = vmatpush1.msra.mxu0 %v7343
    %7410 = vmatprep.subr.mxu0 0.0
    %7411 = vmatpush1.msra.mxu0 %v7344
    %7412 = vmatprep.subr.mxu0 0.0
    %7413 = vmatpush1.msra.mxu0 %v7345
    %7414 = vmatprep.subr.mxu0 0.0
    %7415 = vmatpush1.msra.mxu0 %v7346
    %7416 = vmatprep.subr.mxu0 0.0
    %7417 = vmatpush1.msra.mxu0 %v7347
    %7418 = vmatprep.subr.mxu0 0.0
    %7419 = vmatpush1.msra.mxu0 %v7348
    %7420 = vmatprep.mubr.f32.mxu0 %v7316
    %7421 = vmatmul.mubr.f32.gmra.mrb[0].mxu0 %v7315
    %v7422 = vpop.f32.mrb[0].mxu0
    %v7423 = vadd.f32 %v7354, %v7422
    %v7424 = vpop.f32.mrb[0].mxu0
    %7425 = vdwg.mxu0
    %7426 = vst [vmem:[#allocation2] sm:$0x3] %v7423
    // Predicated region
    $region38: #{cnn_mnist_forward.1} parent=1 // pred_check
      _
    $region39: #{cnn_mnist_forward.1} parent=1 // pred_check_branch
      %7428 = sbr.rel (0) target = $region41
    $region40: #{cnn_mnist_forward.1} parent=1 // pred_region
      %s7430 = ssub.s32 32, 32
      %7431 = vsyncadd [#allocation3], %s7430
      %s7433 = sshll.u32 [#allocation2], 4
      %s7434 = int_to_ptr.vmem [resolvable:$true] %s7433
      %7436 = dma.vmem_to_hbm [thread:$0]  %s7434, 32, %s9, [#allocation3]
    $region41: #{cnn_mnist_forward.1} parent=1 // pred_fallthru
      _
    // Predicated region
    $region42: #{cnn_mnist_forward.1} parent=1 // pred_check
      _
    $region43: #{cnn_mnist_forward.1} parent=1 // pred_check_branch
      %7438 = sbr.rel (0) target = $region45
    $region44: #{cnn_mnist_forward.1} parent=1 // pred_region
      %7439 = dma.done [#allocation3], 32
    $region45: #{cnn_mnist_forward.1} parent=1 // pred_fallthru
      _
    %7440 = vsyncpa [#allocation3], 1

</llo_original>
